<compile_context>
chip_gen: v7x
topology: tpu7x:2x2x1
jax: 0.10.0
libtpu: 0.0.40
codegen_flags: <defaults>
</compile_context>

<pallas_src>
import functools
import math

import jax
import jax.numpy as jnp
from jax import lax
from jax.experimental import pallas as pl
from jax.experimental.pallas import tpu as pltpu

BN_EPS = 1e-5
LRELU_SLOPE = 0.01
LANES = 128

_TAPS = [(kd, kh, kw) for kd in range(3) for kh in range(3) for kw in range(3)]


def _round_up(x, m):
    return ((x + m - 1) // m) * m


# ----------------------------------------------------------------------------
# Pass 1a (conv1, small Cin): taps folded into K.  One grid step = one batch
# element: build an in-VMEM im2col slab (D*H*Wp, 27*Cin -> padded K) and run a
# single MXU matmul.  BN partial sums accumulate from the f32 result.
# ----------------------------------------------------------------------------
def _make_conv_fold_kernel(D, H, W, Cin):
    Wp = W + 2
    HWo = H * Wp
    row_align = 16 if HWo % 16 == 0 else 8

    def kernel(x_ref, w_ref, mask_ref, y_ref, sum_ref, ssq_ref, lhs_ref):
        # x_ref   : (1, D+2, Hp*Wp, Cin) bf16   padded input, full depth for this n
        # w_ref   : (Kp, Coutp) bf16            taps folded into K (zero-padded rows)
        # mask_ref: (D*HWo, 1) f32              junk-column mask
        # y_ref   : (D*HWo, Coutp) bf16
        # lhs_ref : (D*HWo, Kp) bf16 scratch    in-VMEM im2col slab
        @pl.when(pl.program_id(0) == 0)
        def _init():
            sum_ref[...] = jnp.zeros_like(sum_ref)
            ssq_ref[...] = jnp.zeros_like(ssq_ref)
            lhs_ref[...] = jnp.zeros_like(lhs_ref)   # zero the K-padding columns once

        def build(dd, carry):
            row0 = pl.multiple_of(dd * HWo, row_align)
            for t, (kd, kh, kw) in enumerate(_TAPS):
                off = kh * Wp + kw                   # static shift inside the plane
                lhs_ref[pl.ds(row0, HWo), t * Cin:(t + 1) * Cin] = (
                    x_ref[0, dd + kd, off:off + HWo, :])
            return carry

        lax.fori_loop(0, D, build, 0)

        y = jnp.dot(lhs_ref[...], w_ref[...], preferred_element_type=jnp.float32)
        yv = y * mask_ref[...]                       # zero junk columns for the stats
        sum_ref[...] += jnp.sum(yv, axis=0, keepdims=True)
        ssq_ref[...] += jnp.sum(yv * yv, axis=0, keepdims=True)
        y_ref[...] = y.astype(y_ref.dtype)

    return kernel


# ----------------------------------------------------------------------------
# Pass 1b (conv2, Cin >= 128): direct 27-tap matmuls, full depth per grid step.
# ----------------------------------------------------------------------------
def _make_conv_direct_kernel(D, H, W):
    Wp = W + 2
    HWo = H * Wp
    row_align = 16 if HWo % 16 == 0 else 8

    def kernel(x_ref, w_ref, mask_ref, y_ref, sum_ref, ssq_ref):
        # x_ref   : (1, D+2, Hp*Wp, Cinp) bf16
        # w_ref   : (27, Cinp, Coutp) bf16
        # mask_ref: (HWo, 1) f32
        # y_ref   : (D*HWo, Coutp) bf16
        @pl.when(pl.program_id(0) == 0)
        def _init():
            sum_ref[...] = jnp.zeros_like(sum_ref)
            ssq_ref[...] = jnp.zeros_like(ssq_ref)

        mask = mask_ref[...]
        coutp = y_ref.shape[-1]

        def body(dd, carry):
            acc = jnp.zeros((HWo, coutp), jnp.float32)
            for t, (kd, kh, kw) in enumerate(_TAPS):
                off = kh * Wp + kw
                acc = acc + jnp.dot(
                    x_ref[0, dd + kd, off:off + HWo, :], w_ref[t],
                    preferred_element_type=jnp.float32)
            yv = acc * mask
            sum_ref[...] += jnp.sum(yv, axis=0, keepdims=True)
            ssq_ref[...] += jnp.sum(yv * yv, axis=0, keepdims=True)
            row0 = pl.multiple_of(dd * HWo, row_align)
            y_ref[pl.ds(row0, HWo), :] = acc.astype(y_ref.dtype)
            return carry

        lax.fori_loop(0, D, body, 0)

    return kernel


# ----------------------------------------------------------------------------
# Pass 2 of block 1: BN affine + LeakyReLU, written straight into conv2's
# padded, flattened bf16 input layout (one padded depth plane per grid step).
# ----------------------------------------------------------------------------
def _make_bn_to_padded_kernel(D, Wp, HWo):
    def kernel(y_ref, scale_ref, shift_ref, mask_ref, o_ref):
        p = pl.program_id(1)                         # padded-depth plane index
        o_ref[...] = jnp.zeros_like(o_ref)           # zero ring (and boundary planes)

        @pl.when(jnp.logical_and(p >= 1, p <= D))
        def _interior():
            z = y_ref[...].astype(jnp.float32) * scale_ref[...] + shift_ref[...]
            z = jnp.where(z > 0, z, LRELU_SLOPE * z) * mask_ref[...]
            # interior of the padded plane starts at flat row Wp+1
            o_ref[0, 0, Wp + 1:Wp + 1 + HWo, :] = z.astype(o_ref.dtype)

    return kernel


# ----------------------------------------------------------------------------
# Pass 2 of block 2: BN affine + LeakyReLU, flat lane-dense tiles.
# ----------------------------------------------------------------------------
def _bn_lrelu_kernel(y_ref, scale_ref, shift_ref, o_ref):
    z = y_ref[...].astype(jnp.float32) * scale_ref[...] + shift_ref[...]
    o_ref[...] = jnp.where(z > 0, z, LRELU_SLOPE * z).astype(o_ref.dtype)


# ----------------------------------------------------------------------------
# Wrappers around the pallas_calls
# ----------------------------------------------------------------------------
def _conv_stats(xp, w, mask, *, D, H, W, fold_cin):
    """3x3x3 conv + per-channel sum / sum-of-squares over the valid positions."""
    N = xp.shape[0]
    Cin = xp.shape[-1]
    HWin = xp.shape[2]
    Wp = W + 2
    HWo = H * Wp
    My = D * HWo
    Coutp = w.shape[-1]

    if fold_cin:
        kernel = _make_conv_fold_kernel(D, H, W, Cin)
        kcp = w.shape[0]
        scratch = [pltpu.VMEM((My, kcp), jnp.bfloat16)]
        w_spec = pl.BlockSpec((kcp, Coutp), lambda n: (0, 0))
    else:
        kernel = _make_conv_direct_kernel(D, H, W)
        scratch = []
        w_spec = pl.BlockSpec((27, Cin, Coutp), lambda n: (0, 0, 0))

    y, ssum, ssq = pl.pallas_call(
        kernel,
        grid=(N,),
        in_specs=[
            pl.BlockSpec((1, D + 2, HWin, Cin), lambda n: (n, 0, 0, 0)),
            w_spec,
            pl.BlockSpec(mask.shape, lambda n: (0, 0)),
        ],
        out_specs=(
            pl.BlockSpec((My, Coutp), lambda n: (n, 0)),
            pl.BlockSpec((1, Coutp), lambda n: (0, 0)),
            pl.BlockSpec((1, Coutp), lambda n: (0, 0)),
        ),
        out_shape=(
            jax.ShapeDtypeStruct((N * My, Coutp), jnp.bfloat16),
            jax.ShapeDtypeStruct((1, Coutp), jnp.float32),
            jax.ShapeDtypeStruct((1, Coutp), jnp.float32),
        ),
        scratch_shapes=scratch,
        compiler_params=pltpu.CompilerParams(
            dimension_semantics=("arbitrary",)),     # resident stats accumulators
    )(xp, w, mask)
    return y, ssum, ssq


def _bn_affine(ssum, ssq, count, gamma_p, beta_p):
    mean = ssum / count
    var = jnp.maximum(ssq / count - mean * mean, 0.0)
    scale = gamma_p * lax.rsqrt(var + BN_EPS)
    shift = beta_p - mean * scale
    return scale, shift


def _bn_lrelu_to_padded(y, scale, shift, mask_plane, *, N, D, H, W, Coutp):
    Wp, Hp = W + 2, H + 3
    HWin, HWo = Hp * Wp, H * Wp
    return pl.pallas_call(
        _make_bn_to_padded_kernel(D, Wp, HWo),
        grid=(N, D + 2),
        in_specs=[
            pl.BlockSpec((HWo, Coutp),
                         lambda n, p: (n * D + jnp.clip(p - 1, 0, D - 1), 0)),
            pl.BlockSpec((1, Coutp), lambda n, p: (0, 0)),
            pl.BlockSpec((1, Coutp), lambda n, p: (0, 0)),
            pl.BlockSpec((HWo, 1), lambda n, p: (0, 0)),
        ],
        out_specs=pl.BlockSpec((1, 1, HWin, Coutp), lambda n, p: (n, p, 0, 0)),
        out_shape=jax.ShapeDtypeStruct((N, D + 2, HWin, Coutp), jnp.bfloat16),
        compiler_params=pltpu.CompilerParams(
            dimension_semantics=("parallel", "parallel")),
    )(y, scale, shift, mask_plane)


def _bn_lrelu_flat(y, scale, shift, out_dtype, fallback_tm):
    M, Coutp = y.shape
    TM = next((c for c in (2048, 1024, 512, 256, 128) if M % c == 0), fallback_tm)
    return pl.pallas_call(
        _bn_lrelu_kernel,
        grid=(M // TM,),
        in_specs=[
            pl.BlockSpec((TM, Coutp), lambda i: (i, 0)),
            pl.BlockSpec((1, Coutp), lambda i: (0, 0)),
            pl.BlockSpec((1, Coutp), lambda i: (0, 0)),
        ],
        out_specs=pl.BlockSpec((TM, Coutp), lambda i: (i, 0)),
        out_shape=jax.ShapeDtypeStruct((M, Coutp), out_dtype),
        compiler_params=pltpu.CompilerParams(dimension_semantics=("parallel",)),
    )(y, scale, shift)


# ----------------------------------------------------------------------------
# BasicBlock3D forward (norm='bn', training-mode batch statistics)
# ----------------------------------------------------------------------------
@functools.partial(jax.jit, static_argnames=("planes",))
def basic_block3d_forward(x_ncdhw, params, *, planes):
    x = jnp.transpose(x_ncdhw, (0, 2, 3, 4, 1))                      # NCDHW -> NDHWC
    N, D, H, W, Cin = x.shape
    Wp, Hp = W + 2, H + 3
    HWin, HWo = Hp * Wp, H * Wp
    Coutp = params["w1_fold"].shape[-1]
    count = float(N * D * H * W)

    # TODO(synk): general H/W would need row padding to the bf16 (16,128) tile.
    assert HWo % 16 == 0, "H*(W+2) must be a multiple of 16 for the bf16 y tiles"

    # Precomputed junk-column masks (loaded once per conv pass).
    mask_plane = ((jnp.arange(HWo) % Wp) < W).astype(jnp.float32).reshape(HWo, 1)
    mask_full = jnp.tile(mask_plane, (D, 1))

    # ---- block 1 ----------------------------------------------------------
    # Only wrapper-side activation prep pass: pad + flatten + bf16 the module input.
    x1p = jnp.pad(x, ((0, 0), (1, 1), (1, 2), (1, 1), (0, 0)))
    x1p = x1p.reshape(N, D + 2, HWin, Cin).astype(jnp.bfloat16)

    y1, s1, q1 = _conv_stats(x1p, params["w1_fold"], mask_full,
                             D=D, H=H, W=W, fold_cin=True)
    scale1, shift1 = _bn_affine(s1, q1, count, params["g1_p"], params["beta1_p"])

    # bn1 + LeakyReLU written directly into conv2's padded bf16 input layout.
    x2p = _bn_lrelu_to_padded(y1, scale1, shift1, mask_plane,
                              N=N, D=D, H=H, W=W, Coutp=Coutp)

    # ---- block 2 ----------------------------------------------------------
    y2, s2, q2 = _conv_stats(x2p, params["w2_tap"], mask_plane,
                             D=D, H=H, W=W, fold_cin=False)
    scale2, shift2 = _bn_affine(s2, q2, count, params["g2_p"], params["beta2_p"])

    out = _bn_lrelu_flat(y2, scale2, shift2, jnp.float32, fallback_tm=HWo)

    out = out.reshape(N, D, H, Wp, Coutp)[:, :, :, :W, :planes]      # drop junk + pad
    return jnp.transpose(out, (0, 4, 1, 2, 3))                       # back to NCDHW


# ----------------------------------------------------------------------------
# Deterministic parameter init (mirrors nn.Conv3d / nn.BatchNorm3d defaults).
# Conv biases are omitted: followed by training-mode BatchNorm they are absorbed
# exactly into the batch mean and cancel from the forward output.
# ----------------------------------------------------------------------------
def init_params(key, inplanes, planes):
    k1, k2 = jax.random.split(key, 2)
    coutp = _round_up(planes, LANES)
    kcp = _round_up(27 * inplanes, LANES)

    def conv_weight(k, cin, cout):
        bound = 1.0 / math.sqrt(cin * 27)
        return jax.random.uniform(k, (3, 3, 3, cin, cout), jnp.float32, -bound, bound)

    w1 = conv_weight(k1, inplanes, planes)
    w2 = conv_weight(k2, planes, planes)

    def pad_c(v):
        return jnp.zeros((1, coutp), jnp.float32).at[:, :planes].set(v)

    # conv1: taps folded into the contraction dim, K zero-padded to a lane multiple.
    w1_fold = jnp.zeros((kcp, coutp), jnp.bfloat16)
    w1_fold = w1_fold.at[:27 * inplanes, :planes].set(
        w1.reshape(27 * inplanes, planes).astype(jnp.bfloat16))
    # conv2: per-tap (Cin, Cout) slices, channels zero-padded to 128 lanes.
    w2_tap = jnp.zeros((27, coutp, coutp), jnp.bfloat16)
    w2_tap = w2_tap.at[:, :planes, :planes].set(
        w2.reshape(27, planes, planes).astype(jnp.bfloat16))

    g1 = jnp.ones((1, planes), jnp.float32)
    g2 = jnp.ones((1, planes), jnp.float32)
    beta1 = jnp.zeros((1, planes), jnp.float32)
    beta2 = jnp.zeros((1, planes), jnp.float32)

    return {
        # reference (unpadded) params
        "w1_dhwio": w1, "g1": g1, "beta1": beta1,
        "w2_dhwio": w2, "g2": g2, "beta2": beta2,
        # kernel (padded) params
        "w1_fold": w1_fold, "g1_p": pad_c(g1), "beta1_p": pad_c(beta1),
        "w2_tap": w2_tap, "g2_p": pad_c(g2), "beta2_p": pad_c(beta2),
    }


# ----------------------------------------------------------------------------
# Pure-JAX reference (bf16 conv operands / bf16 y intermediate mirrored, f32 math)
# ----------------------------------------------------------------------------
def reference_forward(x_ncdhw, params):
    x = jnp.transpose(x_ncdhw, (0, 2, 3, 4, 1))
    dn = ("NDHWC", "DHWIO", "NDHWC")

    def block(a, w, g, beta):
        a = a.astype(jnp.bfloat16).astype(jnp.float32)
        w = w.astype(jnp.bfloat16).astype(jnp.float32)
        y = lax.conv_general_dilated(
            a, w, (1, 1, 1), "SAME", dimension_numbers=dn,
            precision=lax.Precision.HIGHEST)
        mu = jnp.mean(y, axis=(0, 1, 2, 3), keepdims=True)
        var = jnp.mean((y - mu) ** 2, axis=(0, 1, 2, 3), keepdims=True)
        yq = y.astype(jnp.bfloat16).astype(jnp.float32)   # kernel stores y in bf16
        z = (yq - mu) * lax.rsqrt(var + BN_EPS) * g.reshape(1, 1, 1, 1, -1) \
            + beta.reshape(1, 1, 1, 1, -1)
        return jnp.where(z > 0, z, LRELU_SLOPE * z)

    y = block(x, params["w1_dhwio"], params["g1"], params["beta1"])
    y = block(y, params["w2_dhwio"], params["g2"], params["beta2"])
    return jnp.transpose(y, (0, 4, 1, 2, 3))


# ----------------------------------------------------------------------------
if __name__ == "__main__":
    key = jax.random.PRNGKey(0)
    kx, kp = jax.random.split(key)

    N, CIN, PLANES, D, H, W = 2, 4, 8, 8, 8, 8
    x = jax.random.normal(kx, (N, CIN, D, H, W), jnp.float32)        # NCDHW like PyTorch
    params = init_params(kp, CIN, PLANES)

    out = jax.block_until_ready(basic_block3d_forward(x, params, planes=PLANES))
    ref = jax.block_until_ready(reference_forward(x, params))

    assert out.shape == (N, PLANES, D, H, W), out.shape
    diff = jnp.abs(out - ref)
    err_max = float(jnp.max(diff))
    err_mean = float(jnp.mean(diff))
    # bf16 intermediates -> rare one-ulp rounding flips; bound max and mean error.
    assert err_max < 3e-2, f"max abs err {err_max}"
    assert err_mean < 2e-3, f"mean abs err {err_mean}"

    print("KERNEL_OK")
</pallas_src>

<mosaic_0001>
module attributes {stable_mosaic.version = 11 : i64} {
  func.func @kernel(%arg0: i32, %arg1: memref<1x10x110x4xbf16, #tpu.memory_space<vmem>>, %arg2: memref<128x128xbf16, #tpu.memory_space<vmem>>, %arg3: memref<640x1xf32, #tpu.memory_space<vmem>>, %arg4: memref<640x128xbf16, #tpu.memory_space<vmem>>, %arg5: memref<1x128xf32, #tpu.memory_space<vmem>>, %arg6: memref<1x128xf32, #tpu.memory_space<vmem>>, %arg7: memref<640x128xbf16, #tpu.memory_space<vmem>>) attributes {dimension_semantics = [#tpu.dimension_semantics<arbitrary>], iteration_bounds = array<i64: 2>, scalar_prefetch = 0 : i64, scratch_operands = 1 : i64, tpu.core_type = #tpu.core_type<tc>, window_params = [{transform_indices = @transform_0, window_bounds = array<i64: 1, 10, 110, 4>}, {pipeline_mode = #tpu.pipeline_mode<synchronous>, transform_indices = @transform_1, window_bounds = array<i64: 128, 128>}, {pipeline_mode = #tpu.pipeline_mode<synchronous>, transform_indices = @transform_2, window_bounds = array<i64: 640, 1>}, {transform_indices = @transform_3, window_bounds = array<i64: 640, 128>}, {pipeline_mode = #tpu.pipeline_mode<synchronous>, transform_indices = @transform_4, window_bounds = array<i64: 1, 128>}, {pipeline_mode = #tpu.pipeline_mode<synchronous>, transform_indices = @transform_5, window_bounds = array<i64: 1, 128>}]} {
    %c0_i32 = arith.constant 0 : i32
    %0 = arith.cmpi eq, %arg0, %c0_i32 : i32
    %1 = arith.extui %0 : i1 to i32
    %c0_i32_0 = arith.constant 0 : i32
    %2 = arith.cmpi ne, %1, %c0_i32_0 : i32
    scf.if %2 {
      %cst_20 = arith.constant 0.000000e+00 : f32
      %23 = vector.broadcast %cst_20 : f32 to vector<1x128xf32>
      %c0_21 = arith.constant 0 : index
      %c0_22 = arith.constant 0 : index
      %24 = vector.load %arg5[%c0_21, %c0_22] : memref<1x128xf32, #tpu.memory_space<vmem>>, vector<1x128xf32>
      tpu.vector_store %arg5[%c0_21, %c0_22], %23 {strides = array<i32>} : memref<1x128xf32, #tpu.memory_space<vmem>>, vector<1x128xf32>,
      %cst_23 = arith.constant 0.000000e+00 : f32
      %25 = vector.broadcast %cst_23 : f32 to vector<1x128xf32>
      %c0_24 = arith.constant 0 : index
      %c0_25 = arith.constant 0 : index
      %26 = vector.load %arg6[%c0_24, %c0_25] : memref<1x128xf32, #tpu.memory_space<vmem>>, vector<1x128xf32>
      tpu.vector_store %arg6[%c0_24, %c0_25], %25 {strides = array<i32>} : memref<1x128xf32, #tpu.memory_space<vmem>>, vector<1x128xf32>,
      %cst_26 = arith.constant 0.000000e+00 : bf16
      %27 = vector.broadcast %cst_26 : bf16 to vector<640x128xbf16>
      %c0_27 = arith.constant 0 : index
      %c0_28 = arith.constant 0 : index
      %28 = vector.load %arg7[%c0_27, %c0_28] : memref<640x128xbf16, #tpu.memory_space<vmem>>, vector<640x128xbf16>
      tpu.vector_store %arg7[%c0_27, %c0_28], %27 {strides = array<i32>} : memref<640x128xbf16, #tpu.memory_space<vmem>>, vector<640x128xbf16>,
    } else {
    }
    %c0_i32_1 = arith.constant 0 : i32
    %c8_i32 = arith.constant 8 : i32
    %3 = arith.addi %c0_i32_1, %c8_i32 : i32
    %c1_i32 = arith.constant 1 : i32
    scf.for %arg8 = %c0_i32_1 to %3 step %c1_i32  : i32 {
      %c80_i32 = arith.constant 80 : i32
      %23 = arith.muli %arg8, %c80_i32 : i32
      %24 = tpu.assume_multiple %23, 16 : i32
      %c0_i32_20 = arith.constant 0 : i32
      %25 = arith.addi %arg8, %c0_i32_20 : i32
      %c0_21 = arith.constant 0 : index
      %26 = arith.index_cast %25 : i32 to index
      %c0_22 = arith.constant 0 : index
      %c0_23 = arith.constant 0 : index
      %27 = vector.load %arg1[%c0_21, %26, %c0_22, %c0_23] : memref<1x10x110x4xbf16, #tpu.memory_space<vmem>>, vector<1x1x80x4xbf16>
      %28 = vector.shape_cast %27 : vector<1x1x80x4xbf16> to vector<80x4xbf16>
      %29 = arith.index_cast %24 : i32 to index
      %c0_24 = arith.constant 0 : index
      %30 = vector.load %arg7[%29, %c0_24] : memref<640x128xbf16, #tpu.memory_space<vmem>>, vector<80x4xbf16>
      tpu.vector_store %arg7[%29, %c0_24], %28 {strides = array<i32>} : memref<640x128xbf16, #tpu.memory_space<vmem>>, vector<80x4xbf16>,
      %c0_i32_25 = arith.constant 0 : i32
      %31 = arith.addi %arg8, %c0_i32_25 : i32
      %c0_26 = arith.constant 0 : index
      %32 = arith.index_cast %31 : i32 to index
      %c1 = arith.constant 1 : index
      %c0_27 = arith.constant 0 : index
      %33 = vector.load %arg1[%c0_26, %32, %c1, %c0_27] : memref<1x10x110x4xbf16, #tpu.memory_space<vmem>>, vector<1x1x80x4xbf16>
      %34 = vector.shape_cast %33 : vector<1x1x80x4xbf16> to vector<80x4xbf16>
      %35 = arith.index_cast %24 : i32 to index
      %c4 = arith.constant 4 : index
      %36 = vector.load %arg7[%35, %c4] : memref<640x128xbf16, #tpu.memory_space<vmem>>, vector<80x4xbf16>
      tpu.vector_store %arg7[%35, %c4], %34 {strides = array<i32>} : memref<640x128xbf16, #tpu.memory_space<vmem>>, vector<80x4xbf16>,
      %c0_i32_28 = arith.constant 0 : i32
      %37 = arith.addi %arg8, %c0_i32_28 : i32
      %c0_29 = arith.constant 0 : index
      %38 = arith.index_cast %37 : i32 to index
      %c2 = arith.constant 2 : index
      %c0_30 = arith.constant 0 : index
      %39 = vector.load %arg1[%c0_29, %38, %c2, %c0_30] : memref<1x10x110x4xbf16, #tpu.memory_space<vmem>>, vector<1x1x80x4xbf16>
      %40 = vector.shape_cast %39 : vector<1x1x80x4xbf16> to vector<80x4xbf16>
      %41 = arith.index_cast %24 : i32 to index
      %c8 = arith.constant 8 : index
      %42 = vector.load %arg7[%41, %c8] : memref<640x128xbf16, #tpu.memory_space<vmem>>, vector<80x4xbf16>
      tpu.vector_store %arg7[%41, %c8], %40 {strides = array<i32>} : memref<640x128xbf16, #tpu.memory_space<vmem>>, vector<80x4xbf16>,
      %c0_i32_31 = arith.constant 0 : i32
      %43 = arith.addi %arg8, %c0_i32_31 : i32
      %c0_32 = arith.constant 0 : index
      %44 = arith.index_cast %43 : i32 to index
      %c10 = arith.constant 10 : index
      %c0_33 = arith.constant 0 : index
      %45 = vector.load %arg1[%c0_32, %44, %c10, %c0_33] : memref<1x10x110x4xbf16, #tpu.memory_space<vmem>>, vector<1x1x80x4xbf16>
      %46 = vector.shape_cast %45 : vector<1x1x80x4xbf16> to vector<80x4xbf16>
      %47 = arith.index_cast %24 : i32 to index
      %c12 = arith.constant 12 : index
      %48 = vector.load %arg7[%47, %c12] : memref<640x128xbf16, #tpu.memory_space<vmem>>, vector<80x4xbf16>
      tpu.vector_store %arg7[%47, %c12], %46 {strides = array<i32>} : memref<640x128xbf16, #tpu.memory_space<vmem>>, vector<80x4xbf16>,
      %c0_i32_34 = arith.constant 0 : i32
      %49 = arith.addi %arg8, %c0_i32_34 : i32
      %c0_35 = arith.constant 0 : index
      %50 = arith.index_cast %49 : i32 to index
      %c11 = arith.constant 11 : index
      %c0_36 = arith.constant 0 : index
      %51 = vector.load %arg1[%c0_35, %50, %c11, %c0_36] : memref<1x10x110x4xbf16, #tpu.memory_space<vmem>>, vector<1x1x80x4xbf16>
      %52 = vector.shape_cast %51 : vector<1x1x80x4xbf16> to vector<80x4xbf16>
      %53 = arith.index_cast %24 : i32 to index
      %c16 = arith.constant 16 : index
      %54 = vector.load %arg7[%53, %c16] : memref<640x128xbf16, #tpu.memory_space<vmem>>, vector<80x4xbf16>
      tpu.vector_store %arg7[%53, %c16], %52 {strides = array<i32>} : memref<640x128xbf16, #tpu.memory_space<vmem>>, vector<80x4xbf16>,
      %c0_i32_37 = arith.constant 0 : i32
      %55 = arith.addi %arg8, %c0_i32_37 : i32
      %c0_38 = arith.constant 0 : index
      %56 = arith.index_cast %55 : i32 to index
      %c12_39 = arith.constant 12 : index
      %c0_40 = arith.constant 0 : index
      %57 = vector.load %arg1[%c0_38, %56, %c12_39, %c0_40] : memref<1x10x110x4xbf16, #tpu.memory_space<vmem>>, vector<1x1x80x4xbf16>
      %58 = vector.shape_cast %57 : vector<1x1x80x4xbf16> to vector<80x4xbf16>
      %59 = arith.index_cast %24 : i32 to index
      %c20 = arith.constant 20 : index
      %60 = vector.load %arg7[%59, %c20] : memref<640x128xbf16, #tpu.memory_space<vmem>>, vector<80x4xbf16>
      tpu.vector_store %arg7[%59, %c20], %58 {strides = array<i32>} : memref<640x128xbf16, #tpu.memory_space<vmem>>, vector<80x4xbf16>,
      %c0_i32_41 = arith.constant 0 : i32
      %61 = arith.addi %arg8, %c0_i32_41 : i32
      %c0_42 = arith.constant 0 : index
      %62 = arith.index_cast %61 : i32 to index
      %c20_43 = arith.constant 20 : index
      %c0_44 = arith.constant 0 : index
      %63 = vector.load %arg1[%c0_42, %62, %c20_43, %c0_44] : memref<1x10x110x4xbf16, #tpu.memory_space<vmem>>, vector<1x1x80x4xbf16>
      %64 = vector.shape_cast %63 : vector<1x1x80x4xbf16> to vector<80x4xbf16>
      %65 = arith.index_cast %24 : i32 to index
      %c24 = arith.constant 24 : index
      %66 = vector.load %arg7[%65, %c24] : memref<640x128xbf16, #tpu.memory_space<vmem>>, vector<80x4xbf16>
      tpu.vector_store %arg7[%65, %c24], %64 {strides = array<i32>} : memref<640x128xbf16, #tpu.memory_space<vmem>>, vector<80x4xbf16>,
      %c0_i32_45 = arith.constant 0 : i32
      %67 = arith.addi %arg8, %c0_i32_45 : i32
      %c0_46 = arith.constant 0 : index
      %68 = arith.index_cast %67 : i32 to index
      %c21 = arith.constant 21 : index
      %c0_47 = arith.constant 0 : index
      %69 = vector.load %arg1[%c0_46, %68, %c21, %c0_47] : memref<1x10x110x4xbf16, #tpu.memory_space<vmem>>, vector<1x1x80x4xbf16>
      %70 = vector.shape_cast %69 : vector<1x1x80x4xbf16> to vector<80x4xbf16>
      %71 = arith.index_cast %24 : i32 to index
      %c28 = arith.constant 28 : index
      %72 = vector.load %arg7[%71, %c28] : memref<640x128xbf16, #tpu.memory_space<vmem>>, vector<80x4xbf16>
      tpu.vector_store %arg7[%71, %c28], %70 {strides = array<i32>} : memref<640x128xbf16, #tpu.memory_space<vmem>>, vector<80x4xbf16>,
      %c0_i32_48 = arith.constant 0 : i32
      %73 = arith.addi %arg8, %c0_i32_48 : i32
      %c0_49 = arith.constant 0 : index
      %74 = arith.index_cast %73 : i32 to index
      %c22 = arith.constant 22 : index
      %c0_50 = arith.constant 0 : index
      %75 = vector.load %arg1[%c0_49, %74, %c22, %c0_50] : memref<1x10x110x4xbf16, #tpu.memory_space<vmem>>, vector<1x1x80x4xbf16>
      %76 = vector.shape_cast %75 : vector<1x1x80x4xbf16> to vector<80x4xbf16>
      %77 = arith.index_cast %24 : i32 to index
      %c32 = arith.constant 32 : index
      %78 = vector.load %arg7[%77, %c32] : memref<640x128xbf16, #tpu.memory_space<vmem>>, vector<80x4xbf16>
      tpu.vector_store %arg7[%77, %c32], %76 {strides = array<i32>} : memref<640x128xbf16, #tpu.memory_space<vmem>>, vector<80x4xbf16>,
      %c1_i32_51 = arith.constant 1 : i32
      %79 = arith.addi %arg8, %c1_i32_51 : i32
      %c0_52 = arith.constant 0 : index
      %80 = arith.index_cast %79 : i32 to index
      %c0_53 = arith.constant 0 : index
      %c0_54 = arith.constant 0 : index
      %81 = vector.load %arg1[%c0_52, %80, %c0_53, %c0_54] : memref<1x10x110x4xbf16, #tpu.memory_space<vmem>>, vector<1x1x80x4xbf16>
      %82 = vector.shape_cast %81 : vector<1x1x80x4xbf16> to vector<80x4xbf16>
      %83 = arith.index_cast %24 : i32 to index
      %c36 = arith.constant 36 : index
      %84 = vector.load %arg7[%83, %c36] : memref<640x128xbf16, #tpu.memory_space<vmem>>, vector<80x4xbf16>
      tpu.vector_store %arg7[%83, %c36], %82 {strides = array<i32>} : memref<640x128xbf16, #tpu.memory_space<vmem>>, vector<80x4xbf16>,
      %c1_i32_55 = arith.constant 1 : i32
      %85 = arith.addi %arg8, %c1_i32_55 : i32
      %c0_56 = arith.constant 0 : index
      %86 = arith.index_cast %85 : i32 to index
      %c1_57 = arith.constant 1 : index
      %c0_58 = arith.constant 0 : index
      %87 = vector.load %arg1[%c0_56, %86, %c1_57, %c0_58] : memref<1x10x110x4xbf16, #tpu.memory_space<vmem>>, vector<1x1x80x4xbf16>
      %88 = vector.shape_cast %87 : vector<1x1x80x4xbf16> to vector<80x4xbf16>
      %89 = arith.index_cast %24 : i32 to index
      %c40 = arith.constant 40 : index
      %90 = vector.load %arg7[%89, %c40] : memref<640x128xbf16, #tpu.memory_space<vmem>>, vector<80x4xbf16>
      tpu.vector_store %arg7[%89, %c40], %88 {strides = array<i32>} : memref<640x128xbf16, #tpu.memory_space<vmem>>, vector<80x4xbf16>,
      %c1_i32_59 = arith.constant 1 : i32
      %91 = arith.addi %arg8, %c1_i32_59 : i32
      %c0_60 = arith.constant 0 : index
      %92 = arith.index_cast %91 : i32 to index
      %c2_61 = arith.constant 2 : index
      %c0_62 = arith.constant 0 : index
      %93 = vector.load %arg1[%c0_60, %92, %c2_61, %c0_62] : memref<1x10x110x4xbf16, #tpu.memory_space<vmem>>, vector<1x1x80x4xbf16>
      %94 = vector.shape_cast %93 : vector<1x1x80x4xbf16> to vector<80x4xbf16>
      %95 = arith.index_cast %24 : i32 to index
      %c44 = arith.constant 44 : index
      %96 = vector.load %arg7[%95, %c44] : memref<640x128xbf16, #tpu.memory_space<vmem>>, vector<80x4xbf16>
      tpu.vector_store %arg7[%95, %c44], %94 {strides = array<i32>} : memref<640x128xbf16, #tpu.memory_space<vmem>>, vector<80x4xbf16>,
      %c1_i32_63 = arith.constant 1 : i32
      %97 = arith.addi %arg8, %c1_i32_63 : i32
      %c0_64 = arith.constant 0 : index
      %98 = arith.index_cast %97 : i32 to index
      %c10_65 = arith.constant 10 : index
      %c0_66 = arith.constant 0 : index
      %99 = vector.load %arg1[%c0_64, %98, %c10_65, %c0_66] : memref<1x10x110x4xbf16, #tpu.memory_space<vmem>>, vector<1x1x80x4xbf16>
      %100 = vector.shape_cast %99 : vector<1x1x80x4xbf16> to vector<80x4xbf16>
      %101 = arith.index_cast %24 : i32 to index
      %c48 = arith.constant 48 : index
      %102 = vector.load %arg7[%101, %c48] : memref<640x128xbf16, #tpu.memory_space<vmem>>, vector<80x4xbf16>
      tpu.vector_store %arg7[%101, %c48], %100 {strides = array<i32>} : memref<640x128xbf16, #tpu.memory_space<vmem>>, vector<80x4xbf16>,
      %c1_i32_67 = arith.constant 1 : i32
      %103 = arith.addi %arg8, %c1_i32_67 : i32
      %c0_68 = arith.constant 0 : index
      %104 = arith.index_cast %103 : i32 to index
      %c11_69 = arith.constant 11 : index
      %c0_70 = arith.constant 0 : index
      %105 = vector.load %arg1[%c0_68, %104, %c11_69, %c0_70] : memref<1x10x110x4xbf16, #tpu.memory_space<vmem>>, vector<1x1x80x4xbf16>
      %106 = vector.shape_cast %105 : vector<1x1x80x4xbf16> to vector<80x4xbf16>
      %107 = arith.index_cast %24 : i32 to index
      %c52 = arith.constant 52 : index
      %108 = vector.load %arg7[%107, %c52] : memref<640x128xbf16, #tpu.memory_space<vmem>>, vector<80x4xbf16>
      tpu.vector_store %arg7[%107, %c52], %106 {strides = array<i32>} : memref<640x128xbf16, #tpu.memory_space<vmem>>, vector<80x4xbf16>,
      %c1_i32_71 = arith.constant 1 : i32
      %109 = arith.addi %arg8, %c1_i32_71 : i32
      %c0_72 = arith.constant 0 : index
      %110 = arith.index_cast %109 : i32 to index
      %c12_73 = arith.constant 12 : index
      %c0_74 = arith.constant 0 : index
      %111 = vector.load %arg1[%c0_72, %110, %c12_73, %c0_74] : memref<1x10x110x4xbf16, #tpu.memory_space<vmem>>, vector<1x1x80x4xbf16>
      %112 = vector.shape_cast %111 : vector<1x1x80x4xbf16> to vector<80x4xbf16>
      %113 = arith.index_cast %24 : i32 to index
      %c56 = arith.constant 56 : index
      %114 = vector.load %arg7[%113, %c56] : memref<640x128xbf16, #tpu.memory_space<vmem>>, vector<80x4xbf16>
      tpu.vector_store %arg7[%113, %c56], %112 {strides = array<i32>} : memref<640x128xbf16, #tpu.memory_space<vmem>>, vector<80x4xbf16>,
      %c1_i32_75 = arith.constant 1 : i32
      %115 = arith.addi %arg8, %c1_i32_75 : i32
      %c0_76 = arith.constant 0 : index
      %116 = arith.index_cast %115 : i32 to index
      %c20_77 = arith.constant 20 : index
      %c0_78 = arith.constant 0 : index
      %117 = vector.load %arg1[%c0_76, %116, %c20_77, %c0_78] : memref<1x10x110x4xbf16, #tpu.memory_space<vmem>>, vector<1x1x80x4xbf16>
      %118 = vector.shape_cast %117 : vector<1x1x80x4xbf16> to vector<80x4xbf16>
      %119 = arith.index_cast %24 : i32 to index
      %c60 = arith.constant 60 : index
      %120 = vector.load %arg7[%119, %c60] : memref<640x128xbf16, #tpu.memory_space<vmem>>, vector<80x4xbf16>
      tpu.vector_store %arg7[%119, %c60], %118 {strides = array<i32>} : memref<640x128xbf16, #tpu.memory_space<vmem>>, vector<80x4xbf16>,
      %c1_i32_79 = arith.constant 1 : i32
      %121 = arith.addi %arg8, %c1_i32_79 : i32
      %c0_80 = arith.constant 0 : index
      %122 = arith.index_cast %121 : i32 to index
      %c21_81 = arith.constant 21 : index
      %c0_82 = arith.constant 0 : index
      %123 = vector.load %arg1[%c0_80, %122, %c21_81, %c0_82] : memref<1x10x110x4xbf16, #tpu.memory_space<vmem>>, vector<1x1x80x4xbf16>
      %124 = vector.shape_cast %123 : vector<1x1x80x4xbf16> to vector<80x4xbf16>
      %125 = arith.index_cast %24 : i32 to index
      %c64 = arith.constant 64 : index
      %126 = vector.load %arg7[%125, %c64] : memref<640x128xbf16, #tpu.memory_space<vmem>>, vector<80x4xbf16>
      tpu.vector_store %arg7[%125, %c64], %124 {strides = array<i32>} : memref<640x128xbf16, #tpu.memory_space<vmem>>, vector<80x4xbf16>,
      %c1_i32_83 = arith.constant 1 : i32
      %127 = arith.addi %arg8, %c1_i32_83 : i32
      %c0_84 = arith.constant 0 : index
      %128 = arith.index_cast %127 : i32 to index
      %c22_85 = arith.constant 22 : index
      %c0_86 = arith.constant 0 : index
      %129 = vector.load %arg1[%c0_84, %128, %c22_85, %c0_86] : memref<1x10x110x4xbf16, #tpu.memory_space<vmem>>, vector<1x1x80x4xbf16>
      %130 = vector.shape_cast %129 : vector<1x1x80x4xbf16> to vector<80x4xbf16>
      %131 = arith.index_cast %24 : i32 to index
      %c68 = arith.constant 68 : index
      %132 = vector.load %arg7[%131, %c68] : memref<640x128xbf16, #tpu.memory_space<vmem>>, vector<80x4xbf16>
      tpu.vector_store %arg7[%131, %c68], %130 {strides = array<i32>} : memref<640x128xbf16, #tpu.memory_space<vmem>>, vector<80x4xbf16>,
      %c2_i32 = arith.constant 2 : i32
      %133 = arith.addi %arg8, %c2_i32 : i32
      %c0_87 = arith.constant 0 : index
      %134 = arith.index_cast %133 : i32 to index
      %c0_88 = arith.constant 0 : index
      %c0_89 = arith.constant 0 : index
      %135 = vector.load %arg1[%c0_87, %134, %c0_88, %c0_89] : memref<1x10x110x4xbf16, #tpu.memory_space<vmem>>, vector<1x1x80x4xbf16>
      %136 = vector.shape_cast %135 : vector<1x1x80x4xbf16> to vector<80x4xbf16>
      %137 = arith.index_cast %24 : i32 to index
      %c72 = arith.constant 72 : index
      %138 = vector.load %arg7[%137, %c72] : memref<640x128xbf16, #tpu.memory_space<vmem>>, vector<80x4xbf16>
      tpu.vector_store %arg7[%137, %c72], %136 {strides = array<i32>} : memref<640x128xbf16, #tpu.memory_space<vmem>>, vector<80x4xbf16>,
      %c2_i32_90 = arith.constant 2 : i32
      %139 = arith.addi %arg8, %c2_i32_90 : i32
      %c0_91 = arith.constant 0 : index
      %140 = arith.index_cast %139 : i32 to index
      %c1_92 = arith.constant 1 : index
      %c0_93 = arith.constant 0 : index
      %141 = vector.load %arg1[%c0_91, %140, %c1_92, %c0_93] : memref<1x10x110x4xbf16, #tpu.memory_space<vmem>>, vector<1x1x80x4xbf16>
      %142 = vector.shape_cast %141 : vector<1x1x80x4xbf16> to vector<80x4xbf16>
      %143 = arith.index_cast %24 : i32 to index
      %c76 = arith.constant 76 : index
      %144 = vector.load %arg7[%143, %c76] : memref<640x128xbf16, #tpu.memory_space<vmem>>, vector<80x4xbf16>
      tpu.vector_store %arg7[%143, %c76], %142 {strides = array<i32>} : memref<640x128xbf16, #tpu.memory_space<vmem>>, vector<80x4xbf16>,
      %c2_i32_94 = arith.constant 2 : i32
      %145 = arith.addi %arg8, %c2_i32_94 : i32
      %c0_95 = arith.constant 0 : index
      %146 = arith.index_cast %145 : i32 to index
      %c2_96 = arith.constant 2 : index
      %c0_97 = arith.constant 0 : index
      %147 = vector.load %arg1[%c0_95, %146, %c2_96, %c0_97] : memref<1x10x110x4xbf16, #tpu.memory_space<vmem>>, vector<1x1x80x4xbf16>
      %148 = vector.shape_cast %147 : vector<1x1x80x4xbf16> to vector<80x4xbf16>
      %149 = arith.index_cast %24 : i32 to index
      %c80 = arith.constant 80 : index
      %150 = vector.load %arg7[%149, %c80] : memref<640x128xbf16, #tpu.memory_space<vmem>>, vector<80x4xbf16>
      tpu.vector_store %arg7[%149, %c80], %148 {strides = array<i32>} : memref<640x128xbf16, #tpu.memory_space<vmem>>, vector<80x4xbf16>,
      %c2_i32_98 = arith.constant 2 : i32
      %151 = arith.addi %arg8, %c2_i32_98 : i32
      %c0_99 = arith.constant 0 : index
      %152 = arith.index_cast %151 : i32 to index
      %c10_100 = arith.constant 10 : index
      %c0_101 = arith.constant 0 : index
      %153 = vector.load %arg1[%c0_99, %152, %c10_100, %c0_101] : memref<1x10x110x4xbf16, #tpu.memory_space<vmem>>, vector<1x1x80x4xbf16>
      %154 = vector.shape_cast %153 : vector<1x1x80x4xbf16> to vector<80x4xbf16>
      %155 = arith.index_cast %24 : i32 to index
      %c84 = arith.constant 84 : index
      %156 = vector.load %arg7[%155, %c84] : memref<640x128xbf16, #tpu.memory_space<vmem>>, vector<80x4xbf16>
      tpu.vector_store %arg7[%155, %c84], %154 {strides = array<i32>} : memref<640x128xbf16, #tpu.memory_space<vmem>>, vector<80x4xbf16>,
      %c2_i32_102 = arith.constant 2 : i32
      %157 = arith.addi %arg8, %c2_i32_102 : i32
      %c0_103 = arith.constant 0 : index
      %158 = arith.index_cast %157 : i32 to index
      %c11_104 = arith.constant 11 : index
      %c0_105 = arith.constant 0 : index
      %159 = vector.load %arg1[%c0_103, %158, %c11_104, %c0_105] : memref<1x10x110x4xbf16, #tpu.memory_space<vmem>>, vector<1x1x80x4xbf16>
      %160 = vector.shape_cast %159 : vector<1x1x80x4xbf16> to vector<80x4xbf16>
      %161 = arith.index_cast %24 : i32 to index
      %c88 = arith.constant 88 : index
      %162 = vector.load %arg7[%161, %c88] : memref<640x128xbf16, #tpu.memory_space<vmem>>, vector<80x4xbf16>
      tpu.vector_store %arg7[%161, %c88], %160 {strides = array<i32>} : memref<640x128xbf16, #tpu.memory_space<vmem>>, vector<80x4xbf16>,
      %c2_i32_106 = arith.constant 2 : i32
      %163 = arith.addi %arg8, %c2_i32_106 : i32
      %c0_107 = arith.constant 0 : index
      %164 = arith.index_cast %163 : i32 to index
      %c12_108 = arith.constant 12 : index
      %c0_109 = arith.constant 0 : index
      %165 = vector.load %arg1[%c0_107, %164, %c12_108, %c0_109] : memref<1x10x110x4xbf16, #tpu.memory_space<vmem>>, vector<1x1x80x4xbf16>
      %166 = vector.shape_cast %165 : vector<1x1x80x4xbf16> to vector<80x4xbf16>
      %167 = arith.index_cast %24 : i32 to index
      %c92 = arith.constant 92 : index
      %168 = vector.load %arg7[%167, %c92] : memref<640x128xbf16, #tpu.memory_space<vmem>>, vector<80x4xbf16>
      tpu.vector_store %arg7[%167, %c92], %166 {strides = array<i32>} : memref<640x128xbf16, #tpu.memory_space<vmem>>, vector<80x4xbf16>,
      %c2_i32_110 = arith.constant 2 : i32
      %169 = arith.addi %arg8, %c2_i32_110 : i32
      %c0_111 = arith.constant 0 : index
      %170 = arith.index_cast %169 : i32 to index
      %c20_112 = arith.constant 20 : index
      %c0_113 = arith.constant 0 : index
      %171 = vector.load %arg1[%c0_111, %170, %c20_112, %c0_113] : memref<1x10x110x4xbf16, #tpu.memory_space<vmem>>, vector<1x1x80x4xbf16>
      %172 = vector.shape_cast %171 : vector<1x1x80x4xbf16> to vector<80x4xbf16>
      %173 = arith.index_cast %24 : i32 to index
      %c96 = arith.constant 96 : index
      %174 = vector.load %arg7[%173, %c96] : memref<640x128xbf16, #tpu.memory_space<vmem>>, vector<80x4xbf16>
      tpu.vector_store %arg7[%173, %c96], %172 {strides = array<i32>} : memref<640x128xbf16, #tpu.memory_space<vmem>>, vector<80x4xbf16>,
      %c2_i32_114 = arith.constant 2 : i32
      %175 = arith.addi %arg8, %c2_i32_114 : i32
      %c0_115 = arith.constant 0 : index
      %176 = arith.index_cast %175 : i32 to index
      %c21_116 = arith.constant 21 : index
      %c0_117 = arith.constant 0 : index
      %177 = vector.load %arg1[%c0_115, %176, %c21_116, %c0_117] : memref<1x10x110x4xbf16, #tpu.memory_space<vmem>>, vector<1x1x80x4xbf16>
      %178 = vector.shape_cast %177 : vector<1x1x80x4xbf16> to vector<80x4xbf16>
      %179 = arith.index_cast %24 : i32 to index
      %c100 = arith.constant 100 : index
      %180 = vector.load %arg7[%179, %c100] : memref<640x128xbf16, #tpu.memory_space<vmem>>, vector<80x4xbf16>
      tpu.vector_store %arg7[%179, %c100], %178 {strides = array<i32>} : memref<640x128xbf16, #tpu.memory_space<vmem>>, vector<80x4xbf16>,
      %c2_i32_118 = arith.constant 2 : i32
      %181 = arith.addi %arg8, %c2_i32_118 : i32
      %c0_119 = arith.constant 0 : index
      %182 = arith.index_cast %181 : i32 to index
      %c22_120 = arith.constant 22 : index
      %c0_121 = arith.constant 0 : index
      %183 = vector.load %arg1[%c0_119, %182, %c22_120, %c0_121] : memref<1x10x110x4xbf16, #tpu.memory_space<vmem>>, vector<1x1x80x4xbf16>
      %184 = vector.shape_cast %183 : vector<1x1x80x4xbf16> to vector<80x4xbf16>
      %185 = arith.index_cast %24 : i32 to index
      %c104 = arith.constant 104 : index
      %186 = vector.load %arg7[%185, %c104] : memref<640x128xbf16, #tpu.memory_space<vmem>>, vector<80x4xbf16>
      tpu.vector_store %arg7[%185, %c104], %184 {strides = array<i32>} : memref<640x128xbf16, #tpu.memory_space<vmem>>, vector<80x4xbf16>,
    }
    %c8_i32_2 = arith.constant 8 : i32
    %c0 = arith.constant 0 : index
    %c0_3 = arith.constant 0 : index
    %4 = vector.load %arg7[%c0, %c0_3] : memref<640x128xbf16, #tpu.memory_space<vmem>>, vector<640x128xbf16>
    %c0_4 = arith.constant 0 : index
    %c0_5 = arith.constant 0 : index
    %5 = vector.load %arg2[%c0_4, %c0_5] : memref<128x128xbf16, #tpu.memory_space<vmem>>, vector<128x128xbf16>
    %cst = arith.constant dense<0.000000e+00> : vector<640x128xf32>
    %6 = tpu.matmul %4, %5, %cst {dimension_numbers = #tpu.dot_dimension_numbers<[1], [0], [0], [1], [0, 0, 1, 1], [], []>} : vector<640x128xbf16>, vector<128x128xbf16>, vector<640x128xf32> -> vector<640x128xf32>
    %c0_6 = arith.constant 0 : index
    %c0_7 = arith.constant 0 : index
    %7 = vector.load %arg3[%c0_6, %c0_7] : memref<640x1xf32, #tpu.memory_space<vmem>>, vector<640x1xf32>
    %8 = vector.broadcast %7 : vector<640x1xf32> to vector<640x128xf32>
    %9 = arith.mulf %6, %8 : vector<640x128xf32>
    %c0_8 = arith.constant 0 : index
    %c0_9 = arith.constant 0 : index
    %10 = vector.load %arg5[%c0_8, %c0_9] : memref<1x128xf32, #tpu.memory_space<vmem>>, vector<1x128xf32>
    %cst_10 = arith.constant dense<0.000000e+00> : vector<128xf32>
    %11 = vector.multi_reduction <add>, %9, %cst_10 [0] : vector<640x128xf32> to vector<128xf32>
    %12 = vector.shape_cast %11 : vector<128xf32> to vector<1x128xf32>
    %13 = arith.addf %10, %12 : vector<1x128xf32>
    %c0_11 = arith.constant 0 : index
    %c0_12 = arith.constant 0 : index
    %14 = vector.load %arg5[%c0_11, %c0_12] : memref<1x128xf32, #tpu.memory_space<vmem>>, vector<1x128xf32>
    tpu.vector_store %arg5[%c0_11, %c0_12], %13 {strides = array<i32>} : memref<1x128xf32, #tpu.memory_space<vmem>>, vector<1x128xf32>,
    %c0_13 = arith.constant 0 : index
    %c0_14 = arith.constant 0 : index
    %15 = vector.load %arg6[%c0_13, %c0_14] : memref<1x128xf32, #tpu.memory_space<vmem>>, vector<1x128xf32>
    %16 = arith.mulf %9, %9 : vector<640x128xf32>
    %cst_15 = arith.constant dense<0.000000e+00> : vector<128xf32>
    %17 = vector.multi_reduction <add>, %16, %cst_15 [0] : vector<640x128xf32> to vector<128xf32>
    %18 = vector.shape_cast %17 : vector<128xf32> to vector<1x128xf32>
    %19 = arith.addf %15, %18 : vector<1x128xf32>
    %c0_16 = arith.constant 0 : index
    %c0_17 = arith.constant 0 : index
    %20 = vector.load %arg6[%c0_16, %c0_17] : memref<1x128xf32, #tpu.memory_space<vmem>>, vector<1x128xf32>
    tpu.vector_store %arg6[%c0_16, %c0_17], %19 {strides = array<i32>} : memref<1x128xf32, #tpu.memory_space<vmem>>, vector<1x128xf32>,
    %21 = arith.truncf %6 : vector<640x128xf32> to vector<640x128xbf16>
    %c0_18 = arith.constant 0 : index
    %c0_19 = arith.constant 0 : index
    %22 = vector.load %arg4[%c0_18, %c0_19] : memref<640x128xbf16, #tpu.memory_space<vmem>>, vector<640x128xbf16>
    tpu.vector_store %arg4[%c0_18, %c0_19], %21 {strides = array<i32>} : memref<640x128xbf16, #tpu.memory_space<vmem>>, vector<640x128xbf16>,
    return
  }
  func.func @transform_0(%arg0: i32) -> (i32, i32, i32, i32) {
    %c0_i32 = arith.constant 0 : i32
    %c0_i32_0 = arith.constant 0 : i32
    %c0_i32_1 = arith.constant 0 : i32
    %c0_i32_2 = arith.constant 0 : i32
    return %arg0, %c0_i32, %c0_i32_0, %c0_i32_1 : i32, i32, i32, i32
  }
  func.func @transform_1(%arg0: i32) -> (i32, i32) {
    %c0_i32 = arith.constant 0 : i32
    %c0_i32_0 = arith.constant 0 : i32
    %c0_i32_1 = arith.constant 0 : i32
    return %c0_i32, %c0_i32_0 : i32, i32
  }
  func.func @transform_2(%arg0: i32) -> (i32, i32) {
    %c0_i32 = arith.constant 0 : i32
    %c0_i32_0 = arith.constant 0 : i32
    %c0_i32_1 = arith.constant 0 : i32
    return %c0_i32, %c0_i32_0 : i32, i32
  }
  func.func @transform_3(%arg0: i32) -> (i32, i32) {
    %c0_i32 = arith.constant 0 : i32
    %c0_i32_0 = arith.constant 0 : i32
    return %arg0, %c0_i32 : i32, i32
  }
  func.func @transform_4(%arg0: i32) -> (i32, i32) {
    %c0_i32 = arith.constant 0 : i32
    %c0_i32_0 = arith.constant 0 : i32
    %c0_i32_1 = arith.constant 0 : i32
    return %c0_i32, %c0_i32_0 : i32, i32
  }
  func.func @transform_5(%arg0: i32) -> (i32, i32) {
    %c0_i32 = arith.constant 0 : i32
    %c0_i32_0 = arith.constant 0 : i32
    %c0_i32_1 = arith.constant 0 : i32
    return %c0_i32, %c0_i32_0 : i32, i32
  }
}

module attributes {stable_mosaic.version = 11 : i64} {
  func.func @kernel(%arg0: i32, %arg1: i32, %arg2: memref<80x128xbf16, #tpu.memory_space<vmem>>, %arg3: memref<1x128xf32, #tpu.memory_space<vmem>>, %arg4: memref<1x128xf32, #tpu.memory_space<vmem>>, %arg5: memref<80x1xf32, #tpu.memory_space<vmem>>, %arg6: memref<1x1x110x128xbf16, #tpu.memory_space<vmem>>) attributes {dimension_semantics = [#tpu.dimension_semantics<parallel>, #tpu.dimension_semantics<parallel>], iteration_bounds = array<i64: 2, 10>, scalar_prefetch = 0 : i64, scratch_operands = 0 : i64, tpu.core_type = #tpu.core_type<tc>, window_params = [{transform_indices = @transform_0, window_bounds = array<i64: 80, 128>}, {pipeline_mode = #tpu.pipeline_mode<synchronous>, transform_indices = @transform_1, window_bounds = array<i64: 1, 128>}, {pipeline_mode = #tpu.pipeline_mode<synchronous>, transform_indices = @transform_2, window_bounds = array<i64: 1, 128>}, {pipeline_mode = #tpu.pipeline_mode<synchronous>, transform_indices = @transform_3, window_bounds = array<i64: 80, 1>}, {transform_indices = @transform_4, window_bounds = array<i64: 1, 1, 110, 128>}]} {
    %cst = arith.constant 0.000000e+00 : bf16
    %0 = vector.broadcast %cst : bf16 to vector<1x1x110x128xbf16>
    %c0 = arith.constant 0 : index
    %c0_0 = arith.constant 0 : index
    %c0_1 = arith.constant 0 : index
    %c0_2 = arith.constant 0 : index
    %1 = vector.load %arg6[%c0, %c0_0, %c0_1, %c0_2] : memref<1x1x110x128xbf16, #tpu.memory_space<vmem>>, vector<1x1x110x128xbf16>
    tpu.vector_store %arg6[%c0, %c0_0, %c0_1, %c0_2], %0 {strides = array<i32>} : memref<1x1x110x128xbf16, #tpu.memory_space<vmem>>, vector<1x1x110x128xbf16>,
    %c1_i32 = arith.constant 1 : i32
    %2 = arith.cmpi sge, %arg1, %c1_i32 : i32
    %c8_i32 = arith.constant 8 : i32
    %3 = arith.cmpi sle, %arg1, %c8_i32 : i32
    %4 = arith.andi %2, %3 : i1
    %5 = arith.extui %4 : i1 to i32
    %c0_i32 = arith.constant 0 : i32
    %6 = arith.cmpi ne, %5, %c0_i32 : i32
    scf.if %6 {
      %c0_3 = arith.constant 0 : index
      %c0_4 = arith.constant 0 : index
      %7 = vector.load %arg2[%c0_3, %c0_4] : memref<80x128xbf16, #tpu.memory_space<vmem>>, vector<80x128xbf16>
      %8 = arith.extf %7 : vector<80x128xbf16> to vector<80x128xf32>
      %c0_5 = arith.constant 0 : index
      %c0_6 = arith.constant 0 : index
      %9 = vector.load %arg3[%c0_5, %c0_6] : memref<1x128xf32, #tpu.memory_space<vmem>>, vector<1x128xf32>
      %10 = vector.broadcast %9 : vector<1x128xf32> to vector<80x128xf32>
      %11 = arith.mulf %8, %10 : vector<80x128xf32>
      %c0_7 = arith.constant 0 : index
      %c0_8 = arith.constant 0 : index
      %12 = vector.load %arg4[%c0_7, %c0_8] : memref<1x128xf32, #tpu.memory_space<vmem>>, vector<1x128xf32>
      %13 = vector.broadcast %12 : vector<1x128xf32> to vector<80x128xf32>
      %14 = arith.addf %11, %13 : vector<80x128xf32>
      %cst_9 = arith.constant 0.000000e+00 : f32
      %15 = vector.broadcast %cst_9 : f32 to vector<80x128xf32>
      %16 = arith.cmpf ogt, %14, %15 : vector<80x128xf32>
      %cst_10 = arith.constant 0.00999999977 : f32
      %17 = vector.broadcast %cst_10 : f32 to vector<80x128xf32>
      %18 = arith.mulf %17, %14 : vector<80x128xf32>
      %19 = arith.select %16, %14, %18 : vector<80x128xi1>, vector<80x128xf32>
      %c0_11 = arith.constant 0 : index
      %c0_12 = arith.constant 0 : index
      %20 = vector.load %arg5[%c0_11, %c0_12] : memref<80x1xf32, #tpu.memory_space<vmem>>, vector<80x1xf32>
      %21 = vector.broadcast %20 : vector<80x1xf32> to vector<80x128xf32>
      %22 = arith.mulf %19, %21 : vector<80x128xf32>
      %23 = arith.truncf %22 : vector<80x128xf32> to vector<80x128xbf16>
      %c0_13 = arith.constant 0 : index
      %c0_14 = arith.constant 0 : index
      %c11 = arith.constant 11 : index
      %c0_15 = arith.constant 0 : index
      %24 = vector.load %arg6[%c0_13, %c0_14, %c11, %c0_15] : memref<1x1x110x128xbf16, #tpu.memory_space<vmem>>, vector<1x1x80x128xbf16>
      %25 = vector.shape_cast %24 : vector<1x1x80x128xbf16> to vector<80x128xbf16>
      %26 = vector.shape_cast %23 : vector<80x128xbf16> to vector<1x1x80x128xbf16>
      tpu.vector_store %arg6[%c0_13, %c0_14, %c11, %c0_15], %26 {strides = array<i32>} : memref<1x1x110x128xbf16, #tpu.memory_space<vmem>>, vector<1x1x80x128xbf16>,
    } else {
    }
    return
  }
  func.func @transform_0(%arg0: i32, %arg1: i32) -> (i32, i32) {
    %c8_i32 = arith.constant 8 : i32
    %0 = arith.muli %arg0, %c8_i32 : i32
    %c1_i32 = arith.constant 1 : i32
    %1 = arith.subi %arg1, %c1_i32 : i32
    %c0_i32 = arith.constant 0 : i32
    %c7_i32 = arith.constant 7 : i32
    %2 = arith.maxsi %c0_i32, %1 : i32
    %3 = arith.minsi %c7_i32, %2 : i32
    %4 = arith.addi %0, %3 : i32
    %c0_i32_0 = arith.constant 0 : i32
    %c0_i32_1 = arith.constant 0 : i32
    return %4, %c0_i32_0 : i32, i32
  }
  func.func @transform_1(%arg0: i32, %arg1: i32) -> (i32, i32) {
    %c0_i32 = arith.constant 0 : i32
    %c0_i32_0 = arith.constant 0 : i32
    %c0_i32_1 = arith.constant 0 : i32
    return %c0_i32, %c0_i32_0 : i32, i32
  }
  func.func @transform_2(%arg0: i32, %arg1: i32) -> (i32, i32) {
    %c0_i32 = arith.constant 0 : i32
    %c0_i32_0 = arith.constant 0 : i32
    %c0_i32_1 = arith.constant 0 : i32
    return %c0_i32, %c0_i32_0 : i32, i32
  }
  func.func @transform_3(%arg0: i32, %arg1: i32) -> (i32, i32) {
    %c0_i32 = arith.constant 0 : i32
    %c0_i32_0 = arith.constant 0 : i32
    %c0_i32_1 = arith.constant 0 : i32
    return %c0_i32, %c0_i32_0 : i32, i32
  }
  func.func @transform_4(%arg0: i32, %arg1: i32) -> (i32, i32, i32, i32) {
    %c0_i32 = arith.constant 0 : i32
    %c0_i32_0 = arith.constant 0 : i32
    %c0_i32_1 = arith.constant 0 : i32
    return %arg0, %arg1, %c0_i32, %c0_i32_0 : i32, i32, i32, i32
  }
}

module attributes {stable_mosaic.version = 11 : i64} {
  func.func @kernel(%arg0: i32, %arg1: memref<1x10x110x128xbf16, #tpu.memory_space<vmem>>, %arg2: memref<27x128x128xbf16, #tpu.memory_space<vmem>>, %arg3: memref<80x1xf32, #tpu.memory_space<vmem>>, %arg4: memref<640x128xbf16, #tpu.memory_space<vmem>>, %arg5: memref<1x128xf32, #tpu.memory_space<vmem>>, %arg6: memref<1x128xf32, #tpu.memory_space<vmem>>) attributes {dimension_semantics = [#tpu.dimension_semantics<arbitrary>], iteration_bounds = array<i64: 2>, scalar_prefetch = 0 : i64, scratch_operands = 0 : i64, tpu.core_type = #tpu.core_type<tc>, window_params = [{transform_indices = @transform_0, window_bounds = array<i64: 1, 10, 110, 128>}, {pipeline_mode = #tpu.pipeline_mode<synchronous>, transform_indices = @transform_1, window_bounds = array<i64: 27, 128, 128>}, {pipeline_mode = #tpu.pipeline_mode<synchronous>, transform_indices = @transform_2, window_bounds = array<i64: 80, 1>}, {transform_indices = @transform_3, window_bounds = array<i64: 640, 128>}, {pipeline_mode = #tpu.pipeline_mode<synchronous>, transform_indices = @transform_4, window_bounds = array<i64: 1, 128>}, {pipeline_mode = #tpu.pipeline_mode<synchronous>, transform_indices = @transform_5, window_bounds = array<i64: 1, 128>}]} {
    %c0_i32 = arith.constant 0 : i32
    %0 = arith.cmpi eq, %arg0, %c0_i32 : i32
    %1 = arith.extui %0 : i1 to i32
    %c0_i32_0 = arith.constant 0 : i32
    %2 = arith.cmpi ne, %1, %c0_i32_0 : i32
    scf.if %2 {
      %cst = arith.constant 0.000000e+00 : f32
      %5 = vector.broadcast %cst : f32 to vector<1x128xf32>
      %c0_4 = arith.constant 0 : index
      %c0_5 = arith.constant 0 : index
      %6 = vector.load %arg5[%c0_4, %c0_5] : memref<1x128xf32, #tpu.memory_space<vmem>>, vector<1x128xf32>
      tpu.vector_store %arg5[%c0_4, %c0_5], %5 {strides = array<i32>} : memref<1x128xf32, #tpu.memory_space<vmem>>, vector<1x128xf32>,
      %cst_6 = arith.constant 0.000000e+00 : f32
      %7 = vector.broadcast %cst_6 : f32 to vector<1x128xf32>
      %c0_7 = arith.constant 0 : index
      %c0_8 = arith.constant 0 : index
      %8 = vector.load %arg6[%c0_7, %c0_8] : memref<1x128xf32, #tpu.memory_space<vmem>>, vector<1x128xf32>
      tpu.vector_store %arg6[%c0_7, %c0_8], %7 {strides = array<i32>} : memref<1x128xf32, #tpu.memory_space<vmem>>, vector<1x128xf32>,
    } else {
    }
    %c0 = arith.constant 0 : index
    %c0_1 = arith.constant 0 : index
    %3 = vector.load %arg3[%c0, %c0_1] : memref<80x1xf32, #tpu.memory_space<vmem>>, vector<80x1xf32>
    %c0_i32_2 = arith.constant 0 : i32
    %c8_i32 = arith.constant 8 : i32
    %4 = arith.addi %c0_i32_2, %c8_i32 : i32
    %c1_i32 = arith.constant 1 : i32
    scf.for %arg7 = %c0_i32_2 to %4 step %c1_i32  : i32 {
      %cst = arith.constant 0.000000e+00 : f32
      %5 = vector.broadcast %cst : f32 to vector<80x128xf32>
      %c0_i32_4 = arith.constant 0 : i32
      %6 = arith.addi %arg7, %c0_i32_4 : i32
      %c0_5 = arith.constant 0 : index
      %7 = arith.index_cast %6 : i32 to index
      %c0_6 = arith.constant 0 : index
      %c0_7 = arith.constant 0 : index
      %8 = vector.load %arg1[%c0_5, %7, %c0_6, %c0_7] : memref<1x10x110x128xbf16, #tpu.memory_space<vmem>>, vector<1x1x80x128xbf16>
      %9 = vector.shape_cast %8 : vector<1x1x80x128xbf16> to vector<80x128xbf16>
      %c0_8 = arith.constant 0 : index
      %c0_9 = arith.constant 0 : index
      %c0_10 = arith.constant 0 : index
      %10 = vector.load %arg2[%c0_8, %c0_9, %c0_10] : memref<27x128x128xbf16, #tpu.memory_space<vmem>>, vector<1x128x128xbf16>
      %11 = vector.shape_cast %10 : vector<1x128x128xbf16> to vector<128x128xbf16>
      %cst_11 = arith.constant dense<0.000000e+00> : vector<80x128xf32>
      %12 = tpu.matmul %9, %11, %cst_11 {dimension_numbers = #tpu.dot_dimension_numbers<[1], [0], [0], [1], [0, 0, 1, 1], [], []>} : vector<80x128xbf16>, vector<128x128xbf16>, vector<80x128xf32> -> vector<80x128xf32>
      %13 = arith.addf %5, %12 : vector<80x128xf32>
      %c0_i32_12 = arith.constant 0 : i32
      %14 = arith.addi %arg7, %c0_i32_12 : i32
      %c0_13 = arith.constant 0 : index
      %15 = arith.index_cast %14 : i32 to index
      %c1 = arith.constant 1 : index
      %c0_14 = arith.constant 0 : index
      %16 = vector.load %arg1[%c0_13, %15, %c1, %c0_14] : memref<1x10x110x128xbf16, #tpu.memory_space<vmem>>, vector<1x1x80x128xbf16>
      %17 = vector.shape_cast %16 : vector<1x1x80x128xbf16> to vector<80x128xbf16>
      %c1_15 = arith.constant 1 : index
      %c0_16 = arith.constant 0 : index
      %c0_17 = arith.constant 0 : index
      %18 = vector.load %arg2[%c1_15, %c0_16, %c0_17] : memref<27x128x128xbf16, #tpu.memory_space<vmem>>, vector<1x128x128xbf16>
      %19 = vector.shape_cast %18 : vector<1x128x128xbf16> to vector<128x128xbf16>
      %cst_18 = arith.constant dense<0.000000e+00> : vector<80x128xf32>
      %20 = tpu.matmul %17, %19, %cst_18 {dimension_numbers = #tpu.dot_dimension_numbers<[1], [0], [0], [1], [0, 0, 1, 1], [], []>} : vector<80x128xbf16>, vector<128x128xbf16>, vector<80x128xf32> -> vector<80x128xf32>
      %21 = arith.addf %13, %20 : vector<80x128xf32>
      %c0_i32_19 = arith.constant 0 : i32
      %22 = arith.addi %arg7, %c0_i32_19 : i32
      %c0_20 = arith.constant 0 : index
      %23 = arith.index_cast %22 : i32 to index
      %c2 = arith.constant 2 : index
      %c0_21 = arith.constant 0 : index
      %24 = vector.load %arg1[%c0_20, %23, %c2, %c0_21] : memref<1x10x110x128xbf16, #tpu.memory_space<vmem>>, vector<1x1x80x128xbf16>
      %25 = vector.shape_cast %24 : vector<1x1x80x128xbf16> to vector<80x128xbf16>
      %c2_22 = arith.constant 2 : index
      %c0_23 = arith.constant 0 : index
      %c0_24 = arith.constant 0 : index
      %26 = vector.load %arg2[%c2_22, %c0_23, %c0_24] : memref<27x128x128xbf16, #tpu.memory_space<vmem>>, vector<1x128x128xbf16>
      %27 = vector.shape_cast %26 : vector<1x128x128xbf16> to vector<128x128xbf16>
      %cst_25 = arith.constant dense<0.000000e+00> : vector<80x128xf32>
      %28 = tpu.matmul %25, %27, %cst_25 {dimension_numbers = #tpu.dot_dimension_numbers<[1], [0], [0], [1], [0, 0, 1, 1], [], []>} : vector<80x128xbf16>, vector<128x128xbf16>, vector<80x128xf32> -> vector<80x128xf32>
      %29 = arith.addf %21, %28 : vector<80x128xf32>
      %c0_i32_26 = arith.constant 0 : i32
      %30 = arith.addi %arg7, %c0_i32_26 : i32
      %c0_27 = arith.constant 0 : index
      %31 = arith.index_cast %30 : i32 to index
      %c10 = arith.constant 10 : index
      %c0_28 = arith.constant 0 : index
      %32 = vector.load %arg1[%c0_27, %31, %c10, %c0_28] : memref<1x10x110x128xbf16, #tpu.memory_space<vmem>>, vector<1x1x80x128xbf16>
      %33 = vector.shape_cast %32 : vector<1x1x80x128xbf16> to vector<80x128xbf16>
      %c3 = arith.constant 3 : index
      %c0_29 = arith.constant 0 : index
      %c0_30 = arith.constant 0 : index
      %34 = vector.load %arg2[%c3, %c0_29, %c0_30] : memref<27x128x128xbf16, #tpu.memory_space<vmem>>, vector<1x128x128xbf16>
      %35 = vector.shape_cast %34 : vector<1x128x128xbf16> to vector<128x128xbf16>
      %cst_31 = arith.constant dense<0.000000e+00> : vector<80x128xf32>
      %36 = tpu.matmul %33, %35, %cst_31 {dimension_numbers = #tpu.dot_dimension_numbers<[1], [0], [0], [1], [0, 0, 1, 1], [], []>} : vector<80x128xbf16>, vector<128x128xbf16>, vector<80x128xf32> -> vector<80x128xf32>
      %37 = arith.addf %29, %36 : vector<80x128xf32>
      %c0_i32_32 = arith.constant 0 : i32
      %38 = arith.addi %arg7, %c0_i32_32 : i32
      %c0_33 = arith.constant 0 : index
      %39 = arith.index_cast %38 : i32 to index
      %c11 = arith.constant 11 : index
      %c0_34 = arith.constant 0 : index
      %40 = vector.load %arg1[%c0_33, %39, %c11, %c0_34] : memref<1x10x110x128xbf16, #tpu.memory_space<vmem>>, vector<1x1x80x128xbf16>
      %41 = vector.shape_cast %40 : vector<1x1x80x128xbf16> to vector<80x128xbf16>
      %c4 = arith.constant 4 : index
      %c0_35 = arith.constant 0 : index
      %c0_36 = arith.constant 0 : index
      %42 = vector.load %arg2[%c4, %c0_35, %c0_36] : memref<27x128x128xbf16, #tpu.memory_space<vmem>>, vector<1x128x128xbf16>
      %43 = vector.shape_cast %42 : vector<1x128x128xbf16> to vector<128x128xbf16>
      %cst_37 = arith.constant dense<0.000000e+00> : vector<80x128xf32>
      %44 = tpu.matmul %41, %43, %cst_37 {dimension_numbers = #tpu.dot_dimension_numbers<[1], [0], [0], [1], [0, 0, 1, 1], [], []>} : vector<80x128xbf16>, vector<128x128xbf16>, vector<80x128xf32> -> vector<80x128xf32>
      %45 = arith.addf %37, %44 : vector<80x128xf32>
      %c0_i32_38 = arith.constant 0 : i32
      %46 = arith.addi %arg7, %c0_i32_38 : i32
      %c0_39 = arith.constant 0 : index
      %47 = arith.index_cast %46 : i32 to index
      %c12 = arith.constant 12 : index
      %c0_40 = arith.constant 0 : index
      %48 = vector.load %arg1[%c0_39, %47, %c12, %c0_40] : memref<1x10x110x128xbf16, #tpu.memory_space<vmem>>, vector<1x1x80x128xbf16>
      %49 = vector.shape_cast %48 : vector<1x1x80x128xbf16> to vector<80x128xbf16>
      %c5 = arith.constant 5 : index
      %c0_41 = arith.constant 0 : index
      %c0_42 = arith.constant 0 : index
      %50 = vector.load %arg2[%c5, %c0_41, %c0_42] : memref<27x128x128xbf16, #tpu.memory_space<vmem>>, vector<1x128x128xbf16>
      %51 = vector.shape_cast %50 : vector<1x128x128xbf16> to vector<128x128xbf16>
      %cst_43 = arith.constant dense<0.000000e+00> : vector<80x128xf32>
      %52 = tpu.matmul %49, %51, %cst_43 {dimension_numbers = #tpu.dot_dimension_numbers<[1], [0], [0], [1], [0, 0, 1, 1], [], []>} : vector<80x128xbf16>, vector<128x128xbf16>, vector<80x128xf32> -> vector<80x128xf32>
      %53 = arith.addf %45, %52 : vector<80x128xf32>
      %c0_i32_44 = arith.constant 0 : i32
      %54 = arith.addi %arg7, %c0_i32_44 : i32
      %c0_45 = arith.constant 0 : index
      %55 = arith.index_cast %54 : i32 to index
      %c20 = arith.constant 20 : index
      %c0_46 = arith.constant 0 : index
      %56 = vector.load %arg1[%c0_45, %55, %c20, %c0_46] : memref<1x10x110x128xbf16, #tpu.memory_space<vmem>>, vector<1x1x80x128xbf16>
      %57 = vector.shape_cast %56 : vector<1x1x80x128xbf16> to vector<80x128xbf16>
      %c6 = arith.constant 6 : index
      %c0_47 = arith.constant 0 : index
      %c0_48 = arith.constant 0 : index
      %58 = vector.load %arg2[%c6, %c0_47, %c0_48] : memref<27x128x128xbf16, #tpu.memory_space<vmem>>, vector<1x128x128xbf16>
      %59 = vector.shape_cast %58 : vector<1x128x128xbf16> to vector<128x128xbf16>
      %cst_49 = arith.constant dense<0.000000e+00> : vector<80x128xf32>
      %60 = tpu.matmul %57, %59, %cst_49 {dimension_numbers = #tpu.dot_dimension_numbers<[1], [0], [0], [1], [0, 0, 1, 1], [], []>} : vector<80x128xbf16>, vector<128x128xbf16>, vector<80x128xf32> -> vector<80x128xf32>
      %61 = arith.addf %53, %60 : vector<80x128xf32>
      %c0_i32_50 = arith.constant 0 : i32
      %62 = arith.addi %arg7, %c0_i32_50 : i32
      %c0_51 = arith.constant 0 : index
      %63 = arith.index_cast %62 : i32 to index
      %c21 = arith.constant 21 : index
      %c0_52 = arith.constant 0 : index
      %64 = vector.load %arg1[%c0_51, %63, %c21, %c0_52] : memref<1x10x110x128xbf16, #tpu.memory_space<vmem>>, vector<1x1x80x128xbf16>
      %65 = vector.shape_cast %64 : vector<1x1x80x128xbf16> to vector<80x128xbf16>
      %c7 = arith.constant 7 : index
      %c0_53 = arith.constant 0 : index
      %c0_54 = arith.constant 0 : index
      %66 = vector.load %arg2[%c7, %c0_53, %c0_54] : memref<27x128x128xbf16, #tpu.memory_space<vmem>>, vector<1x128x128xbf16>
      %67 = vector.shape_cast %66 : vector<1x128x128xbf16> to vector<128x128xbf16>
      %cst_55 = arith.constant dense<0.000000e+00> : vector<80x128xf32>
      %68 = tpu.matmul %65, %67, %cst_55 {dimension_numbers = #tpu.dot_dimension_numbers<[1], [0], [0], [1], [0, 0, 1, 1], [], []>} : vector<80x128xbf16>, vector<128x128xbf16>, vector<80x128xf32> -> vector<80x128xf32>
      %69 = arith.addf %61, %68 : vector<80x128xf32>
      %c0_i32_56 = arith.constant 0 : i32
      %70 = arith.addi %arg7, %c0_i32_56 : i32
      %c0_57 = arith.constant 0 : index
      %71 = arith.index_cast %70 : i32 to index
      %c22 = arith.constant 22 : index
      %c0_58 = arith.constant 0 : index
      %72 = vector.load %arg1[%c0_57, %71, %c22, %c0_58] : memref<1x10x110x128xbf16, #tpu.memory_space<vmem>>, vector<1x1x80x128xbf16>
      %73 = vector.shape_cast %72 : vector<1x1x80x128xbf16> to vector<80x128xbf16>
      %c8 = arith.constant 8 : index
      %c0_59 = arith.constant 0 : index
      %c0_60 = arith.constant 0 : index
      %74 = vector.load %arg2[%c8, %c0_59, %c0_60] : memref<27x128x128xbf16, #tpu.memory_space<vmem>>, vector<1x128x128xbf16>
      %75 = vector.shape_cast %74 : vector<1x128x128xbf16> to vector<128x128xbf16>
      %cst_61 = arith.constant dense<0.000000e+00> : vector<80x128xf32>
      %76 = tpu.matmul %73, %75, %cst_61 {dimension_numbers = #tpu.dot_dimension_numbers<[1], [0], [0], [1], [0, 0, 1, 1], [], []>} : vector<80x128xbf16>, vector<128x128xbf16>, vector<80x128xf32> -> vector<80x128xf32>
      %77 = arith.addf %69, %76 : vector<80x128xf32>
      %c1_i32_62 = arith.constant 1 : i32
      %78 = arith.addi %arg7, %c1_i32_62 : i32
      %c0_63 = arith.constant 0 : index
      %79 = arith.index_cast %78 : i32 to index
      %c0_64 = arith.constant 0 : index
      %c0_65 = arith.constant 0 : index
      %80 = vector.load %arg1[%c0_63, %79, %c0_64, %c0_65] : memref<1x10x110x128xbf16, #tpu.memory_space<vmem>>, vector<1x1x80x128xbf16>
      %81 = vector.shape_cast %80 : vector<1x1x80x128xbf16> to vector<80x128xbf16>
      %c9 = arith.constant 9 : index
      %c0_66 = arith.constant 0 : index
      %c0_67 = arith.constant 0 : index
      %82 = vector.load %arg2[%c9, %c0_66, %c0_67] : memref<27x128x128xbf16, #tpu.memory_space<vmem>>, vector<1x128x128xbf16>
      %83 = vector.shape_cast %82 : vector<1x128x128xbf16> to vector<128x128xbf16>
      %cst_68 = arith.constant dense<0.000000e+00> : vector<80x128xf32>
      %84 = tpu.matmul %81, %83, %cst_68 {dimension_numbers = #tpu.dot_dimension_numbers<[1], [0], [0], [1], [0, 0, 1, 1], [], []>} : vector<80x128xbf16>, vector<128x128xbf16>, vector<80x128xf32> -> vector<80x128xf32>
      %85 = arith.addf %77, %84 : vector<80x128xf32>
      %c1_i32_69 = arith.constant 1 : i32
      %86 = arith.addi %arg7, %c1_i32_69 : i32
      %c0_70 = arith.constant 0 : index
      %87 = arith.index_cast %86 : i32 to index
      %c1_71 = arith.constant 1 : index
      %c0_72 = arith.constant 0 : index
      %88 = vector.load %arg1[%c0_70, %87, %c1_71, %c0_72] : memref<1x10x110x128xbf16, #tpu.memory_space<vmem>>, vector<1x1x80x128xbf16>
      %89 = vector.shape_cast %88 : vector<1x1x80x128xbf16> to vector<80x128xbf16>
      %c10_73 = arith.constant 10 : index
      %c0_74 = arith.constant 0 : index
      %c0_75 = arith.constant 0 : index
      %90 = vector.load %arg2[%c10_73, %c0_74, %c0_75] : memref<27x128x128xbf16, #tpu.memory_space<vmem>>, vector<1x128x128xbf16>
      %91 = vector.shape_cast %90 : vector<1x128x128xbf16> to vector<128x128xbf16>
      %cst_76 = arith.constant dense<0.000000e+00> : vector<80x128xf32>
      %92 = tpu.matmul %89, %91, %cst_76 {dimension_numbers = #tpu.dot_dimension_numbers<[1], [0], [0], [1], [0, 0, 1, 1], [], []>} : vector<80x128xbf16>, vector<128x128xbf16>, vector<80x128xf32> -> vector<80x128xf32>
      %93 = arith.addf %85, %92 : vector<80x128xf32>
      %c1_i32_77 = arith.constant 1 : i32
      %94 = arith.addi %arg7, %c1_i32_77 : i32
      %c0_78 = arith.constant 0 : index
      %95 = arith.index_cast %94 : i32 to index
      %c2_79 = arith.constant 2 : index
      %c0_80 = arith.constant 0 : index
      %96 = vector.load %arg1[%c0_78, %95, %c2_79, %c0_80] : memref<1x10x110x128xbf16, #tpu.memory_space<vmem>>, vector<1x1x80x128xbf16>
      %97 = vector.shape_cast %96 : vector<1x1x80x128xbf16> to vector<80x128xbf16>
      %c11_81 = arith.constant 11 : index
      %c0_82 = arith.constant 0 : index
      %c0_83 = arith.constant 0 : index
      %98 = vector.load %arg2[%c11_81, %c0_82, %c0_83] : memref<27x128x128xbf16, #tpu.memory_space<vmem>>, vector<1x128x128xbf16>
      %99 = vector.shape_cast %98 : vector<1x128x128xbf16> to vector<128x128xbf16>
      %cst_84 = arith.constant dense<0.000000e+00> : vector<80x128xf32>
      %100 = tpu.matmul %97, %99, %cst_84 {dimension_numbers = #tpu.dot_dimension_numbers<[1], [0], [0], [1], [0, 0, 1, 1], [], []>} : vector<80x128xbf16>, vector<128x128xbf16>, vector<80x128xf32> -> vector<80x128xf32>
      %101 = arith.addf %93, %100 : vector<80x128xf32>
      %c1_i32_85 = arith.constant 1 : i32
      %102 = arith.addi %arg7, %c1_i32_85 : i32
      %c0_86 = arith.constant 0 : index
      %103 = arith.index_cast %102 : i32 to index
      %c10_87 = arith.constant 10 : index
      %c0_88 = arith.constant 0 : index
      %104 = vector.load %arg1[%c0_86, %103, %c10_87, %c0_88] : memref<1x10x110x128xbf16, #tpu.memory_space<vmem>>, vector<1x1x80x128xbf16>
      %105 = vector.shape_cast %104 : vector<1x1x80x128xbf16> to vector<80x128xbf16>
      %c12_89 = arith.constant 12 : index
      %c0_90 = arith.constant 0 : index
      %c0_91 = arith.constant 0 : index
      %106 = vector.load %arg2[%c12_89, %c0_90, %c0_91] : memref<27x128x128xbf16, #tpu.memory_space<vmem>>, vector<1x128x128xbf16>
      %107 = vector.shape_cast %106 : vector<1x128x128xbf16> to vector<128x128xbf16>
      %cst_92 = arith.constant dense<0.000000e+00> : vector<80x128xf32>
      %108 = tpu.matmul %105, %107, %cst_92 {dimension_numbers = #tpu.dot_dimension_numbers<[1], [0], [0], [1], [0, 0, 1, 1], [], []>} : vector<80x128xbf16>, vector<128x128xbf16>, vector<80x128xf32> -> vector<80x128xf32>
      %109 = arith.addf %101, %108 : vector<80x128xf32>
      %c1_i32_93 = arith.constant 1 : i32
      %110 = arith.addi %arg7, %c1_i32_93 : i32
      %c0_94 = arith.constant 0 : index
      %111 = arith.index_cast %110 : i32 to index
      %c11_95 = arith.constant 11 : index
      %c0_96 = arith.constant 0 : index
      %112 = vector.load %arg1[%c0_94, %111, %c11_95, %c0_96] : memref<1x10x110x128xbf16, #tpu.memory_space<vmem>>, vector<1x1x80x128xbf16>
      %113 = vector.shape_cast %112 : vector<1x1x80x128xbf16> to vector<80x128xbf16>
      %c13 = arith.constant 13 : index
      %c0_97 = arith.constant 0 : index
      %c0_98 = arith.constant 0 : index
      %114 = vector.load %arg2[%c13, %c0_97, %c0_98] : memref<27x128x128xbf16, #tpu.memory_space<vmem>>, vector<1x128x128xbf16>
      %115 = vector.shape_cast %114 : vector<1x128x128xbf16> to vector<128x128xbf16>
      %cst_99 = arith.constant dense<0.000000e+00> : vector<80x128xf32>
      %116 = tpu.matmul %113, %115, %cst_99 {dimension_numbers = #tpu.dot_dimension_numbers<[1], [0], [0], [1], [0, 0, 1, 1], [], []>} : vector<80x128xbf16>, vector<128x128xbf16>, vector<80x128xf32> -> vector<80x128xf32>
      %117 = arith.addf %109, %116 : vector<80x128xf32>
      %c1_i32_100 = arith.constant 1 : i32
      %118 = arith.addi %arg7, %c1_i32_100 : i32
      %c0_101 = arith.constant 0 : index
      %119 = arith.index_cast %118 : i32 to index
      %c12_102 = arith.constant 12 : index
      %c0_103 = arith.constant 0 : index
      %120 = vector.load %arg1[%c0_101, %119, %c12_102, %c0_103] : memref<1x10x110x128xbf16, #tpu.memory_space<vmem>>, vector<1x1x80x128xbf16>
      %121 = vector.shape_cast %120 : vector<1x1x80x128xbf16> to vector<80x128xbf16>
      %c14 = arith.constant 14 : index
      %c0_104 = arith.constant 0 : index
      %c0_105 = arith.constant 0 : index
      %122 = vector.load %arg2[%c14, %c0_104, %c0_105] : memref<27x128x128xbf16, #tpu.memory_space<vmem>>, vector<1x128x128xbf16>
      %123 = vector.shape_cast %122 : vector<1x128x128xbf16> to vector<128x128xbf16>
      %cst_106 = arith.constant dense<0.000000e+00> : vector<80x128xf32>
      %124 = tpu.matmul %121, %123, %cst_106 {dimension_numbers = #tpu.dot_dimension_numbers<[1], [0], [0], [1], [0, 0, 1, 1], [], []>} : vector<80x128xbf16>, vector<128x128xbf16>, vector<80x128xf32> -> vector<80x128xf32>
      %125 = arith.addf %117, %124 : vector<80x128xf32>
      %c1_i32_107 = arith.constant 1 : i32
      %126 = arith.addi %arg7, %c1_i32_107 : i32
      %c0_108 = arith.constant 0 : index
      %127 = arith.index_cast %126 : i32 to index
      %c20_109 = arith.constant 20 : index
      %c0_110 = arith.constant 0 : index
      %128 = vector.load %arg1[%c0_108, %127, %c20_109, %c0_110] : memref<1x10x110x128xbf16, #tpu.memory_space<vmem>>, vector<1x1x80x128xbf16>
      %129 = vector.shape_cast %128 : vector<1x1x80x128xbf16> to vector<80x128xbf16>
      %c15 = arith.constant 15 : index
      %c0_111 = arith.constant 0 : index
      %c0_112 = arith.constant 0 : index
      %130 = vector.load %arg2[%c15, %c0_111, %c0_112] : memref<27x128x128xbf16, #tpu.memory_space<vmem>>, vector<1x128x128xbf16>
      %131 = vector.shape_cast %130 : vector<1x128x128xbf16> to vector<128x128xbf16>
      %cst_113 = arith.constant dense<0.000000e+00> : vector<80x128xf32>
      %132 = tpu.matmul %129, %131, %cst_113 {dimension_numbers = #tpu.dot_dimension_numbers<[1], [0], [0], [1], [0, 0, 1, 1], [], []>} : vector<80x128xbf16>, vector<128x128xbf16>, vector<80x128xf32> -> vector<80x128xf32>
      %133 = arith.addf %125, %132 : vector<80x128xf32>
      %c1_i32_114 = arith.constant 1 : i32
      %134 = arith.addi %arg7, %c1_i32_114 : i32
      %c0_115 = arith.constant 0 : index
      %135 = arith.index_cast %134 : i32 to index
      %c21_116 = arith.constant 21 : index
      %c0_117 = arith.constant 0 : index
      %136 = vector.load %arg1[%c0_115, %135, %c21_116, %c0_117] : memref<1x10x110x128xbf16, #tpu.memory_space<vmem>>, vector<1x1x80x128xbf16>
      %137 = vector.shape_cast %136 : vector<1x1x80x128xbf16> to vector<80x128xbf16>
      %c16 = arith.constant 16 : index
      %c0_118 = arith.constant 0 : index
      %c0_119 = arith.constant 0 : index
      %138 = vector.load %arg2[%c16, %c0_118, %c0_119] : memref<27x128x128xbf16, #tpu.memory_space<vmem>>, vector<1x128x128xbf16>
      %139 = vector.shape_cast %138 : vector<1x128x128xbf16> to vector<128x128xbf16>
      %cst_120 = arith.constant dense<0.000000e+00> : vector<80x128xf32>
      %140 = tpu.matmul %137, %139, %cst_120 {dimension_numbers = #tpu.dot_dimension_numbers<[1], [0], [0], [1], [0, 0, 1, 1], [], []>} : vector<80x128xbf16>, vector<128x128xbf16>, vector<80x128xf32> -> vector<80x128xf32>
      %141 = arith.addf %133, %140 : vector<80x128xf32>
      %c1_i32_121 = arith.constant 1 : i32
      %142 = arith.addi %arg7, %c1_i32_121 : i32
      %c0_122 = arith.constant 0 : index
      %143 = arith.index_cast %142 : i32 to index
      %c22_123 = arith.constant 22 : index
      %c0_124 = arith.constant 0 : index
      %144 = vector.load %arg1[%c0_122, %143, %c22_123, %c0_124] : memref<1x10x110x128xbf16, #tpu.memory_space<vmem>>, vector<1x1x80x128xbf16>
      %145 = vector.shape_cast %144 : vector<1x1x80x128xbf16> to vector<80x128xbf16>
      %c17 = arith.constant 17 : index
      %c0_125 = arith.constant 0 : index
      %c0_126 = arith.constant 0 : index
      %146 = vector.load %arg2[%c17, %c0_125, %c0_126] : memref<27x128x128xbf16, #tpu.memory_space<vmem>>, vector<1x128x128xbf16>
      %147 = vector.shape_cast %146 : vector<1x128x128xbf16> to vector<128x128xbf16>
      %cst_127 = arith.constant dense<0.000000e+00> : vector<80x128xf32>
      %148 = tpu.matmul %145, %147, %cst_127 {dimension_numbers = #tpu.dot_dimension_numbers<[1], [0], [0], [1], [0, 0, 1, 1], [], []>} : vector<80x128xbf16>, vector<128x128xbf16>, vector<80x128xf32> -> vector<80x128xf32>
      %149 = arith.addf %141, %148 : vector<80x128xf32>
      %c2_i32 = arith.constant 2 : i32
      %150 = arith.addi %arg7, %c2_i32 : i32
      %c0_128 = arith.constant 0 : index
      %151 = arith.index_cast %150 : i32 to index
      %c0_129 = arith.constant 0 : index
      %c0_130 = arith.constant 0 : index
      %152 = vector.load %arg1[%c0_128, %151, %c0_129, %c0_130] : memref<1x10x110x128xbf16, #tpu.memory_space<vmem>>, vector<1x1x80x128xbf16>
      %153 = vector.shape_cast %152 : vector<1x1x80x128xbf16> to vector<80x128xbf16>
      %c18 = arith.constant 18 : index
      %c0_131 = arith.constant 0 : index
      %c0_132 = arith.constant 0 : index
      %154 = vector.load %arg2[%c18, %c0_131, %c0_132] : memref<27x128x128xbf16, #tpu.memory_space<vmem>>, vector<1x128x128xbf16>
      %155 = vector.shape_cast %154 : vector<1x128x128xbf16> to vector<128x128xbf16>
      %cst_133 = arith.constant dense<0.000000e+00> : vector<80x128xf32>
      %156 = tpu.matmul %153, %155, %cst_133 {dimension_numbers = #tpu.dot_dimension_numbers<[1], [0], [0], [1], [0, 0, 1, 1], [], []>} : vector<80x128xbf16>, vector<128x128xbf16>, vector<80x128xf32> -> vector<80x128xf32>
      %157 = arith.addf %149, %156 : vector<80x128xf32>
      %c2_i32_134 = arith.constant 2 : i32
      %158 = arith.addi %arg7, %c2_i32_134 : i32
      %c0_135 = arith.constant 0 : index
      %159 = arith.index_cast %158 : i32 to index
      %c1_136 = arith.constant 1 : index
      %c0_137 = arith.constant 0 : index
      %160 = vector.load %arg1[%c0_135, %159, %c1_136, %c0_137] : memref<1x10x110x128xbf16, #tpu.memory_space<vmem>>, vector<1x1x80x128xbf16>
      %161 = vector.shape_cast %160 : vector<1x1x80x128xbf16> to vector<80x128xbf16>
      %c19 = arith.constant 19 : index
      %c0_138 = arith.constant 0 : index
      %c0_139 = arith.constant 0 : index
      %162 = vector.load %arg2[%c19, %c0_138, %c0_139] : memref<27x128x128xbf16, #tpu.memory_space<vmem>>, vector<1x128x128xbf16>
      %163 = vector.shape_cast %162 : vector<1x128x128xbf16> to vector<128x128xbf16>
      %cst_140 = arith.constant dense<0.000000e+00> : vector<80x128xf32>
      %164 = tpu.matmul %161, %163, %cst_140 {dimension_numbers = #tpu.dot_dimension_numbers<[1], [0], [0], [1], [0, 0, 1, 1], [], []>} : vector<80x128xbf16>, vector<128x128xbf16>, vector<80x128xf32> -> vector<80x128xf32>
      %165 = arith.addf %157, %164 : vector<80x128xf32>
      %c2_i32_141 = arith.constant 2 : i32
      %166 = arith.addi %arg7, %c2_i32_141 : i32
      %c0_142 = arith.constant 0 : index
      %167 = arith.index_cast %166 : i32 to index
      %c2_143 = arith.constant 2 : index
      %c0_144 = arith.constant 0 : index
      %168 = vector.load %arg1[%c0_142, %167, %c2_143, %c0_144] : memref<1x10x110x128xbf16, #tpu.memory_space<vmem>>, vector<1x1x80x128xbf16>
      %169 = vector.shape_cast %168 : vector<1x1x80x128xbf16> to vector<80x128xbf16>
      %c20_145 = arith.constant 20 : index
      %c0_146 = arith.constant 0 : index
      %c0_147 = arith.constant 0 : index
      %170 = vector.load %arg2[%c20_145, %c0_146, %c0_147] : memref<27x128x128xbf16, #tpu.memory_space<vmem>>, vector<1x128x128xbf16>
      %171 = vector.shape_cast %170 : vector<1x128x128xbf16> to vector<128x128xbf16>
      %cst_148 = arith.constant dense<0.000000e+00> : vector<80x128xf32>
      %172 = tpu.matmul %169, %171, %cst_148 {dimension_numbers = #tpu.dot_dimension_numbers<[1], [0], [0], [1], [0, 0, 1, 1], [], []>} : vector<80x128xbf16>, vector<128x128xbf16>, vector<80x128xf32> -> vector<80x128xf32>
      %173 = arith.addf %165, %172 : vector<80x128xf32>
      %c2_i32_149 = arith.constant 2 : i32
      %174 = arith.addi %arg7, %c2_i32_149 : i32
      %c0_150 = arith.constant 0 : index
      %175 = arith.index_cast %174 : i32 to index
      %c10_151 = arith.constant 10 : index
      %c0_152 = arith.constant 0 : index
      %176 = vector.load %arg1[%c0_150, %175, %c10_151, %c0_152] : memref<1x10x110x128xbf16, #tpu.memory_space<vmem>>, vector<1x1x80x128xbf16>
      %177 = vector.shape_cast %176 : vector<1x1x80x128xbf16> to vector<80x128xbf16>
      %c21_153 = arith.constant 21 : index
      %c0_154 = arith.constant 0 : index
      %c0_155 = arith.constant 0 : index
      %178 = vector.load %arg2[%c21_153, %c0_154, %c0_155] : memref<27x128x128xbf16, #tpu.memory_space<vmem>>, vector<1x128x128xbf16>
      %179 = vector.shape_cast %178 : vector<1x128x128xbf16> to vector<128x128xbf16>
      %cst_156 = arith.constant dense<0.000000e+00> : vector<80x128xf32>
      %180 = tpu.matmul %177, %179, %cst_156 {dimension_numbers = #tpu.dot_dimension_numbers<[1], [0], [0], [1], [0, 0, 1, 1], [], []>} : vector<80x128xbf16>, vector<128x128xbf16>, vector<80x128xf32> -> vector<80x128xf32>
      %181 = arith.addf %173, %180 : vector<80x128xf32>
      %c2_i32_157 = arith.constant 2 : i32
      %182 = arith.addi %arg7, %c2_i32_157 : i32
      %c0_158 = arith.constant 0 : index
      %183 = arith.index_cast %182 : i32 to index
      %c11_159 = arith.constant 11 : index
      %c0_160 = arith.constant 0 : index
      %184 = vector.load %arg1[%c0_158, %183, %c11_159, %c0_160] : memref<1x10x110x128xbf16, #tpu.memory_space<vmem>>, vector<1x1x80x128xbf16>
      %185 = vector.shape_cast %184 : vector<1x1x80x128xbf16> to vector<80x128xbf16>
      %c22_161 = arith.constant 22 : index
      %c0_162 = arith.constant 0 : index
      %c0_163 = arith.constant 0 : index
      %186 = vector.load %arg2[%c22_161, %c0_162, %c0_163] : memref<27x128x128xbf16, #tpu.memory_space<vmem>>, vector<1x128x128xbf16>
      %187 = vector.shape_cast %186 : vector<1x128x128xbf16> to vector<128x128xbf16>
      %cst_164 = arith.constant dense<0.000000e+00> : vector<80x128xf32>
      %188 = tpu.matmul %185, %187, %cst_164 {dimension_numbers = #tpu.dot_dimension_numbers<[1], [0], [0], [1], [0, 0, 1, 1], [], []>} : vector<80x128xbf16>, vector<128x128xbf16>, vector<80x128xf32> -> vector<80x128xf32>
      %189 = arith.addf %181, %188 : vector<80x128xf32>
      %c2_i32_165 = arith.constant 2 : i32
      %190 = arith.addi %arg7, %c2_i32_165 : i32
      %c0_166 = arith.constant 0 : index
      %191 = arith.index_cast %190 : i32 to index
      %c12_167 = arith.constant 12 : index
      %c0_168 = arith.constant 0 : index
      %192 = vector.load %arg1[%c0_166, %191, %c12_167, %c0_168] : memref<1x10x110x128xbf16, #tpu.memory_space<vmem>>, vector<1x1x80x128xbf16>
      %193 = vector.shape_cast %192 : vector<1x1x80x128xbf16> to vector<80x128xbf16>
      %c23 = arith.constant 23 : index
      %c0_169 = arith.constant 0 : index
      %c0_170 = arith.constant 0 : index
      %194 = vector.load %arg2[%c23, %c0_169, %c0_170] : memref<27x128x128xbf16, #tpu.memory_space<vmem>>, vector<1x128x128xbf16>
      %195 = vector.shape_cast %194 : vector<1x128x128xbf16> to vector<128x128xbf16>
      %cst_171 = arith.constant dense<0.000000e+00> : vector<80x128xf32>
      %196 = tpu.matmul %193, %195, %cst_171 {dimension_numbers = #tpu.dot_dimension_numbers<[1], [0], [0], [1], [0, 0, 1, 1], [], []>} : vector<80x128xbf16>, vector<128x128xbf16>, vector<80x128xf32> -> vector<80x128xf32>
      %197 = arith.addf %189, %196 : vector<80x128xf32>
      %c2_i32_172 = arith.constant 2 : i32
      %198 = arith.addi %arg7, %c2_i32_172 : i32
      %c0_173 = arith.constant 0 : index
      %199 = arith.index_cast %198 : i32 to index
      %c20_174 = arith.constant 20 : index
      %c0_175 = arith.constant 0 : index
      %200 = vector.load %arg1[%c0_173, %199, %c20_174, %c0_175] : memref<1x10x110x128xbf16, #tpu.memory_space<vmem>>, vector<1x1x80x128xbf16>
      %201 = vector.shape_cast %200 : vector<1x1x80x128xbf16> to vector<80x128xbf16>
      %c24 = arith.constant 24 : index
      %c0_176 = arith.constant 0 : index
      %c0_177 = arith.constant 0 : index
      %202 = vector.load %arg2[%c24, %c0_176, %c0_177] : memref<27x128x128xbf16, #tpu.memory_space<vmem>>, vector<1x128x128xbf16>
      %203 = vector.shape_cast %202 : vector<1x128x128xbf16> to vector<128x128xbf16>
      %cst_178 = arith.constant dense<0.000000e+00> : vector<80x128xf32>
      %204 = tpu.matmul %201, %203, %cst_178 {dimension_numbers = #tpu.dot_dimension_numbers<[1], [0], [0], [1], [0, 0, 1, 1], [], []>} : vector<80x128xbf16>, vector<128x128xbf16>, vector<80x128xf32> -> vector<80x128xf32>
      %205 = arith.addf %197, %204 : vector<80x128xf32>
      %c2_i32_179 = arith.constant 2 : i32
      %206 = arith.addi %arg7, %c2_i32_179 : i32
      %c0_180 = arith.constant 0 : index
      %207 = arith.index_cast %206 : i32 to index
      %c21_181 = arith.constant 21 : index
      %c0_182 = arith.constant 0 : index
      %208 = vector.load %arg1[%c0_180, %207, %c21_181, %c0_182] : memref<1x10x110x128xbf16, #tpu.memory_space<vmem>>, vector<1x1x80x128xbf16>
      %209 = vector.shape_cast %208 : vector<1x1x80x128xbf16> to vector<80x128xbf16>
      %c25 = arith.constant 25 : index
      %c0_183 = arith.constant 0 : index
      %c0_184 = arith.constant 0 : index
      %210 = vector.load %arg2[%c25, %c0_183, %c0_184] : memref<27x128x128xbf16, #tpu.memory_space<vmem>>, vector<1x128x128xbf16>
      %211 = vector.shape_cast %210 : vector<1x128x128xbf16> to vector<128x128xbf16>
      %cst_185 = arith.constant dense<0.000000e+00> : vector<80x128xf32>
      %212 = tpu.matmul %209, %211, %cst_185 {dimension_numbers = #tpu.dot_dimension_numbers<[1], [0], [0], [1], [0, 0, 1, 1], [], []>} : vector<80x128xbf16>, vector<128x128xbf16>, vector<80x128xf32> -> vector<80x128xf32>
      %213 = arith.addf %205, %212 : vector<80x128xf32>
      %c2_i32_186 = arith.constant 2 : i32
      %214 = arith.addi %arg7, %c2_i32_186 : i32
      %c0_187 = arith.constant 0 : index
      %215 = arith.index_cast %214 : i32 to index
      %c22_188 = arith.constant 22 : index
      %c0_189 = arith.constant 0 : index
      %216 = vector.load %arg1[%c0_187, %215, %c22_188, %c0_189] : memref<1x10x110x128xbf16, #tpu.memory_space<vmem>>, vector<1x1x80x128xbf16>
      %217 = vector.shape_cast %216 : vector<1x1x80x128xbf16> to vector<80x128xbf16>
      %c26 = arith.constant 26 : index
      %c0_190 = arith.constant 0 : index
      %c0_191 = arith.constant 0 : index
      %218 = vector.load %arg2[%c26, %c0_190, %c0_191] : memref<27x128x128xbf16, #tpu.memory_space<vmem>>, vector<1x128x128xbf16>
      %219 = vector.shape_cast %218 : vector<1x128x128xbf16> to vector<128x128xbf16>
      %cst_192 = arith.constant dense<0.000000e+00> : vector<80x128xf32>
      %220 = tpu.matmul %217, %219, %cst_192 {dimension_numbers = #tpu.dot_dimension_numbers<[1], [0], [0], [1], [0, 0, 1, 1], [], []>} : vector<80x128xbf16>, vector<128x128xbf16>, vector<80x128xf32> -> vector<80x128xf32>
      %221 = arith.addf %213, %220 : vector<80x128xf32>
      %222 = vector.broadcast %3 : vector<80x1xf32> to vector<80x128xf32>
      %223 = arith.mulf %221, %222 : vector<80x128xf32>
      %c0_193 = arith.constant 0 : index
      %c0_194 = arith.constant 0 : index
      %224 = vector.load %arg5[%c0_193, %c0_194] : memref<1x128xf32, #tpu.memory_space<vmem>>, vector<1x128xf32>
      %cst_195 = arith.constant dense<0.000000e+00> : vector<128xf32>
      %225 = vector.multi_reduction <add>, %223, %cst_195 [0] : vector<80x128xf32> to vector<128xf32>
      %226 = vector.shape_cast %225 : vector<128xf32> to vector<1x128xf32>
      %227 = arith.addf %224, %226 : vector<1x128xf32>
      %c0_196 = arith.constant 0 : index
      %c0_197 = arith.constant 0 : index
      %228 = vector.load %arg5[%c0_196, %c0_197] : memref<1x128xf32, #tpu.memory_space<vmem>>, vector<1x128xf32>
      tpu.vector_store %arg5[%c0_196, %c0_197], %227 {strides = array<i32>} : memref<1x128xf32, #tpu.memory_space<vmem>>, vector<1x128xf32>,
      %c0_198 = arith.constant 0 : index
      %c0_199 = arith.constant 0 : index
      %229 = vector.load %arg6[%c0_198, %c0_199] : memref<1x128xf32, #tpu.memory_space<vmem>>, vector<1x128xf32>
      %230 = arith.mulf %223, %223 : vector<80x128xf32>
      %cst_200 = arith.constant dense<0.000000e+00> : vector<128xf32>
      %231 = vector.multi_reduction <add>, %230, %cst_200 [0] : vector<80x128xf32> to vector<128xf32>
      %232 = vector.shape_cast %231 : vector<128xf32> to vector<1x128xf32>
      %233 = arith.addf %229, %232 : vector<1x128xf32>
      %c0_201 = arith.constant 0 : index
      %c0_202 = arith.constant 0 : index
      %234 = vector.load %arg6[%c0_201, %c0_202] : memref<1x128xf32, #tpu.memory_space<vmem>>, vector<1x128xf32>
      tpu.vector_store %arg6[%c0_201, %c0_202], %233 {strides = array<i32>} : memref<1x128xf32, #tpu.memory_space<vmem>>, vector<1x128xf32>,
      %c80_i32 = arith.constant 80 : i32
      %235 = arith.muli %arg7, %c80_i32 : i32
      %236 = tpu.assume_multiple %235, 16 : i32
      %237 = arith.truncf %221 : vector<80x128xf32> to vector<80x128xbf16>
      %238 = arith.index_cast %236 : i32 to index
      %c0_203 = arith.constant 0 : index
      %239 = vector.load %arg4[%238, %c0_203] : memref<640x128xbf16, #tpu.memory_space<vmem>>, vector<80x128xbf16>
      tpu.vector_store %arg4[%238, %c0_203], %237 {strides = array<i32>} : memref<640x128xbf16, #tpu.memory_space<vmem>>, vector<80x128xbf16>,
    }
    %c8_i32_3 = arith.constant 8 : i32
    return
  }
  func.func @transform_0(%arg0: i32) -> (i32, i32, i32, i32) {
    %c0_i32 = arith.constant 0 : i32
    %c0_i32_0 = arith.constant 0 : i32
    %c0_i32_1 = arith.constant 0 : i32
    %c0_i32_2 = arith.constant 0 : i32
    return %arg0, %c0_i32, %c0_i32_0, %c0_i32_1 : i32, i32, i32, i32
  }
  func.func @transform_1(%arg0: i32) -> (i32, i32, i32) {
    %c0_i32 = arith.constant 0 : i32
    %c0_i32_0 = arith.constant 0 : i32
    %c0_i32_1 = arith.constant 0 : i32
    %c0_i32_2 = arith.constant 0 : i32
    return %c0_i32, %c0_i32_0, %c0_i32_1 : i32, i32, i32
  }
  func.func @transform_2(%arg0: i32) -> (i32, i32) {
    %c0_i32 = arith.constant 0 : i32
    %c0_i32_0 = arith.constant 0 : i32
    %c0_i32_1 = arith.constant 0 : i32
    return %c0_i32, %c0_i32_0 : i32, i32
  }
  func.func @transform_3(%arg0: i32) -> (i32, i32) {
    %c0_i32 = arith.constant 0 : i32
    %c0_i32_0 = arith.constant 0 : i32
    return %arg0, %c0_i32 : i32, i32
  }
  func.func @transform_4(%arg0: i32) -> (i32, i32) {
    %c0_i32 = arith.constant 0 : i32
    %c0_i32_0 = arith.constant 0 : i32
    %c0_i32_1 = arith.constant 0 : i32
    return %c0_i32, %c0_i32_0 : i32, i32
  }
  func.func @transform_5(%arg0: i32) -> (i32, i32) {
    %c0_i32 = arith.constant 0 : i32
    %c0_i32_0 = arith.constant 0 : i32
    %c0_i32_1 = arith.constant 0 : i32
    return %c0_i32, %c0_i32_0 : i32, i32
  }
}

module attributes {stable_mosaic.version = 11 : i64} {
  func.func @_bn_lrelu_kernel(%arg0: i32, %arg1: memref<256x128xbf16, #tpu.memory_space<vmem>>, %arg2: memref<1x128xf32, #tpu.memory_space<vmem>>, %arg3: memref<1x128xf32, #tpu.memory_space<vmem>>, %arg4: memref<256x128xf32, #tpu.memory_space<vmem>>) attributes {dimension_semantics = [#tpu.dimension_semantics<parallel>], iteration_bounds = array<i64: 5>, scalar_prefetch = 0 : i64, scratch_operands = 0 : i64, tpu.core_type = #tpu.core_type<tc>, window_params = [{transform_indices = @transform_0, window_bounds = array<i64: 256, 128>}, {pipeline_mode = #tpu.pipeline_mode<synchronous>, transform_indices = @transform_1, window_bounds = array<i64: 1, 128>}, {pipeline_mode = #tpu.pipeline_mode<synchronous>, transform_indices = @transform_2, window_bounds = array<i64: 1, 128>}, {transform_indices = @transform_3, window_bounds = array<i64: 256, 128>}]} {
    %c0 = arith.constant 0 : index
    %c0_0 = arith.constant 0 : index
    %0 = vector.load %arg1[%c0, %c0_0] : memref<256x128xbf16, #tpu.memory_space<vmem>>, vector<256x128xbf16>
    %1 = arith.extf %0 : vector<256x128xbf16> to vector<256x128xf32>
    %c0_1 = arith.constant 0 : index
    %c0_2 = arith.constant 0 : index
    %2 = vector.load %arg2[%c0_1, %c0_2] : memref<1x128xf32, #tpu.memory_space<vmem>>, vector<1x128xf32>
    %3 = vector.broadcast %2 : vector<1x128xf32> to vector<256x128xf32>
    %4 = arith.mulf %1, %3 : vector<256x128xf32>
    %c0_3 = arith.constant 0 : index
    %c0_4 = arith.constant 0 : index
    %5 = vector.load %arg3[%c0_3, %c0_4] : memref<1x128xf32, #tpu.memory_space<vmem>>, vector<1x128xf32>
    %6 = vector.broadcast %5 : vector<1x128xf32> to vector<256x128xf32>
    %7 = arith.addf %4, %6 : vector<256x128xf32>
    %cst = arith.constant 0.000000e+00 : f32
    %8 = vector.broadcast %cst : f32 to vector<256x128xf32>
    %9 = arith.cmpf ogt, %7, %8 : vector<256x128xf32>
    %cst_5 = arith.constant 0.00999999977 : f32
    %10 = vector.broadcast %cst_5 : f32 to vector<256x128xf32>
    %11 = arith.mulf %10, %7 : vector<256x128xf32>
    %12 = arith.select %9, %7, %11 : vector<256x128xi1>, vector<256x128xf32>
    %c0_6 = arith.constant 0 : index
    %c0_7 = arith.constant 0 : index
    %13 = vector.load %arg4[%c0_6, %c0_7] : memref<256x128xf32, #tpu.memory_space<vmem>>, vector<256x128xf32>
    tpu.vector_store %arg4[%c0_6, %c0_7], %12 {strides = array<i32>} : memref<256x128xf32, #tpu.memory_space<vmem>>, vector<256x128xf32>,
    return
  }
  func.func @transform_0(%arg0: i32) -> (i32, i32) {
    %c0_i32 = arith.constant 0 : i32
    %c0_i32_0 = arith.constant 0 : i32
    return %arg0, %c0_i32 : i32, i32
  }
  func.func @transform_1(%arg0: i32) -> (i32, i32) {
    %c0_i32 = arith.constant 0 : i32
    %c0_i32_0 = arith.constant 0 : i32
    %c0_i32_1 = arith.constant 0 : i32
    return %c0_i32, %c0_i32_0 : i32, i32
  }
  func.func @transform_2(%arg0: i32) -> (i32, i32) {
    %c0_i32 = arith.constant 0 : i32
    %c0_i32_0 = arith.constant 0 : i32
    %c0_i32_1 = arith.constant 0 : i32
    return %c0_i32, %c0_i32_0 : i32, i32
  }
  func.func @transform_3(%arg0: i32) -> (i32, i32) {
    %c0_i32 = arith.constant 0 : i32
    %c0_i32_0 = arith.constant 0 : i32
    return %arg0, %c0_i32 : i32, i32
  }
}

</mosaic_0001>

<llo_original>
// kernel: basic_block3d_forward.5
$region0: #{basic_block3d_forward.5}
  #allocation0 [shape = 'u32[]', space=smem, size = 0x4, offset = 0x4, fixed_abs, tag = 'smem constant byte address 0x4 - core index']
  #allocation1 [shape = 'u32[144,128]{1,0:T(1,128)}', space=vmem, size = 0x12000, scoped, tag = 'internal scratch']
  %s0 = inlined_call_operand.vmem [shape: bf16[1280,128], index: 0, kind: input, shape index: {}]
  %s1 = inlined_call_operand.vmem [shape: f32[1,128], index: 1, kind: input, shape index: {}]
  %s2 = inlined_call_operand.vmem [shape: f32[1,128], index: 2, kind: input, shape index: {}]
  %s3 = inlined_call_operand.vmem [shape: f32[80,1], index: 3, kind: input, shape index: {}]
  %s4 = inlined_call_operand.vmem [shape: bf16[2,10,110,128], index: 4, kind: output, shape index: {}]
  %s5 = sld [smem:[#allocation0]]
  $region53: #{basic_block3d_forward.5} parent=0
    _
  %s7 = ssub.s32 1, %s5
  %s8 = scalar_select 0, %s7, %s5
  loop: start=0, step=1, limit=22
  $region2: #{basic_block3d_forward.5} parent=0 // loop_pre_header
    _
  $region3: #{basic_block3d_forward.5} parent=0 // loop_header
    %s10 = sphi 0, %s14
    %p11 = scmp.ge.s32.totalorder %s10, 22
    %s17 = sphi 0, %s29
    %s18 = sphi 0, %s25
    %s19 = sphi 0, %s17
    %s20 = sphi 0, %s18
    %s21 = sphi 0, %s19
    %s22 = sphi 0, %s20
    %s46 = sphi 0, %s48
    %s49 = sphi 0, %s46
    %s50 = sphi 0, %s49
    %s66 = sphi 0, %s50
    %s70 = sphi 0, %s70
    %s72 = sphi 0, %s70
    %s73 = sphi 0, %s72
    %s87 = sphi 0, %s73
    %s91 = sphi 0, %s91
    %s93 = sphi 0, %s91
    %s94 = sphi 0, %s93
    %s108 = sphi 0, %s94
    %s112 = sphi 0, %s112
    %s114 = sphi 0, %s112
    %s115 = sphi 0, %s114
    %s129 = sphi 0, %s115
    %s137 = sphi 0, %s139
    %s140 = sphi 0, %s137
    %s141 = sphi 0, %s140
    %s157 = sphi 0, %s141
  $region4: #{basic_block3d_forward.5} parent=0 // loop_header_branch
    %13 = sbr.rel (%p11) target = $region8
  $region5: #{basic_block3d_forward.5} parent=0 // loop_body
    %s15 = ssub.s32 %s10, 1
    %s16 = ssub.s32 %s10, 2
    %s23 = sadd.s32 1, %s18
    %p24 = scmp.ge.s32.totalorder %s23, 10
    %s25 = scalar_select %p24, 0, %s23
    %s26 = sadd.s32 1, %s17
    %s27 = scalar_select %p24, %s26, %s17
    %p28 = scmp.ge.s32.totalorder %s27, 2
    %s29 = scalar_select %p28, 0, %s27
    %s30 = smul.u32 %s17, 8
    %s31 = ssub.s32 %s18, 1
    %p32 = scmp.gt.s32.totalorder %s31, 0
    %s33 = scalar_select %p32, %s31, 0
    %p34 = scmp.lt.s32.totalorder %s33, 7
    %s35 = scalar_select %p34, %s33, 7
    %s36 = sadd.s32 %s30, %s35
    %s37 = smul.u32 %s29, 8
    %s38 = ssub.s32 %s25, 1
    %p39 = scmp.gt.s32.totalorder %s38, 0
    %s40 = scalar_select %p39, %s38, 0
    %p41 = scmp.lt.s32.totalorder %s40, 7
    %s42 = scalar_select %p41, %s40, 7
    %s43 = sadd.s32 %s37, %s42
    %s44 = ssub.s32 %s36, %s43
    %p45 = scmp.eq.s32.totalorder %s44, 0
    %s47 = sadd.s32 %s46, 1
    %s48 = scalar_select %p45, %s46, %s47
    %p51 = pneg %p45
    %p52 = scmp.eq.s32.totalorder %s10, 19
    %p53 = por %p51, %p52
    %p54 = scmp.ne.s32.totalorder %s46, %s49
    %p55 = scmp.eq.s32.totalorder %s10, 0
    %p56 = por %p54, %p55
    %p57 = scmp.ne.s32.totalorder %s46, %s49
    %p58 = scmp.eq.s32.totalorder %s15, 19
    %p59 = por %p57, %p58
    %p60 = scmp.ne.s32.totalorder %s49, %s50
    %p61 = scmp.eq.s32.totalorder %s15, 0
    %p62 = por %p60, %p61
    %p63 = scmp.ne.s32.totalorder %s49, %s50
    %p64 = scmp.eq.s32.totalorder %s16, 19
    %p65 = por %p63, %p64
    %p67 = scmp.ne.s32.totalorder %s50, %s66
    %p68 = scmp.eq.s32.totalorder %s16, 0
    %p69 = por %p67, %p68
    %s71 = sadd.s32 %s70, 1
    %p74 = scmp.eq.s32.totalorder %s10, 19
    %p75 = scmp.ne.s32.totalorder %s70, %s72
    %p76 = scmp.eq.s32.totalorder %s10, 0
    %p77 = por %p75, %p76
    %p78 = scmp.ne.s32.totalorder %s70, %s72
    %p79 = scmp.eq.s32.totalorder %s15, 19
    %p80 = por %p78, %p79
    %p81 = scmp.ne.s32.totalorder %s72, %s73
    %p82 = scmp.eq.s32.totalorder %s15, 0
    %p83 = por %p81, %p82
    %p84 = scmp.ne.s32.totalorder %s72, %s73
    %p85 = scmp.eq.s32.totalorder %s16, 19
    %p86 = por %p84, %p85
    %p88 = scmp.ne.s32.totalorder %s73, %s87
    %p89 = scmp.eq.s32.totalorder %s16, 0
    %p90 = por %p88, %p89
    %s92 = sadd.s32 %s91, 1
    %p95 = scmp.eq.s32.totalorder %s10, 19
    %p96 = scmp.ne.s32.totalorder %s91, %s93
    %p97 = scmp.eq.s32.totalorder %s10, 0
    %p98 = por %p96, %p97
    %p99 = scmp.ne.s32.totalorder %s91, %s93
    %p100 = scmp.eq.s32.totalorder %s15, 19
    %p101 = por %p99, %p100
    %p102 = scmp.ne.s32.totalorder %s93, %s94
    %p103 = scmp.eq.s32.totalorder %s15, 0
    %p104 = por %p102, %p103
    %p105 = scmp.ne.s32.totalorder %s93, %s94
    %p106 = scmp.eq.s32.totalorder %s16, 19
    %p107 = por %p105, %p106
    %p109 = scmp.ne.s32.totalorder %s94, %s108
    %p110 = scmp.eq.s32.totalorder %s16, 0
    %p111 = por %p109, %p110
    %s113 = sadd.s32 %s112, 1
    %p116 = scmp.eq.s32.totalorder %s10, 19
    %p117 = scmp.ne.s32.totalorder %s112, %s114
    %p118 = scmp.eq.s32.totalorder %s10, 0
    %p119 = por %p117, %p118
    %p120 = scmp.ne.s32.totalorder %s112, %s114
    %p121 = scmp.eq.s32.totalorder %s15, 19
    %p122 = por %p120, %p121
    %p123 = scmp.ne.s32.totalorder %s114, %s115
    %p124 = scmp.eq.s32.totalorder %s15, 0
    %p125 = por %p123, %p124
    %p126 = scmp.ne.s32.totalorder %s114, %s115
    %p127 = scmp.eq.s32.totalorder %s16, 19
    %p128 = por %p126, %p127
    %p130 = scmp.ne.s32.totalorder %s115, %s129
    %p131 = scmp.eq.s32.totalorder %s16, 0
    %p132 = por %p130, %p131
    %s133 = ssub.s32 %s17, %s29
    %s134 = ssub.s32 %s18, %s25
    %s135 = sor.u32 %s133, %s134
    %p136 = scmp.eq.s32.totalorder %s135, 0
    %s138 = sadd.s32 %s137, 1
    %s139 = scalar_select %p136, %s137, %s138
    %p142 = pneg %p136
    %p143 = scmp.eq.s32.totalorder %s10, 19
    %p144 = por %p142, %p143
    %p145 = scmp.ne.s32.totalorder %s137, %s140
    %p146 = scmp.eq.s32.totalorder %s10, 0
    %p147 = por %p145, %p146
    %p148 = scmp.ne.s32.totalorder %s137, %s140
    %p149 = scmp.eq.s32.totalorder %s15, 19
    %p150 = por %p148, %p149
    %p151 = scmp.ne.s32.totalorder %s140, %s141
    %p152 = scmp.eq.s32.totalorder %s15, 0
    %p153 = por %p151, %p152
    %p154 = scmp.ne.s32.totalorder %s140, %s141
    %p155 = scmp.eq.s32.totalorder %s16, 19
    %p156 = por %p154, %p155
    %p158 = scmp.ne.s32.totalorder %s141, %s157
    %p159 = scmp.eq.s32.totalorder %s16, 0
    %p160 = por %p158, %p159
    %p161 = scmp.le.s32.totalorder 1, %s10
    %p162 = scmp.lt.s32.totalorder %s10, 21
    %p163 = pnand %p161, %p162
    %p164 = pneg %p163
    // Predicated region
    $region9: #{basic_block3d_forward.5} parent=5 // pred_check
      _
    $region10: #{basic_block3d_forward.5} parent=5 // pred_check_branch
      %166 = sbr.rel (%p163) target = $region12
    $region11: #{basic_block3d_forward.5} parent=5 // pred_region
      %s167 = ssub.s32 %s10, 1
      // Predicated region
      $region13: #{basic_block3d_forward.5} parent=11 // pred_check
        %p168 = pneg %p83
      $region14: #{basic_block3d_forward.5} parent=11 // pred_check_branch
        %170 = sbr.rel (%p168) target = $region16
      $region15: #{basic_block3d_forward.5} parent=11 // pred_region
        _
      $region16: #{basic_block3d_forward.5} parent=11 // pred_fallthru
        _
      // Predicated region
      $region17: #{basic_block3d_forward.5} parent=11 // pred_check
        %p171 = pneg %p104
      $region18: #{basic_block3d_forward.5} parent=11 // pred_check_branch
        %173 = sbr.rel (%p171) target = $region20
      $region19: #{basic_block3d_forward.5} parent=11 // pred_region
        _
      $region20: #{basic_block3d_forward.5} parent=11 // pred_fallthru
        _
      // Predicated region
      $region21: #{basic_block3d_forward.5} parent=11 // pred_check
        %p174 = pneg %p125
      $region22: #{basic_block3d_forward.5} parent=11 // pred_check_branch
        %176 = sbr.rel (%p174) target = $region24
      $region23: #{basic_block3d_forward.5} parent=11 // pred_region
        _
      $region24: #{basic_block3d_forward.5} parent=11 // pred_fallthru
        _
    $region12: #{basic_block3d_forward.5} parent=5 // pred_fallthru
      _
    %p177 = scmp.lt.s32.totalorder %s10, 20
    // Predicated region
    $region25: #{basic_block3d_forward.5} parent=5 // pred_check
      %p178 = pneg %p177
    $region26: #{basic_block3d_forward.5} parent=5 // pred_check_branch
      %180 = sbr.rel (%p178) target = $region28
    $region27: #{basic_block3d_forward.5} parent=5 // pred_region
      // Predicated region
      $region29: #{basic_block3d_forward.5} parent=27 // pred_check
        %p181 = pneg %p56
      $region30: #{basic_block3d_forward.5} parent=27 // pred_check_branch
        %183 = sbr.rel (%p181) target = $region32
      $region31: #{basic_block3d_forward.5} parent=27 // pred_region
        %s184 = smul.u32 %s17, 8
        %s185 = ssub.s32 %s18, 1
        %p186 = scmp.gt.s32.totalorder %s185, 0
        %s187 = scalar_select %p186, %s185, 0
        %p188 = scmp.lt.s32.totalorder %s187, 7
        %s189 = scalar_select %p188, %s187, 7
        %s190 = sadd.s32 %s184, %s189
        %s191 = smul.u32 10, %s190
        %p192 = scmp.lt.s32.totalorder %s191, 159
        %s193 = scalar_select %p192, %s191, 159
        %s194 = smul.addr %s193, 4
        %s195 = scalar_lea.vmem %s0, %s194
        %s196 = smul.u32 %s17, 8
        %s197 = ssub.s32 %s18, 1
        %p198 = scmp.gt.s32.totalorder %s197, 0
        %s199 = scalar_select %p198, %s197, 0
        %p200 = scmp.lt.s32.totalorder %s199, 7
        %s201 = scalar_select %p200, %s199, 7
        %s202 = sadd.s32 %s196, %s201
        %s203 = smul.u32 10, %s202
      $region32: #{basic_block3d_forward.5} parent=27 // pred_fallthru
        _
    $region28: #{basic_block3d_forward.5} parent=5 // pred_fallthru
      _
    %p204 = scmp.le.s32.totalorder 1, %s10
    %p205 = scmp.lt.s32.totalorder %s10, 21
    %p206 = pnand %p204, %p205
    %p207 = pneg %p206
    // Predicated region
    $region33: #{basic_block3d_forward.5} parent=5 // pred_check
      _
    $region34: #{basic_block3d_forward.5} parent=5 // pred_check_branch
      %209 = sbr.rel (%p206) target = $region36
    $region35: #{basic_block3d_forward.5} parent=5 // pred_region
      %s210 = ssub.s32 %s10, 1
      %s211 = smul.u32 %s19, 8
      %s212 = ssub.s32 %s20, 1
      %p213 = scmp.gt.s32.totalorder %s212, 0
      %s214 = scalar_select %p213, %s212, 0
      %p215 = scmp.lt.s32.totalorder %s214, 7
      %s216 = scalar_select %p215, %s214, 7
      %s217 = sadd.s32 %s211, %s216
      %s218 = smul.u32 10, %s217
      %p219 = scmp.lt.s32.totalorder %s218, 159
      %s220 = scalar_select %p219, %s218, 159
      %s221 = smul.addr %s220, 4
      %s222 = scalar_lea.vmem %s0, %s221
      %p223 = pneg %p62
      %p224 = pneg %p59
      %p225 = pneg %p83
      %p226 = pneg %p80
      %p227 = pneg %p104
      %p228 = pneg %p101
      %p229 = pneg %p125
      %p230 = pneg %p122
      %p231 = pneg %p153
      %p232 = pneg %p150
      %p233 = scmp.lt.s32.totalorder %s19, 1
      %s234 = scalar_select %p233, %s19, 1
      %p235 = scmp.lt.s32.totalorder %s20, 9
      %s236 = scalar_select %p235, %s20, 9
      %s237 = smul.addr %s236, 14
      %s238 = smul.addr %s234, 140
      %s239 = sadd.s32 %s237, %s238
      %s240 = smul.addr %s239, 4
      %s241 = scalar_lea.vmem %s4, %s240
      %s242 = smul.u32 %s19, 8
      %s243 = ssub.s32 %s20, 1
      %p244 = scmp.gt.s32.totalorder %s243, 0
      %s245 = scalar_select %p244, %s243, 0
      %p246 = scmp.lt.s32.totalorder %s245, 7
      %s247 = scalar_select %p246, %s245, 7
      %s248 = sadd.s32 %s242, %s247
      %s249 = smul.u32 10, %s248
      %p250 = scmp.lt.s32.totalorder %s249, 159
      %s251 = scalar_select %p250, %s249, 159
      %s252 = smul.addr %s251, 4
      %s253 = scalar_lea.vmem %s0, %s252
      %s254 = smul.u32 %s19, 8
      %s255 = ssub.s32 %s20, 1
      %p256 = scmp.gt.s32.totalorder %s255, 0
      %s257 = scalar_select %p256, %s255, 0
      %p258 = scmp.lt.s32.totalorder %s257, 7
      %s259 = scalar_select %p258, %s257, 7
      %s260 = sadd.s32 %s254, %s259
      %s261 = smul.u32 10, %s260
      %p262 = scmp.lt.s32.totalorder %s19, 1
      %s263 = scalar_select %p262, %s19, 1
      %p264 = scmp.lt.s32.totalorder %s20, 9
      %s265 = scalar_select %p264, %s20, 9
      %s266 = smul.addr %s265, 14
      %s267 = smul.addr %s263, 140
      %s268 = sadd.s32 %s266, %s267
      %s269 = smul.addr %s268, 4
      %s270 = scalar_lea.vmem %s4, %s269
      %272 = vst [vmem:[%s270] sm:$0xf] 0
      %273 = vst [vmem:[%s270 + $0x4] sm:$0xf] 0
      %274 = vst [vmem:[%s270 + $0x8] sm:$0xf] 0
      %275 = vst [vmem:[%s270 + $0xc] sm:$0xf] 0
      %276 = vst [vmem:[%s270 + $0x10] sm:$0xf] 0
      %277 = vst [vmem:[%s270 + $0x14] sm:$0xf] 0
      %278 = vst [vmem:[%s270 + $0x18] sm:$0xf] 0
      %279 = vst [vmem:[%s270 + $0x1c] sm:$0xf] 0
      %280 = vst [vmem:[%s270 + $0x20] sm:$0xf] 0
      %281 = vst [vmem:[%s270 + $0x24] sm:$0xf] 0
      %282 = vst [vmem:[%s270 + $0x28] sm:$0xf] 0
      %283 = vst [vmem:[%s270 + $0x2c] sm:$0xf] 0
      %284 = vst [vmem:[%s270 + $0x30] sm:$0xf] 0
      %285 = vst [vmem:[%s270 + $0x34] sm:$0x7] 0
      %p286 = scmp.ge.s32.totalorder %s20, 1
      %p287 = scmp.le.s32.totalorder %s20, 8
      %p288 = pnand %p286, %p287
      %p289 = pneg %p288
      // Predicated region
      $region37: #{basic_block3d_forward.5} parent=35 // pred_check
        _
      $region38: #{basic_block3d_forward.5} parent=35 // pred_check_branch
        %291 = sbr.rel (%p288) target = $region40
      $region39: #{basic_block3d_forward.5} parent=35 // pred_region
        %v292 = vld [vmem:[%s253] sm:$0xf]
        %v293 = vld [vmem:[%s253 + $0x4] sm:$0xf]
        %v294 = vld [vmem:[%s253 + $0x8] sm:$0xf]
        %v295 = vld [vmem:[%s253 + $0xc] sm:$0xf]
        %v296 = vld [vmem:[%s253 + $0x10] sm:$0xf]
        %v297 = vld [vmem:[%s253 + $0x14] sm:$0xf]
        %v298 = vld [vmem:[%s253 + $0x18] sm:$0xf]
        %v299 = vld [vmem:[%s253 + $0x1c] sm:$0xf]
        %v300 = vld [vmem:[%s253 + $0x20] sm:$0xf]
        %v301 = vld [vmem:[%s253 + $0x24] sm:$0xf]
        %v302 = vunpack.c.l.bf16 %v292
        %v303 = vunpack.c.l.bf16 %v293
        %v304 = vunpack.c.l.bf16 %v294
        %v305 = vunpack.c.l.bf16 %v295
        %v306 = vunpack.c.l.bf16 %v296
        %v307 = vunpack.c.l.bf16 %v297
        %v308 = vunpack.c.l.bf16 %v298
        %v309 = vunpack.c.l.bf16 %v299
        %v310 = vunpack.c.l.bf16 %v300
        %v311 = vunpack.c.l.bf16 %v301
        %v312 = vld [vmem:[%s1] sm:$0x1]
        %v314 = vlaneseq
        %v315 = vshrl.u32 %v314, 7
        %v316 = vsub.s32 0, %v315
        %v317 = vrot.slane %v312, %v316
        %v319 = vmul.f32 %v302, %v317
        %v320 = vmul.f32 %v303, %v317
        %v321 = vmul.f32 %v304, %v317
        %v322 = vmul.f32 %v305, %v317
        %v323 = vmul.f32 %v306, %v317
        %v324 = vmul.f32 %v307, %v317
        %v325 = vmul.f32 %v308, %v317
        %v326 = vmul.f32 %v309, %v317
        %v327 = vmul.f32 %v310, %v317
        %v328 = vmul.f32 %v311, %v317
        %v329 = vld [vmem:[%s2] sm:$0x1]
        %v331 = vlaneseq
        %v332 = vshrl.u32 %v331, 7
        %v333 = vsub.s32 0, %v332
        %v334 = vrot.slane %v329, %v333
        %v336 = vadd.f32 %v319, %v334
        %v337 = vadd.f32 %v320, %v334
        %v338 = vadd.f32 %v321, %v334
        %v339 = vadd.f32 %v322, %v334
        %v340 = vadd.f32 %v323, %v334
        %v341 = vadd.f32 %v324, %v334
        %v342 = vadd.f32 %v325, %v334
        %v343 = vadd.f32 %v326, %v334
        %v344 = vadd.f32 %v327, %v334
        %v345 = vadd.f32 %v328, %v334
        %vm346 = vcmp.gt.f32.partialorder %v336, 0.0
        %vm347 = vcmp.gt.f32.partialorder %v337, 0.0
        %vm348 = vcmp.gt.f32.partialorder %v338, 0.0
        %vm349 = vcmp.gt.f32.partialorder %v339, 0.0
        %vm350 = vcmp.gt.f32.partialorder %v340, 0.0
        %vm351 = vcmp.gt.f32.partialorder %v341, 0.0
        %vm352 = vcmp.gt.f32.partialorder %v342, 0.0
        %vm353 = vcmp.gt.f32.partialorder %v343, 0.0
        %vm354 = vcmp.gt.f32.partialorder %v344, 0.0
        %vm355 = vcmp.gt.f32.partialorder %v345, 0.0
        %v356 = vmul.f32 %v336, 0.01
        %v357 = vmul.f32 %v337, 0.01
        %v358 = vmul.f32 %v338, 0.01
        %v359 = vmul.f32 %v339, 0.01
        %v360 = vmul.f32 %v340, 0.01
        %v361 = vmul.f32 %v341, 0.01
        %v362 = vmul.f32 %v342, 0.01
        %v363 = vmul.f32 %v343, 0.01
        %v364 = vmul.f32 %v344, 0.01
        %v365 = vmul.f32 %v345, 0.01
        %v366 = vsel %vm346, %v336, %v356
        %v367 = vsel %vm347, %v337, %v357
        %v368 = vsel %vm348, %v338, %v358
        %v369 = vsel %vm349, %v339, %v359
        %v370 = vsel %vm350, %v340, %v360
        %v371 = vsel %vm351, %v341, %v361
        %v372 = vsel %vm352, %v342, %v362
        %v373 = vsel %vm353, %v343, %v363
        %v374 = vsel %vm354, %v344, %v364
        %v375 = vsel %vm355, %v345, %v365
        %v376 = vld [vmem:[%s3] sm:$0xff]
        %v377 = vld [vmem:[%s3 + $0x8] sm:$0xff]
        %v378 = vld [vmem:[%s3 + $0x10] sm:$0xff]
        %v379 = vld [vmem:[%s3 + $0x18] sm:$0xff]
        %v380 = vld [vmem:[%s3 + $0x20] sm:$0xff]
        %v381 = vld [vmem:[%s3 + $0x28] sm:$0xff]
        %v382 = vld [vmem:[%s3 + $0x30] sm:$0xff]
        %v383 = vld [vmem:[%s3 + $0x38] sm:$0xff]
        %v384 = vld [vmem:[%s3 + $0x40] sm:$0xff]
        %v385 = vld [vmem:[%s3 + $0x48] sm:$0xff]
        %387 = vset.pattern.permute.xlu0 0
        %388 = vperm.xlu0 %387, %v376
        %v389 = vpop.permute.xlu0 %388
        %392 = vset.pattern.permute.xlu0 0
        %393 = vperm.xlu0 %392, %v377
        %v394 = vpop.permute.xlu0 %393
        %397 = vset.pattern.permute.xlu0 0
        %398 = vperm.xlu0 %397, %v378
        %v399 = vpop.permute.xlu0 %398
        %402 = vset.pattern.permute.xlu0 0
        %403 = vperm.xlu0 %402, %v379
        %v404 = vpop.permute.xlu0 %403
        %407 = vset.pattern.permute.xlu0 0
        %408 = vperm.xlu0 %407, %v380
        %v409 = vpop.permute.xlu0 %408
        %412 = vset.pattern.permute.xlu0 0
        %413 = vperm.xlu0 %412, %v381
        %v414 = vpop.permute.xlu0 %413
        %417 = vset.pattern.permute.xlu0 0
        %418 = vperm.xlu0 %417, %v382
        %v419 = vpop.permute.xlu0 %418
        %422 = vset.pattern.permute.xlu0 0
        %423 = vperm.xlu0 %422, %v383
        %v424 = vpop.permute.xlu0 %423
        %427 = vset.pattern.permute.xlu0 0
        %428 = vperm.xlu0 %427, %v384
        %v429 = vpop.permute.xlu0 %428
        %432 = vset.pattern.permute.xlu0 0
        %433 = vperm.xlu0 %432, %v385
        %v434 = vpop.permute.xlu0 %433
        %v436 = vmul.f32 %v366, %v389
        %v437 = vmul.f32 %v367, %v394
        %v438 = vmul.f32 %v368, %v399
        %v439 = vmul.f32 %v369, %v404
        %v440 = vmul.f32 %v370, %v409
        %v441 = vmul.f32 %v371, %v414
        %v442 = vmul.f32 %v372, %v419
        %v443 = vmul.f32 %v373, %v424
        %v444 = vmul.f32 %v374, %v429
        %v445 = vmul.f32 %v375, %v434
        %v446 = vpack.c.bf16 %v437, %v436
        %v447 = vpack.c.bf16 %v439, %v438
        %v448 = vpack.c.bf16 %v441, %v440
        %v449 = vpack.c.bf16 %v443, %v442
        %v450 = vpack.c.bf16 %v445, %v444
        %v456 = vunpack.c.l.b16 %v446
        %v457 = vunpack.c.h.b16 %v446
        %v458 = vunpack.c.l.b16 %v447
        %v459 = vunpack.c.h.b16 %v447
        %v460 = vunpack.c.l.b16 %v448
        %v461 = vunpack.c.h.b16 %v448
        %v462 = vunpack.c.l.b16 %v449
        %v463 = vunpack.c.h.b16 %v449
        %v464 = vunpack.c.l.b16 %v450
        %v465 = vunpack.c.h.b16 %v450
        %v466 = vpack.c.b16 %v456, %v456
        %v467 = vpack.c.b16 %v457, %v457
        %v468 = vpack.c.b16 %v458, %v458
        %v469 = vpack.c.b16 %v459, %v459
        %v470 = vpack.c.b16 %v460, %v460
        %v471 = vpack.c.b16 %v461, %v461
        %v472 = vpack.c.b16 %v462, %v462
        %v473 = vpack.c.b16 %v463, %v463
        %v474 = vpack.c.b16 %v464, %v464
        %v475 = vpack.c.b16 %v465, %v465
        %vm476 = vsmask.f32 1280
        %vm477 = vsmask.f32 5392
        %vm478 = vmor %vm476, %vm477
        %v480 = vshrl.u32 %v466, 16
        %v482 = vrot.slane %v480, 6
        %v483 = vshll.u32 %v466, 16
        %v485 = vrot.slane %v483, 7
        %v486 = vor.u32 %v482, %v485
        %v487 = vrot.slane %v486, 4
        %v489 = vshrl.u32 %v467, 16
        %v491 = vrot.slane %v489, 6
        %v492 = vshll.u32 %v467, 16
        %v494 = vrot.slane %v492, 7
        %v495 = vor.u32 %v491, %v494
        %v496 = vsel %vm478, %v487, %v495
        %v497 = vrot.slane %v495, 4
        %v499 = vshrl.u32 %v468, 16
        %v501 = vrot.slane %v499, 6
        %v502 = vshll.u32 %v468, 16
        %v504 = vrot.slane %v502, 7
        %v505 = vor.u32 %v501, %v504
        %v506 = vsel %vm478, %v497, %v505
        %v507 = vrot.slane %v505, 4
        %v509 = vshrl.u32 %v469, 16
        %v511 = vrot.slane %v509, 6
        %v512 = vshll.u32 %v469, 16
        %v514 = vrot.slane %v512, 7
        %v515 = vor.u32 %v511, %v514
        %v516 = vsel %vm478, %v507, %v515
        %v517 = vrot.slane %v515, 4
        %v519 = vshrl.u32 %v470, 16
        %v521 = vrot.slane %v519, 6
        %v522 = vshll.u32 %v470, 16
        %v524 = vrot.slane %v522, 7
        %v525 = vor.u32 %v521, %v524
        %v526 = vsel %vm478, %v517, %v525
        %v527 = vrot.slane %v525, 4
        %v529 = vshrl.u32 %v471, 16
        %v531 = vrot.slane %v529, 6
        %v532 = vshll.u32 %v471, 16
        %v534 = vrot.slane %v532, 7
        %v535 = vor.u32 %v531, %v534
        %v536 = vsel %vm478, %v527, %v535
        %v537 = vrot.slane %v535, 4
        %v539 = vshrl.u32 %v472, 16
        %v541 = vrot.slane %v539, 6
        %v542 = vshll.u32 %v472, 16
        %v544 = vrot.slane %v542, 7
        %v545 = vor.u32 %v541, %v544
        %v546 = vsel %vm478, %v537, %v545
        %v547 = vrot.slane %v545, 4
        %v549 = vshrl.u32 %v473, 16
        %v551 = vrot.slane %v549, 6
        %v552 = vshll.u32 %v473, 16
        %v554 = vrot.slane %v552, 7
        %v555 = vor.u32 %v551, %v554
        %v556 = vsel %vm478, %v547, %v555
        %v557 = vrot.slane %v555, 4
        %v559 = vshrl.u32 %v474, 16
        %v561 = vrot.slane %v559, 6
        %v562 = vshll.u32 %v474, 16
        %v564 = vrot.slane %v562, 7
        %v565 = vor.u32 %v561, %v564
        %v566 = vsel %vm478, %v557, %v565
        %v567 = vrot.slane %v565, 4
        %v569 = vshrl.u32 %v475, 16
        %v571 = vrot.slane %v569, 6
        %v572 = vshll.u32 %v475, 16
        %v574 = vrot.slane %v572, 7
        %v575 = vor.u32 %v571, %v574
        %v576 = vsel %vm478, %v567, %v575
        %v577 = vrot.slane %v575, 4
        %vm589 = vcmask 1043457
        %vm590 = vsmask.f32 7942
        %vm591 = vmand %vm589, %vm590
        %v592 = vld [vmem:[%s270 + $0x4] sm:$0xe]
        %v593 = vsel %vm591, %v486, %v592
        %594 = vst [vmem:[%s270 + $0x4] sm:$0xe] %v593
        %595 = vst [vmem:[%s270 + $0x8] sm:$0xf] %v496
        %596 = vst [vmem:[%s270 + $0xc] sm:$0xf] %v506
        %597 = vst [vmem:[%s270 + $0x10] sm:$0xf] %v516
        %598 = vst [vmem:[%s270 + $0x14] sm:$0xf] %v526
        %599 = vst [vmem:[%s270 + $0x18] sm:$0xf] %v536
        %600 = vst [vmem:[%s270 + $0x1c] sm:$0xf] %v546
        %601 = vst [vmem:[%s270 + $0x20] sm:$0xf] %v556
        %602 = vst [vmem:[%s270 + $0x24] sm:$0xf] %v566
        %603 = vst [vmem:[%s270 + $0x28] sm:$0xf] %v576
        %vm604 = vcmask 1041408
        %vm605 = vmand %vm604, %vm476
        %v606 = vld [vmem:[%s270 + $0x2c] sm:$0x3]
        %v607 = vsel %vm605, %v577, %v606
        %608 = vst [vmem:[%s270 + $0x2c] sm:$0x3] %v607
      $region40: #{basic_block3d_forward.5} parent=35 // pred_fallthru
        _
      %p609 = scmp.lt.s32.totalorder %s19, 1
      %s610 = scalar_select %p609, %s19, 1
      %p611 = scmp.lt.s32.totalorder %s20, 9
      %s612 = scalar_select %p611, %s20, 9
      %s613 = smul.addr %s612, 14
      %s614 = smul.addr %s610, 140
      %s615 = sadd.s32 %s613, %s614
      %s616 = smul.addr %s615, 4
      %s617 = scalar_lea.vmem %s4, %s616
      // Predicated region
      $region41: #{basic_block3d_forward.5} parent=35 // pred_check
        %p618 = pneg %p150
      $region42: #{basic_block3d_forward.5} parent=35 // pred_check_branch
        %620 = sbr.rel (%p618) target = $region44
      $region43: #{basic_block3d_forward.5} parent=35 // pred_region
        _
      $region44: #{basic_block3d_forward.5} parent=35 // pred_fallthru
        _
    $region36: #{basic_block3d_forward.5} parent=5 // pred_fallthru
      _
    %p621 = scmp.le.s32.totalorder 2, %s10
    // Predicated region
    $region45: #{basic_block3d_forward.5} parent=5 // pred_check
      %p622 = pneg %p621
    $region46: #{basic_block3d_forward.5} parent=5 // pred_check_branch
      %624 = sbr.rel (%p622) target = $region48
    $region47: #{basic_block3d_forward.5} parent=5 // pred_region
      %s625 = ssub.s32 %s10, 2
      // Predicated region
      $region49: #{basic_block3d_forward.5} parent=47 // pred_check
        %p626 = pneg %p156
      $region50: #{basic_block3d_forward.5} parent=47 // pred_check_branch
        %628 = sbr.rel (%p626) target = $region52
      $region51: #{basic_block3d_forward.5} parent=47 // pred_region
        %p629 = scmp.lt.s32.totalorder %s21, 1
        %s630 = scalar_select %p629, %s21, 1
        %p631 = scmp.lt.s32.totalorder %s22, 9
        %s632 = scalar_select %p631, %s22, 9
        %s633 = smul.addr %s632, 14
        %s634 = smul.addr %s630, 140
        %s635 = sadd.s32 %s633, %s634
        %s636 = smul.addr %s635, 4
        %s637 = scalar_lea.vmem %s4, %s636
      $region52: #{basic_block3d_forward.5} parent=47 // pred_fallthru
        _
    $region48: #{basic_block3d_forward.5} parent=5 // pred_fallthru
      _
  $region6: #{basic_block3d_forward.5} parent=0 // loop_footer
    %s14 = sadd.s32 1, %s10
  $region7: #{basic_block3d_forward.5} parent=0 // loop_footer_branch
    %9 = sbr.rel target = $region3
  $region8: #{basic_block3d_forward.5} parent=0 // loop_exit
    _

// kernel: basic_block3d_forward.7
$region0: #{basic_block3d_forward.7}
  #allocation0 [shape = 'u32[]', space=smem, size = 0x4, offset = 0x4, fixed_abs, tag = 'smem constant byte address 0x4 - core index']
  #allocation1 [shape = 'u32[144,128]{1,0:T(1,128)}', space=vmem, size = 0x12000, scoped, tag = 'internal scratch']
  %s0 = inlined_call_operand.vmem [shape: bf16[1280,128], index: 0, kind: input, shape index: {}]
  %s1 = inlined_call_operand.vmem [shape: f32[1,128], index: 1, kind: input, shape index: {}]
  %s2 = inlined_call_operand.vmem [shape: f32[1,128], index: 2, kind: input, shape index: {}]
  %s3 = inlined_call_operand.vmem [shape: f32[1280,128], index: 3, kind: output, shape index: {}]
  %s4 = sld [smem:[#allocation0]]
  $region45: #{basic_block3d_forward.7} parent=0
    _
  %s6 = ssub.s32 1, %s4
  %s7 = scalar_select 0, %s6, %s4
  loop: start=0, step=1, limit=7
  $region2: #{basic_block3d_forward.7} parent=0 // loop_pre_header
    _
  $region3: #{basic_block3d_forward.7} parent=0 // loop_header
    %s9 = sphi 0, %s13
    %p10 = scmp.ge.s32.totalorder %s9, 7
    %s19 = sphi 0, %s21
    %s22 = sphi 0, %s19
    %s23 = sphi 0, %s22
    %s39 = sphi 0, %s23
    %s43 = sphi 0, %s43
    %s45 = sphi 0, %s43
    %s46 = sphi 0, %s45
    %s60 = sphi 0, %s46
    %s64 = sphi 0, %s64
    %s66 = sphi 0, %s64
    %s67 = sphi 0, %s66
    %s81 = sphi 0, %s67
    %s87 = sphi 0, %s89
    %s90 = sphi 0, %s87
    %s91 = sphi 0, %s90
    %s107 = sphi 0, %s91
  $region4: #{basic_block3d_forward.7} parent=0 // loop_header_branch
    %12 = sbr.rel (%p10) target = $region8
  $region5: #{basic_block3d_forward.7} parent=0 // loop_body
    %s14 = ssub.s32 %s9, 1
    %s15 = ssub.s32 %s9, 2
    %s16 = sadd.s32 %s9, 1
    %s17 = ssub.s32 %s9, %s16
    %p18 = scmp.eq.s32.totalorder %s17, 0
    %s20 = sadd.s32 %s19, 1
    %s21 = scalar_select %p18, %s19, %s20
    %p24 = pneg %p18
    %p25 = scmp.eq.s32.totalorder %s9, 4
    %p26 = por %p24, %p25
    %p27 = scmp.ne.s32.totalorder %s19, %s22
    %p28 = scmp.eq.s32.totalorder %s9, 0
    %p29 = por %p27, %p28
    %p30 = scmp.ne.s32.totalorder %s19, %s22
    %p31 = scmp.eq.s32.totalorder %s14, 4
    %p32 = por %p30, %p31
    %p33 = scmp.ne.s32.totalorder %s22, %s23
    %p34 = scmp.eq.s32.totalorder %s14, 0
    %p35 = por %p33, %p34
    %p36 = scmp.ne.s32.totalorder %s22, %s23
    %p37 = scmp.eq.s32.totalorder %s15, 4
    %p38 = por %p36, %p37
    %p40 = scmp.ne.s32.totalorder %s23, %s39
    %p41 = scmp.eq.s32.totalorder %s15, 0
    %p42 = por %p40, %p41
    %s44 = sadd.s32 %s43, 1
    %p47 = scmp.eq.s32.totalorder %s9, 4
    %p48 = scmp.ne.s32.totalorder %s43, %s45
    %p49 = scmp.eq.s32.totalorder %s9, 0
    %p50 = por %p48, %p49
    %p51 = scmp.ne.s32.totalorder %s43, %s45
    %p52 = scmp.eq.s32.totalorder %s14, 4
    %p53 = por %p51, %p52
    %p54 = scmp.ne.s32.totalorder %s45, %s46
    %p55 = scmp.eq.s32.totalorder %s14, 0
    %p56 = por %p54, %p55
    %p57 = scmp.ne.s32.totalorder %s45, %s46
    %p58 = scmp.eq.s32.totalorder %s15, 4
    %p59 = por %p57, %p58
    %p61 = scmp.ne.s32.totalorder %s46, %s60
    %p62 = scmp.eq.s32.totalorder %s15, 0
    %p63 = por %p61, %p62
    %s65 = sadd.s32 %s64, 1
    %p68 = scmp.eq.s32.totalorder %s9, 4
    %p69 = scmp.ne.s32.totalorder %s64, %s66
    %p70 = scmp.eq.s32.totalorder %s9, 0
    %p71 = por %p69, %p70
    %p72 = scmp.ne.s32.totalorder %s64, %s66
    %p73 = scmp.eq.s32.totalorder %s14, 4
    %p74 = por %p72, %p73
    %p75 = scmp.ne.s32.totalorder %s66, %s67
    %p76 = scmp.eq.s32.totalorder %s14, 0
    %p77 = por %p75, %p76
    %p78 = scmp.ne.s32.totalorder %s66, %s67
    %p79 = scmp.eq.s32.totalorder %s15, 4
    %p80 = por %p78, %p79
    %p82 = scmp.ne.s32.totalorder %s67, %s81
    %p83 = scmp.eq.s32.totalorder %s15, 0
    %p84 = por %p82, %p83
    %s85 = ssub.s32 %s9, %s16
    %p86 = scmp.eq.s32.totalorder %s85, 0
    %s88 = sadd.s32 %s87, 1
    %s89 = scalar_select %p86, %s87, %s88
    %p92 = pneg %p86
    %p93 = scmp.eq.s32.totalorder %s9, 4
    %p94 = por %p92, %p93
    %p95 = scmp.ne.s32.totalorder %s87, %s90
    %p96 = scmp.eq.s32.totalorder %s9, 0
    %p97 = por %p95, %p96
    %p98 = scmp.ne.s32.totalorder %s87, %s90
    %p99 = scmp.eq.s32.totalorder %s14, 4
    %p100 = por %p98, %p99
    %p101 = scmp.ne.s32.totalorder %s90, %s91
    %p102 = scmp.eq.s32.totalorder %s14, 0
    %p103 = por %p101, %p102
    %p104 = scmp.ne.s32.totalorder %s90, %s91
    %p105 = scmp.eq.s32.totalorder %s15, 4
    %p106 = por %p104, %p105
    %p108 = scmp.ne.s32.totalorder %s91, %s107
    %p109 = scmp.eq.s32.totalorder %s15, 0
    %p110 = por %p108, %p109
    %p111 = scmp.le.s32.totalorder 1, %s9
    %p112 = scmp.lt.s32.totalorder %s9, 6
    %p113 = pnand %p111, %p112
    %p114 = pneg %p113
    // Predicated region
    $region9: #{basic_block3d_forward.7} parent=5 // pred_check
      _
    $region10: #{basic_block3d_forward.7} parent=5 // pred_check_branch
      %116 = sbr.rel (%p113) target = $region12
    $region11: #{basic_block3d_forward.7} parent=5 // pred_region
      %s117 = ssub.s32 %s9, 1
      // Predicated region
      $region13: #{basic_block3d_forward.7} parent=11 // pred_check
        %p118 = pneg %p56
      $region14: #{basic_block3d_forward.7} parent=11 // pred_check_branch
        %120 = sbr.rel (%p118) target = $region16
      $region15: #{basic_block3d_forward.7} parent=11 // pred_region
        _
      $region16: #{basic_block3d_forward.7} parent=11 // pred_fallthru
        _
      // Predicated region
      $region17: #{basic_block3d_forward.7} parent=11 // pred_check
        %p121 = pneg %p77
      $region18: #{basic_block3d_forward.7} parent=11 // pred_check_branch
        %123 = sbr.rel (%p121) target = $region20
      $region19: #{basic_block3d_forward.7} parent=11 // pred_region
        _
      $region20: #{basic_block3d_forward.7} parent=11 // pred_fallthru
        _
    $region12: #{basic_block3d_forward.7} parent=5 // pred_fallthru
      _
    %p124 = scmp.lt.s32.totalorder %s9, 5
    // Predicated region
    $region21: #{basic_block3d_forward.7} parent=5 // pred_check
      %p125 = pneg %p124
    $region22: #{basic_block3d_forward.7} parent=5 // pred_check_branch
      %127 = sbr.rel (%p125) target = $region24
    $region23: #{basic_block3d_forward.7} parent=5 // pred_region
      // Predicated region
      $region25: #{basic_block3d_forward.7} parent=23 // pred_check
        %p128 = pneg %p29
      $region26: #{basic_block3d_forward.7} parent=23 // pred_check_branch
        %130 = sbr.rel (%p128) target = $region28
      $region27: #{basic_block3d_forward.7} parent=23 // pred_region
        %s131 = smul.u32 32, %s9
        %p132 = scmp.lt.s32.totalorder %s131, 159
        %s133 = scalar_select %p132, %s131, 159
        %s134 = smul.addr %s133, 4
        %s135 = scalar_lea.vmem %s0, %s134
        %s136 = smul.u32 32, %s9
      $region28: #{basic_block3d_forward.7} parent=23 // pred_fallthru
        _
    $region24: #{basic_block3d_forward.7} parent=5 // pred_fallthru
      _
    %p137 = scmp.le.s32.totalorder 1, %s9
    %p138 = scmp.lt.s32.totalorder %s9, 6
    %p139 = pnand %p137, %p138
    %p140 = pneg %p139
    // Predicated region
    $region29: #{basic_block3d_forward.7} parent=5 // pred_check
      _
    $region30: #{basic_block3d_forward.7} parent=5 // pred_check_branch
      %142 = sbr.rel (%p139) target = $region32
    $region31: #{basic_block3d_forward.7} parent=5 // pred_region
      %s143 = ssub.s32 %s9, 1
      %s144 = smul.u32 32, %s14
      %p145 = scmp.lt.s32.totalorder %s144, 159
      %s146 = scalar_select %p145, %s144, 159
      %s147 = smul.addr %s146, 4
      %s148 = scalar_lea.vmem %s0, %s147
      %p149 = pneg %p35
      %p150 = pneg %p32
      %p151 = pneg %p56
      %p152 = pneg %p53
      %p153 = pneg %p77
      %p154 = pneg %p74
      %p155 = pneg %p103
      %p156 = pneg %p100
      %s157 = smul.u32 32, %s14
      %p158 = scmp.lt.s32.totalorder %s157, 159
      %s159 = scalar_select %p158, %s157, 159
      %s160 = smul.addr %s159, 8
      %s161 = scalar_lea.vmem %s3, %s160
      %s162 = smul.u32 32, %s14
      %p163 = scmp.lt.s32.totalorder %s162, 159
      %s164 = scalar_select %p163, %s162, 159
      %s165 = smul.addr %s164, 4
      %s166 = scalar_lea.vmem %s0, %s165
      %s167 = smul.u32 32, %s14
      %s168 = smul.u32 32, %s14
      %p169 = scmp.lt.s32.totalorder %s168, 159
      %s170 = scalar_select %p169, %s168, 159
      %s171 = smul.addr %s170, 8
      %s172 = scalar_lea.vmem %s3, %s171
      %s173 = smul.u32 32, %s14
      %v174 = vld [vmem:[%s166] sm:$0xf]
      %v175 = vld [vmem:[%s166 + $0x4] sm:$0xf]
      %v176 = vld [vmem:[%s166 + $0x8] sm:$0xf]
      %v177 = vld [vmem:[%s166 + $0xc] sm:$0xf]
      %v178 = vld [vmem:[%s166 + $0x10] sm:$0xf]
      %v179 = vld [vmem:[%s166 + $0x14] sm:$0xf]
      %v180 = vld [vmem:[%s166 + $0x18] sm:$0xf]
      %v181 = vld [vmem:[%s166 + $0x1c] sm:$0xf]
      %v182 = vld [vmem:[%s166 + $0x20] sm:$0xf]
      %v183 = vld [vmem:[%s166 + $0x24] sm:$0xf]
      %v184 = vld [vmem:[%s166 + $0x28] sm:$0xf]
      %v185 = vld [vmem:[%s166 + $0x2c] sm:$0xf]
      %v186 = vld [vmem:[%s166 + $0x30] sm:$0xf]
      %v187 = vld [vmem:[%s166 + $0x34] sm:$0xf]
      %v188 = vld [vmem:[%s166 + $0x38] sm:$0xf]
      %v189 = vld [vmem:[%s166 + $0x3c] sm:$0xf]
      %v190 = vld [vmem:[%s166 + $0x40] sm:$0xf]
      %v191 = vld [vmem:[%s166 + $0x44] sm:$0xf]
      %v192 = vld [vmem:[%s166 + $0x48] sm:$0xf]
      %v193 = vld [vmem:[%s166 + $0x4c] sm:$0xf]
      %v194 = vld [vmem:[%s166 + $0x50] sm:$0xf]
      %v195 = vld [vmem:[%s166 + $0x54] sm:$0xf]
      %v196 = vld [vmem:[%s166 + $0x58] sm:$0xf]
      %v197 = vld [vmem:[%s166 + $0x5c] sm:$0xf]
      %v198 = vld [vmem:[%s166 + $0x60] sm:$0xf]
      %v199 = vld [vmem:[%s166 + $0x64] sm:$0xf]
      %v200 = vld [vmem:[%s166 + $0x68] sm:$0xf]
      %v201 = vld [vmem:[%s166 + $0x6c] sm:$0xf]
      %v202 = vld [vmem:[%s166 + $0x70] sm:$0xf]
      %v203 = vld [vmem:[%s166 + $0x74] sm:$0xf]
      %v204 = vld [vmem:[%s166 + $0x78] sm:$0xf]
      %v205 = vld [vmem:[%s166 + $0x7c] sm:$0xf]
      %v206 = vunpack.c.l.bf16 %v174
      %v207 = vunpack.c.l.bf16 %v175
      %v208 = vunpack.c.l.bf16 %v176
      %v209 = vunpack.c.l.bf16 %v177
      %v210 = vunpack.c.l.bf16 %v178
      %v211 = vunpack.c.l.bf16 %v179
      %v212 = vunpack.c.l.bf16 %v180
      %v213 = vunpack.c.l.bf16 %v181
      %v214 = vunpack.c.l.bf16 %v182
      %v215 = vunpack.c.l.bf16 %v183
      %v216 = vunpack.c.l.bf16 %v184
      %v217 = vunpack.c.l.bf16 %v185
      %v218 = vunpack.c.l.bf16 %v186
      %v219 = vunpack.c.l.bf16 %v187
      %v220 = vunpack.c.l.bf16 %v188
      %v221 = vunpack.c.l.bf16 %v189
      %v222 = vunpack.c.l.bf16 %v190
      %v223 = vunpack.c.l.bf16 %v191
      %v224 = vunpack.c.l.bf16 %v192
      %v225 = vunpack.c.l.bf16 %v193
      %v226 = vunpack.c.l.bf16 %v194
      %v227 = vunpack.c.l.bf16 %v195
      %v228 = vunpack.c.l.bf16 %v196
      %v229 = vunpack.c.l.bf16 %v197
      %v230 = vunpack.c.l.bf16 %v198
      %v231 = vunpack.c.l.bf16 %v199
      %v232 = vunpack.c.l.bf16 %v200
      %v233 = vunpack.c.l.bf16 %v201
      %v234 = vunpack.c.l.bf16 %v202
      %v235 = vunpack.c.l.bf16 %v203
      %v236 = vunpack.c.l.bf16 %v204
      %v237 = vunpack.c.l.bf16 %v205
      %v238 = vld [vmem:[%s1] sm:$0x1]
      %v240 = vlaneseq
      %v241 = vshrl.u32 %v240, 7
      %v242 = vsub.s32 0, %v241
      %v243 = vrot.slane %v238, %v242
      %v245 = vmul.f32 %v206, %v243
      %v246 = vmul.f32 %v207, %v243
      %v247 = vmul.f32 %v208, %v243
      %v248 = vmul.f32 %v209, %v243
      %v249 = vmul.f32 %v210, %v243
      %v250 = vmul.f32 %v211, %v243
      %v251 = vmul.f32 %v212, %v243
      %v252 = vmul.f32 %v213, %v243
      %v253 = vmul.f32 %v214, %v243
      %v254 = vmul.f32 %v215, %v243
      %v255 = vmul.f32 %v216, %v243
      %v256 = vmul.f32 %v217, %v243
      %v257 = vmul.f32 %v218, %v243
      %v258 = vmul.f32 %v219, %v243
      %v259 = vmul.f32 %v220, %v243
      %v260 = vmul.f32 %v221, %v243
      %v261 = vmul.f32 %v222, %v243
      %v262 = vmul.f32 %v223, %v243
      %v263 = vmul.f32 %v224, %v243
      %v264 = vmul.f32 %v225, %v243
      %v265 = vmul.f32 %v226, %v243
      %v266 = vmul.f32 %v227, %v243
      %v267 = vmul.f32 %v228, %v243
      %v268 = vmul.f32 %v229, %v243
      %v269 = vmul.f32 %v230, %v243
      %v270 = vmul.f32 %v231, %v243
      %v271 = vmul.f32 %v232, %v243
      %v272 = vmul.f32 %v233, %v243
      %v273 = vmul.f32 %v234, %v243
      %v274 = vmul.f32 %v235, %v243
      %v275 = vmul.f32 %v236, %v243
      %v276 = vmul.f32 %v237, %v243
      %v277 = vld [vmem:[%s2] sm:$0x1]
      %v279 = vlaneseq
      %v280 = vshrl.u32 %v279, 7
      %v281 = vsub.s32 0, %v280
      %v282 = vrot.slane %v277, %v281
      %v284 = vadd.f32 %v245, %v282
      %v285 = vadd.f32 %v246, %v282
      %v286 = vadd.f32 %v247, %v282
      %v287 = vadd.f32 %v248, %v282
      %v288 = vadd.f32 %v249, %v282
      %v289 = vadd.f32 %v250, %v282
      %v290 = vadd.f32 %v251, %v282
      %v291 = vadd.f32 %v252, %v282
      %v292 = vadd.f32 %v253, %v282
      %v293 = vadd.f32 %v254, %v282
      %v294 = vadd.f32 %v255, %v282
      %v295 = vadd.f32 %v256, %v282
      %v296 = vadd.f32 %v257, %v282
      %v297 = vadd.f32 %v258, %v282
      %v298 = vadd.f32 %v259, %v282
      %v299 = vadd.f32 %v260, %v282
      %v300 = vadd.f32 %v261, %v282
      %v301 = vadd.f32 %v262, %v282
      %v302 = vadd.f32 %v263, %v282
      %v303 = vadd.f32 %v264, %v282
      %v304 = vadd.f32 %v265, %v282
      %v305 = vadd.f32 %v266, %v282
      %v306 = vadd.f32 %v267, %v282
      %v307 = vadd.f32 %v268, %v282
      %v308 = vadd.f32 %v269, %v282
      %v309 = vadd.f32 %v270, %v282
      %v310 = vadd.f32 %v271, %v282
      %v311 = vadd.f32 %v272, %v282
      %v312 = vadd.f32 %v273, %v282
      %v313 = vadd.f32 %v274, %v282
      %v314 = vadd.f32 %v275, %v282
      %v315 = vadd.f32 %v276, %v282
      %vm316 = vcmp.gt.f32.partialorder %v284, 0.0
      %vm317 = vcmp.gt.f32.partialorder %v285, 0.0
      %vm318 = vcmp.gt.f32.partialorder %v286, 0.0
      %vm319 = vcmp.gt.f32.partialorder %v287, 0.0
      %vm320 = vcmp.gt.f32.partialorder %v288, 0.0
      %vm321 = vcmp.gt.f32.partialorder %v289, 0.0
      %vm322 = vcmp.gt.f32.partialorder %v290, 0.0
      %vm323 = vcmp.gt.f32.partialorder %v291, 0.0
      %vm324 = vcmp.gt.f32.partialorder %v292, 0.0
      %vm325 = vcmp.gt.f32.partialorder %v293, 0.0
      %vm326 = vcmp.gt.f32.partialorder %v294, 0.0
      %vm327 = vcmp.gt.f32.partialorder %v295, 0.0
      %vm328 = vcmp.gt.f32.partialorder %v296, 0.0
      %vm329 = vcmp.gt.f32.partialorder %v297, 0.0
      %vm330 = vcmp.gt.f32.partialorder %v298, 0.0
      %vm331 = vcmp.gt.f32.partialorder %v299, 0.0
      %vm332 = vcmp.gt.f32.partialorder %v300, 0.0
      %vm333 = vcmp.gt.f32.partialorder %v301, 0.0
      %vm334 = vcmp.gt.f32.partialorder %v302, 0.0
      %vm335 = vcmp.gt.f32.partialorder %v303, 0.0
      %vm336 = vcmp.gt.f32.partialorder %v304, 0.0
      %vm337 = vcmp.gt.f32.partialorder %v305, 0.0
      %vm338 = vcmp.gt.f32.partialorder %v306, 0.0
      %vm339 = vcmp.gt.f32.partialorder %v307, 0.0
      %vm340 = vcmp.gt.f32.partialorder %v308, 0.0
      %vm341 = vcmp.gt.f32.partialorder %v309, 0.0
      %vm342 = vcmp.gt.f32.partialorder %v310, 0.0
      %vm343 = vcmp.gt.f32.partialorder %v311, 0.0
      %vm344 = vcmp.gt.f32.partialorder %v312, 0.0
      %vm345 = vcmp.gt.f32.partialorder %v313, 0.0
      %vm346 = vcmp.gt.f32.partialorder %v314, 0.0
      %vm347 = vcmp.gt.f32.partialorder %v315, 0.0
      %v348 = vmul.f32 %v284, 0.01
      %v349 = vmul.f32 %v285, 0.01
      %v350 = vmul.f32 %v286, 0.01
      %v351 = vmul.f32 %v287, 0.01
      %v352 = vmul.f32 %v288, 0.01
      %v353 = vmul.f32 %v289, 0.01
      %v354 = vmul.f32 %v290, 0.01
      %v355 = vmul.f32 %v291, 0.01
      %v356 = vmul.f32 %v292, 0.01
      %v357 = vmul.f32 %v293, 0.01
      %v358 = vmul.f32 %v294, 0.01
      %v359 = vmul.f32 %v295, 0.01
      %v360 = vmul.f32 %v296, 0.01
      %v361 = vmul.f32 %v297, 0.01
      %v362 = vmul.f32 %v298, 0.01
      %v363 = vmul.f32 %v299, 0.01
      %v364 = vmul.f32 %v300, 0.01
      %v365 = vmul.f32 %v301, 0.01
      %v366 = vmul.f32 %v302, 0.01
      %v367 = vmul.f32 %v303, 0.01
      %v368 = vmul.f32 %v304, 0.01
      %v369 = vmul.f32 %v305, 0.01
      %v370 = vmul.f32 %v306, 0.01
      %v371 = vmul.f32 %v307, 0.01
      %v372 = vmul.f32 %v308, 0.01
      %v373 = vmul.f32 %v309, 0.01
      %v374 = vmul.f32 %v310, 0.01
      %v375 = vmul.f32 %v311, 0.01
      %v376 = vmul.f32 %v312, 0.01
      %v377 = vmul.f32 %v313, 0.01
      %v378 = vmul.f32 %v314, 0.01
      %v379 = vmul.f32 %v315, 0.01
      %v380 = vsel %vm316, %v284, %v348
      %v381 = vsel %vm317, %v285, %v349
      %v382 = vsel %vm318, %v286, %v350
      %v383 = vsel %vm319, %v287, %v351
      %v384 = vsel %vm320, %v288, %v352
      %v385 = vsel %vm321, %v289, %v353
      %v386 = vsel %vm322, %v290, %v354
      %v387 = vsel %vm323, %v291, %v355
      %v388 = vsel %vm324, %v292, %v356
      %v389 = vsel %vm325, %v293, %v357
      %v390 = vsel %vm326, %v294, %v358
      %v391 = vsel %vm327, %v295, %v359
      %v392 = vsel %vm328, %v296, %v360
      %v393 = vsel %vm329, %v297, %v361
      %v394 = vsel %vm330, %v298, %v362
      %v395 = vsel %vm331, %v299, %v363
      %v396 = vsel %vm332, %v300, %v364
      %v397 = vsel %vm333, %v301, %v365
      %v398 = vsel %vm334, %v302, %v366
      %v399 = vsel %vm335, %v303, %v367
      %v400 = vsel %vm336, %v304, %v368
      %v401 = vsel %vm337, %v305, %v369
      %v402 = vsel %vm338, %v306, %v370
      %v403 = vsel %vm339, %v307, %v371
      %v404 = vsel %vm340, %v308, %v372
      %v405 = vsel %vm341, %v309, %v373
      %v406 = vsel %vm342, %v310, %v374
      %v407 = vsel %vm343, %v311, %v375
      %v408 = vsel %vm344, %v312, %v376
      %v409 = vsel %vm345, %v313, %v377
      %v410 = vsel %vm346, %v314, %v378
      %v411 = vsel %vm347, %v315, %v379
      %412 = vst [vmem:[%s172] sm:$0xff] %v380
      %413 = vst [vmem:[%s172 + $0x8] sm:$0xff] %v381
      %414 = vst [vmem:[%s172 + $0x10] sm:$0xff] %v382
      %415 = vst [vmem:[%s172 + $0x18] sm:$0xff] %v383
      %416 = vst [vmem:[%s172 + $0x20] sm:$0xff] %v384
      %417 = vst [vmem:[%s172 + $0x28] sm:$0xff] %v385
      %418 = vst [vmem:[%s172 + $0x30] sm:$0xff] %v386
      %419 = vst [vmem:[%s172 + $0x38] sm:$0xff] %v387
      %420 = vst [vmem:[%s172 + $0x40] sm:$0xff] %v388
      %421 = vst [vmem:[%s172 + $0x48] sm:$0xff] %v389
      %422 = vst [vmem:[%s172 + $0x50] sm:$0xff] %v390
      %423 = vst [vmem:[%s172 + $0x58] sm:$0xff] %v391
      %424 = vst [vmem:[%s172 + $0x60] sm:$0xff] %v392
      %425 = vst [vmem:[%s172 + $0x68] sm:$0xff] %v393
      %426 = vst [vmem:[%s172 + $0x70] sm:$0xff] %v394
      %427 = vst [vmem:[%s172 + $0x78] sm:$0xff] %v395
      %428 = vst [vmem:[%s172 + $0x80] sm:$0xff] %v396
      %429 = vst [vmem:[%s172 + $0x88] sm:$0xff] %v397
      %430 = vst [vmem:[%s172 + $0x90] sm:$0xff] %v398
      %431 = vst [vmem:[%s172 + $0x98] sm:$0xff] %v399
      %432 = vst [vmem:[%s172 + $0xa0] sm:$0xff] %v400
      %433 = vst [vmem:[%s172 + $0xa8] sm:$0xff] %v401
      %434 = vst [vmem:[%s172 + $0xb0] sm:$0xff] %v402
      %435 = vst [vmem:[%s172 + $0xb8] sm:$0xff] %v403
      %436 = vst [vmem:[%s172 + $0xc0] sm:$0xff] %v404
      %437 = vst [vmem:[%s172 + $0xc8] sm:$0xff] %v405
      %438 = vst [vmem:[%s172 + $0xd0] sm:$0xff] %v406
      %439 = vst [vmem:[%s172 + $0xd8] sm:$0xff] %v407
      %440 = vst [vmem:[%s172 + $0xe0] sm:$0xff] %v408
      %441 = vst [vmem:[%s172 + $0xe8] sm:$0xff] %v409
      %442 = vst [vmem:[%s172 + $0xf0] sm:$0xff] %v410
      %443 = vst [vmem:[%s172 + $0xf8] sm:$0xff] %v411
      %s444 = smul.u32 32, %s14
      %p445 = scmp.lt.s32.totalorder %s444, 159
      %s446 = scalar_select %p445, %s444, 159
      %s447 = smul.addr %s446, 8
      %s448 = scalar_lea.vmem %s3, %s447
      // Predicated region
      $region33: #{basic_block3d_forward.7} parent=31 // pred_check
        %p449 = pneg %p100
      $region34: #{basic_block3d_forward.7} parent=31 // pred_check_branch
        %451 = sbr.rel (%p449) target = $region36
      $region35: #{basic_block3d_forward.7} parent=31 // pred_region
        %s452 = smul.u32 32, %s14
      $region36: #{basic_block3d_forward.7} parent=31 // pred_fallthru
        _
    $region32: #{basic_block3d_forward.7} parent=5 // pred_fallthru
      _
    %p453 = scmp.le.s32.totalorder 2, %s9
    // Predicated region
    $region37: #{basic_block3d_forward.7} parent=5 // pred_check
      %p454 = pneg %p453
    $region38: #{basic_block3d_forward.7} parent=5 // pred_check_branch
      %456 = sbr.rel (%p454) target = $region40
    $region39: #{basic_block3d_forward.7} parent=5 // pred_region
      %s457 = ssub.s32 %s9, 2
      // Predicated region
      $region41: #{basic_block3d_forward.7} parent=39 // pred_check
        %p458 = pneg %p106
      $region42: #{basic_block3d_forward.7} parent=39 // pred_check_branch
        %460 = sbr.rel (%p458) target = $region44
      $region43: #{basic_block3d_forward.7} parent=39 // pred_region
        %s461 = smul.u32 32, %s15
        %p462 = scmp.lt.s32.totalorder %s461, 159
        %s463 = scalar_select %p462, %s461, 159
        %s464 = smul.addr %s463, 8
        %s465 = scalar_lea.vmem %s3, %s464
      $region44: #{basic_block3d_forward.7} parent=39 // pred_fallthru
        _
    $region40: #{basic_block3d_forward.7} parent=5 // pred_fallthru
      _
  $region6: #{basic_block3d_forward.7} parent=0 // loop_footer
    %s13 = sadd.s32 1, %s9
  $region7: #{basic_block3d_forward.7} parent=0 // loop_footer_branch
    %8 = sbr.rel target = $region3
  $region8: #{basic_block3d_forward.7} parent=0 // loop_exit
    _

// kernel: basic_block3d_forward.4
$region0: #{basic_block3d_forward.4}
  #allocation0 [shape = 'u32[]', space=smem, size = 0x4, offset = 0x4, fixed_abs, tag = 'smem constant byte address 0x4 - core index']
  #allocation1 [shape = 'u32[144,128]{1,0:T(1,128)}', space=vmem, size = 0x12000, scoped, tag = 'internal scratch']
  #allocation2 [shape = 'bf16[640,128]{1,0:T(16,128)(2,1)}', space=vmem, size = 0x28000, scoped, tag = 'scratch operand']
  %s0 = inlined_call_operand.vmem [shape: bf16[2,10,110,4], index: 0, kind: input, shape index: {}]
  %s1 = inlined_call_operand.vmem [shape: bf16[128,128], index: 1, kind: input, shape index: {}]
  %s2 = inlined_call_operand.vmem [shape: f32[640,1], index: 2, kind: input, shape index: {}]
  %s3 = inlined_call_operand.vmem [shape: bf16[1280,128], index: 3, kind: output, shape index: {0}]
  %s4 = inlined_call_operand.vmem [shape: f32[1,128], index: 4, kind: output, shape index: {1}]
  %s5 = inlined_call_operand.vmem [shape: f32[1,128], index: 5, kind: output, shape index: {2}]
  %6 = xla_tuple %s3, %s4, %s5
  %s7 = sld [smem:[#allocation0]]
  $region72: #{basic_block3d_forward.4} parent=0
    _
  %s9 = ssub.s32 1, %s7
  %s10 = scalar_select 0, %s9, %s7
  loop: start=0, step=1, limit=4
  $region2: #{basic_block3d_forward.4} parent=0 // loop_pre_header
    _
  $region3: #{basic_block3d_forward.4} parent=0 // loop_header
    %s12 = sphi 0, %s16
    %p13 = scmp.ge.s32.totalorder %s12, 4
    %s22 = sphi 0, %s24
    %s25 = sphi 0, %s22
    %s26 = sphi 0, %s25
    %s42 = sphi 0, %s26
    %s46 = sphi 0, %s46
    %s48 = sphi 0, %s46
    %s49 = sphi 0, %s48
    %s63 = sphi 0, %s49
    %s67 = sphi 0, %s67
    %s69 = sphi 0, %s67
    %s70 = sphi 0, %s69
    %s84 = sphi 0, %s70
    %s90 = sphi 0, %s92
    %s93 = sphi 0, %s90
    %s94 = sphi 0, %s93
    %s110 = sphi 0, %s94
    %s114 = sphi 0, %s114
    %s116 = sphi 0, %s114
    %s117 = sphi 0, %s116
    %s131 = sphi 0, %s117
    %s135 = sphi 0, %s135
    %s137 = sphi 0, %s135
    %s138 = sphi 0, %s137
    %s152 = sphi 0, %s138
  $region4: #{basic_block3d_forward.4} parent=0 // loop_header_branch
    %15 = sbr.rel (%p13) target = $region8
  $region5: #{basic_block3d_forward.4} parent=0 // loop_body
    %s17 = ssub.s32 %s12, 1
    %s18 = ssub.s32 %s12, 2
    %s19 = sadd.s32 %s12, 1
    %s20 = ssub.s32 %s12, %s19
    %p21 = scmp.eq.s32.totalorder %s20, 0
    %s23 = sadd.s32 %s22, 1
    %s24 = scalar_select %p21, %s22, %s23
    %p27 = pneg %p21
    %p28 = scmp.eq.s32.totalorder %s12, 1
    %p29 = por %p27, %p28
    %p30 = scmp.ne.s32.totalorder %s22, %s25
    %p31 = scmp.eq.s32.totalorder %s12, 0
    %p32 = por %p30, %p31
    %p33 = scmp.ne.s32.totalorder %s22, %s25
    %p34 = scmp.eq.s32.totalorder %s17, 1
    %p35 = por %p33, %p34
    %p36 = scmp.ne.s32.totalorder %s25, %s26
    %p37 = scmp.eq.s32.totalorder %s17, 0
    %p38 = por %p36, %p37
    %p39 = scmp.ne.s32.totalorder %s25, %s26
    %p40 = scmp.eq.s32.totalorder %s18, 1
    %p41 = por %p39, %p40
    %p43 = scmp.ne.s32.totalorder %s26, %s42
    %p44 = scmp.eq.s32.totalorder %s18, 0
    %p45 = por %p43, %p44
    %s47 = sadd.s32 %s46, 1
    %p50 = scmp.eq.s32.totalorder %s12, 1
    %p51 = scmp.ne.s32.totalorder %s46, %s48
    %p52 = scmp.eq.s32.totalorder %s12, 0
    %p53 = por %p51, %p52
    %p54 = scmp.ne.s32.totalorder %s46, %s48
    %p55 = scmp.eq.s32.totalorder %s17, 1
    %p56 = por %p54, %p55
    %p57 = scmp.ne.s32.totalorder %s48, %s49
    %p58 = scmp.eq.s32.totalorder %s17, 0
    %p59 = por %p57, %p58
    %p60 = scmp.ne.s32.totalorder %s48, %s49
    %p61 = scmp.eq.s32.totalorder %s18, 1
    %p62 = por %p60, %p61
    %p64 = scmp.ne.s32.totalorder %s49, %s63
    %p65 = scmp.eq.s32.totalorder %s18, 0
    %p66 = por %p64, %p65
    %s68 = sadd.s32 %s67, 1
    %p71 = scmp.eq.s32.totalorder %s12, 1
    %p72 = scmp.ne.s32.totalorder %s67, %s69
    %p73 = scmp.eq.s32.totalorder %s12, 0
    %p74 = por %p72, %p73
    %p75 = scmp.ne.s32.totalorder %s67, %s69
    %p76 = scmp.eq.s32.totalorder %s17, 1
    %p77 = por %p75, %p76
    %p78 = scmp.ne.s32.totalorder %s69, %s70
    %p79 = scmp.eq.s32.totalorder %s17, 0
    %p80 = por %p78, %p79
    %p81 = scmp.ne.s32.totalorder %s69, %s70
    %p82 = scmp.eq.s32.totalorder %s18, 1
    %p83 = por %p81, %p82
    %p85 = scmp.ne.s32.totalorder %s70, %s84
    %p86 = scmp.eq.s32.totalorder %s18, 0
    %p87 = por %p85, %p86
    %s88 = ssub.s32 %s12, %s19
    %p89 = scmp.eq.s32.totalorder %s88, 0
    %s91 = sadd.s32 %s90, 1
    %s92 = scalar_select %p89, %s90, %s91
    %p95 = pneg %p89
    %p96 = scmp.eq.s32.totalorder %s12, 1
    %p97 = por %p95, %p96
    %p98 = scmp.ne.s32.totalorder %s90, %s93
    %p99 = scmp.eq.s32.totalorder %s12, 0
    %p100 = por %p98, %p99
    %p101 = scmp.ne.s32.totalorder %s90, %s93
    %p102 = scmp.eq.s32.totalorder %s17, 1
    %p103 = por %p101, %p102
    %p104 = scmp.ne.s32.totalorder %s93, %s94
    %p105 = scmp.eq.s32.totalorder %s17, 0
    %p106 = por %p104, %p105
    %p107 = scmp.ne.s32.totalorder %s93, %s94
    %p108 = scmp.eq.s32.totalorder %s18, 1
    %p109 = por %p107, %p108
    %p111 = scmp.ne.s32.totalorder %s94, %s110
    %p112 = scmp.eq.s32.totalorder %s18, 0
    %p113 = por %p111, %p112
    %s115 = sadd.s32 %s114, 1
    %p118 = scmp.eq.s32.totalorder %s12, 1
    %p119 = scmp.ne.s32.totalorder %s114, %s116
    %p120 = scmp.eq.s32.totalorder %s12, 0
    %p121 = por %p119, %p120
    %p122 = scmp.ne.s32.totalorder %s114, %s116
    %p123 = scmp.eq.s32.totalorder %s17, 1
    %p124 = por %p122, %p123
    %p125 = scmp.ne.s32.totalorder %s116, %s117
    %p126 = scmp.eq.s32.totalorder %s17, 0
    %p127 = por %p125, %p126
    %p128 = scmp.ne.s32.totalorder %s116, %s117
    %p129 = scmp.eq.s32.totalorder %s18, 1
    %p130 = por %p128, %p129
    %p132 = scmp.ne.s32.totalorder %s117, %s131
    %p133 = scmp.eq.s32.totalorder %s18, 0
    %p134 = por %p132, %p133
    %s136 = sadd.s32 %s135, 1
    %p139 = scmp.eq.s32.totalorder %s12, 1
    %p140 = scmp.ne.s32.totalorder %s135, %s137
    %p141 = scmp.eq.s32.totalorder %s12, 0
    %p142 = por %p140, %p141
    %p143 = scmp.ne.s32.totalorder %s135, %s137
    %p144 = scmp.eq.s32.totalorder %s17, 1
    %p145 = por %p143, %p144
    %p146 = scmp.ne.s32.totalorder %s137, %s138
    %p147 = scmp.eq.s32.totalorder %s17, 0
    %p148 = por %p146, %p147
    %p149 = scmp.ne.s32.totalorder %s137, %s138
    %p150 = scmp.eq.s32.totalorder %s18, 1
    %p151 = por %p149, %p150
    %p153 = scmp.ne.s32.totalorder %s138, %s152
    %p154 = scmp.eq.s32.totalorder %s18, 0
    %p155 = por %p153, %p154
    %p156 = scmp.le.s32.totalorder 1, %s12
    %p157 = scmp.lt.s32.totalorder %s12, 3
    %p158 = pnand %p156, %p157
    %p159 = pneg %p158
    // Predicated region
    $region9: #{basic_block3d_forward.4} parent=5 // pred_check
      _
    $region10: #{basic_block3d_forward.4} parent=5 // pred_check_branch
      %161 = sbr.rel (%p158) target = $region12
    $region11: #{basic_block3d_forward.4} parent=5 // pred_region
      %s162 = ssub.s32 %s12, 1
      // Predicated region
      $region13: #{basic_block3d_forward.4} parent=11 // pred_check
        %p163 = pneg %p59
      $region14: #{basic_block3d_forward.4} parent=11 // pred_check_branch
        %165 = sbr.rel (%p163) target = $region16
      $region15: #{basic_block3d_forward.4} parent=11 // pred_region
        _
      $region16: #{basic_block3d_forward.4} parent=11 // pred_fallthru
        _
      // Predicated region
      $region17: #{basic_block3d_forward.4} parent=11 // pred_check
        %p166 = pneg %p80
      $region18: #{basic_block3d_forward.4} parent=11 // pred_check_branch
        %168 = sbr.rel (%p166) target = $region20
      $region19: #{basic_block3d_forward.4} parent=11 // pred_region
        _
      $region20: #{basic_block3d_forward.4} parent=11 // pred_fallthru
        _
    $region12: #{basic_block3d_forward.4} parent=5 // pred_fallthru
      _
    %p169 = scmp.lt.s32.totalorder %s12, 2
    // Predicated region
    $region21: #{basic_block3d_forward.4} parent=5 // pred_check
      %p170 = pneg %p169
    $region22: #{basic_block3d_forward.4} parent=5 // pred_check_branch
      %172 = sbr.rel (%p170) target = $region24
    $region23: #{basic_block3d_forward.4} parent=5 // pred_region
      // Predicated region
      $region25: #{basic_block3d_forward.4} parent=23 // pred_check
        %p173 = pneg %p32
      $region26: #{basic_block3d_forward.4} parent=23 // pred_check_branch
        %175 = sbr.rel (%p173) target = $region28
      $region27: #{basic_block3d_forward.4} parent=23 // pred_region
        %p176 = scmp.lt.s32.totalorder %s12, 1
        %s177 = scalar_select %p176, %s12, 1
        %s178 = smul.addr %s177, 140
        %s179 = smul.addr %s178, 4
        %s180 = scalar_lea.vmem %s0, %s179
      $region28: #{basic_block3d_forward.4} parent=23 // pred_fallthru
        _
    $region24: #{basic_block3d_forward.4} parent=5 // pred_fallthru
      _
    %p181 = scmp.le.s32.totalorder 1, %s12
    %p182 = scmp.lt.s32.totalorder %s12, 3
    %p183 = pnand %p181, %p182
    %p184 = pneg %p183
    // Predicated region
    $region29: #{basic_block3d_forward.4} parent=5 // pred_check
      _
    $region30: #{basic_block3d_forward.4} parent=5 // pred_check_branch
      %186 = sbr.rel (%p183) target = $region32
    $region31: #{basic_block3d_forward.4} parent=5 // pred_region
      %s187 = ssub.s32 %s12, 1
      %p188 = scmp.lt.s32.totalorder %s17, 1
      %s189 = scalar_select %p188, %s17, 1
      %s190 = smul.addr %s189, 140
      %s191 = smul.addr %s190, 4
      %s192 = scalar_lea.vmem %s0, %s191
      %p193 = pneg %p38
      %p194 = pneg %p35
      %p195 = pneg %p59
      %p196 = pneg %p56
      %p197 = pneg %p80
      %p198 = pneg %p77
      %p199 = pneg %p106
      %p200 = pneg %p103
      %s201 = smul.u32 80, %s17
      %p202 = scmp.lt.s32.totalorder %s201, 159
      %s203 = scalar_select %p202, %s201, 159
      %s204 = smul.addr %s203, 4
      %s205 = scalar_lea.vmem %s3, %s204
      %p206 = pneg %p127
      %p207 = pneg %p124
      %p208 = pneg %p148
      %p209 = pneg %p145
      %p210 = scmp.lt.s32.totalorder %s17, 1
      %s211 = scalar_select %p210, %s17, 1
      %s212 = smul.addr %s211, 140
      %s213 = smul.addr %s212, 4
      %s214 = scalar_lea.vmem %s0, %s213
      %s215 = smul.u32 80, %s17
      %p216 = scmp.lt.s32.totalorder %s215, 159
      %s217 = scalar_select %p216, %s215, 159
      %s218 = smul.addr %s217, 4
      %s219 = scalar_lea.vmem %s3, %s218
      %s220 = smul.u32 80, %s17
      %p222 = scmp.eq.s32.totalorder %s17, 0
      // Predicated region
      $region33: #{basic_block3d_forward.4} parent=31 // pred_check
        %p223 = pneg %p222
      $region34: #{basic_block3d_forward.4} parent=31 // pred_check_branch
        %225 = sbr.rel (%p223) target = $region36
      $region35: #{basic_block3d_forward.4} parent=31 // pred_region
        %226 = vst [vmem:[%s4] sm:$0x1] 0.0
        %227 = vst [vmem:[%s5] sm:$0x1] 0.0
        %228 = vst [vmem:[#allocation2] sm:$0xff] 0
        %229 = vst [vmem:[#allocation2 + $0x8] sm:$0xff] 0
        %230 = vst [vmem:[#allocation2 + $0x10] sm:$0xff] 0
        %231 = vst [vmem:[#allocation2 + $0x18] sm:$0xff] 0
        %232 = vst [vmem:[#allocation2 + $0x20] sm:$0xff] 0
        %233 = vst [vmem:[#allocation2 + $0x28] sm:$0xff] 0
        %234 = vst [vmem:[#allocation2 + $0x30] sm:$0xff] 0
        %235 = vst [vmem:[#allocation2 + $0x38] sm:$0xff] 0
        %236 = vst [vmem:[#allocation2 + $0x40] sm:$0xff] 0
        %237 = vst [vmem:[#allocation2 + $0x48] sm:$0xff] 0
        %238 = vst [vmem:[#allocation2 + $0x50] sm:$0xff] 0
        %239 = vst [vmem:[#allocation2 + $0x58] sm:$0xff] 0
        %240 = vst [vmem:[#allocation2 + $0x60] sm:$0xff] 0
        %241 = vst [vmem:[#allocation2 + $0x68] sm:$0xff] 0
        %242 = vst [vmem:[#allocation2 + $0x70] sm:$0xff] 0
        %243 = vst [vmem:[#allocation2 + $0x78] sm:$0xff] 0
        %244 = vst [vmem:[#allocation2 + $0x80] sm:$0xff] 0
        %245 = vst [vmem:[#allocation2 + $0x88] sm:$0xff] 0
        %246 = vst [vmem:[#allocation2 + $0x90] sm:$0xff] 0
        %247 = vst [vmem:[#allocation2 + $0x98] sm:$0xff] 0
        %248 = vst [vmem:[#allocation2 + $0xa0] sm:$0xff] 0
        %249 = vst [vmem:[#allocation2 + $0xa8] sm:$0xff] 0
        %250 = vst [vmem:[#allocation2 + $0xb0] sm:$0xff] 0
        %251 = vst [vmem:[#allocation2 + $0xb8] sm:$0xff] 0
        %252 = vst [vmem:[#allocation2 + $0xc0] sm:$0xff] 0
        %253 = vst [vmem:[#allocation2 + $0xc8] sm:$0xff] 0
        %254 = vst [vmem:[#allocation2 + $0xd0] sm:$0xff] 0
        %255 = vst [vmem:[#allocation2 + $0xd8] sm:$0xff] 0
        %256 = vst [vmem:[#allocation2 + $0xe0] sm:$0xff] 0
        %257 = vst [vmem:[#allocation2 + $0xe8] sm:$0xff] 0
        %258 = vst [vmem:[#allocation2 + $0xf0] sm:$0xff] 0
        %259 = vst [vmem:[#allocation2 + $0xf8] sm:$0xff] 0
        %260 = vst [vmem:[#allocation2 + $0x100] sm:$0xff] 0
        %261 = vst [vmem:[#allocation2 + $0x108] sm:$0xff] 0
        %262 = vst [vmem:[#allocation2 + $0x110] sm:$0xff] 0
        %263 = vst [vmem:[#allocation2 + $0x118] sm:$0xff] 0
        %264 = vst [vmem:[#allocation2 + $0x120] sm:$0xff] 0
        %265 = vst [vmem:[#allocation2 + $0x128] sm:$0xff] 0
        %266 = vst [vmem:[#allocation2 + $0x130] sm:$0xff] 0
        %267 = vst [vmem:[#allocation2 + $0x138] sm:$0xff] 0
      $region36: #{basic_block3d_forward.4} parent=31 // pred_fallthru
        _
      loop: start=0, step=1, limit=8
      $region37: #{basic_block3d_forward.4} parent=31 // loop_pre_header
        _
      $region38: #{basic_block3d_forward.4} parent=31 // loop_header
        %s269 = sphi 0, %s273
        %p270 = scmp.ge.s32.totalorder %s269, 8
      $region39: #{basic_block3d_forward.4} parent=31 // loop_header_branch
        %272 = sbr.rel (%p270) target = $region43
      $region40: #{basic_block3d_forward.4} parent=31 // loop_body
        %s274 = smul.u32 %s269, 80
        %s275 = smul.u32 %s269, 14
        %s276 = smul.addr %s275, 4
        %s277 = scalar_lea.vmem %s214, %s276
        %v278 = vld [vmem:[%s277] sm:$0xf]
        %v279 = vld [vmem:[%s277 + $0x4] sm:$0xf]
        %v280 = vld [vmem:[%s277 + $0x8] sm:$0xf]
        %v281 = vld [vmem:[%s277 + $0xc] sm:$0xf]
        %v282 = vld [vmem:[%s277 + $0x10] sm:$0xf]
        %v283 = vld [vmem:[%s277 + $0x14] sm:$0xf]
        %v284 = vld [vmem:[%s277 + $0x18] sm:$0xf]
        %v285 = vld [vmem:[%s277 + $0x1c] sm:$0xf]
        %v286 = vld [vmem:[%s277 + $0x20] sm:$0xf]
        %v287 = vld [vmem:[%s277 + $0x24] sm:$0xf]
        %v298 = vunpack.c.l.b16 %v278
        %v299 = vunpack.c.l.b16 %v279
        %v300 = vunpack.c.l.b16 %v280
        %v301 = vunpack.c.l.b16 %v281
        %v302 = vunpack.c.l.b16 %v282
        %v303 = vunpack.c.l.b16 %v283
        %v304 = vunpack.c.l.b16 %v284
        %v305 = vunpack.c.l.b16 %v285
        %v306 = vunpack.c.l.b16 %v286
        %v307 = vunpack.c.l.b16 %v287
        %v308 = vpack.c.b16 %v299, %v298
        %v309 = vpack.c.b16 %v301, %v300
        %v310 = vpack.c.b16 %v303, %v302
        %v311 = vpack.c.b16 %v305, %v304
        %v312 = vpack.c.b16 %v307, %v306
        %s318 = sshra.s32 %s274, 4
        %s319 = sand.u32 %s274, 15
        %s320 = smul.addr %s318, 8
        %s321 = scalar_lea.vmem [#allocation2], %s320
        %vm322 = vcmask 31744
        %323 = vst.msk [vmem:[%s321] sm:$0xff] %vm322, %v308
        %324 = vst.msk [vmem:[%s321 + $0x8] sm:$0xff] %vm322, %v309
        %325 = vst.msk [vmem:[%s321 + $0x10] sm:$0xff] %vm322, %v310
        %326 = vst.msk [vmem:[%s321 + $0x18] sm:$0xff] %vm322, %v311
        %327 = vst.msk [vmem:[%s321 + $0x20] sm:$0xff] %vm322, %v312
        %v328 = vld [vmem:[%s277] sm:$0xf]
        %v329 = vld [vmem:[%s277 + $0x4] sm:$0xf]
        %v330 = vld [vmem:[%s277 + $0x8] sm:$0xf]
        %v331 = vld [vmem:[%s277 + $0xc] sm:$0xf]
        %v332 = vld [vmem:[%s277 + $0x10] sm:$0xf]
        %v333 = vld [vmem:[%s277 + $0x14] sm:$0xf]
        %v334 = vld [vmem:[%s277 + $0x18] sm:$0xf]
        %v335 = vld [vmem:[%s277 + $0x1c] sm:$0xf]
        %v336 = vld [vmem:[%s277 + $0x20] sm:$0xf]
        %v337 = vld [vmem:[%s277 + $0x24] sm:$0xf]
        %v338 = vld [vmem:[%s277 + $0x28] sm:$0x1]
        %v350 = vunpack.c.l.b16 %v328
        %v351 = vunpack.c.l.b16 %v329
        %v352 = vunpack.c.l.b16 %v330
        %v353 = vunpack.c.l.b16 %v331
        %v354 = vunpack.c.l.b16 %v332
        %v355 = vunpack.c.l.b16 %v333
        %v356 = vunpack.c.l.b16 %v334
        %v357 = vunpack.c.l.b16 %v335
        %v358 = vunpack.c.l.b16 %v336
        %v359 = vunpack.c.l.b16 %v337
        %v360 = vunpack.c.l.b16 %v338
        %v361 = vpack.c.b16 %v351, %v350
        %v362 = vpack.c.b16 %v353, %v352
        %v363 = vpack.c.b16 %v355, %v354
        %v364 = vpack.c.b16 %v357, %v356
        %v365 = vpack.c.b16 %v359, %v358
        %v366 = vpack.c.b16 %v360, %v360
        %vm367 = vsmask.f32 7424
        %v369 = vshrl.u32 %v361, 16
        %v371 = vshll.u32 %v361, 16
        %v373 = vrot.slane %v371, 1
        %v374 = vor.u32 %v369, %v373
        %v376 = vshll.u32 %v362, 16
        %v378 = vrot.slane %v376, 1
        %v379 = vsel %vm367, %v374, %v378
        %v380 = vshrl.u32 %v362, 16
        %v382 = vor.u32 %v380, %v378
        %v384 = vshll.u32 %v363, 16
        %v386 = vrot.slane %v384, 1
        %v387 = vsel %vm367, %v382, %v386
        %v388 = vshrl.u32 %v363, 16
        %v390 = vor.u32 %v388, %v386
        %v392 = vshll.u32 %v364, 16
        %v394 = vrot.slane %v392, 1
        %v395 = vsel %vm367, %v390, %v394
        %v396 = vshrl.u32 %v364, 16
        %v398 = vor.u32 %v396, %v394
        %v400 = vshll.u32 %v365, 16
        %v402 = vrot.slane %v400, 1
        %v403 = vsel %vm367, %v398, %v402
        %v404 = vshrl.u32 %v365, 16
        %v406 = vor.u32 %v404, %v402
        %v408 = vshll.u32 %v366, 16
        %v410 = vrot.slane %v408, 1
        %v411 = vsel %vm367, %v406, %v410
        %412 = vrot.lane.b32.xlu0 %v379, 4
        %v413 = vpop.permute.xlu0 %412
        %414 = vrot.lane.b32.xlu0 %v387, 4
        %v415 = vpop.permute.xlu0 %414
        %416 = vrot.lane.b32.xlu0 %v395, 4
        %v417 = vpop.permute.xlu0 %416
        %418 = vrot.lane.b32.xlu0 %v403, 4
        %v419 = vpop.permute.xlu0 %418
        %420 = vrot.lane.b32.xlu0 %v411, 4
        %v421 = vpop.permute.xlu0 %420
        %vm427 = vcmask 64544
        %428 = vst.msk [vmem:[%s321] sm:$0xff] %vm427, %v413
        %429 = vst.msk [vmem:[%s321 + $0x8] sm:$0xff] %vm427, %v415
        %430 = vst.msk [vmem:[%s321 + $0x10] sm:$0xff] %vm427, %v417
        %431 = vst.msk [vmem:[%s321 + $0x18] sm:$0xff] %vm427, %v419
        %432 = vst.msk [vmem:[%s321 + $0x20] sm:$0xff] %vm427, %v421
        %v433 = vld [vmem:[%s277] sm:$0xe]
        %v434 = vld [vmem:[%s277 + $0x4] sm:$0xf]
        %v435 = vld [vmem:[%s277 + $0x8] sm:$0xf]
        %v436 = vld [vmem:[%s277 + $0xc] sm:$0xf]
        %v437 = vld [vmem:[%s277 + $0x10] sm:$0xf]
        %v438 = vld [vmem:[%s277 + $0x14] sm:$0xf]
        %v439 = vld [vmem:[%s277 + $0x18] sm:$0xf]
        %v440 = vld [vmem:[%s277 + $0x1c] sm:$0xf]
        %v441 = vld [vmem:[%s277 + $0x20] sm:$0xf]
        %v442 = vld [vmem:[%s277 + $0x24] sm:$0xf]
        %v443 = vld [vmem:[%s277 + $0x28] sm:$0x1]
        %v455 = vunpack.c.l.b16 %v433
        %v456 = vunpack.c.l.b16 %v434
        %v457 = vunpack.c.l.b16 %v435
        %v458 = vunpack.c.l.b16 %v436
        %v459 = vunpack.c.l.b16 %v437
        %v460 = vunpack.c.l.b16 %v438
        %v461 = vunpack.c.l.b16 %v439
        %v462 = vunpack.c.l.b16 %v440
        %v463 = vunpack.c.l.b16 %v441
        %v464 = vunpack.c.l.b16 %v442
        %v465 = vunpack.c.l.b16 %v443
        %v466 = vpack.c.b16 %v456, %v455
        %v467 = vpack.c.b16 %v458, %v457
        %v468 = vpack.c.b16 %v460, %v459
        %v469 = vpack.c.b16 %v462, %v461
        %v470 = vpack.c.b16 %v464, %v463
        %v471 = vpack.c.b16 %v465, %v465
        %vm472 = vcmask 1046528
        %v473 = vrot.slane %v466, 1
        %v474 = vrot.slane %v467, 1
        %v475 = vsel %vm472, %v473, %v474
        %v476 = vrot.slane %v468, 1
        %v477 = vsel %vm472, %v474, %v476
        %v478 = vrot.slane %v469, 1
        %v479 = vsel %vm472, %v476, %v478
        %v480 = vrot.slane %v470, 1
        %v481 = vsel %vm472, %v478, %v480
        %v482 = vrot.slane %v471, 1
        %v483 = vsel %vm472, %v480, %v482
        %484 = vrot.lane.b32.xlu0 %v475, 8
        %v485 = vpop.permute.xlu0 %484
        %486 = vrot.lane.b32.xlu0 %v477, 8
        %v487 = vpop.permute.xlu0 %486
        %488 = vrot.lane.b32.xlu0 %v479, 8
        %v489 = vpop.permute.xlu0 %488
        %490 = vrot.lane.b32.xlu0 %v481, 8
        %v491 = vpop.permute.xlu0 %490
        %492 = vrot.lane.b32.xlu0 %v483, 8
        %v493 = vpop.permute.xlu0 %492
        %vm499 = vcmask 97344
        %500 = vst.msk [vmem:[%s321] sm:$0xff] %vm499, %v485
        %501 = vst.msk [vmem:[%s321 + $0x8] sm:$0xff] %vm499, %v487
        %502 = vst.msk [vmem:[%s321 + $0x10] sm:$0xff] %vm499, %v489
        %503 = vst.msk [vmem:[%s321 + $0x18] sm:$0xff] %vm499, %v491
        %504 = vst.msk [vmem:[%s321 + $0x20] sm:$0xff] %vm499, %v493
        %v505 = vld [vmem:[%s277 + $0x4] sm:$0xe]
        %v506 = vld [vmem:[%s277 + $0x8] sm:$0xf]
        %v507 = vld [vmem:[%s277 + $0xc] sm:$0xf]
        %v508 = vld [vmem:[%s277 + $0x10] sm:$0xf]
        %v509 = vld [vmem:[%s277 + $0x14] sm:$0xf]
        %v510 = vld [vmem:[%s277 + $0x18] sm:$0xf]
        %v511 = vld [vmem:[%s277 + $0x1c] sm:$0xf]
        %v512 = vld [vmem:[%s277 + $0x20] sm:$0xf]
        %v513 = vld [vmem:[%s277 + $0x24] sm:$0xf]
        %v514 = vld [vmem:[%s277 + $0x28] sm:$0xf]
        %v515 = vld [vmem:[%s277 + $0x2c] sm:$0x1]
        %v527 = vunpack.c.l.b16 %v505
        %v528 = vunpack.c.l.b16 %v506
        %v529 = vunpack.c.l.b16 %v507
        %v530 = vunpack.c.l.b16 %v508
        %v531 = vunpack.c.l.b16 %v509
        %v532 = vunpack.c.l.b16 %v510
        %v533 = vunpack.c.l.b16 %v511
        %v534 = vunpack.c.l.b16 %v512
        %v535 = vunpack.c.l.b16 %v513
        %v536 = vunpack.c.l.b16 %v514
        %v537 = vunpack.c.l.b16 %v515
        %v538 = vpack.c.b16 %v528, %v527
        %v539 = vpack.c.b16 %v530, %v529
        %v540 = vpack.c.b16 %v532, %v531
        %v541 = vpack.c.b16 %v534, %v533
        %v542 = vpack.c.b16 %v536, %v535
        %v543 = vpack.c.b16 %v537, %v537
        %v544 = vrot.slane %v538, 1
        %v545 = vrot.slane %v539, 1
        %v546 = vsel %vm472, %v544, %v545
        %v547 = vrot.slane %v540, 1
        %v548 = vsel %vm472, %v545, %v547
        %v549 = vrot.slane %v541, 1
        %v550 = vsel %vm472, %v547, %v549
        %v551 = vrot.slane %v542, 1
        %v552 = vsel %vm472, %v549, %v551
        %v553 = vrot.slane %v543, 1
        %v554 = vsel %vm472, %v551, %v553
        %555 = vrot.lane.b32.xlu0 %v546, 12
        %v556 = vpop.permute.xlu0 %555
        %557 = vrot.lane.b32.xlu0 %v548, 12
        %v558 = vpop.permute.xlu0 %557
        %559 = vrot.lane.b32.xlu0 %v550, 12
        %v560 = vpop.permute.xlu0 %559
        %561 = vrot.lane.b32.xlu0 %v552, 12
        %v562 = vpop.permute.xlu0 %561
        %563 = vrot.lane.b32.xlu0 %v554, 12
        %v564 = vpop.permute.xlu0 %563
        %vm570 = vcmask 130144
        %571 = vst.msk [vmem:[%s321] sm:$0xff] %vm570, %v556
        %572 = vst.msk [vmem:[%s321 + $0x8] sm:$0xff] %vm570, %v558
        %573 = vst.msk [vmem:[%s321 + $0x10] sm:$0xff] %vm570, %v560
        %574 = vst.msk [vmem:[%s321 + $0x18] sm:$0xff] %vm570, %v562
        %575 = vst.msk [vmem:[%s321 + $0x20] sm:$0xff] %vm570, %v564
        %v576 = vld [vmem:[%s277 + $0x4] sm:$0xe]
        %v577 = vld [vmem:[%s277 + $0x8] sm:$0xf]
        %v578 = vld [vmem:[%s277 + $0xc] sm:$0xf]
        %v579 = vld [vmem:[%s277 + $0x10] sm:$0xf]
        %v580 = vld [vmem:[%s277 + $0x14] sm:$0xf]
        %v581 = vld [vmem:[%s277 + $0x18] sm:$0xf]
        %v582 = vld [vmem:[%s277 + $0x1c] sm:$0xf]
        %v583 = vld [vmem:[%s277 + $0x20] sm:$0xf]
        %v584 = vld [vmem:[%s277 + $0x24] sm:$0xf]
        %v585 = vld [vmem:[%s277 + $0x28] sm:$0xf]
        %v586 = vld [vmem:[%s277 + $0x2c] sm:$0x3]
        %v598 = vunpack.c.l.b16 %v576
        %v599 = vunpack.c.l.b16 %v577
        %v600 = vunpack.c.l.b16 %v578
        %v601 = vunpack.c.l.b16 %v579
        %v602 = vunpack.c.l.b16 %v580
        %v603 = vunpack.c.l.b16 %v581
        %v604 = vunpack.c.l.b16 %v582
        %v605 = vunpack.c.l.b16 %v583
        %v606 = vunpack.c.l.b16 %v584
        %v607 = vunpack.c.l.b16 %v585
        %v608 = vunpack.c.l.b16 %v586
        %v609 = vpack.c.b16 %v599, %v598
        %v610 = vpack.c.b16 %v601, %v600
        %v611 = vpack.c.b16 %v603, %v602
        %v612 = vpack.c.b16 %v605, %v604
        %v613 = vpack.c.b16 %v607, %v606
        %v614 = vpack.c.b16 %v608, %v608
        %vm615 = vsmask.f32 6400
        %v617 = vshrl.u32 %v609, 16
        %v619 = vrot.slane %v617, 1
        %v620 = vshll.u32 %v609, 16
        %v622 = vrot.slane %v620, 2
        %v623 = vor.u32 %v619, %v622
        %v625 = vshrl.u32 %v610, 16
        %v627 = vrot.slane %v625, 1
        %v628 = vshll.u32 %v610, 16
        %v630 = vrot.slane %v628, 2
        %v631 = vor.u32 %v627, %v630
        %v632 = vsel %vm615, %v623, %v631
        %v634 = vshrl.u32 %v611, 16
        %v636 = vrot.slane %v634, 1
        %v637 = vshll.u32 %v611, 16
        %v639 = vrot.slane %v637, 2
        %v640 = vor.u32 %v636, %v639
        %v641 = vsel %vm615, %v631, %v640
        %v643 = vshrl.u32 %v612, 16
        %v645 = vrot.slane %v643, 1
        %v646 = vshll.u32 %v612, 16
        %v648 = vrot.slane %v646, 2
        %v649 = vor.u32 %v645, %v648
        %v650 = vsel %vm615, %v640, %v649
        %v652 = vshrl.u32 %v613, 16
        %v654 = vrot.slane %v652, 1
        %v655 = vshll.u32 %v613, 16
        %v657 = vrot.slane %v655, 2
        %v658 = vor.u32 %v654, %v657
        %v659 = vsel %vm615, %v649, %v658
        %v661 = vshrl.u32 %v614, 16
        %v663 = vrot.slane %v661, 1
        %v664 = vshll.u32 %v614, 16
        %v666 = vrot.slane %v664, 2
        %v667 = vor.u32 %v663, %v666
        %v668 = vsel %vm615, %v658, %v667
        %669 = vrot.lane.b32.xlu0 %v632, 16
        %v670 = vpop.permute.xlu0 %669
        %671 = vrot.lane.b32.xlu0 %v641, 16
        %v672 = vpop.permute.xlu0 %671
        %673 = vrot.lane.b32.xlu0 %v650, 16
        %v674 = vpop.permute.xlu0 %673
        %675 = vrot.lane.b32.xlu0 %v659, 16
        %v676 = vpop.permute.xlu0 %675
        %677 = vrot.lane.b32.xlu0 %v668, 16
        %v678 = vpop.permute.xlu0 %677
        %vm684 = vcmask 162944
        %685 = vst.msk [vmem:[%s321] sm:$0xff] %vm684, %v670
        %686 = vst.msk [vmem:[%s321 + $0x8] sm:$0xff] %vm684, %v672
        %687 = vst.msk [vmem:[%s321 + $0x10] sm:$0xff] %vm684, %v674
        %688 = vst.msk [vmem:[%s321 + $0x18] sm:$0xff] %vm684, %v676
        %689 = vst.msk [vmem:[%s321 + $0x20] sm:$0xff] %vm684, %v678
        %v690 = vld [vmem:[%s277 + $0x4] sm:$0xc]
        %v691 = vld [vmem:[%s277 + $0x8] sm:$0xf]
        %v692 = vld [vmem:[%s277 + $0xc] sm:$0xf]
        %v693 = vld [vmem:[%s277 + $0x10] sm:$0xf]
        %v694 = vld [vmem:[%s277 + $0x14] sm:$0xf]
        %v695 = vld [vmem:[%s277 + $0x18] sm:$0xf]
        %v696 = vld [vmem:[%s277 + $0x1c] sm:$0xf]
        %v697 = vld [vmem:[%s277 + $0x20] sm:$0xf]
        %v698 = vld [vmem:[%s277 + $0x24] sm:$0xf]
        %v699 = vld [vmem:[%s277 + $0x28] sm:$0xf]
        %v700 = vld [vmem:[%s277 + $0x2c] sm:$0x3]
        %v712 = vunpack.c.l.b16 %v690
        %v713 = vunpack.c.l.b16 %v691
        %v714 = vunpack.c.l.b16 %v692
        %v715 = vunpack.c.l.b16 %v693
        %v716 = vunpack.c.l.b16 %v694
        %v717 = vunpack.c.l.b16 %v695
        %v718 = vunpack.c.l.b16 %v696
        %v719 = vunpack.c.l.b16 %v697
        %v720 = vunpack.c.l.b16 %v698
        %v721 = vunpack.c.l.b16 %v699
        %v722 = vunpack.c.l.b16 %v700
        %v723 = vpack.c.b16 %v713, %v712
        %v724 = vpack.c.b16 %v715, %v714
        %v725 = vpack.c.b16 %v717, %v716
        %v726 = vpack.c.b16 %v719, %v718
        %v727 = vpack.c.b16 %v721, %v720
        %v728 = vpack.c.b16 %v722, %v722
        %vm729 = vcmask 1045504
        %v730 = vrot.slane %v723, 2
        %v731 = vrot.slane %v724, 2
        %v732 = vsel %vm729, %v730, %v731
        %v733 = vrot.slane %v725, 2
        %v734 = vsel %vm729, %v731, %v733
        %v735 = vrot.slane %v726, 2
        %v736 = vsel %vm729, %v733, %v735
        %v737 = vrot.slane %v727, 2
        %v738 = vsel %vm729, %v735, %v737
        %v739 = vrot.slane %v728, 2
        %v740 = vsel %vm729, %v737, %v739
        %741 = vrot.lane.b32.xlu0 %v732, 20
        %v742 = vpop.permute.xlu0 %741
        %743 = vrot.lane.b32.xlu0 %v734, 20
        %v744 = vpop.permute.xlu0 %743
        %745 = vrot.lane.b32.xlu0 %v736, 20
        %v746 = vpop.permute.xlu0 %745
        %747 = vrot.lane.b32.xlu0 %v738, 20
        %v748 = vpop.permute.xlu0 %747
        %749 = vrot.lane.b32.xlu0 %v740, 20
        %v750 = vpop.permute.xlu0 %749
        %vm756 = vcmask 195744
        %757 = vst.msk [vmem:[%s321] sm:$0xff] %vm756, %v742
        %758 = vst.msk [vmem:[%s321 + $0x8] sm:$0xff] %vm756, %v744
        %759 = vst.msk [vmem:[%s321 + $0x10] sm:$0xff] %vm756, %v746
        %760 = vst.msk [vmem:[%s321 + $0x18] sm:$0xff] %vm756, %v748
        %761 = vst.msk [vmem:[%s321 + $0x20] sm:$0xff] %vm756, %v750
        %v762 = vld [vmem:[%s277 + $0x8] sm:$0xc]
        %v763 = vld [vmem:[%s277 + $0xc] sm:$0xf]
        %v764 = vld [vmem:[%s277 + $0x10] sm:$0xf]
        %v765 = vld [vmem:[%s277 + $0x14] sm:$0xf]
        %v766 = vld [vmem:[%s277 + $0x18] sm:$0xf]
        %v767 = vld [vmem:[%s277 + $0x1c] sm:$0xf]
        %v768 = vld [vmem:[%s277 + $0x20] sm:$0xf]
        %v769 = vld [vmem:[%s277 + $0x24] sm:$0xf]
        %v770 = vld [vmem:[%s277 + $0x28] sm:$0xf]
        %v771 = vld [vmem:[%s277 + $0x2c] sm:$0xf]
        %v772 = vld [vmem:[%s277 + $0x30] sm:$0x3]
        %v784 = vunpack.c.l.b16 %v762
        %v785 = vunpack.c.l.b16 %v763
        %v786 = vunpack.c.l.b16 %v764
        %v787 = vunpack.c.l.b16 %v765
        %v788 = vunpack.c.l.b16 %v766
        %v789 = vunpack.c.l.b16 %v767
        %v790 = vunpack.c.l.b16 %v768
        %v791 = vunpack.c.l.b16 %v769
        %v792 = vunpack.c.l.b16 %v770
        %v793 = vunpack.c.l.b16 %v771
        %v794 = vunpack.c.l.b16 %v772
        %v795 = vpack.c.b16 %v785, %v784
        %v796 = vpack.c.b16 %v787, %v786
        %v797 = vpack.c.b16 %v789, %v788
        %v798 = vpack.c.b16 %v791, %v790
        %v799 = vpack.c.b16 %v793, %v792
        %v800 = vpack.c.b16 %v794, %v794
        %v801 = vrot.slane %v795, 2
        %v802 = vrot.slane %v796, 2
        %v803 = vsel %vm729, %v801, %v802
        %v804 = vrot.slane %v797, 2
        %v805 = vsel %vm729, %v802, %v804
        %v806 = vrot.slane %v798, 2
        %v807 = vsel %vm729, %v804, %v806
        %v808 = vrot.slane %v799, 2
        %v809 = vsel %vm729, %v806, %v808
        %v810 = vrot.slane %v800, 2
        %v811 = vsel %vm729, %v808, %v810
        %812 = vrot.lane.b32.xlu0 %v803, 24
        %v813 = vpop.permute.xlu0 %812
        %814 = vrot.lane.b32.xlu0 %v805, 24
        %v815 = vpop.permute.xlu0 %814
        %816 = vrot.lane.b32.xlu0 %v807, 24
        %v817 = vpop.permute.xlu0 %816
        %818 = vrot.lane.b32.xlu0 %v809, 24
        %v819 = vpop.permute.xlu0 %818
        %820 = vrot.lane.b32.xlu0 %v811, 24
        %v821 = vpop.permute.xlu0 %820
        %vm827 = vcmask 228544
        %828 = vst.msk [vmem:[%s321] sm:$0xff] %vm827, %v813
        %829 = vst.msk [vmem:[%s321 + $0x8] sm:$0xff] %vm827, %v815
        %830 = vst.msk [vmem:[%s321 + $0x10] sm:$0xff] %vm827, %v817
        %831 = vst.msk [vmem:[%s321 + $0x18] sm:$0xff] %vm827, %v819
        %832 = vst.msk [vmem:[%s321 + $0x20] sm:$0xff] %vm827, %v821
        %v833 = vld [vmem:[%s277 + $0x8] sm:$0xc]
        %v834 = vld [vmem:[%s277 + $0xc] sm:$0xf]
        %v835 = vld [vmem:[%s277 + $0x10] sm:$0xf]
        %v836 = vld [vmem:[%s277 + $0x14] sm:$0xf]
        %v837 = vld [vmem:[%s277 + $0x18] sm:$0xf]
        %v838 = vld [vmem:[%s277 + $0x1c] sm:$0xf]
        %v839 = vld [vmem:[%s277 + $0x20] sm:$0xf]
        %v840 = vld [vmem:[%s277 + $0x24] sm:$0xf]
        %v841 = vld [vmem:[%s277 + $0x28] sm:$0xf]
        %v842 = vld [vmem:[%s277 + $0x2c] sm:$0xf]
        %v843 = vld [vmem:[%s277 + $0x30] sm:$0x7]
        %v855 = vunpack.c.l.b16 %v833
        %v856 = vunpack.c.l.b16 %v834
        %v857 = vunpack.c.l.b16 %v835
        %v858 = vunpack.c.l.b16 %v836
        %v859 = vunpack.c.l.b16 %v837
        %v860 = vunpack.c.l.b16 %v838
        %v861 = vunpack.c.l.b16 %v839
        %v862 = vunpack.c.l.b16 %v840
        %v863 = vunpack.c.l.b16 %v841
        %v864 = vunpack.c.l.b16 %v842
        %v865 = vunpack.c.l.b16 %v843
        %v866 = vpack.c.b16 %v856, %v855
        %v867 = vpack.c.b16 %v858, %v857
        %v868 = vpack.c.b16 %v860, %v859
        %v869 = vpack.c.b16 %v862, %v861
        %v870 = vpack.c.b16 %v864, %v863
        %v871 = vpack.c.b16 %v865, %v865
        %vm872 = vsmask.f32 5376
        %v874 = vshrl.u32 %v866, 16
        %v876 = vrot.slane %v874, 2
        %v877 = vshll.u32 %v866, 16
        %v879 = vrot.slane %v877, 3
        %v880 = vor.u32 %v876, %v879
        %v882 = vshrl.u32 %v867, 16
        %v884 = vrot.slane %v882, 2
        %v885 = vshll.u32 %v867, 16
        %v887 = vrot.slane %v885, 3
        %v888 = vor.u32 %v884, %v887
        %v889 = vsel %vm872, %v880, %v888
        %v891 = vshrl.u32 %v868, 16
        %v893 = vrot.slane %v891, 2
        %v894 = vshll.u32 %v868, 16
        %v896 = vrot.slane %v894, 3
        %v897 = vor.u32 %v893, %v896
        %v898 = vsel %vm872, %v888, %v897
        %v900 = vshrl.u32 %v869, 16
        %v902 = vrot.slane %v900, 2
        %v903 = vshll.u32 %v869, 16
        %v905 = vrot.slane %v903, 3
        %v906 = vor.u32 %v902, %v905
        %v907 = vsel %vm872, %v897, %v906
        %v909 = vshrl.u32 %v870, 16
        %v911 = vrot.slane %v909, 2
        %v912 = vshll.u32 %v870, 16
        %v914 = vrot.slane %v912, 3
        %v915 = vor.u32 %v911, %v914
        %v916 = vsel %vm872, %v906, %v915
        %v918 = vshrl.u32 %v871, 16
        %v920 = vrot.slane %v918, 2
        %v921 = vshll.u32 %v871, 16
        %v923 = vrot.slane %v921, 3
        %v924 = vor.u32 %v920, %v923
        %v925 = vsel %vm872, %v915, %v924
        %926 = vrot.lane.b32.xlu0 %v889, 28
        %v927 = vpop.permute.xlu0 %926
        %928 = vrot.lane.b32.xlu0 %v898, 28
        %v929 = vpop.permute.xlu0 %928
        %930 = vrot.lane.b32.xlu0 %v907, 28
        %v931 = vpop.permute.xlu0 %930
        %932 = vrot.lane.b32.xlu0 %v916, 28
        %v933 = vpop.permute.xlu0 %932
        %934 = vrot.lane.b32.xlu0 %v925, 28
        %v935 = vpop.permute.xlu0 %934
        %vm941 = vcmask 261344
        %942 = vst.msk [vmem:[%s321] sm:$0xff] %vm941, %v927
        %943 = vst.msk [vmem:[%s321 + $0x8] sm:$0xff] %vm941, %v929
        %944 = vst.msk [vmem:[%s321 + $0x10] sm:$0xff] %vm941, %v931
        %945 = vst.msk [vmem:[%s321 + $0x18] sm:$0xff] %vm941, %v933
        %946 = vst.msk [vmem:[%s321 + $0x20] sm:$0xff] %vm941, %v935
        %v947 = vld [vmem:[%s277 + $0x8] sm:$0x8]
        %v948 = vld [vmem:[%s277 + $0xc] sm:$0xf]
        %v949 = vld [vmem:[%s277 + $0x10] sm:$0xf]
        %v950 = vld [vmem:[%s277 + $0x14] sm:$0xf]
        %v951 = vld [vmem:[%s277 + $0x18] sm:$0xf]
        %v952 = vld [vmem:[%s277 + $0x1c] sm:$0xf]
        %v953 = vld [vmem:[%s277 + $0x20] sm:$0xf]
        %v954 = vld [vmem:[%s277 + $0x24] sm:$0xf]
        %v955 = vld [vmem:[%s277 + $0x28] sm:$0xf]
        %v956 = vld [vmem:[%s277 + $0x2c] sm:$0xf]
        %v957 = vld [vmem:[%s277 + $0x30] sm:$0x7]
        %v969 = vunpack.c.l.b16 %v947
        %v970 = vunpack.c.l.b16 %v948
        %v971 = vunpack.c.l.b16 %v949
        %v972 = vunpack.c.l.b16 %v950
        %v973 = vunpack.c.l.b16 %v951
        %v974 = vunpack.c.l.b16 %v952
        %v975 = vunpack.c.l.b16 %v953
        %v976 = vunpack.c.l.b16 %v954
        %v977 = vunpack.c.l.b16 %v955
        %v978 = vunpack.c.l.b16 %v956
        %v979 = vunpack.c.l.b16 %v957
        %v980 = vpack.c.b16 %v970, %v969
        %v981 = vpack.c.b16 %v972, %v971
        %v982 = vpack.c.b16 %v974, %v973
        %v983 = vpack.c.b16 %v976, %v975
        %v984 = vpack.c.b16 %v978, %v977
        %v985 = vpack.c.b16 %v979, %v979
        %vm986 = vcmask 1044480
        %v987 = vrot.slane %v980, 3
        %v988 = vrot.slane %v981, 3
        %v989 = vsel %vm986, %v987, %v988
        %v990 = vrot.slane %v982, 3
        %v991 = vsel %vm986, %v988, %v990
        %v992 = vrot.slane %v983, 3
        %v993 = vsel %vm986, %v990, %v992
        %v994 = vrot.slane %v984, 3
        %v995 = vsel %vm986, %v992, %v994
        %v996 = vrot.slane %v985, 3
        %v997 = vsel %vm986, %v994, %v996
        %998 = vrot.lane.b32.xlu0 %v989, 32
        %v999 = vpop.permute.xlu0 %998
        %1000 = vrot.lane.b32.xlu0 %v991, 32
        %v1001 = vpop.permute.xlu0 %1000
        %1002 = vrot.lane.b32.xlu0 %v993, 32
        %v1003 = vpop.permute.xlu0 %1002
        %1004 = vrot.lane.b32.xlu0 %v995, 32
        %v1005 = vpop.permute.xlu0 %1004
        %1006 = vrot.lane.b32.xlu0 %v997, 32
        %v1007 = vpop.permute.xlu0 %1006
        %vm1013 = vcmask 294144
        %1014 = vst.msk [vmem:[%s321] sm:$0xff] %vm1013, %v999
        %1015 = vst.msk [vmem:[%s321 + $0x8] sm:$0xff] %vm1013, %v1001
        %1016 = vst.msk [vmem:[%s321 + $0x10] sm:$0xff] %vm1013, %v1003
        %1017 = vst.msk [vmem:[%s321 + $0x18] sm:$0xff] %vm1013, %v1005
        %1018 = vst.msk [vmem:[%s321 + $0x20] sm:$0xff] %vm1013, %v1007
        %s1019 = sadd.s32 %s269, 1
        %s1020 = smul.u32 %s1019, 14
        %s1021 = smul.addr %s1020, 4
        %s1022 = scalar_lea.vmem %s214, %s1021
        %v1023 = vld [vmem:[%s1022] sm:$0xf]
        %v1024 = vld [vmem:[%s1022 + $0x4] sm:$0xf]
        %v1025 = vld [vmem:[%s1022 + $0x8] sm:$0xf]
        %v1026 = vld [vmem:[%s1022 + $0xc] sm:$0xf]
        %v1027 = vld [vmem:[%s1022 + $0x10] sm:$0xf]
        %v1028 = vld [vmem:[%s1022 + $0x14] sm:$0xf]
        %v1029 = vld [vmem:[%s1022 + $0x18] sm:$0xf]
        %v1030 = vld [vmem:[%s1022 + $0x1c] sm:$0xf]
        %v1031 = vld [vmem:[%s1022 + $0x20] sm:$0xf]
        %v1032 = vld [vmem:[%s1022 + $0x24] sm:$0xf]
        %v1043 = vunpack.c.l.b16 %v1023
        %v1044 = vunpack.c.l.b16 %v1024
        %v1045 = vunpack.c.l.b16 %v1025
        %v1046 = vunpack.c.l.b16 %v1026
        %v1047 = vunpack.c.l.b16 %v1027
        %v1048 = vunpack.c.l.b16 %v1028
        %v1049 = vunpack.c.l.b16 %v1029
        %v1050 = vunpack.c.l.b16 %v1030
        %v1051 = vunpack.c.l.b16 %v1031
        %v1052 = vunpack.c.l.b16 %v1032
        %v1053 = vpack.c.b16 %v1044, %v1043
        %v1054 = vpack.c.b16 %v1046, %v1045
        %v1055 = vpack.c.b16 %v1048, %v1047
        %v1056 = vpack.c.b16 %v1050, %v1049
        %v1057 = vpack.c.b16 %v1052, %v1051
        %1058 = vrot.lane.b32.xlu0 %v1053, 36
        %v1059 = vpop.permute.xlu0 %1058
        %1060 = vrot.lane.b32.xlu0 %v1054, 36
        %v1061 = vpop.permute.xlu0 %1060
        %1062 = vrot.lane.b32.xlu0 %v1055, 36
        %v1063 = vpop.permute.xlu0 %1062
        %1064 = vrot.lane.b32.xlu0 %v1056, 36
        %v1065 = vpop.permute.xlu0 %1064
        %1066 = vrot.lane.b32.xlu0 %v1057, 36
        %v1067 = vpop.permute.xlu0 %1066
        %vm1073 = vcmask 326944
        %1074 = vst.msk [vmem:[%s321] sm:$0xff] %vm1073, %v1059
        %1075 = vst.msk [vmem:[%s321 + $0x8] sm:$0xff] %vm1073, %v1061
        %1076 = vst.msk [vmem:[%s321 + $0x10] sm:$0xff] %vm1073, %v1063
        %1077 = vst.msk [vmem:[%s321 + $0x18] sm:$0xff] %vm1073, %v1065
        %1078 = vst.msk [vmem:[%s321 + $0x20] sm:$0xff] %vm1073, %v1067
        %v1079 = vld [vmem:[%s1022] sm:$0xf]
        %v1080 = vld [vmem:[%s1022 + $0x4] sm:$0xf]
        %v1081 = vld [vmem:[%s1022 + $0x8] sm:$0xf]
        %v1082 = vld [vmem:[%s1022 + $0xc] sm:$0xf]
        %v1083 = vld [vmem:[%s1022 + $0x10] sm:$0xf]
        %v1084 = vld [vmem:[%s1022 + $0x14] sm:$0xf]
        %v1085 = vld [vmem:[%s1022 + $0x18] sm:$0xf]
        %v1086 = vld [vmem:[%s1022 + $0x1c] sm:$0xf]
        %v1087 = vld [vmem:[%s1022 + $0x20] sm:$0xf]
        %v1088 = vld [vmem:[%s1022 + $0x24] sm:$0xf]
        %v1089 = vld [vmem:[%s1022 + $0x28] sm:$0x1]
        %v1101 = vunpack.c.l.b16 %v1079
        %v1102 = vunpack.c.l.b16 %v1080
        %v1103 = vunpack.c.l.b16 %v1081
        %v1104 = vunpack.c.l.b16 %v1082
        %v1105 = vunpack.c.l.b16 %v1083
        %v1106 = vunpack.c.l.b16 %v1084
        %v1107 = vunpack.c.l.b16 %v1085
        %v1108 = vunpack.c.l.b16 %v1086
        %v1109 = vunpack.c.l.b16 %v1087
        %v1110 = vunpack.c.l.b16 %v1088
        %v1111 = vunpack.c.l.b16 %v1089
        %v1112 = vpack.c.b16 %v1102, %v1101
        %v1113 = vpack.c.b16 %v1104, %v1103
        %v1114 = vpack.c.b16 %v1106, %v1105
        %v1115 = vpack.c.b16 %v1108, %v1107
        %v1116 = vpack.c.b16 %v1110, %v1109
        %v1117 = vpack.c.b16 %v1111, %v1111
        %v1119 = vshrl.u32 %v1112, 16
        %v1121 = vshll.u32 %v1112, 16
        %v1123 = vrot.slane %v1121, 1
        %v1124 = vor.u32 %v1119, %v1123
        %v1126 = vshll.u32 %v1113, 16
        %v1128 = vrot.slane %v1126, 1
        %v1129 = vsel %vm367, %v1124, %v1128
        %v1130 = vshrl.u32 %v1113, 16
        %v1132 = vor.u32 %v1130, %v1128
        %v1134 = vshll.u32 %v1114, 16
        %v1136 = vrot.slane %v1134, 1
        %v1137 = vsel %vm367, %v1132, %v1136
        %v1138 = vshrl.u32 %v1114, 16
        %v1140 = vor.u32 %v1138, %v1136
        %v1142 = vshll.u32 %v1115, 16
        %v1144 = vrot.slane %v1142, 1
        %v1145 = vsel %vm367, %v1140, %v1144
        %v1146 = vshrl.u32 %v1115, 16
        %v1148 = vor.u32 %v1146, %v1144
        %v1150 = vshll.u32 %v1116, 16
        %v1152 = vrot.slane %v1150, 1
        %v1153 = vsel %vm367, %v1148, %v1152
        %v1154 = vshrl.u32 %v1116, 16
        %v1156 = vor.u32 %v1154, %v1152
        %v1158 = vshll.u32 %v1117, 16
        %v1160 = vrot.slane %v1158, 1
        %v1161 = vsel %vm367, %v1156, %v1160
        %1162 = vrot.lane.b32.xlu0 %v1129, 40
        %v1163 = vpop.permute.xlu0 %1162
        %1164 = vrot.lane.b32.xlu0 %v1137, 40
        %v1165 = vpop.permute.xlu0 %1164
        %1166 = vrot.lane.b32.xlu0 %v1145, 40
        %v1167 = vpop.permute.xlu0 %1166
        %1168 = vrot.lane.b32.xlu0 %v1153, 40
        %v1169 = vpop.permute.xlu0 %1168
        %1170 = vrot.lane.b32.xlu0 %v1161, 40
        %v1171 = vpop.permute.xlu0 %1170
        %vm1177 = vcmask 359744
        %1178 = vst.msk [vmem:[%s321] sm:$0xff] %vm1177, %v1163
        %1179 = vst.msk [vmem:[%s321 + $0x8] sm:$0xff] %vm1177, %v1165
        %1180 = vst.msk [vmem:[%s321 + $0x10] sm:$0xff] %vm1177, %v1167
        %1181 = vst.msk [vmem:[%s321 + $0x18] sm:$0xff] %vm1177, %v1169
        %1182 = vst.msk [vmem:[%s321 + $0x20] sm:$0xff] %vm1177, %v1171
        %v1183 = vld [vmem:[%s1022] sm:$0xe]
        %v1184 = vld [vmem:[%s1022 + $0x4] sm:$0xf]
        %v1185 = vld [vmem:[%s1022 + $0x8] sm:$0xf]
        %v1186 = vld [vmem:[%s1022 + $0xc] sm:$0xf]
        %v1187 = vld [vmem:[%s1022 + $0x10] sm:$0xf]
        %v1188 = vld [vmem:[%s1022 + $0x14] sm:$0xf]
        %v1189 = vld [vmem:[%s1022 + $0x18] sm:$0xf]
        %v1190 = vld [vmem:[%s1022 + $0x1c] sm:$0xf]
        %v1191 = vld [vmem:[%s1022 + $0x20] sm:$0xf]
        %v1192 = vld [vmem:[%s1022 + $0x24] sm:$0xf]
        %v1193 = vld [vmem:[%s1022 + $0x28] sm:$0x1]
        %v1205 = vunpack.c.l.b16 %v1183
        %v1206 = vunpack.c.l.b16 %v1184
        %v1207 = vunpack.c.l.b16 %v1185
        %v1208 = vunpack.c.l.b16 %v1186
        %v1209 = vunpack.c.l.b16 %v1187
        %v1210 = vunpack.c.l.b16 %v1188
        %v1211 = vunpack.c.l.b16 %v1189
        %v1212 = vunpack.c.l.b16 %v1190
        %v1213 = vunpack.c.l.b16 %v1191
        %v1214 = vunpack.c.l.b16 %v1192
        %v1215 = vunpack.c.l.b16 %v1193
        %v1216 = vpack.c.b16 %v1206, %v1205
        %v1217 = vpack.c.b16 %v1208, %v1207
        %v1218 = vpack.c.b16 %v1210, %v1209
        %v1219 = vpack.c.b16 %v1212, %v1211
        %v1220 = vpack.c.b16 %v1214, %v1213
        %v1221 = vpack.c.b16 %v1215, %v1215
        %v1222 = vrot.slane %v1216, 1
        %v1223 = vrot.slane %v1217, 1
        %v1224 = vsel %vm472, %v1222, %v1223
        %v1225 = vrot.slane %v1218, 1
        %v1226 = vsel %vm472, %v1223, %v1225
        %v1227 = vrot.slane %v1219, 1
        %v1228 = vsel %vm472, %v1225, %v1227
        %v1229 = vrot.slane %v1220, 1
        %v1230 = vsel %vm472, %v1227, %v1229
        %v1231 = vrot.slane %v1221, 1
        %v1232 = vsel %vm472, %v1229, %v1231
        %1233 = vrot.lane.b32.xlu0 %v1224, 44
        %v1234 = vpop.permute.xlu0 %1233
        %1235 = vrot.lane.b32.xlu0 %v1226, 44
        %v1236 = vpop.permute.xlu0 %1235
        %1237 = vrot.lane.b32.xlu0 %v1228, 44
        %v1238 = vpop.permute.xlu0 %1237
        %1239 = vrot.lane.b32.xlu0 %v1230, 44
        %v1240 = vpop.permute.xlu0 %1239
        %1241 = vrot.lane.b32.xlu0 %v1232, 44
        %v1242 = vpop.permute.xlu0 %1241
        %vm1248 = vcmask 392544
        %1249 = vst.msk [vmem:[%s321] sm:$0xff] %vm1248, %v1234
        %1250 = vst.msk [vmem:[%s321 + $0x8] sm:$0xff] %vm1248, %v1236
        %1251 = vst.msk [vmem:[%s321 + $0x10] sm:$0xff] %vm1248, %v1238
        %1252 = vst.msk [vmem:[%s321 + $0x18] sm:$0xff] %vm1248, %v1240
        %1253 = vst.msk [vmem:[%s321 + $0x20] sm:$0xff] %vm1248, %v1242
        %v1254 = vld [vmem:[%s1022 + $0x4] sm:$0xe]
        %v1255 = vld [vmem:[%s1022 + $0x8] sm:$0xf]
        %v1256 = vld [vmem:[%s1022 + $0xc] sm:$0xf]
        %v1257 = vld [vmem:[%s1022 + $0x10] sm:$0xf]
        %v1258 = vld [vmem:[%s1022 + $0x14] sm:$0xf]
        %v1259 = vld [vmem:[%s1022 + $0x18] sm:$0xf]
        %v1260 = vld [vmem:[%s1022 + $0x1c] sm:$0xf]
        %v1261 = vld [vmem:[%s1022 + $0x20] sm:$0xf]
        %v1262 = vld [vmem:[%s1022 + $0x24] sm:$0xf]
        %v1263 = vld [vmem:[%s1022 + $0x28] sm:$0xf]
        %v1264 = vld [vmem:[%s1022 + $0x2c] sm:$0x1]
        %v1276 = vunpack.c.l.b16 %v1254
        %v1277 = vunpack.c.l.b16 %v1255
        %v1278 = vunpack.c.l.b16 %v1256
        %v1279 = vunpack.c.l.b16 %v1257
        %v1280 = vunpack.c.l.b16 %v1258
        %v1281 = vunpack.c.l.b16 %v1259
        %v1282 = vunpack.c.l.b16 %v1260
        %v1283 = vunpack.c.l.b16 %v1261
        %v1284 = vunpack.c.l.b16 %v1262
        %v1285 = vunpack.c.l.b16 %v1263
        %v1286 = vunpack.c.l.b16 %v1264
        %v1287 = vpack.c.b16 %v1277, %v1276
        %v1288 = vpack.c.b16 %v1279, %v1278
        %v1289 = vpack.c.b16 %v1281, %v1280
        %v1290 = vpack.c.b16 %v1283, %v1282
        %v1291 = vpack.c.b16 %v1285, %v1284
        %v1292 = vpack.c.b16 %v1286, %v1286
        %v1293 = vrot.slane %v1287, 1
        %v1294 = vrot.slane %v1288, 1
        %v1295 = vsel %vm472, %v1293, %v1294
        %v1296 = vrot.slane %v1289, 1
        %v1297 = vsel %vm472, %v1294, %v1296
        %v1298 = vrot.slane %v1290, 1
        %v1299 = vsel %vm472, %v1296, %v1298
        %v1300 = vrot.slane %v1291, 1
        %v1301 = vsel %vm472, %v1298, %v1300
        %v1302 = vrot.slane %v1292, 1
        %v1303 = vsel %vm472, %v1300, %v1302
        %1304 = vrot.lane.b32.xlu0 %v1295, 48
        %v1305 = vpop.permute.xlu0 %1304
        %1306 = vrot.lane.b32.xlu0 %v1297, 48
        %v1307 = vpop.permute.xlu0 %1306
        %1308 = vrot.lane.b32.xlu0 %v1299, 48
        %v1309 = vpop.permute.xlu0 %1308
        %1310 = vrot.lane.b32.xlu0 %v1301, 48
        %v1311 = vpop.permute.xlu0 %1310
        %1312 = vrot.lane.b32.xlu0 %v1303, 48
        %v1313 = vpop.permute.xlu0 %1312
        %vm1319 = vcmask 425344
        %1320 = vst.msk [vmem:[%s321] sm:$0xff] %vm1319, %v1305
        %1321 = vst.msk [vmem:[%s321 + $0x8] sm:$0xff] %vm1319, %v1307
        %1322 = vst.msk [vmem:[%s321 + $0x10] sm:$0xff] %vm1319, %v1309
        %1323 = vst.msk [vmem:[%s321 + $0x18] sm:$0xff] %vm1319, %v1311
        %1324 = vst.msk [vmem:[%s321 + $0x20] sm:$0xff] %vm1319, %v1313
        %v1325 = vld [vmem:[%s1022 + $0x4] sm:$0xe]
        %v1326 = vld [vmem:[%s1022 + $0x8] sm:$0xf]
        %v1327 = vld [vmem:[%s1022 + $0xc] sm:$0xf]
        %v1328 = vld [vmem:[%s1022 + $0x10] sm:$0xf]
        %v1329 = vld [vmem:[%s1022 + $0x14] sm:$0xf]
        %v1330 = vld [vmem:[%s1022 + $0x18] sm:$0xf]
        %v1331 = vld [vmem:[%s1022 + $0x1c] sm:$0xf]
        %v1332 = vld [vmem:[%s1022 + $0x20] sm:$0xf]
        %v1333 = vld [vmem:[%s1022 + $0x24] sm:$0xf]
        %v1334 = vld [vmem:[%s1022 + $0x28] sm:$0xf]
        %v1335 = vld [vmem:[%s1022 + $0x2c] sm:$0x3]
        %v1347 = vunpack.c.l.b16 %v1325
        %v1348 = vunpack.c.l.b16 %v1326
        %v1349 = vunpack.c.l.b16 %v1327
        %v1350 = vunpack.c.l.b16 %v1328
        %v1351 = vunpack.c.l.b16 %v1329
        %v1352 = vunpack.c.l.b16 %v1330
        %v1353 = vunpack.c.l.b16 %v1331
        %v1354 = vunpack.c.l.b16 %v1332
        %v1355 = vunpack.c.l.b16 %v1333
        %v1356 = vunpack.c.l.b16 %v1334
        %v1357 = vunpack.c.l.b16 %v1335
        %v1358 = vpack.c.b16 %v1348, %v1347
        %v1359 = vpack.c.b16 %v1350, %v1349
        %v1360 = vpack.c.b16 %v1352, %v1351
        %v1361 = vpack.c.b16 %v1354, %v1353
        %v1362 = vpack.c.b16 %v1356, %v1355
        %v1363 = vpack.c.b16 %v1357, %v1357
        %v1365 = vshrl.u32 %v1358, 16
        %v1367 = vrot.slane %v1365, 1
        %v1368 = vshll.u32 %v1358, 16
        %v1370 = vrot.slane %v1368, 2
        %v1371 = vor.u32 %v1367, %v1370
        %v1373 = vshrl.u32 %v1359, 16
        %v1375 = vrot.slane %v1373, 1
        %v1376 = vshll.u32 %v1359, 16
        %v1378 = vrot.slane %v1376, 2
        %v1379 = vor.u32 %v1375, %v1378
        %v1380 = vsel %vm615, %v1371, %v1379
        %v1382 = vshrl.u32 %v1360, 16
        %v1384 = vrot.slane %v1382, 1
        %v1385 = vshll.u32 %v1360, 16
        %v1387 = vrot.slane %v1385, 2
        %v1388 = vor.u32 %v1384, %v1387
        %v1389 = vsel %vm615, %v1379, %v1388
        %v1391 = vshrl.u32 %v1361, 16
        %v1393 = vrot.slane %v1391, 1
        %v1394 = vshll.u32 %v1361, 16
        %v1396 = vrot.slane %v1394, 2
        %v1397 = vor.u32 %v1393, %v1396
        %v1398 = vsel %vm615, %v1388, %v1397
        %v1400 = vshrl.u32 %v1362, 16
        %v1402 = vrot.slane %v1400, 1
        %v1403 = vshll.u32 %v1362, 16
        %v1405 = vrot.slane %v1403, 2
        %v1406 = vor.u32 %v1402, %v1405
        %v1407 = vsel %vm615, %v1397, %v1406
        %v1409 = vshrl.u32 %v1363, 16
        %v1411 = vrot.slane %v1409, 1
        %v1412 = vshll.u32 %v1363, 16
        %v1414 = vrot.slane %v1412, 2
        %v1415 = vor.u32 %v1411, %v1414
        %v1416 = vsel %vm615, %v1406, %v1415
        %1417 = vrot.lane.b32.xlu0 %v1380, 52
        %v1418 = vpop.permute.xlu0 %1417
        %1419 = vrot.lane.b32.xlu0 %v1389, 52
        %v1420 = vpop.permute.xlu0 %1419
        %1421 = vrot.lane.b32.xlu0 %v1398, 52
        %v1422 = vpop.permute.xlu0 %1421
        %1423 = vrot.lane.b32.xlu0 %v1407, 52
        %v1424 = vpop.permute.xlu0 %1423
        %1425 = vrot.lane.b32.xlu0 %v1416, 52
        %v1426 = vpop.permute.xlu0 %1425
        %vm1432 = vcmask 458144
        %1433 = vst.msk [vmem:[%s321] sm:$0xff] %vm1432, %v1418
        %1434 = vst.msk [vmem:[%s321 + $0x8] sm:$0xff] %vm1432, %v1420
        %1435 = vst.msk [vmem:[%s321 + $0x10] sm:$0xff] %vm1432, %v1422
        %1436 = vst.msk [vmem:[%s321 + $0x18] sm:$0xff] %vm1432, %v1424
        %1437 = vst.msk [vmem:[%s321 + $0x20] sm:$0xff] %vm1432, %v1426
        %v1438 = vld [vmem:[%s1022 + $0x4] sm:$0xc]
        %v1439 = vld [vmem:[%s1022 + $0x8] sm:$0xf]
        %v1440 = vld [vmem:[%s1022 + $0xc] sm:$0xf]
        %v1441 = vld [vmem:[%s1022 + $0x10] sm:$0xf]
        %v1442 = vld [vmem:[%s1022 + $0x14] sm:$0xf]
        %v1443 = vld [vmem:[%s1022 + $0x18] sm:$0xf]
        %v1444 = vld [vmem:[%s1022 + $0x1c] sm:$0xf]
        %v1445 = vld [vmem:[%s1022 + $0x20] sm:$0xf]
        %v1446 = vld [vmem:[%s1022 + $0x24] sm:$0xf]
        %v1447 = vld [vmem:[%s1022 + $0x28] sm:$0xf]
        %v1448 = vld [vmem:[%s1022 + $0x2c] sm:$0x3]
        %v1460 = vunpack.c.l.b16 %v1438
        %v1461 = vunpack.c.l.b16 %v1439
        %v1462 = vunpack.c.l.b16 %v1440
        %v1463 = vunpack.c.l.b16 %v1441
        %v1464 = vunpack.c.l.b16 %v1442
        %v1465 = vunpack.c.l.b16 %v1443
        %v1466 = vunpack.c.l.b16 %v1444
        %v1467 = vunpack.c.l.b16 %v1445
        %v1468 = vunpack.c.l.b16 %v1446
        %v1469 = vunpack.c.l.b16 %v1447
        %v1470 = vunpack.c.l.b16 %v1448
        %v1471 = vpack.c.b16 %v1461, %v1460
        %v1472 = vpack.c.b16 %v1463, %v1462
        %v1473 = vpack.c.b16 %v1465, %v1464
        %v1474 = vpack.c.b16 %v1467, %v1466
        %v1475 = vpack.c.b16 %v1469, %v1468
        %v1476 = vpack.c.b16 %v1470, %v1470
        %v1477 = vrot.slane %v1471, 2
        %v1478 = vrot.slane %v1472, 2
        %v1479 = vsel %vm729, %v1477, %v1478
        %v1480 = vrot.slane %v1473, 2
        %v1481 = vsel %vm729, %v1478, %v1480
        %v1482 = vrot.slane %v1474, 2
        %v1483 = vsel %vm729, %v1480, %v1482
        %v1484 = vrot.slane %v1475, 2
        %v1485 = vsel %vm729, %v1482, %v1484
        %v1486 = vrot.slane %v1476, 2
        %v1487 = vsel %vm729, %v1484, %v1486
        %1488 = vrot.lane.b32.xlu0 %v1479, 56
        %v1489 = vpop.permute.xlu0 %1488
        %1490 = vrot.lane.b32.xlu0 %v1481, 56
        %v1491 = vpop.permute.xlu0 %1490
        %1492 = vrot.lane.b32.xlu0 %v1483, 56
        %v1493 = vpop.permute.xlu0 %1492
        %1494 = vrot.lane.b32.xlu0 %v1485, 56
        %v1495 = vpop.permute.xlu0 %1494
        %1496 = vrot.lane.b32.xlu0 %v1487, 56
        %v1497 = vpop.permute.xlu0 %1496
        %vm1503 = vcmask 490944
        %1504 = vst.msk [vmem:[%s321] sm:$0xff] %vm1503, %v1489
        %1505 = vst.msk [vmem:[%s321 + $0x8] sm:$0xff] %vm1503, %v1491
        %1506 = vst.msk [vmem:[%s321 + $0x10] sm:$0xff] %vm1503, %v1493
        %1507 = vst.msk [vmem:[%s321 + $0x18] sm:$0xff] %vm1503, %v1495
        %1508 = vst.msk [vmem:[%s321 + $0x20] sm:$0xff] %vm1503, %v1497
        %v1509 = vld [vmem:[%s1022 + $0x8] sm:$0xc]
        %v1510 = vld [vmem:[%s1022 + $0xc] sm:$0xf]
        %v1511 = vld [vmem:[%s1022 + $0x10] sm:$0xf]
        %v1512 = vld [vmem:[%s1022 + $0x14] sm:$0xf]
        %v1513 = vld [vmem:[%s1022 + $0x18] sm:$0xf]
        %v1514 = vld [vmem:[%s1022 + $0x1c] sm:$0xf]
        %v1515 = vld [vmem:[%s1022 + $0x20] sm:$0xf]
        %v1516 = vld [vmem:[%s1022 + $0x24] sm:$0xf]
        %v1517 = vld [vmem:[%s1022 + $0x28] sm:$0xf]
        %v1518 = vld [vmem:[%s1022 + $0x2c] sm:$0xf]
        %v1519 = vld [vmem:[%s1022 + $0x30] sm:$0x3]
        %v1531 = vunpack.c.l.b16 %v1509
        %v1532 = vunpack.c.l.b16 %v1510
        %v1533 = vunpack.c.l.b16 %v1511
        %v1534 = vunpack.c.l.b16 %v1512
        %v1535 = vunpack.c.l.b16 %v1513
        %v1536 = vunpack.c.l.b16 %v1514
        %v1537 = vunpack.c.l.b16 %v1515
        %v1538 = vunpack.c.l.b16 %v1516
        %v1539 = vunpack.c.l.b16 %v1517
        %v1540 = vunpack.c.l.b16 %v1518
        %v1541 = vunpack.c.l.b16 %v1519
        %v1542 = vpack.c.b16 %v1532, %v1531
        %v1543 = vpack.c.b16 %v1534, %v1533
        %v1544 = vpack.c.b16 %v1536, %v1535
        %v1545 = vpack.c.b16 %v1538, %v1537
        %v1546 = vpack.c.b16 %v1540, %v1539
        %v1547 = vpack.c.b16 %v1541, %v1541
        %v1548 = vrot.slane %v1542, 2
        %v1549 = vrot.slane %v1543, 2
        %v1550 = vsel %vm729, %v1548, %v1549
        %v1551 = vrot.slane %v1544, 2
        %v1552 = vsel %vm729, %v1549, %v1551
        %v1553 = vrot.slane %v1545, 2
        %v1554 = vsel %vm729, %v1551, %v1553
        %v1555 = vrot.slane %v1546, 2
        %v1556 = vsel %vm729, %v1553, %v1555
        %v1557 = vrot.slane %v1547, 2
        %v1558 = vsel %vm729, %v1555, %v1557
        %1559 = vrot.lane.b32.xlu0 %v1550, 60
        %v1560 = vpop.permute.xlu0 %1559
        %1561 = vrot.lane.b32.xlu0 %v1552, 60
        %v1562 = vpop.permute.xlu0 %1561
        %1563 = vrot.lane.b32.xlu0 %v1554, 60
        %v1564 = vpop.permute.xlu0 %1563
        %1565 = vrot.lane.b32.xlu0 %v1556, 60
        %v1566 = vpop.permute.xlu0 %1565
        %1567 = vrot.lane.b32.xlu0 %v1558, 60
        %v1568 = vpop.permute.xlu0 %1567
        %vm1574 = vcmask 523744
        %1575 = vst.msk [vmem:[%s321] sm:$0xff] %vm1574, %v1560
        %1576 = vst.msk [vmem:[%s321 + $0x8] sm:$0xff] %vm1574, %v1562
        %1577 = vst.msk [vmem:[%s321 + $0x10] sm:$0xff] %vm1574, %v1564
        %1578 = vst.msk [vmem:[%s321 + $0x18] sm:$0xff] %vm1574, %v1566
        %1579 = vst.msk [vmem:[%s321 + $0x20] sm:$0xff] %vm1574, %v1568
        %v1580 = vld [vmem:[%s1022 + $0x8] sm:$0xc]
        %v1581 = vld [vmem:[%s1022 + $0xc] sm:$0xf]
        %v1582 = vld [vmem:[%s1022 + $0x10] sm:$0xf]
        %v1583 = vld [vmem:[%s1022 + $0x14] sm:$0xf]
        %v1584 = vld [vmem:[%s1022 + $0x18] sm:$0xf]
        %v1585 = vld [vmem:[%s1022 + $0x1c] sm:$0xf]
        %v1586 = vld [vmem:[%s1022 + $0x20] sm:$0xf]
        %v1587 = vld [vmem:[%s1022 + $0x24] sm:$0xf]
        %v1588 = vld [vmem:[%s1022 + $0x28] sm:$0xf]
        %v1589 = vld [vmem:[%s1022 + $0x2c] sm:$0xf]
        %v1590 = vld [vmem:[%s1022 + $0x30] sm:$0x7]
        %v1602 = vunpack.c.l.b16 %v1580
        %v1603 = vunpack.c.l.b16 %v1581
        %v1604 = vunpack.c.l.b16 %v1582
        %v1605 = vunpack.c.l.b16 %v1583
        %v1606 = vunpack.c.l.b16 %v1584
        %v1607 = vunpack.c.l.b16 %v1585
        %v1608 = vunpack.c.l.b16 %v1586
        %v1609 = vunpack.c.l.b16 %v1587
        %v1610 = vunpack.c.l.b16 %v1588
        %v1611 = vunpack.c.l.b16 %v1589
        %v1612 = vunpack.c.l.b16 %v1590
        %v1613 = vpack.c.b16 %v1603, %v1602
        %v1614 = vpack.c.b16 %v1605, %v1604
        %v1615 = vpack.c.b16 %v1607, %v1606
        %v1616 = vpack.c.b16 %v1609, %v1608
        %v1617 = vpack.c.b16 %v1611, %v1610
        %v1618 = vpack.c.b16 %v1612, %v1612
        %v1620 = vshrl.u32 %v1613, 16
        %v1622 = vrot.slane %v1620, 2
        %v1623 = vshll.u32 %v1613, 16
        %v1625 = vrot.slane %v1623, 3
        %v1626 = vor.u32 %v1622, %v1625
        %v1628 = vshrl.u32 %v1614, 16
        %v1630 = vrot.slane %v1628, 2
        %v1631 = vshll.u32 %v1614, 16
        %v1633 = vrot.slane %v1631, 3
        %v1634 = vor.u32 %v1630, %v1633
        %v1635 = vsel %vm872, %v1626, %v1634
        %v1637 = vshrl.u32 %v1615, 16
        %v1639 = vrot.slane %v1637, 2
        %v1640 = vshll.u32 %v1615, 16
        %v1642 = vrot.slane %v1640, 3
        %v1643 = vor.u32 %v1639, %v1642
        %v1644 = vsel %vm872, %v1634, %v1643
        %v1646 = vshrl.u32 %v1616, 16
        %v1648 = vrot.slane %v1646, 2
        %v1649 = vshll.u32 %v1616, 16
        %v1651 = vrot.slane %v1649, 3
        %v1652 = vor.u32 %v1648, %v1651
        %v1653 = vsel %vm872, %v1643, %v1652
        %v1655 = vshrl.u32 %v1617, 16
        %v1657 = vrot.slane %v1655, 2
        %v1658 = vshll.u32 %v1617, 16
        %v1660 = vrot.slane %v1658, 3
        %v1661 = vor.u32 %v1657, %v1660
        %v1662 = vsel %vm872, %v1652, %v1661
        %v1664 = vshrl.u32 %v1618, 16
        %v1666 = vrot.slane %v1664, 2
        %v1667 = vshll.u32 %v1618, 16
        %v1669 = vrot.slane %v1667, 3
        %v1670 = vor.u32 %v1666, %v1669
        %v1671 = vsel %vm872, %v1661, %v1670
        %1672 = vrot.lane.b32.xlu0 %v1635, 64
        %v1673 = vpop.permute.xlu0 %1672
        %1674 = vrot.lane.b32.xlu0 %v1644, 64
        %v1675 = vpop.permute.xlu0 %1674
        %1676 = vrot.lane.b32.xlu0 %v1653, 64
        %v1677 = vpop.permute.xlu0 %1676
        %1678 = vrot.lane.b32.xlu0 %v1662, 64
        %v1679 = vpop.permute.xlu0 %1678
        %1680 = vrot.lane.b32.xlu0 %v1671, 64
        %v1681 = vpop.permute.xlu0 %1680
        %vm1687 = vcmask 556544
        %1688 = vst.msk [vmem:[%s321] sm:$0xff] %vm1687, %v1673
        %1689 = vst.msk [vmem:[%s321 + $0x8] sm:$0xff] %vm1687, %v1675
        %1690 = vst.msk [vmem:[%s321 + $0x10] sm:$0xff] %vm1687, %v1677
        %1691 = vst.msk [vmem:[%s321 + $0x18] sm:$0xff] %vm1687, %v1679
        %1692 = vst.msk [vmem:[%s321 + $0x20] sm:$0xff] %vm1687, %v1681
        %v1693 = vld [vmem:[%s1022 + $0x8] sm:$0x8]
        %v1694 = vld [vmem:[%s1022 + $0xc] sm:$0xf]
        %v1695 = vld [vmem:[%s1022 + $0x10] sm:$0xf]
        %v1696 = vld [vmem:[%s1022 + $0x14] sm:$0xf]
        %v1697 = vld [vmem:[%s1022 + $0x18] sm:$0xf]
        %v1698 = vld [vmem:[%s1022 + $0x1c] sm:$0xf]
        %v1699 = vld [vmem:[%s1022 + $0x20] sm:$0xf]
        %v1700 = vld [vmem:[%s1022 + $0x24] sm:$0xf]
        %v1701 = vld [vmem:[%s1022 + $0x28] sm:$0xf]
        %v1702 = vld [vmem:[%s1022 + $0x2c] sm:$0xf]
        %v1703 = vld [vmem:[%s1022 + $0x30] sm:$0x7]
        %v1715 = vunpack.c.l.b16 %v1693
        %v1716 = vunpack.c.l.b16 %v1694
        %v1717 = vunpack.c.l.b16 %v1695
        %v1718 = vunpack.c.l.b16 %v1696
        %v1719 = vunpack.c.l.b16 %v1697
        %v1720 = vunpack.c.l.b16 %v1698
        %v1721 = vunpack.c.l.b16 %v1699
        %v1722 = vunpack.c.l.b16 %v1700
        %v1723 = vunpack.c.l.b16 %v1701
        %v1724 = vunpack.c.l.b16 %v1702
        %v1725 = vunpack.c.l.b16 %v1703
        %v1726 = vpack.c.b16 %v1716, %v1715
        %v1727 = vpack.c.b16 %v1718, %v1717
        %v1728 = vpack.c.b16 %v1720, %v1719
        %v1729 = vpack.c.b16 %v1722, %v1721
        %v1730 = vpack.c.b16 %v1724, %v1723
        %v1731 = vpack.c.b16 %v1725, %v1725
        %v1732 = vrot.slane %v1726, 3
        %v1733 = vrot.slane %v1727, 3
        %v1734 = vsel %vm986, %v1732, %v1733
        %v1735 = vrot.slane %v1728, 3
        %v1736 = vsel %vm986, %v1733, %v1735
        %v1737 = vrot.slane %v1729, 3
        %v1738 = vsel %vm986, %v1735, %v1737
        %v1739 = vrot.slane %v1730, 3
        %v1740 = vsel %vm986, %v1737, %v1739
        %v1741 = vrot.slane %v1731, 3
        %v1742 = vsel %vm986, %v1739, %v1741
        %1743 = vrot.lane.b32.xlu0 %v1734, 68
        %v1744 = vpop.permute.xlu0 %1743
        %1745 = vrot.lane.b32.xlu0 %v1736, 68
        %v1746 = vpop.permute.xlu0 %1745
        %1747 = vrot.lane.b32.xlu0 %v1738, 68
        %v1748 = vpop.permute.xlu0 %1747
        %1749 = vrot.lane.b32.xlu0 %v1740, 68
        %v1750 = vpop.permute.xlu0 %1749
        %1751 = vrot.lane.b32.xlu0 %v1742, 68
        %v1752 = vpop.permute.xlu0 %1751
        %vm1758 = vcmask 589344
        %1759 = vst.msk [vmem:[%s321] sm:$0xff] %vm1758, %v1744
        %1760 = vst.msk [vmem:[%s321 + $0x8] sm:$0xff] %vm1758, %v1746
        %1761 = vst.msk [vmem:[%s321 + $0x10] sm:$0xff] %vm1758, %v1748
        %1762 = vst.msk [vmem:[%s321 + $0x18] sm:$0xff] %vm1758, %v1750
        %1763 = vst.msk [vmem:[%s321 + $0x20] sm:$0xff] %vm1758, %v1752
        %s1764 = sadd.s32 %s269, 2
        %s1765 = smul.u32 %s1764, 14
        %s1766 = smul.addr %s1765, 4
        %s1767 = scalar_lea.vmem %s214, %s1766
        %v1768 = vld [vmem:[%s1767] sm:$0xf]
        %v1769 = vld [vmem:[%s1767 + $0x4] sm:$0xf]
        %v1770 = vld [vmem:[%s1767 + $0x8] sm:$0xf]
        %v1771 = vld [vmem:[%s1767 + $0xc] sm:$0xf]
        %v1772 = vld [vmem:[%s1767 + $0x10] sm:$0xf]
        %v1773 = vld [vmem:[%s1767 + $0x14] sm:$0xf]
        %v1774 = vld [vmem:[%s1767 + $0x18] sm:$0xf]
        %v1775 = vld [vmem:[%s1767 + $0x1c] sm:$0xf]
        %v1776 = vld [vmem:[%s1767 + $0x20] sm:$0xf]
        %v1777 = vld [vmem:[%s1767 + $0x24] sm:$0xf]
        %v1788 = vunpack.c.l.b16 %v1768
        %v1789 = vunpack.c.l.b16 %v1769
        %v1790 = vunpack.c.l.b16 %v1770
        %v1791 = vunpack.c.l.b16 %v1771
        %v1792 = vunpack.c.l.b16 %v1772
        %v1793 = vunpack.c.l.b16 %v1773
        %v1794 = vunpack.c.l.b16 %v1774
        %v1795 = vunpack.c.l.b16 %v1775
        %v1796 = vunpack.c.l.b16 %v1776
        %v1797 = vunpack.c.l.b16 %v1777
        %v1798 = vpack.c.b16 %v1789, %v1788
        %v1799 = vpack.c.b16 %v1791, %v1790
        %v1800 = vpack.c.b16 %v1793, %v1792
        %v1801 = vpack.c.b16 %v1795, %v1794
        %v1802 = vpack.c.b16 %v1797, %v1796
        %1803 = vrot.lane.b32.xlu0 %v1798, 72
        %v1804 = vpop.permute.xlu0 %1803
        %1805 = vrot.lane.b32.xlu0 %v1799, 72
        %v1806 = vpop.permute.xlu0 %1805
        %1807 = vrot.lane.b32.xlu0 %v1800, 72
        %v1808 = vpop.permute.xlu0 %1807
        %1809 = vrot.lane.b32.xlu0 %v1801, 72
        %v1810 = vpop.permute.xlu0 %1809
        %1811 = vrot.lane.b32.xlu0 %v1802, 72
        %v1812 = vpop.permute.xlu0 %1811
        %vm1818 = vcmask 622144
        %1819 = vst.msk [vmem:[%s321] sm:$0xff] %vm1818, %v1804
        %1820 = vst.msk [vmem:[%s321 + $0x8] sm:$0xff] %vm1818, %v1806
        %1821 = vst.msk [vmem:[%s321 + $0x10] sm:$0xff] %vm1818, %v1808
        %1822 = vst.msk [vmem:[%s321 + $0x18] sm:$0xff] %vm1818, %v1810
        %1823 = vst.msk [vmem:[%s321 + $0x20] sm:$0xff] %vm1818, %v1812
        %v1824 = vld [vmem:[%s1767] sm:$0xf]
        %v1825 = vld [vmem:[%s1767 + $0x4] sm:$0xf]
        %v1826 = vld [vmem:[%s1767 + $0x8] sm:$0xf]
        %v1827 = vld [vmem:[%s1767 + $0xc] sm:$0xf]
        %v1828 = vld [vmem:[%s1767 + $0x10] sm:$0xf]
        %v1829 = vld [vmem:[%s1767 + $0x14] sm:$0xf]
        %v1830 = vld [vmem:[%s1767 + $0x18] sm:$0xf]
        %v1831 = vld [vmem:[%s1767 + $0x1c] sm:$0xf]
        %v1832 = vld [vmem:[%s1767 + $0x20] sm:$0xf]
        %v1833 = vld [vmem:[%s1767 + $0x24] sm:$0xf]
        %v1834 = vld [vmem:[%s1767 + $0x28] sm:$0x1]
        %v1846 = vunpack.c.l.b16 %v1824
        %v1847 = vunpack.c.l.b16 %v1825
        %v1848 = vunpack.c.l.b16 %v1826
        %v1849 = vunpack.c.l.b16 %v1827
        %v1850 = vunpack.c.l.b16 %v1828
        %v1851 = vunpack.c.l.b16 %v1829
        %v1852 = vunpack.c.l.b16 %v1830
        %v1853 = vunpack.c.l.b16 %v1831
        %v1854 = vunpack.c.l.b16 %v1832
        %v1855 = vunpack.c.l.b16 %v1833
        %v1856 = vunpack.c.l.b16 %v1834
        %v1857 = vpack.c.b16 %v1847, %v1846
        %v1858 = vpack.c.b16 %v1849, %v1848
        %v1859 = vpack.c.b16 %v1851, %v1850
        %v1860 = vpack.c.b16 %v1853, %v1852
        %v1861 = vpack.c.b16 %v1855, %v1854
        %v1862 = vpack.c.b16 %v1856, %v1856
        %v1864 = vshrl.u32 %v1857, 16
        %v1866 = vshll.u32 %v1857, 16
        %v1868 = vrot.slane %v1866, 1
        %v1869 = vor.u32 %v1864, %v1868
        %v1871 = vshll.u32 %v1858, 16
        %v1873 = vrot.slane %v1871, 1
        %v1874 = vsel %vm367, %v1869, %v1873
        %v1875 = vshrl.u32 %v1858, 16
        %v1877 = vor.u32 %v1875, %v1873
        %v1879 = vshll.u32 %v1859, 16
        %v1881 = vrot.slane %v1879, 1
        %v1882 = vsel %vm367, %v1877, %v1881
        %v1883 = vshrl.u32 %v1859, 16
        %v1885 = vor.u32 %v1883, %v1881
        %v1887 = vshll.u32 %v1860, 16
        %v1889 = vrot.slane %v1887, 1
        %v1890 = vsel %vm367, %v1885, %v1889
        %v1891 = vshrl.u32 %v1860, 16
        %v1893 = vor.u32 %v1891, %v1889
        %v1895 = vshll.u32 %v1861, 16
        %v1897 = vrot.slane %v1895, 1
        %v1898 = vsel %vm367, %v1893, %v1897
        %v1899 = vshrl.u32 %v1861, 16
        %v1901 = vor.u32 %v1899, %v1897
        %v1903 = vshll.u32 %v1862, 16
        %v1905 = vrot.slane %v1903, 1
        %v1906 = vsel %vm367, %v1901, %v1905
        %1907 = vrot.lane.b32.xlu0 %v1874, 76
        %v1908 = vpop.permute.xlu0 %1907
        %1909 = vrot.lane.b32.xlu0 %v1882, 76
        %v1910 = vpop.permute.xlu0 %1909
        %1911 = vrot.lane.b32.xlu0 %v1890, 76
        %v1912 = vpop.permute.xlu0 %1911
        %1913 = vrot.lane.b32.xlu0 %v1898, 76
        %v1914 = vpop.permute.xlu0 %1913
        %1915 = vrot.lane.b32.xlu0 %v1906, 76
        %v1916 = vpop.permute.xlu0 %1915
        %vm1922 = vcmask 654944
        %1923 = vst.msk [vmem:[%s321] sm:$0xff] %vm1922, %v1908
        %1924 = vst.msk [vmem:[%s321 + $0x8] sm:$0xff] %vm1922, %v1910
        %1925 = vst.msk [vmem:[%s321 + $0x10] sm:$0xff] %vm1922, %v1912
        %1926 = vst.msk [vmem:[%s321 + $0x18] sm:$0xff] %vm1922, %v1914
        %1927 = vst.msk [vmem:[%s321 + $0x20] sm:$0xff] %vm1922, %v1916
        %v1928 = vld [vmem:[%s1767] sm:$0xe]
        %v1929 = vld [vmem:[%s1767 + $0x4] sm:$0xf]
        %v1930 = vld [vmem:[%s1767 + $0x8] sm:$0xf]
        %v1931 = vld [vmem:[%s1767 + $0xc] sm:$0xf]
        %v1932 = vld [vmem:[%s1767 + $0x10] sm:$0xf]
        %v1933 = vld [vmem:[%s1767 + $0x14] sm:$0xf]
        %v1934 = vld [vmem:[%s1767 + $0x18] sm:$0xf]
        %v1935 = vld [vmem:[%s1767 + $0x1c] sm:$0xf]
        %v1936 = vld [vmem:[%s1767 + $0x20] sm:$0xf]
        %v1937 = vld [vmem:[%s1767 + $0x24] sm:$0xf]
        %v1938 = vld [vmem:[%s1767 + $0x28] sm:$0x1]
        %v1950 = vunpack.c.l.b16 %v1928
        %v1951 = vunpack.c.l.b16 %v1929
        %v1952 = vunpack.c.l.b16 %v1930
        %v1953 = vunpack.c.l.b16 %v1931
        %v1954 = vunpack.c.l.b16 %v1932
        %v1955 = vunpack.c.l.b16 %v1933
        %v1956 = vunpack.c.l.b16 %v1934
        %v1957 = vunpack.c.l.b16 %v1935
        %v1958 = vunpack.c.l.b16 %v1936
        %v1959 = vunpack.c.l.b16 %v1937
        %v1960 = vunpack.c.l.b16 %v1938
        %v1961 = vpack.c.b16 %v1951, %v1950
        %v1962 = vpack.c.b16 %v1953, %v1952
        %v1963 = vpack.c.b16 %v1955, %v1954
        %v1964 = vpack.c.b16 %v1957, %v1956
        %v1965 = vpack.c.b16 %v1959, %v1958
        %v1966 = vpack.c.b16 %v1960, %v1960
        %v1967 = vrot.slane %v1961, 1
        %v1968 = vrot.slane %v1962, 1
        %v1969 = vsel %vm472, %v1967, %v1968
        %v1970 = vrot.slane %v1963, 1
        %v1971 = vsel %vm472, %v1968, %v1970
        %v1972 = vrot.slane %v1964, 1
        %v1973 = vsel %vm472, %v1970, %v1972
        %v1974 = vrot.slane %v1965, 1
        %v1975 = vsel %vm472, %v1972, %v1974
        %v1976 = vrot.slane %v1966, 1
        %v1977 = vsel %vm472, %v1974, %v1976
        %1978 = vrot.lane.b32.xlu0 %v1969, 80
        %v1979 = vpop.permute.xlu0 %1978
        %1980 = vrot.lane.b32.xlu0 %v1971, 80
        %v1981 = vpop.permute.xlu0 %1980
        %1982 = vrot.lane.b32.xlu0 %v1973, 80
        %v1983 = vpop.permute.xlu0 %1982
        %1984 = vrot.lane.b32.xlu0 %v1975, 80
        %v1985 = vpop.permute.xlu0 %1984
        %1986 = vrot.lane.b32.xlu0 %v1977, 80
        %v1987 = vpop.permute.xlu0 %1986
        %vm1993 = vcmask 687744
        %1994 = vst.msk [vmem:[%s321] sm:$0xff] %vm1993, %v1979
        %1995 = vst.msk [vmem:[%s321 + $0x8] sm:$0xff] %vm1993, %v1981
        %1996 = vst.msk [vmem:[%s321 + $0x10] sm:$0xff] %vm1993, %v1983
        %1997 = vst.msk [vmem:[%s321 + $0x18] sm:$0xff] %vm1993, %v1985
        %1998 = vst.msk [vmem:[%s321 + $0x20] sm:$0xff] %vm1993, %v1987
        %v1999 = vld [vmem:[%s1767 + $0x4] sm:$0xe]
        %v2000 = vld [vmem:[%s1767 + $0x8] sm:$0xf]
        %v2001 = vld [vmem:[%s1767 + $0xc] sm:$0xf]
        %v2002 = vld [vmem:[%s1767 + $0x10] sm:$0xf]
        %v2003 = vld [vmem:[%s1767 + $0x14] sm:$0xf]
        %v2004 = vld [vmem:[%s1767 + $0x18] sm:$0xf]
        %v2005 = vld [vmem:[%s1767 + $0x1c] sm:$0xf]
        %v2006 = vld [vmem:[%s1767 + $0x20] sm:$0xf]
        %v2007 = vld [vmem:[%s1767 + $0x24] sm:$0xf]
        %v2008 = vld [vmem:[%s1767 + $0x28] sm:$0xf]
        %v2009 = vld [vmem:[%s1767 + $0x2c] sm:$0x1]
        %v2021 = vunpack.c.l.b16 %v1999
        %v2022 = vunpack.c.l.b16 %v2000
        %v2023 = vunpack.c.l.b16 %v2001
        %v2024 = vunpack.c.l.b16 %v2002
        %v2025 = vunpack.c.l.b16 %v2003
        %v2026 = vunpack.c.l.b16 %v2004
        %v2027 = vunpack.c.l.b16 %v2005
        %v2028 = vunpack.c.l.b16 %v2006
        %v2029 = vunpack.c.l.b16 %v2007
        %v2030 = vunpack.c.l.b16 %v2008
        %v2031 = vunpack.c.l.b16 %v2009
        %v2032 = vpack.c.b16 %v2022, %v2021
        %v2033 = vpack.c.b16 %v2024, %v2023
        %v2034 = vpack.c.b16 %v2026, %v2025
        %v2035 = vpack.c.b16 %v2028, %v2027
        %v2036 = vpack.c.b16 %v2030, %v2029
        %v2037 = vpack.c.b16 %v2031, %v2031
        %v2038 = vrot.slane %v2032, 1
        %v2039 = vrot.slane %v2033, 1
        %v2040 = vsel %vm472, %v2038, %v2039
        %v2041 = vrot.slane %v2034, 1
        %v2042 = vsel %vm472, %v2039, %v2041
        %v2043 = vrot.slane %v2035, 1
        %v2044 = vsel %vm472, %v2041, %v2043
        %v2045 = vrot.slane %v2036, 1
        %v2046 = vsel %vm472, %v2043, %v2045
        %v2047 = vrot.slane %v2037, 1
        %v2048 = vsel %vm472, %v2045, %v2047
        %2049 = vrot.lane.b32.xlu0 %v2040, 84
        %v2050 = vpop.permute.xlu0 %2049
        %2051 = vrot.lane.b32.xlu0 %v2042, 84
        %v2052 = vpop.permute.xlu0 %2051
        %2053 = vrot.lane.b32.xlu0 %v2044, 84
        %v2054 = vpop.permute.xlu0 %2053
        %2055 = vrot.lane.b32.xlu0 %v2046, 84
        %v2056 = vpop.permute.xlu0 %2055
        %2057 = vrot.lane.b32.xlu0 %v2048, 84
        %v2058 = vpop.permute.xlu0 %2057
        %vm2064 = vcmask 720544
        %2065 = vst.msk [vmem:[%s321] sm:$0xff] %vm2064, %v2050
        %2066 = vst.msk [vmem:[%s321 + $0x8] sm:$0xff] %vm2064, %v2052
        %2067 = vst.msk [vmem:[%s321 + $0x10] sm:$0xff] %vm2064, %v2054
        %2068 = vst.msk [vmem:[%s321 + $0x18] sm:$0xff] %vm2064, %v2056
        %2069 = vst.msk [vmem:[%s321 + $0x20] sm:$0xff] %vm2064, %v2058
        %v2070 = vld [vmem:[%s1767 + $0x4] sm:$0xe]
        %v2071 = vld [vmem:[%s1767 + $0x8] sm:$0xf]
        %v2072 = vld [vmem:[%s1767 + $0xc] sm:$0xf]
        %v2073 = vld [vmem:[%s1767 + $0x10] sm:$0xf]
        %v2074 = vld [vmem:[%s1767 + $0x14] sm:$0xf]
        %v2075 = vld [vmem:[%s1767 + $0x18] sm:$0xf]
        %v2076 = vld [vmem:[%s1767 + $0x1c] sm:$0xf]
        %v2077 = vld [vmem:[%s1767 + $0x20] sm:$0xf]
        %v2078 = vld [vmem:[%s1767 + $0x24] sm:$0xf]
        %v2079 = vld [vmem:[%s1767 + $0x28] sm:$0xf]
        %v2080 = vld [vmem:[%s1767 + $0x2c] sm:$0x3]
        %v2092 = vunpack.c.l.b16 %v2070
        %v2093 = vunpack.c.l.b16 %v2071
        %v2094 = vunpack.c.l.b16 %v2072
        %v2095 = vunpack.c.l.b16 %v2073
        %v2096 = vunpack.c.l.b16 %v2074
        %v2097 = vunpack.c.l.b16 %v2075
        %v2098 = vunpack.c.l.b16 %v2076
        %v2099 = vunpack.c.l.b16 %v2077
        %v2100 = vunpack.c.l.b16 %v2078
        %v2101 = vunpack.c.l.b16 %v2079
        %v2102 = vunpack.c.l.b16 %v2080
        %v2103 = vpack.c.b16 %v2093, %v2092
        %v2104 = vpack.c.b16 %v2095, %v2094
        %v2105 = vpack.c.b16 %v2097, %v2096
        %v2106 = vpack.c.b16 %v2099, %v2098
        %v2107 = vpack.c.b16 %v2101, %v2100
        %v2108 = vpack.c.b16 %v2102, %v2102
        %v2110 = vshrl.u32 %v2103, 16
        %v2112 = vrot.slane %v2110, 1
        %v2113 = vshll.u32 %v2103, 16
        %v2115 = vrot.slane %v2113, 2
        %v2116 = vor.u32 %v2112, %v2115
        %v2118 = vshrl.u32 %v2104, 16
        %v2120 = vrot.slane %v2118, 1
        %v2121 = vshll.u32 %v2104, 16
        %v2123 = vrot.slane %v2121, 2
        %v2124 = vor.u32 %v2120, %v2123
        %v2125 = vsel %vm615, %v2116, %v2124
        %v2127 = vshrl.u32 %v2105, 16
        %v2129 = vrot.slane %v2127, 1
        %v2130 = vshll.u32 %v2105, 16
        %v2132 = vrot.slane %v2130, 2
        %v2133 = vor.u32 %v2129, %v2132
        %v2134 = vsel %vm615, %v2124, %v2133
        %v2136 = vshrl.u32 %v2106, 16
        %v2138 = vrot.slane %v2136, 1
        %v2139 = vshll.u32 %v2106, 16
        %v2141 = vrot.slane %v2139, 2
        %v2142 = vor.u32 %v2138, %v2141
        %v2143 = vsel %vm615, %v2133, %v2142
        %v2145 = vshrl.u32 %v2107, 16
        %v2147 = vrot.slane %v2145, 1
        %v2148 = vshll.u32 %v2107, 16
        %v2150 = vrot.slane %v2148, 2
        %v2151 = vor.u32 %v2147, %v2150
        %v2152 = vsel %vm615, %v2142, %v2151
        %v2154 = vshrl.u32 %v2108, 16
        %v2156 = vrot.slane %v2154, 1
        %v2157 = vshll.u32 %v2108, 16
        %v2159 = vrot.slane %v2157, 2
        %v2160 = vor.u32 %v2156, %v2159
        %v2161 = vsel %vm615, %v2151, %v2160
        %2162 = vrot.lane.b32.xlu0 %v2125, 88
        %v2163 = vpop.permute.xlu0 %2162
        %2164 = vrot.lane.b32.xlu0 %v2134, 88
        %v2165 = vpop.permute.xlu0 %2164
        %2166 = vrot.lane.b32.xlu0 %v2143, 88
        %v2167 = vpop.permute.xlu0 %2166
        %2168 = vrot.lane.b32.xlu0 %v2152, 88
        %v2169 = vpop.permute.xlu0 %2168
        %2170 = vrot.lane.b32.xlu0 %v2161, 88
        %v2171 = vpop.permute.xlu0 %2170
        %vm2177 = vcmask 753344
        %2178 = vst.msk [vmem:[%s321] sm:$0xff] %vm2177, %v2163
        %2179 = vst.msk [vmem:[%s321 + $0x8] sm:$0xff] %vm2177, %v2165
        %2180 = vst.msk [vmem:[%s321 + $0x10] sm:$0xff] %vm2177, %v2167
        %2181 = vst.msk [vmem:[%s321 + $0x18] sm:$0xff] %vm2177, %v2169
        %2182 = vst.msk [vmem:[%s321 + $0x20] sm:$0xff] %vm2177, %v2171
        %v2183 = vld [vmem:[%s1767 + $0x4] sm:$0xc]
        %v2184 = vld [vmem:[%s1767 + $0x8] sm:$0xf]
        %v2185 = vld [vmem:[%s1767 + $0xc] sm:$0xf]
        %v2186 = vld [vmem:[%s1767 + $0x10] sm:$0xf]
        %v2187 = vld [vmem:[%s1767 + $0x14] sm:$0xf]
        %v2188 = vld [vmem:[%s1767 + $0x18] sm:$0xf]
        %v2189 = vld [vmem:[%s1767 + $0x1c] sm:$0xf]
        %v2190 = vld [vmem:[%s1767 + $0x20] sm:$0xf]
        %v2191 = vld [vmem:[%s1767 + $0x24] sm:$0xf]
        %v2192 = vld [vmem:[%s1767 + $0x28] sm:$0xf]
        %v2193 = vld [vmem:[%s1767 + $0x2c] sm:$0x3]
        %v2205 = vunpack.c.l.b16 %v2183
        %v2206 = vunpack.c.l.b16 %v2184
        %v2207 = vunpack.c.l.b16 %v2185
        %v2208 = vunpack.c.l.b16 %v2186
        %v2209 = vunpack.c.l.b16 %v2187
        %v2210 = vunpack.c.l.b16 %v2188
        %v2211 = vunpack.c.l.b16 %v2189
        %v2212 = vunpack.c.l.b16 %v2190
        %v2213 = vunpack.c.l.b16 %v2191
        %v2214 = vunpack.c.l.b16 %v2192
        %v2215 = vunpack.c.l.b16 %v2193
        %v2216 = vpack.c.b16 %v2206, %v2205
        %v2217 = vpack.c.b16 %v2208, %v2207
        %v2218 = vpack.c.b16 %v2210, %v2209
        %v2219 = vpack.c.b16 %v2212, %v2211
        %v2220 = vpack.c.b16 %v2214, %v2213
        %v2221 = vpack.c.b16 %v2215, %v2215
        %v2222 = vrot.slane %v2216, 2
        %v2223 = vrot.slane %v2217, 2
        %v2224 = vsel %vm729, %v2222, %v2223
        %v2225 = vrot.slane %v2218, 2
        %v2226 = vsel %vm729, %v2223, %v2225
        %v2227 = vrot.slane %v2219, 2
        %v2228 = vsel %vm729, %v2225, %v2227
        %v2229 = vrot.slane %v2220, 2
        %v2230 = vsel %vm729, %v2227, %v2229
        %v2231 = vrot.slane %v2221, 2
        %v2232 = vsel %vm729, %v2229, %v2231
        %2233 = vrot.lane.b32.xlu0 %v2224, 92
        %v2234 = vpop.permute.xlu0 %2233
        %2235 = vrot.lane.b32.xlu0 %v2226, 92
        %v2236 = vpop.permute.xlu0 %2235
        %2237 = vrot.lane.b32.xlu0 %v2228, 92
        %v2238 = vpop.permute.xlu0 %2237
        %2239 = vrot.lane.b32.xlu0 %v2230, 92
        %v2240 = vpop.permute.xlu0 %2239
        %2241 = vrot.lane.b32.xlu0 %v2232, 92
        %v2242 = vpop.permute.xlu0 %2241
        %vm2248 = vcmask 786144
        %2249 = vst.msk [vmem:[%s321] sm:$0xff] %vm2248, %v2234
        %2250 = vst.msk [vmem:[%s321 + $0x8] sm:$0xff] %vm2248, %v2236
        %2251 = vst.msk [vmem:[%s321 + $0x10] sm:$0xff] %vm2248, %v2238
        %2252 = vst.msk [vmem:[%s321 + $0x18] sm:$0xff] %vm2248, %v2240
        %2253 = vst.msk [vmem:[%s321 + $0x20] sm:$0xff] %vm2248, %v2242
        %v2254 = vld [vmem:[%s1767 + $0x8] sm:$0xc]
        %v2255 = vld [vmem:[%s1767 + $0xc] sm:$0xf]
        %v2256 = vld [vmem:[%s1767 + $0x10] sm:$0xf]
        %v2257 = vld [vmem:[%s1767 + $0x14] sm:$0xf]
        %v2258 = vld [vmem:[%s1767 + $0x18] sm:$0xf]
        %v2259 = vld [vmem:[%s1767 + $0x1c] sm:$0xf]
        %v2260 = vld [vmem:[%s1767 + $0x20] sm:$0xf]
        %v2261 = vld [vmem:[%s1767 + $0x24] sm:$0xf]
        %v2262 = vld [vmem:[%s1767 + $0x28] sm:$0xf]
        %v2263 = vld [vmem:[%s1767 + $0x2c] sm:$0xf]
        %v2264 = vld [vmem:[%s1767 + $0x30] sm:$0x3]
        %v2276 = vunpack.c.l.b16 %v2254
        %v2277 = vunpack.c.l.b16 %v2255
        %v2278 = vunpack.c.l.b16 %v2256
        %v2279 = vunpack.c.l.b16 %v2257
        %v2280 = vunpack.c.l.b16 %v2258
        %v2281 = vunpack.c.l.b16 %v2259
        %v2282 = vunpack.c.l.b16 %v2260
        %v2283 = vunpack.c.l.b16 %v2261
        %v2284 = vunpack.c.l.b16 %v2262
        %v2285 = vunpack.c.l.b16 %v2263
        %v2286 = vunpack.c.l.b16 %v2264
        %v2287 = vpack.c.b16 %v2277, %v2276
        %v2288 = vpack.c.b16 %v2279, %v2278
        %v2289 = vpack.c.b16 %v2281, %v2280
        %v2290 = vpack.c.b16 %v2283, %v2282
        %v2291 = vpack.c.b16 %v2285, %v2284
        %v2292 = vpack.c.b16 %v2286, %v2286
        %v2293 = vrot.slane %v2287, 2
        %v2294 = vrot.slane %v2288, 2
        %v2295 = vsel %vm729, %v2293, %v2294
        %v2296 = vrot.slane %v2289, 2
        %v2297 = vsel %vm729, %v2294, %v2296
        %v2298 = vrot.slane %v2290, 2
        %v2299 = vsel %vm729, %v2296, %v2298
        %v2300 = vrot.slane %v2291, 2
        %v2301 = vsel %vm729, %v2298, %v2300
        %v2302 = vrot.slane %v2292, 2
        %v2303 = vsel %vm729, %v2300, %v2302
        %2304 = vrot.lane.b32.xlu0 %v2295, 96
        %v2305 = vpop.permute.xlu0 %2304
        %2306 = vrot.lane.b32.xlu0 %v2297, 96
        %v2307 = vpop.permute.xlu0 %2306
        %2308 = vrot.lane.b32.xlu0 %v2299, 96
        %v2309 = vpop.permute.xlu0 %2308
        %2310 = vrot.lane.b32.xlu0 %v2301, 96
        %v2311 = vpop.permute.xlu0 %2310
        %2312 = vrot.lane.b32.xlu0 %v2303, 96
        %v2313 = vpop.permute.xlu0 %2312
        %vm2319 = vcmask 818944
        %2320 = vst.msk [vmem:[%s321] sm:$0xff] %vm2319, %v2305
        %2321 = vst.msk [vmem:[%s321 + $0x8] sm:$0xff] %vm2319, %v2307
        %2322 = vst.msk [vmem:[%s321 + $0x10] sm:$0xff] %vm2319, %v2309
        %2323 = vst.msk [vmem:[%s321 + $0x18] sm:$0xff] %vm2319, %v2311
        %2324 = vst.msk [vmem:[%s321 + $0x20] sm:$0xff] %vm2319, %v2313
        %v2325 = vld [vmem:[%s1767 + $0x8] sm:$0xc]
        %v2326 = vld [vmem:[%s1767 + $0xc] sm:$0xf]
        %v2327 = vld [vmem:[%s1767 + $0x10] sm:$0xf]
        %v2328 = vld [vmem:[%s1767 + $0x14] sm:$0xf]
        %v2329 = vld [vmem:[%s1767 + $0x18] sm:$0xf]
        %v2330 = vld [vmem:[%s1767 + $0x1c] sm:$0xf]
        %v2331 = vld [vmem:[%s1767 + $0x20] sm:$0xf]
        %v2332 = vld [vmem:[%s1767 + $0x24] sm:$0xf]
        %v2333 = vld [vmem:[%s1767 + $0x28] sm:$0xf]
        %v2334 = vld [vmem:[%s1767 + $0x2c] sm:$0xf]
        %v2335 = vld [vmem:[%s1767 + $0x30] sm:$0x7]
        %v2347 = vunpack.c.l.b16 %v2325
        %v2348 = vunpack.c.l.b16 %v2326
        %v2349 = vunpack.c.l.b16 %v2327
        %v2350 = vunpack.c.l.b16 %v2328
        %v2351 = vunpack.c.l.b16 %v2329
        %v2352 = vunpack.c.l.b16 %v2330
        %v2353 = vunpack.c.l.b16 %v2331
        %v2354 = vunpack.c.l.b16 %v2332
        %v2355 = vunpack.c.l.b16 %v2333
        %v2356 = vunpack.c.l.b16 %v2334
        %v2357 = vunpack.c.l.b16 %v2335
        %v2358 = vpack.c.b16 %v2348, %v2347
        %v2359 = vpack.c.b16 %v2350, %v2349
        %v2360 = vpack.c.b16 %v2352, %v2351
        %v2361 = vpack.c.b16 %v2354, %v2353
        %v2362 = vpack.c.b16 %v2356, %v2355
        %v2363 = vpack.c.b16 %v2357, %v2357
        %v2365 = vshrl.u32 %v2358, 16
        %v2367 = vrot.slane %v2365, 2
        %v2368 = vshll.u32 %v2358, 16
        %v2370 = vrot.slane %v2368, 3
        %v2371 = vor.u32 %v2367, %v2370
        %v2373 = vshrl.u32 %v2359, 16
        %v2375 = vrot.slane %v2373, 2
        %v2376 = vshll.u32 %v2359, 16
        %v2378 = vrot.slane %v2376, 3
        %v2379 = vor.u32 %v2375, %v2378
        %v2380 = vsel %vm872, %v2371, %v2379
        %v2382 = vshrl.u32 %v2360, 16
        %v2384 = vrot.slane %v2382, 2
        %v2385 = vshll.u32 %v2360, 16
        %v2387 = vrot.slane %v2385, 3
        %v2388 = vor.u32 %v2384, %v2387
        %v2389 = vsel %vm872, %v2379, %v2388
        %v2391 = vshrl.u32 %v2361, 16
        %v2393 = vrot.slane %v2391, 2
        %v2394 = vshll.u32 %v2361, 16
        %v2396 = vrot.slane %v2394, 3
        %v2397 = vor.u32 %v2393, %v2396
        %v2398 = vsel %vm872, %v2388, %v2397
        %v2400 = vshrl.u32 %v2362, 16
        %v2402 = vrot.slane %v2400, 2
        %v2403 = vshll.u32 %v2362, 16
        %v2405 = vrot.slane %v2403, 3
        %v2406 = vor.u32 %v2402, %v2405
        %v2407 = vsel %vm872, %v2397, %v2406
        %v2409 = vshrl.u32 %v2363, 16
        %v2411 = vrot.slane %v2409, 2
        %v2412 = vshll.u32 %v2363, 16
        %v2414 = vrot.slane %v2412, 3
        %v2415 = vor.u32 %v2411, %v2414
        %v2416 = vsel %vm872, %v2406, %v2415
        %2417 = vrot.lane.b32.xlu0 %v2380, 100
        %v2418 = vpop.permute.xlu0 %2417
        %2419 = vrot.lane.b32.xlu0 %v2389, 100
        %v2420 = vpop.permute.xlu0 %2419
        %2421 = vrot.lane.b32.xlu0 %v2398, 100
        %v2422 = vpop.permute.xlu0 %2421
        %2423 = vrot.lane.b32.xlu0 %v2407, 100
        %v2424 = vpop.permute.xlu0 %2423
        %2425 = vrot.lane.b32.xlu0 %v2416, 100
        %v2426 = vpop.permute.xlu0 %2425
        %vm2432 = vcmask 851744
        %2433 = vst.msk [vmem:[%s321] sm:$0xff] %vm2432, %v2418
        %2434 = vst.msk [vmem:[%s321 + $0x8] sm:$0xff] %vm2432, %v2420
        %2435 = vst.msk [vmem:[%s321 + $0x10] sm:$0xff] %vm2432, %v2422
        %2436 = vst.msk [vmem:[%s321 + $0x18] sm:$0xff] %vm2432, %v2424
        %2437 = vst.msk [vmem:[%s321 + $0x20] sm:$0xff] %vm2432, %v2426
        %v2438 = vld [vmem:[%s1767 + $0x8] sm:$0x8]
        %v2439 = vld [vmem:[%s1767 + $0xc] sm:$0xf]
        %v2440 = vld [vmem:[%s1767 + $0x10] sm:$0xf]
        %v2441 = vld [vmem:[%s1767 + $0x14] sm:$0xf]
        %v2442 = vld [vmem:[%s1767 + $0x18] sm:$0xf]
        %v2443 = vld [vmem:[%s1767 + $0x1c] sm:$0xf]
        %v2444 = vld [vmem:[%s1767 + $0x20] sm:$0xf]
        %v2445 = vld [vmem:[%s1767 + $0x24] sm:$0xf]
        %v2446 = vld [vmem:[%s1767 + $0x28] sm:$0xf]
        %v2447 = vld [vmem:[%s1767 + $0x2c] sm:$0xf]
        %v2448 = vld [vmem:[%s1767 + $0x30] sm:$0x7]
        %v2460 = vunpack.c.l.b16 %v2438
        %v2461 = vunpack.c.l.b16 %v2439
        %v2462 = vunpack.c.l.b16 %v2440
        %v2463 = vunpack.c.l.b16 %v2441
        %v2464 = vunpack.c.l.b16 %v2442
        %v2465 = vunpack.c.l.b16 %v2443
        %v2466 = vunpack.c.l.b16 %v2444
        %v2467 = vunpack.c.l.b16 %v2445
        %v2468 = vunpack.c.l.b16 %v2446
        %v2469 = vunpack.c.l.b16 %v2447
        %v2470 = vunpack.c.l.b16 %v2448
        %v2471 = vpack.c.b16 %v2461, %v2460
        %v2472 = vpack.c.b16 %v2463, %v2462
        %v2473 = vpack.c.b16 %v2465, %v2464
        %v2474 = vpack.c.b16 %v2467, %v2466
        %v2475 = vpack.c.b16 %v2469, %v2468
        %v2476 = vpack.c.b16 %v2470, %v2470
        %v2477 = vrot.slane %v2471, 3
        %v2478 = vrot.slane %v2472, 3
        %v2479 = vsel %vm986, %v2477, %v2478
        %v2480 = vrot.slane %v2473, 3
        %v2481 = vsel %vm986, %v2478, %v2480
        %v2482 = vrot.slane %v2474, 3
        %v2483 = vsel %vm986, %v2480, %v2482
        %v2484 = vrot.slane %v2475, 3
        %v2485 = vsel %vm986, %v2482, %v2484
        %v2486 = vrot.slane %v2476, 3
        %v2487 = vsel %vm986, %v2484, %v2486
        %2488 = vrot.lane.b32.xlu0 %v2479, 104
        %v2489 = vpop.permute.xlu0 %2488
        %2490 = vrot.lane.b32.xlu0 %v2481, 104
        %v2491 = vpop.permute.xlu0 %2490
        %2492 = vrot.lane.b32.xlu0 %v2483, 104
        %v2493 = vpop.permute.xlu0 %2492
        %2494 = vrot.lane.b32.xlu0 %v2485, 104
        %v2495 = vpop.permute.xlu0 %2494
        %2496 = vrot.lane.b32.xlu0 %v2487, 104
        %v2497 = vpop.permute.xlu0 %2496
        %vm2503 = vcmask 884544
        %2504 = vst.msk [vmem:[%s321] sm:$0xff] %vm2503, %v2489
        %2505 = vst.msk [vmem:[%s321 + $0x8] sm:$0xff] %vm2503, %v2491
        %2506 = vst.msk [vmem:[%s321 + $0x10] sm:$0xff] %vm2503, %v2493
        %2507 = vst.msk [vmem:[%s321 + $0x18] sm:$0xff] %vm2503, %v2495
        %2508 = vst.msk [vmem:[%s321 + $0x20] sm:$0xff] %vm2503, %v2497
      $region41: #{basic_block3d_forward.4} parent=31 // loop_footer
        %s273 = sadd.s32 1, %s269
      $region42: #{basic_block3d_forward.4} parent=31 // loop_footer_branch
        %268 = sbr.rel target = $region38
      $region43: #{basic_block3d_forward.4} parent=31 // loop_exit
        _
      %v2509 = vld [vmem:[#allocation2] sm:$0xff]
      %v2510 = vld [vmem:[#allocation2 + $0x8] sm:$0xff]
      %v2511 = vld [vmem:[#allocation2 + $0x10] sm:$0xff]
      %v2512 = vld [vmem:[#allocation2 + $0x18] sm:$0xff]
      %v2513 = vld [vmem:[#allocation2 + $0x20] sm:$0xff]
      %v2514 = vld [vmem:[#allocation2 + $0x28] sm:$0xff]
      %v2515 = vld [vmem:[#allocation2 + $0x30] sm:$0xff]
      %v2516 = vld [vmem:[#allocation2 + $0x38] sm:$0xff]
      %v2517 = vld [vmem:[#allocation2 + $0x40] sm:$0xff]
      %v2518 = vld [vmem:[#allocation2 + $0x48] sm:$0xff]
      %v2519 = vld [vmem:[#allocation2 + $0x50] sm:$0xff]
      %v2520 = vld [vmem:[#allocation2 + $0x58] sm:$0xff]
      %v2521 = vld [vmem:[#allocation2 + $0x60] sm:$0xff]
      %v2522 = vld [vmem:[#allocation2 + $0x68] sm:$0xff]
      %v2523 = vld [vmem:[#allocation2 + $0x70] sm:$0xff]
      %v2524 = vld [vmem:[#allocation2 + $0x78] sm:$0xff]
      %v2525 = vld [vmem:[#allocation2 + $0x80] sm:$0xff]
      %v2526 = vld [vmem:[#allocation2 + $0x88] sm:$0xff]
      %v2527 = vld [vmem:[#allocation2 + $0x90] sm:$0xff]
      %v2528 = vld [vmem:[#allocation2 + $0x98] sm:$0xff]
      %v2529 = vld [vmem:[#allocation2 + $0xa0] sm:$0xff]
      %v2530 = vld [vmem:[#allocation2 + $0xa8] sm:$0xff]
      %v2531 = vld [vmem:[#allocation2 + $0xb0] sm:$0xff]
      %v2532 = vld [vmem:[#allocation2 + $0xb8] sm:$0xff]
      %v2533 = vld [vmem:[#allocation2 + $0xc0] sm:$0xff]
      %v2534 = vld [vmem:[#allocation2 + $0xc8] sm:$0xff]
      %v2535 = vld [vmem:[#allocation2 + $0xd0] sm:$0xff]
      %v2536 = vld [vmem:[#allocation2 + $0xd8] sm:$0xff]
      %v2537 = vld [vmem:[#allocation2 + $0xe0] sm:$0xff]
      %v2538 = vld [vmem:[#allocation2 + $0xe8] sm:$0xff]
      %v2539 = vld [vmem:[#allocation2 + $0xf0] sm:$0xff]
      %v2540 = vld [vmem:[#allocation2 + $0xf8] sm:$0xff]
      %v2541 = vld [vmem:[#allocation2 + $0x100] sm:$0xff]
      %v2542 = vld [vmem:[#allocation2 + $0x108] sm:$0xff]
      %v2543 = vld [vmem:[#allocation2 + $0x110] sm:$0xff]
      %v2544 = vld [vmem:[#allocation2 + $0x118] sm:$0xff]
      %v2545 = vld [vmem:[#allocation2 + $0x120] sm:$0xff]
      %v2546 = vld [vmem:[#allocation2 + $0x128] sm:$0xff]
      %v2547 = vld [vmem:[#allocation2 + $0x130] sm:$0xff]
      %v2548 = vld [vmem:[#allocation2 + $0x138] sm:$0xff]
      %v2549 = vld [vmem:[%s1] sm:$0xf]
      %v2550 = vld [vmem:[%s1 + $0x4] sm:$0xf]
      %v2551 = vld [vmem:[%s1 + $0x8] sm:$0xf]
      %v2552 = vld [vmem:[%s1 + $0xc] sm:$0xf]
      %v2553 = vld [vmem:[%s1 + $0x10] sm:$0xf]
      %v2554 = vld [vmem:[%s1 + $0x14] sm:$0xf]
      %v2555 = vld [vmem:[%s1 + $0x18] sm:$0xf]
      %v2556 = vld [vmem:[%s1 + $0x1c] sm:$0xf]
      %v2557 = vld [vmem:[%s1 + $0x20] sm:$0xf]
      %v2558 = vld [vmem:[%s1 + $0x24] sm:$0xf]
      %v2559 = vld [vmem:[%s1 + $0x28] sm:$0xf]
      %v2560 = vld [vmem:[%s1 + $0x2c] sm:$0xf]
      %v2561 = vld [vmem:[%s1 + $0x30] sm:$0xf]
      %v2562 = vld [vmem:[%s1 + $0x34] sm:$0xf]
      %v2563 = vld [vmem:[%s1 + $0x38] sm:$0xf]
      %v2564 = vld [vmem:[%s1 + $0x3c] sm:$0xf]
      %v2581 = vunpack.c.l.b16 %v2549
      %v2582 = vunpack.c.l.b16 %v2550
      %v2583 = vunpack.c.l.b16 %v2551
      %v2584 = vunpack.c.l.b16 %v2552
      %v2585 = vunpack.c.l.b16 %v2553
      %v2586 = vunpack.c.l.b16 %v2554
      %v2587 = vunpack.c.l.b16 %v2555
      %v2588 = vunpack.c.l.b16 %v2556
      %v2589 = vunpack.c.l.b16 %v2557
      %v2590 = vunpack.c.l.b16 %v2558
      %v2591 = vunpack.c.l.b16 %v2559
      %v2592 = vunpack.c.l.b16 %v2560
      %v2593 = vunpack.c.l.b16 %v2561
      %v2594 = vunpack.c.l.b16 %v2562
      %v2595 = vunpack.c.l.b16 %v2563
      %v2596 = vunpack.c.l.b16 %v2564
      %v2597 = vpack.c.b16 %v2582, %v2581
      %v2598 = vpack.c.b16 %v2584, %v2583
      %v2599 = vpack.c.b16 %v2586, %v2585
      %v2600 = vpack.c.b16 %v2588, %v2587
      %v2601 = vpack.c.b16 %v2590, %v2589
      %v2602 = vpack.c.b16 %v2592, %v2591
      %v2603 = vpack.c.b16 %v2594, %v2593
      %v2604 = vpack.c.b16 %v2596, %v2595
      %2613 = vmatprep.subr.bf16.mxu0 0
      %2614 = vmatpush1.bf16.msra.mxu0 %v2597
      %2615 = vmatprep.subr.bf16.mxu0 0
      %2616 = vmatpush1.bf16.msra.mxu0 %v2598
      %2617 = vmatprep.subr.bf16.mxu0 0
      %2618 = vmatpush1.bf16.msra.mxu0 %v2599
      %2619 = vmatprep.subr.bf16.mxu0 0
      %2620 = vmatpush1.bf16.msra.mxu0 %v2600
      %2621 = vmatprep.subr.bf16.mxu0 0
      %2622 = vmatpush1.bf16.msra.mxu0 %v2601
      %2623 = vmatprep.subr.bf16.mxu0 0
      %2624 = vmatpush1.bf16.msra.mxu0 %v2602
      %2625 = vmatprep.subr.bf16.mxu0 0
      %2626 = vmatpush1.bf16.msra.mxu0 %v2603
      %2627 = vmatprep.subr.bf16.mxu0 0
      %2628 = vmatpush1.bf16.msra.mxu0 %v2604
      %2629 = vmatprep.subr.bf16.mxu0 0
      %2630 = vmatpush1.bf16.msra.mxu0 0
      %2631 = vmatprep.subr.bf16.mxu0 0
      %2632 = vmatpush1.bf16.msra.mxu0 0
      %2633 = vmatprep.subr.bf16.mxu0 0
      %2634 = vmatpush1.bf16.msra.mxu0 0
      %2635 = vmatprep.subr.bf16.mxu0 0
      %2636 = vmatpush1.bf16.msra.mxu0 0
      %2637 = vmatprep.subr.bf16.mxu0 0
      %2638 = vmatpush1.bf16.msra.mxu0 0
      %2639 = vmatprep.subr.bf16.mxu0 0
      %2640 = vmatpush1.bf16.msra.mxu0 0
      %2641 = vmatprep.subr.bf16.mxu0 0
      %2642 = vmatpush1.bf16.msra.mxu0 0
      %2643 = vmatprep.subr.bf16.mxu0 0
      %2644 = vmatpush1.bf16.msra.mxu0 0
      %2645 = vmatprep.mubr.bf16.mxu0 0
      %2646 = vmatmul.mubr.bf16.gmra.mrb[0].mxu0 %v2509
      %v2647 = vpop.f32.mrb[0].mxu0
      %v2648 = vadd.f32 0.0, %v2647
      %v2649 = vpop.f32.mrb[0].mxu0
      %v2650 = vpop.f32.mrb[0].mxu0
      %v2651 = vadd.f32 0.0, %v2650
      %v2652 = vpop.f32.mrb[0].mxu0
      %2653 = vmatprep.mubr.bf16.mxu0 0
      %2654 = vmatmul.mubr.bf16.gmra.mrb[0].mxu0 %v2510
      %v2655 = vpop.f32.mrb[0].mxu0
      %v2656 = vadd.f32 0.0, %v2655
      %v2657 = vpop.f32.mrb[0].mxu0
      %v2658 = vpop.f32.mrb[0].mxu0
      %v2659 = vadd.f32 0.0, %v2658
      %v2660 = vpop.f32.mrb[0].mxu0
      %2661 = vmatprep.mubr.bf16.mxu0 0
      %2662 = vmatmul.mubr.bf16.gmra.mrb[0].mxu0 %v2511
      %v2663 = vpop.f32.mrb[0].mxu0
      %v2664 = vadd.f32 0.0, %v2663
      %v2665 = vpop.f32.mrb[0].mxu0
      %v2666 = vpop.f32.mrb[0].mxu0
      %v2667 = vadd.f32 0.0, %v2666
      %v2668 = vpop.f32.mrb[0].mxu0
      %2669 = vmatprep.mubr.bf16.mxu0 0
      %2670 = vmatmul.mubr.bf16.gmra.mrb[0].mxu0 %v2512
      %v2671 = vpop.f32.mrb[0].mxu0
      %v2672 = vadd.f32 0.0, %v2671
      %v2673 = vpop.f32.mrb[0].mxu0
      %v2674 = vpop.f32.mrb[0].mxu0
      %v2675 = vadd.f32 0.0, %v2674
      %v2676 = vpop.f32.mrb[0].mxu0
      %2677 = vmatprep.mubr.bf16.mxu0 0
      %2678 = vmatmul.mubr.bf16.gmra.mrb[0].mxu0 %v2513
      %v2679 = vpop.f32.mrb[0].mxu0
      %v2680 = vadd.f32 0.0, %v2679
      %v2681 = vpop.f32.mrb[0].mxu0
      %v2682 = vpop.f32.mrb[0].mxu0
      %v2683 = vadd.f32 0.0, %v2682
      %v2684 = vpop.f32.mrb[0].mxu0
      %2685 = vmatprep.mubr.bf16.mxu0 0
      %2686 = vmatmul.mubr.bf16.gmra.mrb[0].mxu0 %v2514
      %v2687 = vpop.f32.mrb[0].mxu0
      %v2688 = vadd.f32 0.0, %v2687
      %v2689 = vpop.f32.mrb[0].mxu0
      %v2690 = vpop.f32.mrb[0].mxu0
      %v2691 = vadd.f32 0.0, %v2690
      %v2692 = vpop.f32.mrb[0].mxu0
      %2693 = vmatprep.mubr.bf16.mxu0 0
      %2694 = vmatmul.mubr.bf16.gmra.mrb[0].mxu0 %v2515
      %v2695 = vpop.f32.mrb[0].mxu0
      %v2696 = vadd.f32 0.0, %v2695
      %v2697 = vpop.f32.mrb[0].mxu0
      %v2698 = vpop.f32.mrb[0].mxu0
      %v2699 = vadd.f32 0.0, %v2698
      %v2700 = vpop.f32.mrb[0].mxu0
      %2701 = vmatprep.mubr.bf16.mxu0 0
      %2702 = vmatmul.mubr.bf16.gmra.mrb[0].mxu0 %v2516
      %v2703 = vpop.f32.mrb[0].mxu0
      %v2704 = vadd.f32 0.0, %v2703
      %v2705 = vpop.f32.mrb[0].mxu0
      %v2706 = vpop.f32.mrb[0].mxu0
      %v2707 = vadd.f32 0.0, %v2706
      %v2708 = vpop.f32.mrb[0].mxu0
      %2709 = vmatprep.mubr.bf16.mxu0 0
      %2710 = vmatmul.mubr.bf16.gmra.mrb[0].mxu0 %v2517
      %v2711 = vpop.f32.mrb[0].mxu0
      %v2712 = vadd.f32 0.0, %v2711
      %v2713 = vpop.f32.mrb[0].mxu0
      %v2714 = vpop.f32.mrb[0].mxu0
      %v2715 = vadd.f32 0.0, %v2714
      %v2716 = vpop.f32.mrb[0].mxu0
      %2717 = vmatprep.mubr.bf16.mxu0 0
      %2718 = vmatmul.mubr.bf16.gmra.mrb[0].mxu0 %v2518
      %v2719 = vpop.f32.mrb[0].mxu0
      %v2720 = vadd.f32 0.0, %v2719
      %v2721 = vpop.f32.mrb[0].mxu0
      %v2722 = vpop.f32.mrb[0].mxu0
      %v2723 = vadd.f32 0.0, %v2722
      %v2724 = vpop.f32.mrb[0].mxu0
      %2725 = vmatprep.mubr.bf16.mxu0 0
      %2726 = vmatmul.mubr.bf16.gmra.mrb[0].mxu0 %v2519
      %v2727 = vpop.f32.mrb[0].mxu0
      %v2728 = vadd.f32 0.0, %v2727
      %v2729 = vpop.f32.mrb[0].mxu0
      %v2730 = vpop.f32.mrb[0].mxu0
      %v2731 = vadd.f32 0.0, %v2730
      %v2732 = vpop.f32.mrb[0].mxu0
      %2733 = vmatprep.mubr.bf16.mxu0 0
      %2734 = vmatmul.mubr.bf16.gmra.mrb[0].mxu0 %v2520
      %v2735 = vpop.f32.mrb[0].mxu0
      %v2736 = vadd.f32 0.0, %v2735
      %v2737 = vpop.f32.mrb[0].mxu0
      %v2738 = vpop.f32.mrb[0].mxu0
      %v2739 = vadd.f32 0.0, %v2738
      %v2740 = vpop.f32.mrb[0].mxu0
      %2741 = vmatprep.mubr.bf16.mxu0 0
      %2742 = vmatmul.mubr.bf16.gmra.mrb[0].mxu0 %v2521
      %v2743 = vpop.f32.mrb[0].mxu0
      %v2744 = vadd.f32 0.0, %v2743
      %v2745 = vpop.f32.mrb[0].mxu0
      %v2746 = vpop.f32.mrb[0].mxu0
      %v2747 = vadd.f32 0.0, %v2746
      %v2748 = vpop.f32.mrb[0].mxu0
      %2749 = vmatprep.mubr.bf16.mxu0 0
      %2750 = vmatmul.mubr.bf16.gmra.mrb[0].mxu0 %v2522
      %v2751 = vpop.f32.mrb[0].mxu0
      %v2752 = vadd.f32 0.0, %v2751
      %v2753 = vpop.f32.mrb[0].mxu0
      %v2754 = vpop.f32.mrb[0].mxu0
      %v2755 = vadd.f32 0.0, %v2754
      %v2756 = vpop.f32.mrb[0].mxu0
      %2757 = vmatprep.mubr.bf16.mxu0 0
      %2758 = vmatmul.mubr.bf16.gmra.mrb[0].mxu0 %v2523
      %v2759 = vpop.f32.mrb[0].mxu0
      %v2760 = vadd.f32 0.0, %v2759
      %v2761 = vpop.f32.mrb[0].mxu0
      %v2762 = vpop.f32.mrb[0].mxu0
      %v2763 = vadd.f32 0.0, %v2762
      %v2764 = vpop.f32.mrb[0].mxu0
      %2765 = vmatprep.mubr.bf16.mxu0 0
      %2766 = vmatmul.mubr.bf16.gmra.mrb[0].mxu0 %v2524
      %v2767 = vpop.f32.mrb[0].mxu0
      %v2768 = vadd.f32 0.0, %v2767
      %v2769 = vpop.f32.mrb[0].mxu0
      %v2770 = vpop.f32.mrb[0].mxu0
      %v2771 = vadd.f32 0.0, %v2770
      %v2772 = vpop.f32.mrb[0].mxu0
      %2773 = vmatprep.mubr.bf16.mxu0 0
      %2774 = vmatmul.mubr.bf16.gmra.mrb[0].mxu0 %v2525
      %v2775 = vpop.f32.mrb[0].mxu0
      %v2776 = vadd.f32 0.0, %v2775
      %v2777 = vpop.f32.mrb[0].mxu0
      %v2778 = vpop.f32.mrb[0].mxu0
      %v2779 = vadd.f32 0.0, %v2778
      %v2780 = vpop.f32.mrb[0].mxu0
      %2781 = vmatprep.mubr.bf16.mxu0 0
      %2782 = vmatmul.mubr.bf16.gmra.mrb[0].mxu0 %v2526
      %v2783 = vpop.f32.mrb[0].mxu0
      %v2784 = vadd.f32 0.0, %v2783
      %v2785 = vpop.f32.mrb[0].mxu0
      %v2786 = vpop.f32.mrb[0].mxu0
      %v2787 = vadd.f32 0.0, %v2786
      %v2788 = vpop.f32.mrb[0].mxu0
      %2789 = vmatprep.mubr.bf16.mxu0 0
      %2790 = vmatmul.mubr.bf16.gmra.mrb[0].mxu0 %v2527
      %v2791 = vpop.f32.mrb[0].mxu0
      %v2792 = vadd.f32 0.0, %v2791
      %v2793 = vpop.f32.mrb[0].mxu0
      %v2794 = vpop.f32.mrb[0].mxu0
      %v2795 = vadd.f32 0.0, %v2794
      %v2796 = vpop.f32.mrb[0].mxu0
      %2797 = vmatprep.mubr.bf16.mxu0 0
      %2798 = vmatmul.mubr.bf16.gmra.mrb[0].mxu0 %v2528
      %v2799 = vpop.f32.mrb[0].mxu0
      %v2800 = vadd.f32 0.0, %v2799
      %v2801 = vpop.f32.mrb[0].mxu0
      %v2802 = vpop.f32.mrb[0].mxu0
      %v2803 = vadd.f32 0.0, %v2802
      %v2804 = vpop.f32.mrb[0].mxu0
      %2805 = vmatprep.mubr.bf16.mxu0 0
      %2806 = vmatmul.mubr.bf16.gmra.mrb[0].mxu0 %v2529
      %v2807 = vpop.f32.mrb[0].mxu0
      %v2808 = vadd.f32 0.0, %v2807
      %v2809 = vpop.f32.mrb[0].mxu0
      %v2810 = vpop.f32.mrb[0].mxu0
      %v2811 = vadd.f32 0.0, %v2810
      %v2812 = vpop.f32.mrb[0].mxu0
      %2813 = vmatprep.mubr.bf16.mxu0 0
      %2814 = vmatmul.mubr.bf16.gmra.mrb[0].mxu0 %v2530
      %v2815 = vpop.f32.mrb[0].mxu0
      %v2816 = vadd.f32 0.0, %v2815
      %v2817 = vpop.f32.mrb[0].mxu0
      %v2818 = vpop.f32.mrb[0].mxu0
      %v2819 = vadd.f32 0.0, %v2818
      %v2820 = vpop.f32.mrb[0].mxu0
      %2821 = vmatprep.mubr.bf16.mxu0 0
      %2822 = vmatmul.mubr.bf16.gmra.mrb[0].mxu0 %v2531
      %v2823 = vpop.f32.mrb[0].mxu0
      %v2824 = vadd.f32 0.0, %v2823
      %v2825 = vpop.f32.mrb[0].mxu0
      %v2826 = vpop.f32.mrb[0].mxu0
      %v2827 = vadd.f32 0.0, %v2826
      %v2828 = vpop.f32.mrb[0].mxu0
      %2829 = vmatprep.mubr.bf16.mxu0 0
      %2830 = vmatmul.mubr.bf16.gmra.mrb[0].mxu0 %v2532
      %v2831 = vpop.f32.mrb[0].mxu0
      %v2832 = vadd.f32 0.0, %v2831
      %v2833 = vpop.f32.mrb[0].mxu0
      %v2834 = vpop.f32.mrb[0].mxu0
      %v2835 = vadd.f32 0.0, %v2834
      %v2836 = vpop.f32.mrb[0].mxu0
      %2837 = vmatprep.mubr.bf16.mxu0 0
      %2838 = vmatmul.mubr.bf16.gmra.mrb[0].mxu0 %v2533
      %v2839 = vpop.f32.mrb[0].mxu0
      %v2840 = vadd.f32 0.0, %v2839
      %v2841 = vpop.f32.mrb[0].mxu0
      %v2842 = vpop.f32.mrb[0].mxu0
      %v2843 = vadd.f32 0.0, %v2842
      %v2844 = vpop.f32.mrb[0].mxu0
      %2845 = vmatprep.mubr.bf16.mxu0 0
      %2846 = vmatmul.mubr.bf16.gmra.mrb[0].mxu0 %v2534
      %v2847 = vpop.f32.mrb[0].mxu0
      %v2848 = vadd.f32 0.0, %v2847
      %v2849 = vpop.f32.mrb[0].mxu0
      %v2850 = vpop.f32.mrb[0].mxu0
      %v2851 = vadd.f32 0.0, %v2850
      %v2852 = vpop.f32.mrb[0].mxu0
      %2853 = vmatprep.mubr.bf16.mxu0 0
      %2854 = vmatmul.mubr.bf16.gmra.mrb[0].mxu0 %v2535
      %v2855 = vpop.f32.mrb[0].mxu0
      %v2856 = vadd.f32 0.0, %v2855
      %v2857 = vpop.f32.mrb[0].mxu0
      %v2858 = vpop.f32.mrb[0].mxu0
      %v2859 = vadd.f32 0.0, %v2858
      %v2860 = vpop.f32.mrb[0].mxu0
      %2861 = vmatprep.mubr.bf16.mxu0 0
      %2862 = vmatmul.mubr.bf16.gmra.mrb[0].mxu0 %v2536
      %v2863 = vpop.f32.mrb[0].mxu0
      %v2864 = vadd.f32 0.0, %v2863
      %v2865 = vpop.f32.mrb[0].mxu0
      %v2866 = vpop.f32.mrb[0].mxu0
      %v2867 = vadd.f32 0.0, %v2866
      %v2868 = vpop.f32.mrb[0].mxu0
      %2869 = vmatprep.mubr.bf16.mxu0 0
      %2870 = vmatmul.mubr.bf16.gmra.mrb[0].mxu0 %v2537
      %v2871 = vpop.f32.mrb[0].mxu0
      %v2872 = vadd.f32 0.0, %v2871
      %v2873 = vpop.f32.mrb[0].mxu0
      %v2874 = vpop.f32.mrb[0].mxu0
      %v2875 = vadd.f32 0.0, %v2874
      %v2876 = vpop.f32.mrb[0].mxu0
      %2877 = vmatprep.mubr.bf16.mxu0 0
      %2878 = vmatmul.mubr.bf16.gmra.mrb[0].mxu0 %v2538
      %v2879 = vpop.f32.mrb[0].mxu0
      %v2880 = vadd.f32 0.0, %v2879
      %v2881 = vpop.f32.mrb[0].mxu0
      %v2882 = vpop.f32.mrb[0].mxu0
      %v2883 = vadd.f32 0.0, %v2882
      %v2884 = vpop.f32.mrb[0].mxu0
      %2885 = vmatprep.mubr.bf16.mxu0 0
      %2886 = vmatmul.mubr.bf16.gmra.mrb[0].mxu0 %v2539
      %v2887 = vpop.f32.mrb[0].mxu0
      %v2888 = vadd.f32 0.0, %v2887
      %v2889 = vpop.f32.mrb[0].mxu0
      %v2890 = vpop.f32.mrb[0].mxu0
      %v2891 = vadd.f32 0.0, %v2890
      %v2892 = vpop.f32.mrb[0].mxu0
      %2893 = vmatprep.mubr.bf16.mxu0 0
      %2894 = vmatmul.mubr.bf16.gmra.mrb[0].mxu0 %v2540
      %v2895 = vpop.f32.mrb[0].mxu0
      %v2896 = vadd.f32 0.0, %v2895
      %v2897 = vpop.f32.mrb[0].mxu0
      %v2898 = vpop.f32.mrb[0].mxu0
      %v2899 = vadd.f32 0.0, %v2898
      %v2900 = vpop.f32.mrb[0].mxu0
      %2901 = vmatprep.mubr.bf16.mxu0 0
      %2902 = vmatmul.mubr.bf16.gmra.mrb[0].mxu0 %v2541
      %v2903 = vpop.f32.mrb[0].mxu0
      %v2904 = vadd.f32 0.0, %v2903
      %v2905 = vpop.f32.mrb[0].mxu0
      %v2906 = vpop.f32.mrb[0].mxu0
      %v2907 = vadd.f32 0.0, %v2906
      %v2908 = vpop.f32.mrb[0].mxu0
      %2909 = vmatprep.mubr.bf16.mxu0 0
      %2910 = vmatmul.mubr.bf16.gmra.mrb[0].mxu0 %v2542
      %v2911 = vpop.f32.mrb[0].mxu0
      %v2912 = vadd.f32 0.0, %v2911
      %v2913 = vpop.f32.mrb[0].mxu0
      %v2914 = vpop.f32.mrb[0].mxu0
      %v2915 = vadd.f32 0.0, %v2914
      %v2916 = vpop.f32.mrb[0].mxu0
      %2917 = vmatprep.mubr.bf16.mxu0 0
      %2918 = vmatmul.mubr.bf16.gmra.mrb[0].mxu0 %v2543
      %v2919 = vpop.f32.mrb[0].mxu0
      %v2920 = vadd.f32 0.0, %v2919
      %v2921 = vpop.f32.mrb[0].mxu0
      %v2922 = vpop.f32.mrb[0].mxu0
      %v2923 = vadd.f32 0.0, %v2922
      %v2924 = vpop.f32.mrb[0].mxu0
      %2925 = vmatprep.mubr.bf16.mxu0 0
      %2926 = vmatmul.mubr.bf16.gmra.mrb[0].mxu0 %v2544
      %v2927 = vpop.f32.mrb[0].mxu0
      %v2928 = vadd.f32 0.0, %v2927
      %v2929 = vpop.f32.mrb[0].mxu0
      %v2930 = vpop.f32.mrb[0].mxu0
      %v2931 = vadd.f32 0.0, %v2930
      %v2932 = vpop.f32.mrb[0].mxu0
      %2933 = vmatprep.mubr.bf16.mxu0 0
      %2934 = vmatmul.mubr.bf16.gmra.mrb[0].mxu0 %v2545
      %v2935 = vpop.f32.mrb[0].mxu0
      %v2936 = vadd.f32 0.0, %v2935
      %v2937 = vpop.f32.mrb[0].mxu0
      %v2938 = vpop.f32.mrb[0].mxu0
      %v2939 = vadd.f32 0.0, %v2938
      %v2940 = vpop.f32.mrb[0].mxu0
      %2941 = vmatprep.mubr.bf16.mxu0 0
      %2942 = vmatmul.mubr.bf16.gmra.mrb[0].mxu0 %v2546
      %v2943 = vpop.f32.mrb[0].mxu0
      %v2944 = vadd.f32 0.0, %v2943
      %v2945 = vpop.f32.mrb[0].mxu0
      %v2946 = vpop.f32.mrb[0].mxu0
      %v2947 = vadd.f32 0.0, %v2946
      %v2948 = vpop.f32.mrb[0].mxu0
      %2949 = vmatprep.mubr.bf16.mxu0 0
      %2950 = vmatmul.mubr.bf16.gmra.mrb[0].mxu0 %v2547
      %v2951 = vpop.f32.mrb[0].mxu0
      %v2952 = vadd.f32 0.0, %v2951
      %v2953 = vpop.f32.mrb[0].mxu0
      %v2954 = vpop.f32.mrb[0].mxu0
      %v2955 = vadd.f32 0.0, %v2954
      %v2956 = vpop.f32.mrb[0].mxu0
      %2957 = vmatprep.mubr.bf16.mxu0 0
      %2958 = vmatmul.mubr.bf16.gmra.mrb[0].mxu0 %v2548
      %v2959 = vpop.f32.mrb[0].mxu0
      %v2960 = vadd.f32 0.0, %v2959
      %v2961 = vpop.f32.mrb[0].mxu0
      %v2962 = vpop.f32.mrb[0].mxu0
      %v2963 = vadd.f32 0.0, %v2962
      %v2964 = vpop.f32.mrb[0].mxu0
      %2965 = vdwg.mxu0
      %v2966 = vld [vmem:[%s2] sm:$0xff]
      %v2967 = vld [vmem:[%s2 + $0x8] sm:$0xff]
      %v2968 = vld [vmem:[%s2 + $0x10] sm:$0xff]
      %v2969 = vld [vmem:[%s2 + $0x18] sm:$0xff]
      %v2970 = vld [vmem:[%s2 + $0x20] sm:$0xff]
      %v2971 = vld [vmem:[%s2 + $0x28] sm:$0xff]
      %v2972 = vld [vmem:[%s2 + $0x30] sm:$0xff]
      %v2973 = vld [vmem:[%s2 + $0x38] sm:$0xff]
      %v2974 = vld [vmem:[%s2 + $0x40] sm:$0xff]
      %v2975 = vld [vmem:[%s2 + $0x48] sm:$0xff]
      %v2976 = vld [vmem:[%s2 + $0x50] sm:$0xff]
      %v2977 = vld [vmem:[%s2 + $0x58] sm:$0xff]
      %v2978 = vld [vmem:[%s2 + $0x60] sm:$0xff]
      %v2979 = vld [vmem:[%s2 + $0x68] sm:$0xff]
      %v2980 = vld [vmem:[%s2 + $0x70] sm:$0xff]
      %v2981 = vld [vmem:[%s2 + $0x78] sm:$0xff]
      %v2982 = vld [vmem:[%s2 + $0x80] sm:$0xff]
      %v2983 = vld [vmem:[%s2 + $0x88] sm:$0xff]
      %v2984 = vld [vmem:[%s2 + $0x90] sm:$0xff]
      %v2985 = vld [vmem:[%s2 + $0x98] sm:$0xff]
      %v2986 = vld [vmem:[%s2 + $0xa0] sm:$0xff]
      %v2987 = vld [vmem:[%s2 + $0xa8] sm:$0xff]
      %v2988 = vld [vmem:[%s2 + $0xb0] sm:$0xff]
      %v2989 = vld [vmem:[%s2 + $0xb8] sm:$0xff]
      %v2990 = vld [vmem:[%s2 + $0xc0] sm:$0xff]
      %v2991 = vld [vmem:[%s2 + $0xc8] sm:$0xff]
      %v2992 = vld [vmem:[%s2 + $0xd0] sm:$0xff]
      %v2993 = vld [vmem:[%s2 + $0xd8] sm:$0xff]
      %v2994 = vld [vmem:[%s2 + $0xe0] sm:$0xff]
      %v2995 = vld [vmem:[%s2 + $0xe8] sm:$0xff]
      %v2996 = vld [vmem:[%s2 + $0xf0] sm:$0xff]
      %v2997 = vld [vmem:[%s2 + $0xf8] sm:$0xff]
      %v2998 = vld [vmem:[%s2 + $0x100] sm:$0xff]
      %v2999 = vld [vmem:[%s2 + $0x108] sm:$0xff]
      %v3000 = vld [vmem:[%s2 + $0x110] sm:$0xff]
      %v3001 = vld [vmem:[%s2 + $0x118] sm:$0xff]
      %v3002 = vld [vmem:[%s2 + $0x120] sm:$0xff]
      %v3003 = vld [vmem:[%s2 + $0x128] sm:$0xff]
      %v3004 = vld [vmem:[%s2 + $0x130] sm:$0xff]
      %v3005 = vld [vmem:[%s2 + $0x138] sm:$0xff]
      %v3006 = vld [vmem:[%s2 + $0x140] sm:$0xff]
      %v3007 = vld [vmem:[%s2 + $0x148] sm:$0xff]
      %v3008 = vld [vmem:[%s2 + $0x150] sm:$0xff]
      %v3009 = vld [vmem:[%s2 + $0x158] sm:$0xff]
      %v3010 = vld [vmem:[%s2 + $0x160] sm:$0xff]
      %v3011 = vld [vmem:[%s2 + $0x168] sm:$0xff]
      %v3012 = vld [vmem:[%s2 + $0x170] sm:$0xff]
      %v3013 = vld [vmem:[%s2 + $0x178] sm:$0xff]
      %v3014 = vld [vmem:[%s2 + $0x180] sm:$0xff]
      %v3015 = vld [vmem:[%s2 + $0x188] sm:$0xff]
      %v3016 = vld [vmem:[%s2 + $0x190] sm:$0xff]
      %v3017 = vld [vmem:[%s2 + $0x198] sm:$0xff]
      %v3018 = vld [vmem:[%s2 + $0x1a0] sm:$0xff]
      %v3019 = vld [vmem:[%s2 + $0x1a8] sm:$0xff]
      %v3020 = vld [vmem:[%s2 + $0x1b0] sm:$0xff]
      %v3021 = vld [vmem:[%s2 + $0x1b8] sm:$0xff]
      %v3022 = vld [vmem:[%s2 + $0x1c0] sm:$0xff]
      %v3023 = vld [vmem:[%s2 + $0x1c8] sm:$0xff]
      %v3024 = vld [vmem:[%s2 + $0x1d0] sm:$0xff]
      %v3025 = vld [vmem:[%s2 + $0x1d8] sm:$0xff]
      %v3026 = vld [vmem:[%s2 + $0x1e0] sm:$0xff]
      %v3027 = vld [vmem:[%s2 + $0x1e8] sm:$0xff]
      %v3028 = vld [vmem:[%s2 + $0x1f0] sm:$0xff]
      %v3029 = vld [vmem:[%s2 + $0x1f8] sm:$0xff]
      %v3030 = vld [vmem:[%s2 + $0x200] sm:$0xff]
      %v3031 = vld [vmem:[%s2 + $0x208] sm:$0xff]
      %v3032 = vld [vmem:[%s2 + $0x210] sm:$0xff]
      %v3033 = vld [vmem:[%s2 + $0x218] sm:$0xff]
      %v3034 = vld [vmem:[%s2 + $0x220] sm:$0xff]
      %v3035 = vld [vmem:[%s2 + $0x228] sm:$0xff]
      %v3036 = vld [vmem:[%s2 + $0x230] sm:$0xff]
      %v3037 = vld [vmem:[%s2 + $0x238] sm:$0xff]
      %v3038 = vld [vmem:[%s2 + $0x240] sm:$0xff]
      %v3039 = vld [vmem:[%s2 + $0x248] sm:$0xff]
      %v3040 = vld [vmem:[%s2 + $0x250] sm:$0xff]
      %v3041 = vld [vmem:[%s2 + $0x258] sm:$0xff]
      %v3042 = vld [vmem:[%s2 + $0x260] sm:$0xff]
      %v3043 = vld [vmem:[%s2 + $0x268] sm:$0xff]
      %v3044 = vld [vmem:[%s2 + $0x270] sm:$0xff]
      %v3045 = vld [vmem:[%s2 + $0x278] sm:$0xff]
      %3047 = vset.pattern.permute.xlu0 0
      %3048 = vperm.xlu0 %3047, %v2966
      %v3049 = vpop.permute.xlu0 %3048
      %3052 = vset.pattern.permute.xlu0 0
      %3053 = vperm.xlu0 %3052, %v2967
      %v3054 = vpop.permute.xlu0 %3053
      %3057 = vset.pattern.permute.xlu0 0
      %3058 = vperm.xlu0 %3057, %v2968
      %v3059 = vpop.permute.xlu0 %3058
      %3062 = vset.pattern.permute.xlu0 0
      %3063 = vperm.xlu0 %3062, %v2969
      %v3064 = vpop.permute.xlu0 %3063
      %3067 = vset.pattern.permute.xlu0 0
      %3068 = vperm.xlu0 %3067, %v2970
      %v3069 = vpop.permute.xlu0 %3068
      %3072 = vset.pattern.permute.xlu0 0
      %3073 = vperm.xlu0 %3072, %v2971
      %v3074 = vpop.permute.xlu0 %3073
      %3077 = vset.pattern.permute.xlu0 0
      %3078 = vperm.xlu0 %3077, %v2972
      %v3079 = vpop.permute.xlu0 %3078
      %3082 = vset.pattern.permute.xlu0 0
      %3083 = vperm.xlu0 %3082, %v2973
      %v3084 = vpop.permute.xlu0 %3083
      %3087 = vset.pattern.permute.xlu0 0
      %3088 = vperm.xlu0 %3087, %v2974
      %v3089 = vpop.permute.xlu0 %3088
      %3092 = vset.pattern.permute.xlu0 0
      %3093 = vperm.xlu0 %3092, %v2975
      %v3094 = vpop.permute.xlu0 %3093
      %3097 = vset.pattern.permute.xlu0 0
      %3098 = vperm.xlu0 %3097, %v2976
      %v3099 = vpop.permute.xlu0 %3098
      %3102 = vset.pattern.permute.xlu0 0
      %3103 = vperm.xlu0 %3102, %v2977
      %v3104 = vpop.permute.xlu0 %3103
      %3107 = vset.pattern.permute.xlu0 0
      %3108 = vperm.xlu0 %3107, %v2978
      %v3109 = vpop.permute.xlu0 %3108
      %3112 = vset.pattern.permute.xlu0 0
      %3113 = vperm.xlu0 %3112, %v2979
      %v3114 = vpop.permute.xlu0 %3113
      %3117 = vset.pattern.permute.xlu0 0
      %3118 = vperm.xlu0 %3117, %v2980
      %v3119 = vpop.permute.xlu0 %3118
      %3122 = vset.pattern.permute.xlu0 0
      %3123 = vperm.xlu0 %3122, %v2981
      %v3124 = vpop.permute.xlu0 %3123
      %3127 = vset.pattern.permute.xlu0 0
      %3128 = vperm.xlu0 %3127, %v2982
      %v3129 = vpop.permute.xlu0 %3128
      %3132 = vset.pattern.permute.xlu0 0
      %3133 = vperm.xlu0 %3132, %v2983
      %v3134 = vpop.permute.xlu0 %3133
      %3137 = vset.pattern.permute.xlu0 0
      %3138 = vperm.xlu0 %3137, %v2984
      %v3139 = vpop.permute.xlu0 %3138
      %3142 = vset.pattern.permute.xlu0 0
      %3143 = vperm.xlu0 %3142, %v2985
      %v3144 = vpop.permute.xlu0 %3143
      %3147 = vset.pattern.permute.xlu0 0
      %3148 = vperm.xlu0 %3147, %v2986
      %v3149 = vpop.permute.xlu0 %3148
      %3152 = vset.pattern.permute.xlu0 0
      %3153 = vperm.xlu0 %3152, %v2987
      %v3154 = vpop.permute.xlu0 %3153
      %3157 = vset.pattern.permute.xlu0 0
      %3158 = vperm.xlu0 %3157, %v2988
      %v3159 = vpop.permute.xlu0 %3158
      %3162 = vset.pattern.permute.xlu0 0
      %3163 = vperm.xlu0 %3162, %v2989
      %v3164 = vpop.permute.xlu0 %3163
      %3167 = vset.pattern.permute.xlu0 0
      %3168 = vperm.xlu0 %3167, %v2990
      %v3169 = vpop.permute.xlu0 %3168
      %3172 = vset.pattern.permute.xlu0 0
      %3173 = vperm.xlu0 %3172, %v2991
      %v3174 = vpop.permute.xlu0 %3173
      %3177 = vset.pattern.permute.xlu0 0
      %3178 = vperm.xlu0 %3177, %v2992
      %v3179 = vpop.permute.xlu0 %3178
      %3182 = vset.pattern.permute.xlu0 0
      %3183 = vperm.xlu0 %3182, %v2993
      %v3184 = vpop.permute.xlu0 %3183
      %3187 = vset.pattern.permute.xlu0 0
      %3188 = vperm.xlu0 %3187, %v2994
      %v3189 = vpop.permute.xlu0 %3188
      %3192 = vset.pattern.permute.xlu0 0
      %3193 = vperm.xlu0 %3192, %v2995
      %v3194 = vpop.permute.xlu0 %3193
      %3197 = vset.pattern.permute.xlu0 0
      %3198 = vperm.xlu0 %3197, %v2996
      %v3199 = vpop.permute.xlu0 %3198
      %3202 = vset.pattern.permute.xlu0 0
      %3203 = vperm.xlu0 %3202, %v2997
      %v3204 = vpop.permute.xlu0 %3203
      %3207 = vset.pattern.permute.xlu0 0
      %3208 = vperm.xlu0 %3207, %v2998
      %v3209 = vpop.permute.xlu0 %3208
      %3212 = vset.pattern.permute.xlu0 0
      %3213 = vperm.xlu0 %3212, %v2999
      %v3214 = vpop.permute.xlu0 %3213
      %3217 = vset.pattern.permute.xlu0 0
      %3218 = vperm.xlu0 %3217, %v3000
      %v3219 = vpop.permute.xlu0 %3218
      %3222 = vset.pattern.permute.xlu0 0
      %3223 = vperm.xlu0 %3222, %v3001
      %v3224 = vpop.permute.xlu0 %3223
      %3227 = vset.pattern.permute.xlu0 0
      %3228 = vperm.xlu0 %3227, %v3002
      %v3229 = vpop.permute.xlu0 %3228
      %3232 = vset.pattern.permute.xlu0 0
      %3233 = vperm.xlu0 %3232, %v3003
      %v3234 = vpop.permute.xlu0 %3233
      %3237 = vset.pattern.permute.xlu0 0
      %3238 = vperm.xlu0 %3237, %v3004
      %v3239 = vpop.permute.xlu0 %3238
      %3242 = vset.pattern.permute.xlu0 0
      %3243 = vperm.xlu0 %3242, %v3005
      %v3244 = vpop.permute.xlu0 %3243
      %3247 = vset.pattern.permute.xlu0 0
      %3248 = vperm.xlu0 %3247, %v3006
      %v3249 = vpop.permute.xlu0 %3248
      %3252 = vset.pattern.permute.xlu0 0
      %3253 = vperm.xlu0 %3252, %v3007
      %v3254 = vpop.permute.xlu0 %3253
      %3257 = vset.pattern.permute.xlu0 0
      %3258 = vperm.xlu0 %3257, %v3008
      %v3259 = vpop.permute.xlu0 %3258
      %3262 = vset.pattern.permute.xlu0 0
      %3263 = vperm.xlu0 %3262, %v3009
      %v3264 = vpop.permute.xlu0 %3263
      %3267 = vset.pattern.permute.xlu0 0
      %3268 = vperm.xlu0 %3267, %v3010
      %v3269 = vpop.permute.xlu0 %3268
      %3272 = vset.pattern.permute.xlu0 0
      %3273 = vperm.xlu0 %3272, %v3011
      %v3274 = vpop.permute.xlu0 %3273
      %3277 = vset.pattern.permute.xlu0 0
      %3278 = vperm.xlu0 %3277, %v3012
      %v3279 = vpop.permute.xlu0 %3278
      %3282 = vset.pattern.permute.xlu0 0
      %3283 = vperm.xlu0 %3282, %v3013
      %v3284 = vpop.permute.xlu0 %3283
      %3287 = vset.pattern.permute.xlu0 0
      %3288 = vperm.xlu0 %3287, %v3014
      %v3289 = vpop.permute.xlu0 %3288
      %3292 = vset.pattern.permute.xlu0 0
      %3293 = vperm.xlu0 %3292, %v3015
      %v3294 = vpop.permute.xlu0 %3293
      %3297 = vset.pattern.permute.xlu0 0
      %3298 = vperm.xlu0 %3297, %v3016
      %v3299 = vpop.permute.xlu0 %3298
      %3302 = vset.pattern.permute.xlu0 0
      %3303 = vperm.xlu0 %3302, %v3017
      %v3304 = vpop.permute.xlu0 %3303
      %3307 = vset.pattern.permute.xlu0 0
      %3308 = vperm.xlu0 %3307, %v3018
      %v3309 = vpop.permute.xlu0 %3308
      %3312 = vset.pattern.permute.xlu0 0
      %3313 = vperm.xlu0 %3312, %v3019
      %v3314 = vpop.permute.xlu0 %3313
      %3317 = vset.pattern.permute.xlu0 0
      %3318 = vperm.xlu0 %3317, %v3020
      %v3319 = vpop.permute.xlu0 %3318
      %3322 = vset.pattern.permute.xlu0 0
      %3323 = vperm.xlu0 %3322, %v3021
      %v3324 = vpop.permute.xlu0 %3323
      %3327 = vset.pattern.permute.xlu0 0
      %3328 = vperm.xlu0 %3327, %v3022
      %v3329 = vpop.permute.xlu0 %3328
      %3332 = vset.pattern.permute.xlu0 0
      %3333 = vperm.xlu0 %3332, %v3023
      %v3334 = vpop.permute.xlu0 %3333
      %3337 = vset.pattern.permute.xlu0 0
      %3338 = vperm.xlu0 %3337, %v3024
      %v3339 = vpop.permute.xlu0 %3338
      %3342 = vset.pattern.permute.xlu0 0
      %3343 = vperm.xlu0 %3342, %v3025
      %v3344 = vpop.permute.xlu0 %3343
      %3347 = vset.pattern.permute.xlu0 0
      %3348 = vperm.xlu0 %3347, %v3026
      %v3349 = vpop.permute.xlu0 %3348
      %3352 = vset.pattern.permute.xlu0 0
      %3353 = vperm.xlu0 %3352, %v3027
      %v3354 = vpop.permute.xlu0 %3353
      %3357 = vset.pattern.permute.xlu0 0
      %3358 = vperm.xlu0 %3357, %v3028
      %v3359 = vpop.permute.xlu0 %3358
      %3362 = vset.pattern.permute.xlu0 0
      %3363 = vperm.xlu0 %3362, %v3029
      %v3364 = vpop.permute.xlu0 %3363
      %3367 = vset.pattern.permute.xlu0 0
      %3368 = vperm.xlu0 %3367, %v3030
      %v3369 = vpop.permute.xlu0 %3368
      %3372 = vset.pattern.permute.xlu0 0
      %3373 = vperm.xlu0 %3372, %v3031
      %v3374 = vpop.permute.xlu0 %3373
      %3377 = vset.pattern.permute.xlu0 0
      %3378 = vperm.xlu0 %3377, %v3032
      %v3379 = vpop.permute.xlu0 %3378
      %3382 = vset.pattern.permute.xlu0 0
      %3383 = vperm.xlu0 %3382, %v3033
      %v3384 = vpop.permute.xlu0 %3383
      %3387 = vset.pattern.permute.xlu0 0
      %3388 = vperm.xlu0 %3387, %v3034
      %v3389 = vpop.permute.xlu0 %3388
      %3392 = vset.pattern.permute.xlu0 0
      %3393 = vperm.xlu0 %3392, %v3035
      %v3394 = vpop.permute.xlu0 %3393
      %3397 = vset.pattern.permute.xlu0 0
      %3398 = vperm.xlu0 %3397, %v3036
      %v3399 = vpop.permute.xlu0 %3398
      %3402 = vset.pattern.permute.xlu0 0
      %3403 = vperm.xlu0 %3402, %v3037
      %v3404 = vpop.permute.xlu0 %3403
      %3407 = vset.pattern.permute.xlu0 0
      %3408 = vperm.xlu0 %3407, %v3038
      %v3409 = vpop.permute.xlu0 %3408
      %3412 = vset.pattern.permute.xlu0 0
      %3413 = vperm.xlu0 %3412, %v3039
      %v3414 = vpop.permute.xlu0 %3413
      %3417 = vset.pattern.permute.xlu0 0
      %3418 = vperm.xlu0 %3417, %v3040
      %v3419 = vpop.permute.xlu0 %3418
      %3422 = vset.pattern.permute.xlu0 0
      %3423 = vperm.xlu0 %3422, %v3041
      %v3424 = vpop.permute.xlu0 %3423
      %3427 = vset.pattern.permute.xlu0 0
      %3428 = vperm.xlu0 %3427, %v3042
      %v3429 = vpop.permute.xlu0 %3428
      %3432 = vset.pattern.permute.xlu0 0
      %3433 = vperm.xlu0 %3432, %v3043
      %v3434 = vpop.permute.xlu0 %3433
      %3437 = vset.pattern.permute.xlu0 0
      %3438 = vperm.xlu0 %3437, %v3044
      %v3439 = vpop.permute.xlu0 %3438
      %3442 = vset.pattern.permute.xlu0 0
      %3443 = vperm.xlu0 %3442, %v3045
      %v3444 = vpop.permute.xlu0 %3443
      %v3446 = vmul.f32 %v2648, %v3049
      %v3447 = vmul.f32 %v2651, %v3054
      %v3448 = vmul.f32 %v2656, %v3059
      %v3449 = vmul.f32 %v2659, %v3064
      %v3450 = vmul.f32 %v2664, %v3069
      %v3451 = vmul.f32 %v2667, %v3074
      %v3452 = vmul.f32 %v2672, %v3079
      %v3453 = vmul.f32 %v2675, %v3084
      %v3454 = vmul.f32 %v2680, %v3089
      %v3455 = vmul.f32 %v2683, %v3094
      %v3456 = vmul.f32 %v2688, %v3099
      %v3457 = vmul.f32 %v2691, %v3104
      %v3458 = vmul.f32 %v2696, %v3109
      %v3459 = vmul.f32 %v2699, %v3114
      %v3460 = vmul.f32 %v2704, %v3119
      %v3461 = vmul.f32 %v2707, %v3124
      %v3462 = vmul.f32 %v2712, %v3129
      %v3463 = vmul.f32 %v2715, %v3134
      %v3464 = vmul.f32 %v2720, %v3139
      %v3465 = vmul.f32 %v2723, %v3144
      %v3466 = vmul.f32 %v2728, %v3149
      %v3467 = vmul.f32 %v2731, %v3154
      %v3468 = vmul.f32 %v2736, %v3159
      %v3469 = vmul.f32 %v2739, %v3164
      %v3470 = vmul.f32 %v2744, %v3169
      %v3471 = vmul.f32 %v2747, %v3174
      %v3472 = vmul.f32 %v2752, %v3179
      %v3473 = vmul.f32 %v2755, %v3184
      %v3474 = vmul.f32 %v2760, %v3189
      %v3475 = vmul.f32 %v2763, %v3194
      %v3476 = vmul.f32 %v2768, %v3199
      %v3477 = vmul.f32 %v2771, %v3204
      %v3478 = vmul.f32 %v2776, %v3209
      %v3479 = vmul.f32 %v2779, %v3214
      %v3480 = vmul.f32 %v2784, %v3219
      %v3481 = vmul.f32 %v2787, %v3224
      %v3482 = vmul.f32 %v2792, %v3229
      %v3483 = vmul.f32 %v2795, %v3234
      %v3484 = vmul.f32 %v2800, %v3239
      %v3485 = vmul.f32 %v2803, %v3244
      %v3486 = vmul.f32 %v2808, %v3249
      %v3487 = vmul.f32 %v2811, %v3254
      %v3488 = vmul.f32 %v2816, %v3259
      %v3489 = vmul.f32 %v2819, %v3264
      %v3490 = vmul.f32 %v2824, %v3269
      %v3491 = vmul.f32 %v2827, %v3274
      %v3492 = vmul.f32 %v2832, %v3279
      %v3493 = vmul.f32 %v2835, %v3284
      %v3494 = vmul.f32 %v2840, %v3289
      %v3495 = vmul.f32 %v2843, %v3294
      %v3496 = vmul.f32 %v2848, %v3299
      %v3497 = vmul.f32 %v2851, %v3304
      %v3498 = vmul.f32 %v2856, %v3309
      %v3499 = vmul.f32 %v2859, %v3314
      %v3500 = vmul.f32 %v2864, %v3319
      %v3501 = vmul.f32 %v2867, %v3324
      %v3502 = vmul.f32 %v2872, %v3329
      %v3503 = vmul.f32 %v2875, %v3334
      %v3504 = vmul.f32 %v2880, %v3339
      %v3505 = vmul.f32 %v2883, %v3344
      %v3506 = vmul.f32 %v2888, %v3349
      %v3507 = vmul.f32 %v2891, %v3354
      %v3508 = vmul.f32 %v2896, %v3359
      %v3509 = vmul.f32 %v2899, %v3364
      %v3510 = vmul.f32 %v2904, %v3369
      %v3511 = vmul.f32 %v2907, %v3374
      %v3512 = vmul.f32 %v2912, %v3379
      %v3513 = vmul.f32 %v2915, %v3384
      %v3514 = vmul.f32 %v2920, %v3389
      %v3515 = vmul.f32 %v2923, %v3394
      %v3516 = vmul.f32 %v2928, %v3399
      %v3517 = vmul.f32 %v2931, %v3404
      %v3518 = vmul.f32 %v2936, %v3409
      %v3519 = vmul.f32 %v2939, %v3414
      %v3520 = vmul.f32 %v2944, %v3419
      %v3521 = vmul.f32 %v2947, %v3424
      %v3522 = vmul.f32 %v2952, %v3429
      %v3523 = vmul.f32 %v2955, %v3434
      %v3524 = vmul.f32 %v2960, %v3439
      %v3525 = vmul.f32 %v2963, %v3444
      %v3526 = vld [vmem:[%s4] sm:$0x1]
      %v3527 = vadd.f32 %v3446, %v3447
      %v3528 = vadd.f32 %v3527, %v3448
      %v3529 = vadd.f32 %v3528, %v3449
      %v3530 = vadd.f32 %v3529, %v3450
      %v3531 = vadd.f32 %v3530, %v3451
      %v3532 = vadd.f32 %v3531, %v3452
      %v3533 = vadd.f32 %v3532, %v3453
      %v3534 = vadd.f32 %v3533, %v3454
      %v3535 = vadd.f32 %v3534, %v3455
      %v3536 = vadd.f32 %v3535, %v3456
      %v3537 = vadd.f32 %v3536, %v3457
      %v3538 = vadd.f32 %v3537, %v3458
      %v3539 = vadd.f32 %v3538, %v3459
      %v3540 = vadd.f32 %v3539, %v3460
      %v3541 = vadd.f32 %v3540, %v3461
      %v3542 = vadd.f32 %v3541, %v3462
      %v3543 = vadd.f32 %v3542, %v3463
      %v3544 = vadd.f32 %v3543, %v3464
      %v3545 = vadd.f32 %v3544, %v3465
      %v3546 = vadd.f32 %v3545, %v3466
      %v3547 = vadd.f32 %v3546, %v3467
      %v3548 = vadd.f32 %v3547, %v3468
      %v3549 = vadd.f32 %v3548, %v3469
      %v3550 = vadd.f32 %v3549, %v3470
      %v3551 = vadd.f32 %v3550, %v3471
      %v3552 = vadd.f32 %v3551, %v3472
      %v3553 = vadd.f32 %v3552, %v3473
      %v3554 = vadd.f32 %v3553, %v3474
      %v3555 = vadd.f32 %v3554, %v3475
      %v3556 = vadd.f32 %v3555, %v3476
      %v3557 = vadd.f32 %v3556, %v3477
      %v3558 = vadd.f32 %v3557, %v3478
      %v3559 = vadd.f32 %v3558, %v3479
      %v3560 = vadd.f32 %v3559, %v3480
      %v3561 = vadd.f32 %v3560, %v3481
      %v3562 = vadd.f32 %v3561, %v3482
      %v3563 = vadd.f32 %v3562, %v3483
      %v3564 = vadd.f32 %v3563, %v3484
      %v3565 = vadd.f32 %v3564, %v3485
      %v3566 = vadd.f32 %v3565, %v3486
      %v3567 = vadd.f32 %v3566, %v3487
      %v3568 = vadd.f32 %v3567, %v3488
      %v3569 = vadd.f32 %v3568, %v3489
      %v3570 = vadd.f32 %v3569, %v3490
      %v3571 = vadd.f32 %v3570, %v3491
      %v3572 = vadd.f32 %v3571, %v3492
      %v3573 = vadd.f32 %v3572, %v3493
      %v3574 = vadd.f32 %v3573, %v3494
      %v3575 = vadd.f32 %v3574, %v3495
      %v3576 = vadd.f32 %v3575, %v3496
      %v3577 = vadd.f32 %v3576, %v3497
      %v3578 = vadd.f32 %v3577, %v3498
      %v3579 = vadd.f32 %v3578, %v3499
      %v3580 = vadd.f32 %v3579, %v3500
      %v3581 = vadd.f32 %v3580, %v3501
      %v3582 = vadd.f32 %v3581, %v3502
      %v3583 = vadd.f32 %v3582, %v3503
      %v3584 = vadd.f32 %v3583, %v3504
      %v3585 = vadd.f32 %v3584, %v3505
      %v3586 = vadd.f32 %v3585, %v3506
      %v3587 = vadd.f32 %v3586, %v3507
      %v3588 = vadd.f32 %v3587, %v3508
      %v3589 = vadd.f32 %v3588, %v3509
      %v3590 = vadd.f32 %v3589, %v3510
      %v3591 = vadd.f32 %v3590, %v3511
      %v3592 = vadd.f32 %v3591, %v3512
      %v3593 = vadd.f32 %v3592, %v3513
      %v3594 = vadd.f32 %v3593, %v3514
      %v3595 = vadd.f32 %v3594, %v3515
      %v3596 = vadd.f32 %v3595, %v3516
      %v3597 = vadd.f32 %v3596, %v3517
      %v3598 = vadd.f32 %v3597, %v3518
      %v3599 = vadd.f32 %v3598, %v3519
      %v3600 = vadd.f32 %v3599, %v3520
      %v3601 = vadd.f32 %v3600, %v3521
      %v3602 = vadd.f32 %v3601, %v3522
      %v3603 = vadd.f32 %v3602, %v3523
      %v3604 = vadd.f32 %v3603, %v3524
      %v3605 = vadd.f32 %v3604, %v3525
      %v3606 = vrot.slane %v3605, 4
      %v3607 = vadd.f32 %v3605, %v3606
      %v3608 = vrot.slane %v3607, 2
      %v3609 = vadd.f32 %v3607, %v3608
      %v3610 = vrot.slane %v3609, 1
      %v3611 = vadd.f32 %v3609, %v3610
      %v3612 = vadd.f32 %v3526, %v3611
      %3613 = vst [vmem:[%s4] sm:$0x1] %v3612
      %v3614 = vld [vmem:[%s5] sm:$0x1]
      %v3615 = vmul.f32 %v3446, %v3446
      %v3616 = vmul.f32 %v3447, %v3447
      %v3617 = vmul.f32 %v3448, %v3448
      %v3618 = vmul.f32 %v3449, %v3449
      %v3619 = vmul.f32 %v3450, %v3450
      %v3620 = vmul.f32 %v3451, %v3451
      %v3621 = vmul.f32 %v3452, %v3452
      %v3622 = vmul.f32 %v3453, %v3453
      %v3623 = vmul.f32 %v3454, %v3454
      %v3624 = vmul.f32 %v3455, %v3455
      %v3625 = vmul.f32 %v3456, %v3456
      %v3626 = vmul.f32 %v3457, %v3457
      %v3627 = vmul.f32 %v3458, %v3458
      %v3628 = vmul.f32 %v3459, %v3459
      %v3629 = vmul.f32 %v3460, %v3460
      %v3630 = vmul.f32 %v3461, %v3461
      %v3631 = vmul.f32 %v3462, %v3462
      %v3632 = vmul.f32 %v3463, %v3463
      %v3633 = vmul.f32 %v3464, %v3464
      %v3634 = vmul.f32 %v3465, %v3465
      %v3635 = vmul.f32 %v3466, %v3466
      %v3636 = vmul.f32 %v3467, %v3467
      %v3637 = vmul.f32 %v3468, %v3468
      %v3638 = vmul.f32 %v3469, %v3469
      %v3639 = vmul.f32 %v3470, %v3470
      %v3640 = vmul.f32 %v3471, %v3471
      %v3641 = vmul.f32 %v3472, %v3472
      %v3642 = vmul.f32 %v3473, %v3473
      %v3643 = vmul.f32 %v3474, %v3474
      %v3644 = vmul.f32 %v3475, %v3475
      %v3645 = vmul.f32 %v3476, %v3476
      %v3646 = vmul.f32 %v3477, %v3477
      %v3647 = vmul.f32 %v3478, %v3478
      %v3648 = vmul.f32 %v3479, %v3479
      %v3649 = vmul.f32 %v3480, %v3480
      %v3650 = vmul.f32 %v3481, %v3481
      %v3651 = vmul.f32 %v3482, %v3482
      %v3652 = vmul.f32 %v3483, %v3483
      %v3653 = vmul.f32 %v3484, %v3484
      %v3654 = vmul.f32 %v3485, %v3485
      %v3655 = vmul.f32 %v3486, %v3486
      %v3656 = vmul.f32 %v3487, %v3487
      %v3657 = vmul.f32 %v3488, %v3488
      %v3658 = vmul.f32 %v3489, %v3489
      %v3659 = vmul.f32 %v3490, %v3490
      %v3660 = vmul.f32 %v3491, %v3491
      %v3661 = vmul.f32 %v3492, %v3492
      %v3662 = vmul.f32 %v3493, %v3493
      %v3663 = vmul.f32 %v3494, %v3494
      %v3664 = vmul.f32 %v3495, %v3495
      %v3665 = vmul.f32 %v3496, %v3496
      %v3666 = vmul.f32 %v3497, %v3497
      %v3667 = vmul.f32 %v3498, %v3498
      %v3668 = vmul.f32 %v3499, %v3499
      %v3669 = vmul.f32 %v3500, %v3500
      %v3670 = vmul.f32 %v3501, %v3501
      %v3671 = vmul.f32 %v3502, %v3502
      %v3672 = vmul.f32 %v3503, %v3503
      %v3673 = vmul.f32 %v3504, %v3504
      %v3674 = vmul.f32 %v3505, %v3505
      %v3675 = vmul.f32 %v3506, %v3506
      %v3676 = vmul.f32 %v3507, %v3507
      %v3677 = vmul.f32 %v3508, %v3508
      %v3678 = vmul.f32 %v3509, %v3509
      %v3679 = vmul.f32 %v3510, %v3510
      %v3680 = vmul.f32 %v3511, %v3511
      %v3681 = vmul.f32 %v3512, %v3512
      %v3682 = vmul.f32 %v3513, %v3513
      %v3683 = vmul.f32 %v3514, %v3514
      %v3684 = vmul.f32 %v3515, %v3515
      %v3685 = vmul.f32 %v3516, %v3516
      %v3686 = vmul.f32 %v3517, %v3517
      %v3687 = vmul.f32 %v3518, %v3518
      %v3688 = vmul.f32 %v3519, %v3519
      %v3689 = vmul.f32 %v3520, %v3520
      %v3690 = vmul.f32 %v3521, %v3521
      %v3691 = vmul.f32 %v3522, %v3522
      %v3692 = vmul.f32 %v3523, %v3523
      %v3693 = vmul.f32 %v3524, %v3524
      %v3694 = vmul.f32 %v3525, %v3525
      %v3695 = vadd.f32 %v3615, %v3616
      %v3696 = vadd.f32 %v3695, %v3617
      %v3697 = vadd.f32 %v3696, %v3618
      %v3698 = vadd.f32 %v3697, %v3619
      %v3699 = vadd.f32 %v3698, %v3620
      %v3700 = vadd.f32 %v3699, %v3621
      %v3701 = vadd.f32 %v3700, %v3622
      %v3702 = vadd.f32 %v3701, %v3623
      %v3703 = vadd.f32 %v3702, %v3624
      %v3704 = vadd.f32 %v3703, %v3625
      %v3705 = vadd.f32 %v3704, %v3626
      %v3706 = vadd.f32 %v3705, %v3627
      %v3707 = vadd.f32 %v3706, %v3628
      %v3708 = vadd.f32 %v3707, %v3629
      %v3709 = vadd.f32 %v3708, %v3630
      %v3710 = vadd.f32 %v3709, %v3631
      %v3711 = vadd.f32 %v3710, %v3632
      %v3712 = vadd.f32 %v3711, %v3633
      %v3713 = vadd.f32 %v3712, %v3634
      %v3714 = vadd.f32 %v3713, %v3635
      %v3715 = vadd.f32 %v3714, %v3636
      %v3716 = vadd.f32 %v3715, %v3637
      %v3717 = vadd.f32 %v3716, %v3638
      %v3718 = vadd.f32 %v3717, %v3639
      %v3719 = vadd.f32 %v3718, %v3640
      %v3720 = vadd.f32 %v3719, %v3641
      %v3721 = vadd.f32 %v3720, %v3642
      %v3722 = vadd.f32 %v3721, %v3643
      %v3723 = vadd.f32 %v3722, %v3644
      %v3724 = vadd.f32 %v3723, %v3645
      %v3725 = vadd.f32 %v3724, %v3646
      %v3726 = vadd.f32 %v3725, %v3647
      %v3727 = vadd.f32 %v3726, %v3648
      %v3728 = vadd.f32 %v3727, %v3649
      %v3729 = vadd.f32 %v3728, %v3650
      %v3730 = vadd.f32 %v3729, %v3651
      %v3731 = vadd.f32 %v3730, %v3652
      %v3732 = vadd.f32 %v3731, %v3653
      %v3733 = vadd.f32 %v3732, %v3654
      %v3734 = vadd.f32 %v3733, %v3655
      %v3735 = vadd.f32 %v3734, %v3656
      %v3736 = vadd.f32 %v3735, %v3657
      %v3737 = vadd.f32 %v3736, %v3658
      %v3738 = vadd.f32 %v3737, %v3659
      %v3739 = vadd.f32 %v3738, %v3660
      %v3740 = vadd.f32 %v3739, %v3661
      %v3741 = vadd.f32 %v3740, %v3662
      %v3742 = vadd.f32 %v3741, %v3663
      %v3743 = vadd.f32 %v3742, %v3664
      %v3744 = vadd.f32 %v3743, %v3665
      %v3745 = vadd.f32 %v3744, %v3666
      %v3746 = vadd.f32 %v3745, %v3667
      %v3747 = vadd.f32 %v3746, %v3668
      %v3748 = vadd.f32 %v3747, %v3669
      %v3749 = vadd.f32 %v3748, %v3670
      %v3750 = vadd.f32 %v3749, %v3671
      %v3751 = vadd.f32 %v3750, %v3672
      %v3752 = vadd.f32 %v3751, %v3673
      %v3753 = vadd.f32 %v3752, %v3674
      %v3754 = vadd.f32 %v3753, %v3675
      %v3755 = vadd.f32 %v3754, %v3676
      %v3756 = vadd.f32 %v3755, %v3677
      %v3757 = vadd.f32 %v3756, %v3678
      %v3758 = vadd.f32 %v3757, %v3679
      %v3759 = vadd.f32 %v3758, %v3680
      %v3760 = vadd.f32 %v3759, %v3681
      %v3761 = vadd.f32 %v3760, %v3682
      %v3762 = vadd.f32 %v3761, %v3683
      %v3763 = vadd.f32 %v3762, %v3684
      %v3764 = vadd.f32 %v3763, %v3685
      %v3765 = vadd.f32 %v3764, %v3686
      %v3766 = vadd.f32 %v3765, %v3687
      %v3767 = vadd.f32 %v3766, %v3688
      %v3768 = vadd.f32 %v3767, %v3689
      %v3769 = vadd.f32 %v3768, %v3690
      %v3770 = vadd.f32 %v3769, %v3691
      %v3771 = vadd.f32 %v3770, %v3692
      %v3772 = vadd.f32 %v3771, %v3693
      %v3773 = vadd.f32 %v3772, %v3694
      %v3774 = vrot.slane %v3773, 4
      %v3775 = vadd.f32 %v3773, %v3774
      %v3776 = vrot.slane %v3775, 2
      %v3777 = vadd.f32 %v3775, %v3776
      %v3778 = vrot.slane %v3777, 1
      %v3779 = vadd.f32 %v3777, %v3778
      %v3780 = vadd.f32 %v3614, %v3779
      %3781 = vst [vmem:[%s5] sm:$0x1] %v3780
      %v3782 = vpack.c.bf16 %v2651, %v2648
      %v3783 = vpack.c.bf16 %v2659, %v2656
      %v3784 = vpack.c.bf16 %v2667, %v2664
      %v3785 = vpack.c.bf16 %v2675, %v2672
      %v3786 = vpack.c.bf16 %v2683, %v2680
      %v3787 = vpack.c.bf16 %v2691, %v2688
      %v3788 = vpack.c.bf16 %v2699, %v2696
      %v3789 = vpack.c.bf16 %v2707, %v2704
      %v3790 = vpack.c.bf16 %v2715, %v2712
      %v3791 = vpack.c.bf16 %v2723, %v2720
      %v3792 = vpack.c.bf16 %v2731, %v2728
      %v3793 = vpack.c.bf16 %v2739, %v2736
      %v3794 = vpack.c.bf16 %v2747, %v2744
      %v3795 = vpack.c.bf16 %v2755, %v2752
      %v3796 = vpack.c.bf16 %v2763, %v2760
      %v3797 = vpack.c.bf16 %v2771, %v2768
      %v3798 = vpack.c.bf16 %v2779, %v2776
      %v3799 = vpack.c.bf16 %v2787, %v2784
      %v3800 = vpack.c.bf16 %v2795, %v2792
      %v3801 = vpack.c.bf16 %v2803, %v2800
      %v3802 = vpack.c.bf16 %v2811, %v2808
      %v3803 = vpack.c.bf16 %v2819, %v2816
      %v3804 = vpack.c.bf16 %v2827, %v2824
      %v3805 = vpack.c.bf16 %v2835, %v2832
      %v3806 = vpack.c.bf16 %v2843, %v2840
      %v3807 = vpack.c.bf16 %v2851, %v2848
      %v3808 = vpack.c.bf16 %v2859, %v2856
      %v3809 = vpack.c.bf16 %v2867, %v2864
      %v3810 = vpack.c.bf16 %v2875, %v2872
      %v3811 = vpack.c.bf16 %v2883, %v2880
      %v3812 = vpack.c.bf16 %v2891, %v2888
      %v3813 = vpack.c.bf16 %v2899, %v2896
      %v3814 = vpack.c.bf16 %v2907, %v2904
      %v3815 = vpack.c.bf16 %v2915, %v2912
      %v3816 = vpack.c.bf16 %v2923, %v2920
      %v3817 = vpack.c.bf16 %v2931, %v2928
      %v3818 = vpack.c.bf16 %v2939, %v2936
      %v3819 = vpack.c.bf16 %v2947, %v2944
      %v3820 = vpack.c.bf16 %v2955, %v2952
      %v3821 = vpack.c.bf16 %v2963, %v2960
      %v3862 = vunpack.c.l.b16 %v3782
      %v3863 = vunpack.c.h.b16 %v3782
      %v3864 = vunpack.c.l.b16 %v3783
      %v3865 = vunpack.c.h.b16 %v3783
      %v3866 = vunpack.c.l.b16 %v3784
      %v3867 = vunpack.c.h.b16 %v3784
      %v3868 = vunpack.c.l.b16 %v3785
      %v3869 = vunpack.c.h.b16 %v3785
      %v3870 = vunpack.c.l.b16 %v3786
      %v3871 = vunpack.c.h.b16 %v3786
      %v3872 = vunpack.c.l.b16 %v3787
      %v3873 = vunpack.c.h.b16 %v3787
      %v3874 = vunpack.c.l.b16 %v3788
      %v3875 = vunpack.c.h.b16 %v3788
      %v3876 = vunpack.c.l.b16 %v3789
      %v3877 = vunpack.c.h.b16 %v3789
      %v3878 = vunpack.c.l.b16 %v3790
      %v3879 = vunpack.c.h.b16 %v3790
      %v3880 = vunpack.c.l.b16 %v3791
      %v3881 = vunpack.c.h.b16 %v3791
      %v3882 = vunpack.c.l.b16 %v3792
      %v3883 = vunpack.c.h.b16 %v3792
      %v3884 = vunpack.c.l.b16 %v3793
      %v3885 = vunpack.c.h.b16 %v3793
      %v3886 = vunpack.c.l.b16 %v3794
      %v3887 = vunpack.c.h.b16 %v3794
      %v3888 = vunpack.c.l.b16 %v3795
      %v3889 = vunpack.c.h.b16 %v3795
      %v3890 = vunpack.c.l.b16 %v3796
      %v3891 = vunpack.c.h.b16 %v3796
      %v3892 = vunpack.c.l.b16 %v3797
      %v3893 = vunpack.c.h.b16 %v3797
      %v3894 = vunpack.c.l.b16 %v3798
      %v3895 = vunpack.c.h.b16 %v3798
      %v3896 = vunpack.c.l.b16 %v3799
      %v3897 = vunpack.c.h.b16 %v3799
      %v3898 = vunpack.c.l.b16 %v3800
      %v3899 = vunpack.c.h.b16 %v3800
      %v3900 = vunpack.c.l.b16 %v3801
      %v3901 = vunpack.c.h.b16 %v3801
      %v3902 = vunpack.c.l.b16 %v3802
      %v3903 = vunpack.c.h.b16 %v3802
      %v3904 = vunpack.c.l.b16 %v3803
      %v3905 = vunpack.c.h.b16 %v3803
      %v3906 = vunpack.c.l.b16 %v3804
      %v3907 = vunpack.c.h.b16 %v3804
      %v3908 = vunpack.c.l.b16 %v3805
      %v3909 = vunpack.c.h.b16 %v3805
      %v3910 = vunpack.c.l.b16 %v3806
      %v3911 = vunpack.c.h.b16 %v3806
      %v3912 = vunpack.c.l.b16 %v3807
      %v3913 = vunpack.c.h.b16 %v3807
      %v3914 = vunpack.c.l.b16 %v3808
      %v3915 = vunpack.c.h.b16 %v3808
      %v3916 = vunpack.c.l.b16 %v3809
      %v3917 = vunpack.c.h.b16 %v3809
      %v3918 = vunpack.c.l.b16 %v3810
      %v3919 = vunpack.c.h.b16 %v3810
      %v3920 = vunpack.c.l.b16 %v3811
      %v3921 = vunpack.c.h.b16 %v3811
      %v3922 = vunpack.c.l.b16 %v3812
      %v3923 = vunpack.c.h.b16 %v3812
      %v3924 = vunpack.c.l.b16 %v3813
      %v3925 = vunpack.c.h.b16 %v3813
      %v3926 = vunpack.c.l.b16 %v3814
      %v3927 = vunpack.c.h.b16 %v3814
      %v3928 = vunpack.c.l.b16 %v3815
      %v3929 = vunpack.c.h.b16 %v3815
      %v3930 = vunpack.c.l.b16 %v3816
      %v3931 = vunpack.c.h.b16 %v3816
      %v3932 = vunpack.c.l.b16 %v3817
      %v3933 = vunpack.c.h.b16 %v3817
      %v3934 = vunpack.c.l.b16 %v3818
      %v3935 = vunpack.c.h.b16 %v3818
      %v3936 = vunpack.c.l.b16 %v3819
      %v3937 = vunpack.c.h.b16 %v3819
      %v3938 = vunpack.c.l.b16 %v3820
      %v3939 = vunpack.c.h.b16 %v3820
      %v3940 = vunpack.c.l.b16 %v3821
      %v3941 = vunpack.c.h.b16 %v3821
      %v3942 = vpack.c.b16 %v3862, %v3862
      %v3943 = vpack.c.b16 %v3863, %v3863
      %v3944 = vpack.c.b16 %v3864, %v3864
      %v3945 = vpack.c.b16 %v3865, %v3865
      %v3946 = vpack.c.b16 %v3866, %v3866
      %v3947 = vpack.c.b16 %v3867, %v3867
      %v3948 = vpack.c.b16 %v3868, %v3868
      %v3949 = vpack.c.b16 %v3869, %v3869
      %v3950 = vpack.c.b16 %v3870, %v3870
      %v3951 = vpack.c.b16 %v3871, %v3871
      %v3952 = vpack.c.b16 %v3872, %v3872
      %v3953 = vpack.c.b16 %v3873, %v3873
      %v3954 = vpack.c.b16 %v3874, %v3874
      %v3955 = vpack.c.b16 %v3875, %v3875
      %v3956 = vpack.c.b16 %v3876, %v3876
      %v3957 = vpack.c.b16 %v3877, %v3877
      %v3958 = vpack.c.b16 %v3878, %v3878
      %v3959 = vpack.c.b16 %v3879, %v3879
      %v3960 = vpack.c.b16 %v3880, %v3880
      %v3961 = vpack.c.b16 %v3881, %v3881
      %v3962 = vpack.c.b16 %v3882, %v3882
      %v3963 = vpack.c.b16 %v3883, %v3883
      %v3964 = vpack.c.b16 %v3884, %v3884
      %v3965 = vpack.c.b16 %v3885, %v3885
      %v3966 = vpack.c.b16 %v3886, %v3886
      %v3967 = vpack.c.b16 %v3887, %v3887
      %v3968 = vpack.c.b16 %v3888, %v3888
      %v3969 = vpack.c.b16 %v3889, %v3889
      %v3970 = vpack.c.b16 %v3890, %v3890
      %v3971 = vpack.c.b16 %v3891, %v3891
      %v3972 = vpack.c.b16 %v3892, %v3892
      %v3973 = vpack.c.b16 %v3893, %v3893
      %v3974 = vpack.c.b16 %v3894, %v3894
      %v3975 = vpack.c.b16 %v3895, %v3895
      %v3976 = vpack.c.b16 %v3896, %v3896
      %v3977 = vpack.c.b16 %v3897, %v3897
      %v3978 = vpack.c.b16 %v3898, %v3898
      %v3979 = vpack.c.b16 %v3899, %v3899
      %v3980 = vpack.c.b16 %v3900, %v3900
      %v3981 = vpack.c.b16 %v3901, %v3901
      %v3982 = vpack.c.b16 %v3902, %v3902
      %v3983 = vpack.c.b16 %v3903, %v3903
      %v3984 = vpack.c.b16 %v3904, %v3904
      %v3985 = vpack.c.b16 %v3905, %v3905
      %v3986 = vpack.c.b16 %v3906, %v3906
      %v3987 = vpack.c.b16 %v3907, %v3907
      %v3988 = vpack.c.b16 %v3908, %v3908
      %v3989 = vpack.c.b16 %v3909, %v3909
      %v3990 = vpack.c.b16 %v3910, %v3910
      %v3991 = vpack.c.b16 %v3911, %v3911
      %v3992 = vpack.c.b16 %v3912, %v3912
      %v3993 = vpack.c.b16 %v3913, %v3913
      %v3994 = vpack.c.b16 %v3914, %v3914
      %v3995 = vpack.c.b16 %v3915, %v3915
      %v3996 = vpack.c.b16 %v3916, %v3916
      %v3997 = vpack.c.b16 %v3917, %v3917
      %v3998 = vpack.c.b16 %v3918, %v3918
      %v3999 = vpack.c.b16 %v3919, %v3919
      %v4000 = vpack.c.b16 %v3920, %v3920
      %v4001 = vpack.c.b16 %v3921, %v3921
      %v4002 = vpack.c.b16 %v3922, %v3922
      %v4003 = vpack.c.b16 %v3923, %v3923
      %v4004 = vpack.c.b16 %v3924, %v3924
      %v4005 = vpack.c.b16 %v3925, %v3925
      %v4006 = vpack.c.b16 %v3926, %v3926
      %v4007 = vpack.c.b16 %v3927, %v3927
      %v4008 = vpack.c.b16 %v3928, %v3928
      %v4009 = vpack.c.b16 %v3929, %v3929
      %v4010 = vpack.c.b16 %v3930, %v3930
      %v4011 = vpack.c.b16 %v3931, %v3931
      %v4012 = vpack.c.b16 %v3932, %v3932
      %v4013 = vpack.c.b16 %v3933, %v3933
      %v4014 = vpack.c.b16 %v3934, %v3934
      %v4015 = vpack.c.b16 %v3935, %v3935
      %v4016 = vpack.c.b16 %v3936, %v3936
      %v4017 = vpack.c.b16 %v3937, %v3937
      %v4018 = vpack.c.b16 %v3938, %v3938
      %v4019 = vpack.c.b16 %v3939, %v3939
      %v4020 = vpack.c.b16 %v3940, %v3940
      %v4021 = vpack.c.b16 %v3941, %v3941
      %4102 = vst [vmem:[%s219] sm:$0xf] %v3942
      %4103 = vst [vmem:[%s219 + $0x4] sm:$0xf] %v3943
      %4104 = vst [vmem:[%s219 + $0x8] sm:$0xf] %v3944
      %4105 = vst [vmem:[%s219 + $0xc] sm:$0xf] %v3945
      %4106 = vst [vmem:[%s219 + $0x10] sm:$0xf] %v3946
      %4107 = vst [vmem:[%s219 + $0x14] sm:$0xf] %v3947
      %4108 = vst [vmem:[%s219 + $0x18] sm:$0xf] %v3948
      %4109 = vst [vmem:[%s219 + $0x1c] sm:$0xf] %v3949
      %4110 = vst [vmem:[%s219 + $0x20] sm:$0xf] %v3950
      %4111 = vst [vmem:[%s219 + $0x24] sm:$0xf] %v3951
      %4112 = vst [vmem:[%s219 + $0x28] sm:$0xf] %v3952
      %4113 = vst [vmem:[%s219 + $0x2c] sm:$0xf] %v3953
      %4114 = vst [vmem:[%s219 + $0x30] sm:$0xf] %v3954
      %4115 = vst [vmem:[%s219 + $0x34] sm:$0xf] %v3955
      %4116 = vst [vmem:[%s219 + $0x38] sm:$0xf] %v3956
      %4117 = vst [vmem:[%s219 + $0x3c] sm:$0xf] %v3957
      %4118 = vst [vmem:[%s219 + $0x40] sm:$0xf] %v3958
      %4119 = vst [vmem:[%s219 + $0x44] sm:$0xf] %v3959
      %4120 = vst [vmem:[%s219 + $0x48] sm:$0xf] %v3960
      %4121 = vst [vmem:[%s219 + $0x4c] sm:$0xf] %v3961
      %4122 = vst [vmem:[%s219 + $0x50] sm:$0xf] %v3962
      %4123 = vst [vmem:[%s219 + $0x54] sm:$0xf] %v3963
      %4124 = vst [vmem:[%s219 + $0x58] sm:$0xf] %v3964
      %4125 = vst [vmem:[%s219 + $0x5c] sm:$0xf] %v3965
      %4126 = vst [vmem:[%s219 + $0x60] sm:$0xf] %v3966
      %4127 = vst [vmem:[%s219 + $0x64] sm:$0xf] %v3967
      %4128 = vst [vmem:[%s219 + $0x68] sm:$0xf] %v3968
      %4129 = vst [vmem:[%s219 + $0x6c] sm:$0xf] %v3969
      %4130 = vst [vmem:[%s219 + $0x70] sm:$0xf] %v3970
      %4131 = vst [vmem:[%s219 + $0x74] sm:$0xf] %v3971
      %4132 = vst [vmem:[%s219 + $0x78] sm:$0xf] %v3972
      %4133 = vst [vmem:[%s219 + $0x7c] sm:$0xf] %v3973
      %4134 = vst [vmem:[%s219 + $0x80] sm:$0xf] %v3974
      %4135 = vst [vmem:[%s219 + $0x84] sm:$0xf] %v3975
      %4136 = vst [vmem:[%s219 + $0x88] sm:$0xf] %v3976
      %4137 = vst [vmem:[%s219 + $0x8c] sm:$0xf] %v3977
      %4138 = vst [vmem:[%s219 + $0x90] sm:$0xf] %v3978
      %4139 = vst [vmem:[%s219 + $0x94] sm:$0xf] %v3979
      %4140 = vst [vmem:[%s219 + $0x98] sm:$0xf] %v3980
      %4141 = vst [vmem:[%s219 + $0x9c] sm:$0xf] %v3981
      %4142 = vst [vmem:[%s219 + $0xa0] sm:$0xf] %v3982
      %4143 = vst [vmem:[%s219 + $0xa4] sm:$0xf] %v3983
      %4144 = vst [vmem:[%s219 + $0xa8] sm:$0xf] %v3984
      %4145 = vst [vmem:[%s219 + $0xac] sm:$0xf] %v3985
      %4146 = vst [vmem:[%s219 + $0xb0] sm:$0xf] %v3986
      %4147 = vst [vmem:[%s219 + $0xb4] sm:$0xf] %v3987
      %4148 = vst [vmem:[%s219 + $0xb8] sm:$0xf] %v3988
      %4149 = vst [vmem:[%s219 + $0xbc] sm:$0xf] %v3989
      %4150 = vst [vmem:[%s219 + $0xc0] sm:$0xf] %v3990
      %4151 = vst [vmem:[%s219 + $0xc4] sm:$0xf] %v3991
      %4152 = vst [vmem:[%s219 + $0xc8] sm:$0xf] %v3992
      %4153 = vst [vmem:[%s219 + $0xcc] sm:$0xf] %v3993
      %4154 = vst [vmem:[%s219 + $0xd0] sm:$0xf] %v3994
      %4155 = vst [vmem:[%s219 + $0xd4] sm:$0xf] %v3995
      %4156 = vst [vmem:[%s219 + $0xd8] sm:$0xf] %v3996
      %4157 = vst [vmem:[%s219 + $0xdc] sm:$0xf] %v3997
      %4158 = vst [vmem:[%s219 + $0xe0] sm:$0xf] %v3998
      %4159 = vst [vmem:[%s219 + $0xe4] sm:$0xf] %v3999
      %4160 = vst [vmem:[%s219 + $0xe8] sm:$0xf] %v4000
      %4161 = vst [vmem:[%s219 + $0xec] sm:$0xf] %v4001
      %4162 = vst [vmem:[%s219 + $0xf0] sm:$0xf] %v4002
      %4163 = vst [vmem:[%s219 + $0xf4] sm:$0xf] %v4003
      %4164 = vst [vmem:[%s219 + $0xf8] sm:$0xf] %v4004
      %4165 = vst [vmem:[%s219 + $0xfc] sm:$0xf] %v4005
      %4166 = vst [vmem:[%s219 + $0x100] sm:$0xf] %v4006
      %4167 = vst [vmem:[%s219 + $0x104] sm:$0xf] %v4007
      %4168 = vst [vmem:[%s219 + $0x108] sm:$0xf] %v4008
      %4169 = vst [vmem:[%s219 + $0x10c] sm:$0xf] %v4009
      %4170 = vst [vmem:[%s219 + $0x110] sm:$0xf] %v4010
      %4171 = vst [vmem:[%s219 + $0x114] sm:$0xf] %v4011
      %4172 = vst [vmem:[%s219 + $0x118] sm:$0xf] %v4012
      %4173 = vst [vmem:[%s219 + $0x11c] sm:$0xf] %v4013
      %4174 = vst [vmem:[%s219 + $0x120] sm:$0xf] %v4014
      %4175 = vst [vmem:[%s219 + $0x124] sm:$0xf] %v4015
      %4176 = vst [vmem:[%s219 + $0x128] sm:$0xf] %v4016
      %4177 = vst [vmem:[%s219 + $0x12c] sm:$0xf] %v4017
      %4178 = vst [vmem:[%s219 + $0x130] sm:$0xf] %v4018
      %4179 = vst [vmem:[%s219 + $0x134] sm:$0xf] %v4019
      %4180 = vst [vmem:[%s219 + $0x138] sm:$0xf] %v4020
      %4181 = vst [vmem:[%s219 + $0x13c] sm:$0xf] %v4021
      %s4182 = smul.u32 80, %s17
      %p4183 = scmp.lt.s32.totalorder %s4182, 159
      %s4184 = scalar_select %p4183, %s4182, 159
      %s4185 = smul.addr %s4184, 4
      %s4186 = scalar_lea.vmem %s3, %s4185
      // Predicated region
      $region44: #{basic_block3d_forward.4} parent=31 // pred_check
        %p4187 = pneg %p103
      $region45: #{basic_block3d_forward.4} parent=31 // pred_check_branch
        %4189 = sbr.rel (%p4187) target = $region47
      $region46: #{basic_block3d_forward.4} parent=31 // pred_region
        %s4190 = smul.u32 80, %s17
      $region47: #{basic_block3d_forward.4} parent=31 // pred_fallthru
        _
      // Predicated region
      $region48: #{basic_block3d_forward.4} parent=31 // pred_check
        %p4191 = pneg %p124
      $region49: #{basic_block3d_forward.4} parent=31 // pred_check_branch
        %4193 = sbr.rel (%p4191) target = $region51
      $region50: #{basic_block3d_forward.4} parent=31 // pred_region
        _
      $region51: #{basic_block3d_forward.4} parent=31 // pred_fallthru
        _
      // Predicated region
      $region52: #{basic_block3d_forward.4} parent=31 // pred_check
        %p4194 = pneg %p145
      $region53: #{basic_block3d_forward.4} parent=31 // pred_check_branch
        %4196 = sbr.rel (%p4194) target = $region55
      $region54: #{basic_block3d_forward.4} parent=31 // pred_region
        _
      $region55: #{basic_block3d_forward.4} parent=31 // pred_fallthru
        _
      // Predicated region
      $region56: #{basic_block3d_forward.4} parent=31 // pred_check
        %p4197 = pneg %p124
      $region57: #{basic_block3d_forward.4} parent=31 // pred_check_branch
        %4199 = sbr.rel (%p4197) target = $region59
      $region58: #{basic_block3d_forward.4} parent=31 // pred_region
        _
      $region59: #{basic_block3d_forward.4} parent=31 // pred_fallthru
        _
      // Predicated region
      $region60: #{basic_block3d_forward.4} parent=31 // pred_check
        %p4200 = pneg %p145
      $region61: #{basic_block3d_forward.4} parent=31 // pred_check_branch
        %4202 = sbr.rel (%p4200) target = $region63
      $region62: #{basic_block3d_forward.4} parent=31 // pred_region
        _
      $region63: #{basic_block3d_forward.4} parent=31 // pred_fallthru
        _
    $region32: #{basic_block3d_forward.4} parent=5 // pred_fallthru
      _
    %p4203 = scmp.le.s32.totalorder 2, %s12
    // Predicated region
    $region64: #{basic_block3d_forward.4} parent=5 // pred_check
      %p4204 = pneg %p4203
    $region65: #{basic_block3d_forward.4} parent=5 // pred_check_branch
      %4206 = sbr.rel (%p4204) target = $region67
    $region66: #{basic_block3d_forward.4} parent=5 // pred_region
      %s4207 = ssub.s32 %s12, 2
      // Predicated region
      $region68: #{basic_block3d_forward.4} parent=66 // pred_check
        %p4208 = pneg %p109
      $region69: #{basic_block3d_forward.4} parent=66 // pred_check_branch
        %4210 = sbr.rel (%p4208) target = $region71
      $region70: #{basic_block3d_forward.4} parent=66 // pred_region
        %s4211 = smul.u32 80, %s18
        %p4212 = scmp.lt.s32.totalorder %s4211, 159
        %s4213 = scalar_select %p4212, %s4211, 159
        %s4214 = smul.addr %s4213, 4
        %s4215 = scalar_lea.vmem %s3, %s4214
      $region71: #{basic_block3d_forward.4} parent=66 // pred_fallthru
        _
    $region67: #{basic_block3d_forward.4} parent=5 // pred_fallthru
      _
  $region6: #{basic_block3d_forward.4} parent=0 // loop_footer
    %s16 = sadd.s32 1, %s12
  $region7: #{basic_block3d_forward.4} parent=0 // loop_footer_branch
    %11 = sbr.rel target = $region3
  $region8: #{basic_block3d_forward.4} parent=0 // loop_exit
    _

// kernel: basic_block3d_forward.6
$region0: #{basic_block3d_forward.6}
  #allocation0 [shape = 'u32[]', space=smem, size = 0x4, offset = 0x4, fixed_abs, tag = 'smem constant byte address 0x4 - core index']
  #allocation1 [shape = 'u32[144,128]{1,0:T(1,128)}', space=vmem, size = 0x12000, scoped, tag = 'internal scratch']
  %s0 = inlined_call_operand.vmem [shape: bf16[2,10,110,128], index: 0, kind: input, shape index: {}]
  %s1 = inlined_call_operand.vmem [shape: bf16[27,128,128], index: 1, kind: input, shape index: {}]
  %s2 = inlined_call_operand.vmem [shape: f32[80,1], index: 2, kind: input, shape index: {}]
  %s3 = inlined_call_operand.vmem [shape: bf16[1280,128], index: 3, kind: output, shape index: {0}]
  %s4 = inlined_call_operand.vmem [shape: f32[1,128], index: 4, kind: output, shape index: {1}]
  %s5 = inlined_call_operand.vmem [shape: f32[1,128], index: 5, kind: output, shape index: {2}]
  %6 = xla_tuple %s3, %s4, %s5
  %s7 = sld [smem:[#allocation0]]
  $region72: #{basic_block3d_forward.6} parent=0
    _
  %s9 = ssub.s32 1, %s7
  %s10 = scalar_select 0, %s9, %s7
  loop: start=0, step=1, limit=4
  $region2: #{basic_block3d_forward.6} parent=0 // loop_pre_header
    _
  $region3: #{basic_block3d_forward.6} parent=0 // loop_header
    %s12 = sphi 0, %s16
    %p13 = scmp.ge.s32.totalorder %s12, 4
    %s22 = sphi 0, %s24
    %s25 = sphi 0, %s22
    %s26 = sphi 0, %s25
    %s42 = sphi 0, %s26
    %s46 = sphi 0, %s46
    %s48 = sphi 0, %s46
    %s49 = sphi 0, %s48
    %s63 = sphi 0, %s49
    %s67 = sphi 0, %s67
    %s69 = sphi 0, %s67
    %s70 = sphi 0, %s69
    %s84 = sphi 0, %s70
    %s90 = sphi 0, %s92
    %s93 = sphi 0, %s90
    %s94 = sphi 0, %s93
    %s110 = sphi 0, %s94
    %s114 = sphi 0, %s114
    %s116 = sphi 0, %s114
    %s117 = sphi 0, %s116
    %s131 = sphi 0, %s117
    %s135 = sphi 0, %s135
    %s137 = sphi 0, %s135
    %s138 = sphi 0, %s137
    %s152 = sphi 0, %s138
  $region4: #{basic_block3d_forward.6} parent=0 // loop_header_branch
    %15 = sbr.rel (%p13) target = $region8
  $region5: #{basic_block3d_forward.6} parent=0 // loop_body
    %s17 = ssub.s32 %s12, 1
    %s18 = ssub.s32 %s12, 2
    %s19 = sadd.s32 %s12, 1
    %s20 = ssub.s32 %s12, %s19
    %p21 = scmp.eq.s32.totalorder %s20, 0
    %s23 = sadd.s32 %s22, 1
    %s24 = scalar_select %p21, %s22, %s23
    %p27 = pneg %p21
    %p28 = scmp.eq.s32.totalorder %s12, 1
    %p29 = por %p27, %p28
    %p30 = scmp.ne.s32.totalorder %s22, %s25
    %p31 = scmp.eq.s32.totalorder %s12, 0
    %p32 = por %p30, %p31
    %p33 = scmp.ne.s32.totalorder %s22, %s25
    %p34 = scmp.eq.s32.totalorder %s17, 1
    %p35 = por %p33, %p34
    %p36 = scmp.ne.s32.totalorder %s25, %s26
    %p37 = scmp.eq.s32.totalorder %s17, 0
    %p38 = por %p36, %p37
    %p39 = scmp.ne.s32.totalorder %s25, %s26
    %p40 = scmp.eq.s32.totalorder %s18, 1
    %p41 = por %p39, %p40
    %p43 = scmp.ne.s32.totalorder %s26, %s42
    %p44 = scmp.eq.s32.totalorder %s18, 0
    %p45 = por %p43, %p44
    %s47 = sadd.s32 %s46, 1
    %p50 = scmp.eq.s32.totalorder %s12, 1
    %p51 = scmp.ne.s32.totalorder %s46, %s48
    %p52 = scmp.eq.s32.totalorder %s12, 0
    %p53 = por %p51, %p52
    %p54 = scmp.ne.s32.totalorder %s46, %s48
    %p55 = scmp.eq.s32.totalorder %s17, 1
    %p56 = por %p54, %p55
    %p57 = scmp.ne.s32.totalorder %s48, %s49
    %p58 = scmp.eq.s32.totalorder %s17, 0
    %p59 = por %p57, %p58
    %p60 = scmp.ne.s32.totalorder %s48, %s49
    %p61 = scmp.eq.s32.totalorder %s18, 1
    %p62 = por %p60, %p61
    %p64 = scmp.ne.s32.totalorder %s49, %s63
    %p65 = scmp.eq.s32.totalorder %s18, 0
    %p66 = por %p64, %p65
    %s68 = sadd.s32 %s67, 1
    %p71 = scmp.eq.s32.totalorder %s12, 1
    %p72 = scmp.ne.s32.totalorder %s67, %s69
    %p73 = scmp.eq.s32.totalorder %s12, 0
    %p74 = por %p72, %p73
    %p75 = scmp.ne.s32.totalorder %s67, %s69
    %p76 = scmp.eq.s32.totalorder %s17, 1
    %p77 = por %p75, %p76
    %p78 = scmp.ne.s32.totalorder %s69, %s70
    %p79 = scmp.eq.s32.totalorder %s17, 0
    %p80 = por %p78, %p79
    %p81 = scmp.ne.s32.totalorder %s69, %s70
    %p82 = scmp.eq.s32.totalorder %s18, 1
    %p83 = por %p81, %p82
    %p85 = scmp.ne.s32.totalorder %s70, %s84
    %p86 = scmp.eq.s32.totalorder %s18, 0
    %p87 = por %p85, %p86
    %s88 = ssub.s32 %s12, %s19
    %p89 = scmp.eq.s32.totalorder %s88, 0
    %s91 = sadd.s32 %s90, 1
    %s92 = scalar_select %p89, %s90, %s91
    %p95 = pneg %p89
    %p96 = scmp.eq.s32.totalorder %s12, 1
    %p97 = por %p95, %p96
    %p98 = scmp.ne.s32.totalorder %s90, %s93
    %p99 = scmp.eq.s32.totalorder %s12, 0
    %p100 = por %p98, %p99
    %p101 = scmp.ne.s32.totalorder %s90, %s93
    %p102 = scmp.eq.s32.totalorder %s17, 1
    %p103 = por %p101, %p102
    %p104 = scmp.ne.s32.totalorder %s93, %s94
    %p105 = scmp.eq.s32.totalorder %s17, 0
    %p106 = por %p104, %p105
    %p107 = scmp.ne.s32.totalorder %s93, %s94
    %p108 = scmp.eq.s32.totalorder %s18, 1
    %p109 = por %p107, %p108
    %p111 = scmp.ne.s32.totalorder %s94, %s110
    %p112 = scmp.eq.s32.totalorder %s18, 0
    %p113 = por %p111, %p112
    %s115 = sadd.s32 %s114, 1
    %p118 = scmp.eq.s32.totalorder %s12, 1
    %p119 = scmp.ne.s32.totalorder %s114, %s116
    %p120 = scmp.eq.s32.totalorder %s12, 0
    %p121 = por %p119, %p120
    %p122 = scmp.ne.s32.totalorder %s114, %s116
    %p123 = scmp.eq.s32.totalorder %s17, 1
    %p124 = por %p122, %p123
    %p125 = scmp.ne.s32.totalorder %s116, %s117
    %p126 = scmp.eq.s32.totalorder %s17, 0
    %p127 = por %p125, %p126
    %p128 = scmp.ne.s32.totalorder %s116, %s117
    %p129 = scmp.eq.s32.totalorder %s18, 1
    %p130 = por %p128, %p129
    %p132 = scmp.ne.s32.totalorder %s117, %s131
    %p133 = scmp.eq.s32.totalorder %s18, 0
    %p134 = por %p132, %p133
    %s136 = sadd.s32 %s135, 1
    %p139 = scmp.eq.s32.totalorder %s12, 1
    %p140 = scmp.ne.s32.totalorder %s135, %s137
    %p141 = scmp.eq.s32.totalorder %s12, 0
    %p142 = por %p140, %p141
    %p143 = scmp.ne.s32.totalorder %s135, %s137
    %p144 = scmp.eq.s32.totalorder %s17, 1
    %p145 = por %p143, %p144
    %p146 = scmp.ne.s32.totalorder %s137, %s138
    %p147 = scmp.eq.s32.totalorder %s17, 0
    %p148 = por %p146, %p147
    %p149 = scmp.ne.s32.totalorder %s137, %s138
    %p150 = scmp.eq.s32.totalorder %s18, 1
    %p151 = por %p149, %p150
    %p153 = scmp.ne.s32.totalorder %s138, %s152
    %p154 = scmp.eq.s32.totalorder %s18, 0
    %p155 = por %p153, %p154
    %p156 = scmp.le.s32.totalorder 1, %s12
    %p157 = scmp.lt.s32.totalorder %s12, 3
    %p158 = pnand %p156, %p157
    %p159 = pneg %p158
    // Predicated region
    $region9: #{basic_block3d_forward.6} parent=5 // pred_check
      _
    $region10: #{basic_block3d_forward.6} parent=5 // pred_check_branch
      %161 = sbr.rel (%p158) target = $region12
    $region11: #{basic_block3d_forward.6} parent=5 // pred_region
      %s162 = ssub.s32 %s12, 1
      // Predicated region
      $region13: #{basic_block3d_forward.6} parent=11 // pred_check
        %p163 = pneg %p59
      $region14: #{basic_block3d_forward.6} parent=11 // pred_check_branch
        %165 = sbr.rel (%p163) target = $region16
      $region15: #{basic_block3d_forward.6} parent=11 // pred_region
        _
      $region16: #{basic_block3d_forward.6} parent=11 // pred_fallthru
        _
      // Predicated region
      $region17: #{basic_block3d_forward.6} parent=11 // pred_check
        %p166 = pneg %p80
      $region18: #{basic_block3d_forward.6} parent=11 // pred_check_branch
        %168 = sbr.rel (%p166) target = $region20
      $region19: #{basic_block3d_forward.6} parent=11 // pred_region
        _
      $region20: #{basic_block3d_forward.6} parent=11 // pred_fallthru
        _
    $region12: #{basic_block3d_forward.6} parent=5 // pred_fallthru
      _
    %p169 = scmp.lt.s32.totalorder %s12, 2
    // Predicated region
    $region21: #{basic_block3d_forward.6} parent=5 // pred_check
      %p170 = pneg %p169
    $region22: #{basic_block3d_forward.6} parent=5 // pred_check_branch
      %172 = sbr.rel (%p170) target = $region24
    $region23: #{basic_block3d_forward.6} parent=5 // pred_region
      // Predicated region
      $region25: #{basic_block3d_forward.6} parent=23 // pred_check
        %p173 = pneg %p32
      $region26: #{basic_block3d_forward.6} parent=23 // pred_check_branch
        %175 = sbr.rel (%p173) target = $region28
      $region27: #{basic_block3d_forward.6} parent=23 // pred_region
        %p176 = scmp.lt.s32.totalorder %s12, 1
        %s177 = scalar_select %p176, %s12, 1
        %s178 = smul.addr %s177, 140
        %s179 = smul.addr %s178, 4
        %s180 = scalar_lea.vmem %s0, %s179
      $region28: #{basic_block3d_forward.6} parent=23 // pred_fallthru
        _
    $region24: #{basic_block3d_forward.6} parent=5 // pred_fallthru
      _
    %p181 = scmp.le.s32.totalorder 1, %s12
    %p182 = scmp.lt.s32.totalorder %s12, 3
    %p183 = pnand %p181, %p182
    %p184 = pneg %p183
    // Predicated region
    $region29: #{basic_block3d_forward.6} parent=5 // pred_check
      _
    $region30: #{basic_block3d_forward.6} parent=5 // pred_check_branch
      %186 = sbr.rel (%p183) target = $region32
    $region31: #{basic_block3d_forward.6} parent=5 // pred_region
      %s187 = ssub.s32 %s12, 1
      %p188 = scmp.lt.s32.totalorder %s17, 1
      %s189 = scalar_select %p188, %s17, 1
      %s190 = smul.addr %s189, 140
      %s191 = smul.addr %s190, 4
      %s192 = scalar_lea.vmem %s0, %s191
      %p193 = pneg %p38
      %p194 = pneg %p35
      %p195 = pneg %p59
      %p196 = pneg %p56
      %p197 = pneg %p80
      %p198 = pneg %p77
      %p199 = pneg %p106
      %p200 = pneg %p103
      %s201 = smul.u32 80, %s17
      %p202 = scmp.lt.s32.totalorder %s201, 159
      %s203 = scalar_select %p202, %s201, 159
      %s204 = smul.addr %s203, 4
      %s205 = scalar_lea.vmem %s3, %s204
      %p206 = pneg %p127
      %p207 = pneg %p124
      %p208 = pneg %p148
      %p209 = pneg %p145
      %p210 = scmp.lt.s32.totalorder %s17, 1
      %s211 = scalar_select %p210, %s17, 1
      %s212 = smul.addr %s211, 140
      %s213 = smul.addr %s212, 4
      %s214 = scalar_lea.vmem %s0, %s213
      %s215 = smul.u32 80, %s17
      %p216 = scmp.lt.s32.totalorder %s215, 159
      %s217 = scalar_select %p216, %s215, 159
      %s218 = smul.addr %s217, 4
      %s219 = scalar_lea.vmem %s3, %s218
      %s220 = smul.u32 80, %s17
      %p222 = scmp.eq.s32.totalorder %s17, 0
      // Predicated region
      $region33: #{basic_block3d_forward.6} parent=31 // pred_check
        %p223 = pneg %p222
      $region34: #{basic_block3d_forward.6} parent=31 // pred_check_branch
        %225 = sbr.rel (%p223) target = $region36
      $region35: #{basic_block3d_forward.6} parent=31 // pred_region
        %226 = vst [vmem:[%s4] sm:$0x1] 0.0
        %227 = vst [vmem:[%s5] sm:$0x1] 0.0
      $region36: #{basic_block3d_forward.6} parent=31 // pred_fallthru
        _
      %v228 = vld [vmem:[%s2] sm:$0xff]
      %v229 = vld [vmem:[%s2 + $0x8] sm:$0xff]
      %v230 = vld [vmem:[%s2 + $0x10] sm:$0xff]
      %v231 = vld [vmem:[%s2 + $0x18] sm:$0xff]
      %v232 = vld [vmem:[%s2 + $0x20] sm:$0xff]
      %v233 = vld [vmem:[%s2 + $0x28] sm:$0xff]
      %v234 = vld [vmem:[%s2 + $0x30] sm:$0xff]
      %v235 = vld [vmem:[%s2 + $0x38] sm:$0xff]
      %v236 = vld [vmem:[%s2 + $0x40] sm:$0xff]
      %v237 = vld [vmem:[%s2 + $0x48] sm:$0xff]
      loop: start=0, step=1, limit=8
      $region37: #{basic_block3d_forward.6} parent=31 // loop_pre_header
        _
      $region38: #{basic_block3d_forward.6} parent=31 // loop_header
        %s239 = sphi 0, %s243
        %p240 = scmp.ge.s32.totalorder %s239, 8
      $region39: #{basic_block3d_forward.6} parent=31 // loop_header_branch
        %242 = sbr.rel (%p240) target = $region43
      $region40: #{basic_block3d_forward.6} parent=31 // loop_body
        %s244 = smul.u32 %s239, 14
        %s245 = smul.addr %s244, 4
        %s246 = scalar_lea.vmem %s214, %s245
        %v247 = vld [vmem:[%s246] sm:$0xf]
        %v248 = vld [vmem:[%s246 + $0x4] sm:$0xf]
        %v249 = vld [vmem:[%s246 + $0x8] sm:$0xf]
        %v250 = vld [vmem:[%s246 + $0xc] sm:$0xf]
        %v251 = vld [vmem:[%s246 + $0x10] sm:$0xf]
        %v252 = vld [vmem:[%s246 + $0x14] sm:$0xf]
        %v253 = vld [vmem:[%s246 + $0x18] sm:$0xf]
        %v254 = vld [vmem:[%s246 + $0x1c] sm:$0xf]
        %v255 = vld [vmem:[%s246 + $0x20] sm:$0xf]
        %v256 = vld [vmem:[%s246 + $0x24] sm:$0xf]
        %v257 = vld [vmem:[%s1] sm:$0xf]
        %v258 = vld [vmem:[%s1 + $0x4] sm:$0xf]
        %v259 = vld [vmem:[%s1 + $0x8] sm:$0xf]
        %v260 = vld [vmem:[%s1 + $0xc] sm:$0xf]
        %v261 = vld [vmem:[%s1 + $0x10] sm:$0xf]
        %v262 = vld [vmem:[%s1 + $0x14] sm:$0xf]
        %v263 = vld [vmem:[%s1 + $0x18] sm:$0xf]
        %v264 = vld [vmem:[%s1 + $0x1c] sm:$0xf]
        %v265 = vld [vmem:[%s1 + $0x20] sm:$0xf]
        %v266 = vld [vmem:[%s1 + $0x24] sm:$0xf]
        %v267 = vld [vmem:[%s1 + $0x28] sm:$0xf]
        %v268 = vld [vmem:[%s1 + $0x2c] sm:$0xf]
        %v269 = vld [vmem:[%s1 + $0x30] sm:$0xf]
        %v270 = vld [vmem:[%s1 + $0x34] sm:$0xf]
        %v271 = vld [vmem:[%s1 + $0x38] sm:$0xf]
        %v272 = vld [vmem:[%s1 + $0x3c] sm:$0xf]
        %v273 = vld [vmem:[%s246 + $0x28] sm:$0x1]
        %s274 = scalar_lea.vmem %s1, 64
        %v275 = vld [vmem:[%s274] sm:$0xf]
        %v276 = vld [vmem:[%s274 + $0x4] sm:$0xf]
        %v277 = vld [vmem:[%s274 + $0x8] sm:$0xf]
        %v278 = vld [vmem:[%s274 + $0xc] sm:$0xf]
        %v279 = vld [vmem:[%s274 + $0x10] sm:$0xf]
        %v280 = vld [vmem:[%s274 + $0x14] sm:$0xf]
        %v281 = vld [vmem:[%s274 + $0x18] sm:$0xf]
        %v282 = vld [vmem:[%s274 + $0x1c] sm:$0xf]
        %v283 = vld [vmem:[%s274 + $0x20] sm:$0xf]
        %v284 = vld [vmem:[%s274 + $0x24] sm:$0xf]
        %v285 = vld [vmem:[%s274 + $0x28] sm:$0xf]
        %v286 = vld [vmem:[%s274 + $0x2c] sm:$0xf]
        %v287 = vld [vmem:[%s274 + $0x30] sm:$0xf]
        %v288 = vld [vmem:[%s274 + $0x34] sm:$0xf]
        %v289 = vld [vmem:[%s274 + $0x38] sm:$0xf]
        %v290 = vld [vmem:[%s274 + $0x3c] sm:$0xf]
        %v302 = vunpack.c.l.b16 %v247
        %v303 = vunpack.c.l.b16 %v248
        %v304 = vunpack.c.l.b16 %v249
        %v305 = vunpack.c.l.b16 %v250
        %v306 = vunpack.c.l.b16 %v251
        %v307 = vunpack.c.l.b16 %v252
        %v308 = vunpack.c.l.b16 %v253
        %v309 = vunpack.c.l.b16 %v254
        %v310 = vunpack.c.l.b16 %v255
        %v311 = vunpack.c.l.b16 %v256
        %v312 = vunpack.c.l.b16 %v273
        %v313 = vpack.c.b16 %v303, %v302
        %v314 = vpack.c.b16 %v305, %v304
        %v315 = vpack.c.b16 %v307, %v306
        %v316 = vpack.c.b16 %v309, %v308
        %v317 = vpack.c.b16 %v311, %v310
        %v318 = vpack.c.b16 %v312, %v312
        %vm319 = vsmask.f32 7424
        %v321 = vshrl.u32 %v313, 16
        %v323 = vshll.u32 %v313, 16
        %v325 = vrot.slane %v323, 1
        %v326 = vor.u32 %v321, %v325
        %v328 = vshll.u32 %v314, 16
        %v330 = vrot.slane %v328, 1
        %v331 = vsel %vm319, %v326, %v330
        %v332 = vshrl.u32 %v314, 16
        %v334 = vor.u32 %v332, %v330
        %v336 = vshll.u32 %v315, 16
        %v338 = vrot.slane %v336, 1
        %v339 = vsel %vm319, %v334, %v338
        %v340 = vshrl.u32 %v315, 16
        %v342 = vor.u32 %v340, %v338
        %v344 = vshll.u32 %v316, 16
        %v346 = vrot.slane %v344, 1
        %v347 = vsel %vm319, %v342, %v346
        %v348 = vshrl.u32 %v316, 16
        %v350 = vor.u32 %v348, %v346
        %v352 = vshll.u32 %v317, 16
        %v354 = vrot.slane %v352, 1
        %v355 = vsel %vm319, %v350, %v354
        %v356 = vshrl.u32 %v317, 16
        %v358 = vor.u32 %v356, %v354
        %v360 = vshll.u32 %v318, 16
        %v362 = vrot.slane %v360, 1
        %v363 = vsel %vm319, %v358, %v362
        %v385 = vunpack.c.l.b16 %v275
        %v386 = vunpack.c.l.b16 %v276
        %v387 = vunpack.c.l.b16 %v277
        %v388 = vunpack.c.l.b16 %v278
        %v389 = vunpack.c.l.b16 %v279
        %v390 = vunpack.c.l.b16 %v280
        %v391 = vunpack.c.l.b16 %v281
        %v392 = vunpack.c.l.b16 %v282
        %v393 = vunpack.c.l.b16 %v283
        %v394 = vunpack.c.l.b16 %v284
        %v395 = vunpack.c.l.b16 %v285
        %v396 = vunpack.c.l.b16 %v286
        %v397 = vunpack.c.l.b16 %v287
        %v398 = vunpack.c.l.b16 %v288
        %v399 = vunpack.c.l.b16 %v289
        %v400 = vunpack.c.l.b16 %v290
        %v401 = vpack.c.b16 %v386, %v385
        %v402 = vpack.c.b16 %v388, %v387
        %v403 = vpack.c.b16 %v390, %v389
        %v404 = vpack.c.b16 %v392, %v391
        %v405 = vpack.c.b16 %v394, %v393
        %v406 = vpack.c.b16 %v396, %v395
        %v407 = vpack.c.b16 %v398, %v397
        %v408 = vpack.c.b16 %v400, %v399
        %417 = vmatprep.subr.bf16.mxu0 0
        %418 = vmatpush1.bf16.msra.mxu0 %v401
        %419 = vmatprep.subr.bf16.mxu0 0
        %420 = vmatpush1.bf16.msra.mxu0 %v402
        %421 = vmatprep.subr.bf16.mxu0 0
        %422 = vmatpush1.bf16.msra.mxu0 %v403
        %423 = vmatprep.subr.bf16.mxu0 0
        %424 = vmatpush1.bf16.msra.mxu0 %v404
        %425 = vmatprep.subr.bf16.mxu0 0
        %426 = vmatpush1.bf16.msra.mxu0 %v405
        %427 = vmatprep.subr.bf16.mxu0 0
        %428 = vmatpush1.bf16.msra.mxu0 %v406
        %429 = vmatprep.subr.bf16.mxu0 0
        %430 = vmatpush1.bf16.msra.mxu0 %v407
        %431 = vmatprep.subr.bf16.mxu0 0
        %432 = vmatpush1.bf16.msra.mxu0 %v408
        %433 = vmatprep.subr.bf16.mxu0 0
        %434 = vmatpush1.bf16.msra.mxu0 0
        %435 = vmatprep.subr.bf16.mxu0 0
        %436 = vmatpush1.bf16.msra.mxu0 0
        %437 = vmatprep.subr.bf16.mxu0 0
        %438 = vmatpush1.bf16.msra.mxu0 0
        %439 = vmatprep.subr.bf16.mxu0 0
        %440 = vmatpush1.bf16.msra.mxu0 0
        %441 = vmatprep.subr.bf16.mxu0 0
        %442 = vmatpush1.bf16.msra.mxu0 0
        %443 = vmatprep.subr.bf16.mxu0 0
        %444 = vmatpush1.bf16.msra.mxu0 0
        %445 = vmatprep.subr.bf16.mxu0 0
        %446 = vmatpush1.bf16.msra.mxu0 0
        %447 = vmatprep.subr.bf16.mxu0 0
        %448 = vmatpush1.bf16.msra.mxu0 0
        %449 = vmatprep.mubr.bf16.mxu0 0
        %450 = vmatmul.mubr.bf16.gmra.mrb[0].mxu0 %v331
        %v451 = vpop.f32.mrb[0].mxu0
        %v452 = vadd.f32 0.0, %v451
        %v453 = vpop.f32.mrb[0].mxu0
        %v454 = vpop.f32.mrb[0].mxu0
        %v455 = vadd.f32 0.0, %v454
        %v456 = vpop.f32.mrb[0].mxu0
        %457 = vmatprep.mubr.bf16.mxu0 0
        %458 = vmatmul.mubr.bf16.gmra.mrb[0].mxu0 %v339
        %v459 = vpop.f32.mrb[0].mxu0
        %v460 = vadd.f32 0.0, %v459
        %v461 = vpop.f32.mrb[0].mxu0
        %v462 = vpop.f32.mrb[0].mxu0
        %v463 = vadd.f32 0.0, %v462
        %v464 = vpop.f32.mrb[0].mxu0
        %465 = vmatprep.mubr.bf16.mxu0 0
        %466 = vmatmul.mubr.bf16.gmra.mrb[0].mxu0 %v347
        %v467 = vpop.f32.mrb[0].mxu0
        %v468 = vadd.f32 0.0, %v467
        %v469 = vpop.f32.mrb[0].mxu0
        %v470 = vpop.f32.mrb[0].mxu0
        %v471 = vadd.f32 0.0, %v470
        %v472 = vpop.f32.mrb[0].mxu0
        %473 = vmatprep.mubr.bf16.mxu0 0
        %474 = vmatmul.mubr.bf16.gmra.mrb[0].mxu0 %v355
        %v475 = vpop.f32.mrb[0].mxu0
        %v476 = vadd.f32 0.0, %v475
        %v477 = vpop.f32.mrb[0].mxu0
        %v478 = vpop.f32.mrb[0].mxu0
        %v479 = vadd.f32 0.0, %v478
        %v480 = vpop.f32.mrb[0].mxu0
        %481 = vmatprep.mubr.bf16.mxu0 0
        %482 = vmatmul.mubr.bf16.gmra.mrb[0].mxu0 %v363
        %v483 = vpop.f32.mrb[0].mxu0
        %v484 = vadd.f32 0.0, %v483
        %v485 = vpop.f32.mrb[0].mxu0
        %v486 = vpop.f32.mrb[0].mxu0
        %v487 = vadd.f32 0.0, %v486
        %v488 = vpop.f32.mrb[0].mxu0
        %489 = vdwg.mxu0
        %v511 = vunpack.c.l.b16 %v257
        %v512 = vunpack.c.l.b16 %v258
        %v513 = vunpack.c.l.b16 %v259
        %v514 = vunpack.c.l.b16 %v260
        %v515 = vunpack.c.l.b16 %v261
        %v516 = vunpack.c.l.b16 %v262
        %v517 = vunpack.c.l.b16 %v263
        %v518 = vunpack.c.l.b16 %v264
        %v519 = vunpack.c.l.b16 %v265
        %v520 = vunpack.c.l.b16 %v266
        %v521 = vunpack.c.l.b16 %v267
        %v522 = vunpack.c.l.b16 %v268
        %v523 = vunpack.c.l.b16 %v269
        %v524 = vunpack.c.l.b16 %v270
        %v525 = vunpack.c.l.b16 %v271
        %v526 = vunpack.c.l.b16 %v272
        %v527 = vpack.c.b16 %v512, %v511
        %v528 = vpack.c.b16 %v514, %v513
        %v529 = vpack.c.b16 %v516, %v515
        %v530 = vpack.c.b16 %v518, %v517
        %v531 = vpack.c.b16 %v520, %v519
        %v532 = vpack.c.b16 %v522, %v521
        %v533 = vpack.c.b16 %v524, %v523
        %v534 = vpack.c.b16 %v526, %v525
        %543 = vmatprep.subr.bf16.mxu0 0
        %544 = vmatpush1.bf16.msra.mxu0 %v527
        %545 = vmatprep.subr.bf16.mxu0 0
        %546 = vmatpush1.bf16.msra.mxu0 %v528
        %547 = vmatprep.subr.bf16.mxu0 0
        %548 = vmatpush1.bf16.msra.mxu0 %v529
        %549 = vmatprep.subr.bf16.mxu0 0
        %550 = vmatpush1.bf16.msra.mxu0 %v530
        %551 = vmatprep.subr.bf16.mxu0 0
        %552 = vmatpush1.bf16.msra.mxu0 %v531
        %553 = vmatprep.subr.bf16.mxu0 0
        %554 = vmatpush1.bf16.msra.mxu0 %v532
        %555 = vmatprep.subr.bf16.mxu0 0
        %556 = vmatpush1.bf16.msra.mxu0 %v533
        %557 = vmatprep.subr.bf16.mxu0 0
        %558 = vmatpush1.bf16.msra.mxu0 %v534
        %559 = vmatprep.subr.bf16.mxu0 0
        %560 = vmatpush1.bf16.msra.mxu0 0
        %561 = vmatprep.subr.bf16.mxu0 0
        %562 = vmatpush1.bf16.msra.mxu0 0
        %563 = vmatprep.subr.bf16.mxu0 0
        %564 = vmatpush1.bf16.msra.mxu0 0
        %565 = vmatprep.subr.bf16.mxu0 0
        %566 = vmatpush1.bf16.msra.mxu0 0
        %567 = vmatprep.subr.bf16.mxu0 0
        %568 = vmatpush1.bf16.msra.mxu0 0
        %569 = vmatprep.subr.bf16.mxu0 0
        %570 = vmatpush1.bf16.msra.mxu0 0
        %571 = vmatprep.subr.bf16.mxu0 0
        %572 = vmatpush1.bf16.msra.mxu0 0
        %573 = vmatprep.subr.bf16.mxu0 0
        %574 = vmatpush1.bf16.msra.mxu0 0
        %575 = vmatprep.mubr.bf16.mxu0 0
        %576 = vmatmul.mubr.bf16.gmra.mrb[0].mxu0 %v313
        %v577 = vpop.f32.mrb[0].mxu0
        %v578 = vadd.f32 %v452, %v577
        %v579 = vpop.f32.mrb[0].mxu0
        %v580 = vpop.f32.mrb[0].mxu0
        %v581 = vadd.f32 %v455, %v580
        %v582 = vpop.f32.mrb[0].mxu0
        %583 = vmatprep.mubr.bf16.mxu0 0
        %584 = vmatmul.mubr.bf16.gmra.mrb[0].mxu0 %v314
        %v585 = vpop.f32.mrb[0].mxu0
        %v586 = vadd.f32 %v460, %v585
        %v587 = vpop.f32.mrb[0].mxu0
        %v588 = vpop.f32.mrb[0].mxu0
        %v589 = vadd.f32 %v463, %v588
        %v590 = vpop.f32.mrb[0].mxu0
        %591 = vmatprep.mubr.bf16.mxu0 0
        %592 = vmatmul.mubr.bf16.gmra.mrb[0].mxu0 %v315
        %v593 = vpop.f32.mrb[0].mxu0
        %v594 = vadd.f32 %v468, %v593
        %v595 = vpop.f32.mrb[0].mxu0
        %v596 = vpop.f32.mrb[0].mxu0
        %v597 = vadd.f32 %v471, %v596
        %v598 = vpop.f32.mrb[0].mxu0
        %599 = vmatprep.mubr.bf16.mxu0 0
        %600 = vmatmul.mubr.bf16.gmra.mrb[0].mxu0 %v316
        %v601 = vpop.f32.mrb[0].mxu0
        %v602 = vadd.f32 %v476, %v601
        %v603 = vpop.f32.mrb[0].mxu0
        %v604 = vpop.f32.mrb[0].mxu0
        %v605 = vadd.f32 %v479, %v604
        %v606 = vpop.f32.mrb[0].mxu0
        %607 = vmatprep.mubr.bf16.mxu0 0
        %608 = vmatmul.mubr.bf16.gmra.mrb[0].mxu0 %v317
        %v609 = vpop.f32.mrb[0].mxu0
        %v610 = vadd.f32 %v484, %v609
        %v611 = vpop.f32.mrb[0].mxu0
        %v612 = vpop.f32.mrb[0].mxu0
        %v613 = vadd.f32 %v487, %v612
        %v614 = vpop.f32.mrb[0].mxu0
        %615 = vdwg.mxu0
        %v616 = vld [vmem:[%s246] sm:$0xe]
        %s617 = scalar_lea.vmem %s1, 128
        %v618 = vld [vmem:[%s617] sm:$0xf]
        %v619 = vld [vmem:[%s617 + $0x4] sm:$0xf]
        %v620 = vld [vmem:[%s617 + $0x8] sm:$0xf]
        %v621 = vld [vmem:[%s617 + $0xc] sm:$0xf]
        %v622 = vld [vmem:[%s617 + $0x10] sm:$0xf]
        %v623 = vld [vmem:[%s617 + $0x14] sm:$0xf]
        %v624 = vld [vmem:[%s617 + $0x18] sm:$0xf]
        %v625 = vld [vmem:[%s617 + $0x1c] sm:$0xf]
        %v626 = vld [vmem:[%s617 + $0x20] sm:$0xf]
        %v627 = vld [vmem:[%s617 + $0x24] sm:$0xf]
        %v628 = vld [vmem:[%s617 + $0x28] sm:$0xf]
        %v629 = vld [vmem:[%s617 + $0x2c] sm:$0xf]
        %v630 = vld [vmem:[%s617 + $0x30] sm:$0xf]
        %v631 = vld [vmem:[%s617 + $0x34] sm:$0xf]
        %v632 = vld [vmem:[%s617 + $0x38] sm:$0xf]
        %v633 = vld [vmem:[%s617 + $0x3c] sm:$0xf]
        %v635 = vunpack.c.l.b16 %v616
        %v636 = vpack.c.b16 %v303, %v635
        %vm637 = vcmask 1046528
        %v638 = vrot.slane %v636, 1
        %v639 = vrot.slane %v314, 1
        %v640 = vsel %vm637, %v638, %v639
        %v641 = vrot.slane %v315, 1
        %v642 = vsel %vm637, %v639, %v641
        %v643 = vrot.slane %v316, 1
        %v644 = vsel %vm637, %v641, %v643
        %v645 = vrot.slane %v317, 1
        %v646 = vsel %vm637, %v643, %v645
        %v647 = vrot.slane %v318, 1
        %v648 = vsel %vm637, %v645, %v647
        %v670 = vunpack.c.l.b16 %v618
        %v671 = vunpack.c.l.b16 %v619
        %v672 = vunpack.c.l.b16 %v620
        %v673 = vunpack.c.l.b16 %v621
        %v674 = vunpack.c.l.b16 %v622
        %v675 = vunpack.c.l.b16 %v623
        %v676 = vunpack.c.l.b16 %v624
        %v677 = vunpack.c.l.b16 %v625
        %v678 = vunpack.c.l.b16 %v626
        %v679 = vunpack.c.l.b16 %v627
        %v680 = vunpack.c.l.b16 %v628
        %v681 = vunpack.c.l.b16 %v629
        %v682 = vunpack.c.l.b16 %v630
        %v683 = vunpack.c.l.b16 %v631
        %v684 = vunpack.c.l.b16 %v632
        %v685 = vunpack.c.l.b16 %v633
        %v686 = vpack.c.b16 %v671, %v670
        %v687 = vpack.c.b16 %v673, %v672
        %v688 = vpack.c.b16 %v675, %v674
        %v689 = vpack.c.b16 %v677, %v676
        %v690 = vpack.c.b16 %v679, %v678
        %v691 = vpack.c.b16 %v681, %v680
        %v692 = vpack.c.b16 %v683, %v682
        %v693 = vpack.c.b16 %v685, %v684
        %702 = vmatprep.subr.bf16.mxu0 0
        %703 = vmatpush1.bf16.msra.mxu0 %v686
        %704 = vmatprep.subr.bf16.mxu0 0
        %705 = vmatpush1.bf16.msra.mxu0 %v687
        %706 = vmatprep.subr.bf16.mxu0 0
        %707 = vmatpush1.bf16.msra.mxu0 %v688
        %708 = vmatprep.subr.bf16.mxu0 0
        %709 = vmatpush1.bf16.msra.mxu0 %v689
        %710 = vmatprep.subr.bf16.mxu0 0
        %711 = vmatpush1.bf16.msra.mxu0 %v690
        %712 = vmatprep.subr.bf16.mxu0 0
        %713 = vmatpush1.bf16.msra.mxu0 %v691
        %714 = vmatprep.subr.bf16.mxu0 0
        %715 = vmatpush1.bf16.msra.mxu0 %v692
        %716 = vmatprep.subr.bf16.mxu0 0
        %717 = vmatpush1.bf16.msra.mxu0 %v693
        %718 = vmatprep.subr.bf16.mxu0 0
        %719 = vmatpush1.bf16.msra.mxu0 0
        %720 = vmatprep.subr.bf16.mxu0 0
        %721 = vmatpush1.bf16.msra.mxu0 0
        %722 = vmatprep.subr.bf16.mxu0 0
        %723 = vmatpush1.bf16.msra.mxu0 0
        %724 = vmatprep.subr.bf16.mxu0 0
        %725 = vmatpush1.bf16.msra.mxu0 0
        %726 = vmatprep.subr.bf16.mxu0 0
        %727 = vmatpush1.bf16.msra.mxu0 0
        %728 = vmatprep.subr.bf16.mxu0 0
        %729 = vmatpush1.bf16.msra.mxu0 0
        %730 = vmatprep.subr.bf16.mxu0 0
        %731 = vmatpush1.bf16.msra.mxu0 0
        %732 = vmatprep.subr.bf16.mxu0 0
        %733 = vmatpush1.bf16.msra.mxu0 0
        %734 = vmatprep.mubr.bf16.mxu0 0
        %735 = vmatmul.mubr.bf16.gmra.mrb[0].mxu0 %v640
        %v736 = vpop.f32.mrb[0].mxu0
        %v737 = vadd.f32 0.0, %v736
        %v738 = vpop.f32.mrb[0].mxu0
        %v739 = vpop.f32.mrb[0].mxu0
        %v740 = vadd.f32 0.0, %v739
        %v741 = vpop.f32.mrb[0].mxu0
        %742 = vmatprep.mubr.bf16.mxu0 0
        %743 = vmatmul.mubr.bf16.gmra.mrb[0].mxu0 %v642
        %v744 = vpop.f32.mrb[0].mxu0
        %v745 = vadd.f32 0.0, %v744
        %v746 = vpop.f32.mrb[0].mxu0
        %v747 = vpop.f32.mrb[0].mxu0
        %v748 = vadd.f32 0.0, %v747
        %v749 = vpop.f32.mrb[0].mxu0
        %750 = vmatprep.mubr.bf16.mxu0 0
        %751 = vmatmul.mubr.bf16.gmra.mrb[0].mxu0 %v644
        %v752 = vpop.f32.mrb[0].mxu0
        %v753 = vadd.f32 0.0, %v752
        %v754 = vpop.f32.mrb[0].mxu0
        %v755 = vpop.f32.mrb[0].mxu0
        %v756 = vadd.f32 0.0, %v755
        %v757 = vpop.f32.mrb[0].mxu0
        %758 = vmatprep.mubr.bf16.mxu0 0
        %759 = vmatmul.mubr.bf16.gmra.mrb[0].mxu0 %v646
        %v760 = vpop.f32.mrb[0].mxu0
        %v761 = vadd.f32 0.0, %v760
        %v762 = vpop.f32.mrb[0].mxu0
        %v763 = vpop.f32.mrb[0].mxu0
        %v764 = vadd.f32 0.0, %v763
        %v765 = vpop.f32.mrb[0].mxu0
        %766 = vmatprep.mubr.bf16.mxu0 0
        %767 = vmatmul.mubr.bf16.gmra.mrb[0].mxu0 %v648
        %v768 = vpop.f32.mrb[0].mxu0
        %v769 = vadd.f32 0.0, %v768
        %v770 = vpop.f32.mrb[0].mxu0
        %v771 = vpop.f32.mrb[0].mxu0
        %v772 = vadd.f32 0.0, %v771
        %v773 = vpop.f32.mrb[0].mxu0
        %774 = vdwg.mxu0
        %v775 = vadd.f32 %v578, %v737
        %v776 = vadd.f32 %v581, %v740
        %v777 = vadd.f32 %v586, %v745
        %v778 = vadd.f32 %v589, %v748
        %v779 = vadd.f32 %v594, %v753
        %v780 = vadd.f32 %v597, %v756
        %v781 = vadd.f32 %v602, %v761
        %v782 = vadd.f32 %v605, %v764
        %v783 = vadd.f32 %v610, %v769
        %v784 = vadd.f32 %v613, %v772
        %v785 = vld [vmem:[%s246 + $0x4] sm:$0xe]
        %v786 = vld [vmem:[%s246 + $0x8] sm:$0xf]
        %v787 = vld [vmem:[%s246 + $0xc] sm:$0xf]
        %v788 = vld [vmem:[%s246 + $0x10] sm:$0xf]
        %v789 = vld [vmem:[%s246 + $0x14] sm:$0xf]
        %v790 = vld [vmem:[%s246 + $0x18] sm:$0xf]
        %v791 = vld [vmem:[%s246 + $0x1c] sm:$0xf]
        %v792 = vld [vmem:[%s246 + $0x20] sm:$0xf]
        %v793 = vld [vmem:[%s246 + $0x24] sm:$0xf]
        %v794 = vld [vmem:[%s246 + $0x28] sm:$0xf]
        %v795 = vld [vmem:[%s246 + $0x2c] sm:$0x1]
        %s796 = scalar_lea.vmem %s1, 192
        %v797 = vld [vmem:[%s796] sm:$0xf]
        %v798 = vld [vmem:[%s796 + $0x4] sm:$0xf]
        %v799 = vld [vmem:[%s796 + $0x8] sm:$0xf]
        %v800 = vld [vmem:[%s796 + $0xc] sm:$0xf]
        %v801 = vld [vmem:[%s796 + $0x10] sm:$0xf]
        %v802 = vld [vmem:[%s796 + $0x14] sm:$0xf]
        %v803 = vld [vmem:[%s796 + $0x18] sm:$0xf]
        %v804 = vld [vmem:[%s796 + $0x1c] sm:$0xf]
        %v805 = vld [vmem:[%s796 + $0x20] sm:$0xf]
        %v806 = vld [vmem:[%s796 + $0x24] sm:$0xf]
        %v807 = vld [vmem:[%s796 + $0x28] sm:$0xf]
        %v808 = vld [vmem:[%s796 + $0x2c] sm:$0xf]
        %v809 = vld [vmem:[%s796 + $0x30] sm:$0xf]
        %v810 = vld [vmem:[%s796 + $0x34] sm:$0xf]
        %v811 = vld [vmem:[%s796 + $0x38] sm:$0xf]
        %v812 = vld [vmem:[%s796 + $0x3c] sm:$0xf]
        %v824 = vunpack.c.l.b16 %v785
        %v825 = vunpack.c.l.b16 %v786
        %v826 = vunpack.c.l.b16 %v787
        %v827 = vunpack.c.l.b16 %v788
        %v828 = vunpack.c.l.b16 %v789
        %v829 = vunpack.c.l.b16 %v790
        %v830 = vunpack.c.l.b16 %v791
        %v831 = vunpack.c.l.b16 %v792
        %v832 = vunpack.c.l.b16 %v793
        %v833 = vunpack.c.l.b16 %v794
        %v834 = vunpack.c.l.b16 %v795
        %v835 = vpack.c.b16 %v825, %v824
        %v836 = vpack.c.b16 %v827, %v826
        %v837 = vpack.c.b16 %v829, %v828
        %v838 = vpack.c.b16 %v831, %v830
        %v839 = vpack.c.b16 %v833, %v832
        %v840 = vpack.c.b16 %v834, %v834
        %v841 = vrot.slane %v835, 1
        %v842 = vrot.slane %v836, 1
        %v843 = vsel %vm637, %v841, %v842
        %v844 = vrot.slane %v837, 1
        %v845 = vsel %vm637, %v842, %v844
        %v846 = vrot.slane %v838, 1
        %v847 = vsel %vm637, %v844, %v846
        %v848 = vrot.slane %v839, 1
        %v849 = vsel %vm637, %v846, %v848
        %v850 = vrot.slane %v840, 1
        %v851 = vsel %vm637, %v848, %v850
        %v873 = vunpack.c.l.b16 %v797
        %v874 = vunpack.c.l.b16 %v798
        %v875 = vunpack.c.l.b16 %v799
        %v876 = vunpack.c.l.b16 %v800
        %v877 = vunpack.c.l.b16 %v801
        %v878 = vunpack.c.l.b16 %v802
        %v879 = vunpack.c.l.b16 %v803
        %v880 = vunpack.c.l.b16 %v804
        %v881 = vunpack.c.l.b16 %v805
        %v882 = vunpack.c.l.b16 %v806
        %v883 = vunpack.c.l.b16 %v807
        %v884 = vunpack.c.l.b16 %v808
        %v885 = vunpack.c.l.b16 %v809
        %v886 = vunpack.c.l.b16 %v810
        %v887 = vunpack.c.l.b16 %v811
        %v888 = vunpack.c.l.b16 %v812
        %v889 = vpack.c.b16 %v874, %v873
        %v890 = vpack.c.b16 %v876, %v875
        %v891 = vpack.c.b16 %v878, %v877
        %v892 = vpack.c.b16 %v880, %v879
        %v893 = vpack.c.b16 %v882, %v881
        %v894 = vpack.c.b16 %v884, %v883
        %v895 = vpack.c.b16 %v886, %v885
        %v896 = vpack.c.b16 %v888, %v887
        %905 = vmatprep.subr.bf16.mxu0 0
        %906 = vmatpush1.bf16.msra.mxu0 %v889
        %907 = vmatprep.subr.bf16.mxu0 0
        %908 = vmatpush1.bf16.msra.mxu0 %v890
        %909 = vmatprep.subr.bf16.mxu0 0
        %910 = vmatpush1.bf16.msra.mxu0 %v891
        %911 = vmatprep.subr.bf16.mxu0 0
        %912 = vmatpush1.bf16.msra.mxu0 %v892
        %913 = vmatprep.subr.bf16.mxu0 0
        %914 = vmatpush1.bf16.msra.mxu0 %v893
        %915 = vmatprep.subr.bf16.mxu0 0
        %916 = vmatpush1.bf16.msra.mxu0 %v894
        %917 = vmatprep.subr.bf16.mxu0 0
        %918 = vmatpush1.bf16.msra.mxu0 %v895
        %919 = vmatprep.subr.bf16.mxu0 0
        %920 = vmatpush1.bf16.msra.mxu0 %v896
        %921 = vmatprep.subr.bf16.mxu0 0
        %922 = vmatpush1.bf16.msra.mxu0 0
        %923 = vmatprep.subr.bf16.mxu0 0
        %924 = vmatpush1.bf16.msra.mxu0 0
        %925 = vmatprep.subr.bf16.mxu0 0
        %926 = vmatpush1.bf16.msra.mxu0 0
        %927 = vmatprep.subr.bf16.mxu0 0
        %928 = vmatpush1.bf16.msra.mxu0 0
        %929 = vmatprep.subr.bf16.mxu0 0
        %930 = vmatpush1.bf16.msra.mxu0 0
        %931 = vmatprep.subr.bf16.mxu0 0
        %932 = vmatpush1.bf16.msra.mxu0 0
        %933 = vmatprep.subr.bf16.mxu0 0
        %934 = vmatpush1.bf16.msra.mxu0 0
        %935 = vmatprep.subr.bf16.mxu0 0
        %936 = vmatpush1.bf16.msra.mxu0 0
        %937 = vmatprep.mubr.bf16.mxu0 0
        %938 = vmatmul.mubr.bf16.gmra.mrb[0].mxu0 %v843
        %v939 = vpop.f32.mrb[0].mxu0
        %v940 = vadd.f32 0.0, %v939
        %v941 = vpop.f32.mrb[0].mxu0
        %v942 = vpop.f32.mrb[0].mxu0
        %v943 = vadd.f32 0.0, %v942
        %v944 = vpop.f32.mrb[0].mxu0
        %945 = vmatprep.mubr.bf16.mxu0 0
        %946 = vmatmul.mubr.bf16.gmra.mrb[0].mxu0 %v845
        %v947 = vpop.f32.mrb[0].mxu0
        %v948 = vadd.f32 0.0, %v947
        %v949 = vpop.f32.mrb[0].mxu0
        %v950 = vpop.f32.mrb[0].mxu0
        %v951 = vadd.f32 0.0, %v950
        %v952 = vpop.f32.mrb[0].mxu0
        %953 = vmatprep.mubr.bf16.mxu0 0
        %954 = vmatmul.mubr.bf16.gmra.mrb[0].mxu0 %v847
        %v955 = vpop.f32.mrb[0].mxu0
        %v956 = vadd.f32 0.0, %v955
        %v957 = vpop.f32.mrb[0].mxu0
        %v958 = vpop.f32.mrb[0].mxu0
        %v959 = vadd.f32 0.0, %v958
        %v960 = vpop.f32.mrb[0].mxu0
        %961 = vmatprep.mubr.bf16.mxu0 0
        %962 = vmatmul.mubr.bf16.gmra.mrb[0].mxu0 %v849
        %v963 = vpop.f32.mrb[0].mxu0
        %v964 = vadd.f32 0.0, %v963
        %v965 = vpop.f32.mrb[0].mxu0
        %v966 = vpop.f32.mrb[0].mxu0
        %v967 = vadd.f32 0.0, %v966
        %v968 = vpop.f32.mrb[0].mxu0
        %969 = vmatprep.mubr.bf16.mxu0 0
        %970 = vmatmul.mubr.bf16.gmra.mrb[0].mxu0 %v851
        %v971 = vpop.f32.mrb[0].mxu0
        %v972 = vadd.f32 0.0, %v971
        %v973 = vpop.f32.mrb[0].mxu0
        %v974 = vpop.f32.mrb[0].mxu0
        %v975 = vadd.f32 0.0, %v974
        %v976 = vpop.f32.mrb[0].mxu0
        %977 = vdwg.mxu0
        %v978 = vadd.f32 %v775, %v940
        %v979 = vadd.f32 %v776, %v943
        %v980 = vadd.f32 %v777, %v948
        %v981 = vadd.f32 %v778, %v951
        %v982 = vadd.f32 %v779, %v956
        %v983 = vadd.f32 %v780, %v959
        %v984 = vadd.f32 %v781, %v964
        %v985 = vadd.f32 %v782, %v967
        %v986 = vadd.f32 %v783, %v972
        %v987 = vadd.f32 %v784, %v975
        %v988 = vld [vmem:[%s246 + $0x2c] sm:$0x3]
        %s989 = scalar_lea.vmem %s1, 256
        %v990 = vld [vmem:[%s989] sm:$0xf]
        %v991 = vld [vmem:[%s989 + $0x4] sm:$0xf]
        %v992 = vld [vmem:[%s989 + $0x8] sm:$0xf]
        %v993 = vld [vmem:[%s989 + $0xc] sm:$0xf]
        %v994 = vld [vmem:[%s989 + $0x10] sm:$0xf]
        %v995 = vld [vmem:[%s989 + $0x14] sm:$0xf]
        %v996 = vld [vmem:[%s989 + $0x18] sm:$0xf]
        %v997 = vld [vmem:[%s989 + $0x1c] sm:$0xf]
        %v998 = vld [vmem:[%s989 + $0x20] sm:$0xf]
        %v999 = vld [vmem:[%s989 + $0x24] sm:$0xf]
        %v1000 = vld [vmem:[%s989 + $0x28] sm:$0xf]
        %v1001 = vld [vmem:[%s989 + $0x2c] sm:$0xf]
        %v1002 = vld [vmem:[%s989 + $0x30] sm:$0xf]
        %v1003 = vld [vmem:[%s989 + $0x34] sm:$0xf]
        %v1004 = vld [vmem:[%s989 + $0x38] sm:$0xf]
        %v1005 = vld [vmem:[%s989 + $0x3c] sm:$0xf]
        %v1007 = vunpack.c.l.b16 %v988
        %v1008 = vpack.c.b16 %v1007, %v1007
        %vm1009 = vsmask.f32 6400
        %v1011 = vshrl.u32 %v835, 16
        %v1013 = vrot.slane %v1011, 1
        %v1014 = vshll.u32 %v835, 16
        %v1016 = vrot.slane %v1014, 2
        %v1017 = vor.u32 %v1013, %v1016
        %v1019 = vshrl.u32 %v836, 16
        %v1021 = vrot.slane %v1019, 1
        %v1022 = vshll.u32 %v836, 16
        %v1024 = vrot.slane %v1022, 2
        %v1025 = vor.u32 %v1021, %v1024
        %v1026 = vsel %vm1009, %v1017, %v1025
        %v1028 = vshrl.u32 %v837, 16
        %v1030 = vrot.slane %v1028, 1
        %v1031 = vshll.u32 %v837, 16
        %v1033 = vrot.slane %v1031, 2
        %v1034 = vor.u32 %v1030, %v1033
        %v1035 = vsel %vm1009, %v1025, %v1034
        %v1037 = vshrl.u32 %v838, 16
        %v1039 = vrot.slane %v1037, 1
        %v1040 = vshll.u32 %v838, 16
        %v1042 = vrot.slane %v1040, 2
        %v1043 = vor.u32 %v1039, %v1042
        %v1044 = vsel %vm1009, %v1034, %v1043
        %v1046 = vshrl.u32 %v839, 16
        %v1048 = vrot.slane %v1046, 1
        %v1049 = vshll.u32 %v839, 16
        %v1051 = vrot.slane %v1049, 2
        %v1052 = vor.u32 %v1048, %v1051
        %v1053 = vsel %vm1009, %v1043, %v1052
        %v1055 = vshrl.u32 %v1008, 16
        %v1057 = vrot.slane %v1055, 1
        %v1058 = vshll.u32 %v1008, 16
        %v1060 = vrot.slane %v1058, 2
        %v1061 = vor.u32 %v1057, %v1060
        %v1062 = vsel %vm1009, %v1052, %v1061
        %v1084 = vunpack.c.l.b16 %v990
        %v1085 = vunpack.c.l.b16 %v991
        %v1086 = vunpack.c.l.b16 %v992
        %v1087 = vunpack.c.l.b16 %v993
        %v1088 = vunpack.c.l.b16 %v994
        %v1089 = vunpack.c.l.b16 %v995
        %v1090 = vunpack.c.l.b16 %v996
        %v1091 = vunpack.c.l.b16 %v997
        %v1092 = vunpack.c.l.b16 %v998
        %v1093 = vunpack.c.l.b16 %v999
        %v1094 = vunpack.c.l.b16 %v1000
        %v1095 = vunpack.c.l.b16 %v1001
        %v1096 = vunpack.c.l.b16 %v1002
        %v1097 = vunpack.c.l.b16 %v1003
        %v1098 = vunpack.c.l.b16 %v1004
        %v1099 = vunpack.c.l.b16 %v1005
        %v1100 = vpack.c.b16 %v1085, %v1084
        %v1101 = vpack.c.b16 %v1087, %v1086
        %v1102 = vpack.c.b16 %v1089, %v1088
        %v1103 = vpack.c.b16 %v1091, %v1090
        %v1104 = vpack.c.b16 %v1093, %v1092
        %v1105 = vpack.c.b16 %v1095, %v1094
        %v1106 = vpack.c.b16 %v1097, %v1096
        %v1107 = vpack.c.b16 %v1099, %v1098
        %1116 = vmatprep.subr.bf16.mxu0 0
        %1117 = vmatpush1.bf16.msra.mxu0 %v1100
        %1118 = vmatprep.subr.bf16.mxu0 0
        %1119 = vmatpush1.bf16.msra.mxu0 %v1101
        %1120 = vmatprep.subr.bf16.mxu0 0
        %1121 = vmatpush1.bf16.msra.mxu0 %v1102
        %1122 = vmatprep.subr.bf16.mxu0 0
        %1123 = vmatpush1.bf16.msra.mxu0 %v1103
        %1124 = vmatprep.subr.bf16.mxu0 0
        %1125 = vmatpush1.bf16.msra.mxu0 %v1104
        %1126 = vmatprep.subr.bf16.mxu0 0
        %1127 = vmatpush1.bf16.msra.mxu0 %v1105
        %1128 = vmatprep.subr.bf16.mxu0 0
        %1129 = vmatpush1.bf16.msra.mxu0 %v1106
        %1130 = vmatprep.subr.bf16.mxu0 0
        %1131 = vmatpush1.bf16.msra.mxu0 %v1107
        %1132 = vmatprep.subr.bf16.mxu0 0
        %1133 = vmatpush1.bf16.msra.mxu0 0
        %1134 = vmatprep.subr.bf16.mxu0 0
        %1135 = vmatpush1.bf16.msra.mxu0 0
        %1136 = vmatprep.subr.bf16.mxu0 0
        %1137 = vmatpush1.bf16.msra.mxu0 0
        %1138 = vmatprep.subr.bf16.mxu0 0
        %1139 = vmatpush1.bf16.msra.mxu0 0
        %1140 = vmatprep.subr.bf16.mxu0 0
        %1141 = vmatpush1.bf16.msra.mxu0 0
        %1142 = vmatprep.subr.bf16.mxu0 0
        %1143 = vmatpush1.bf16.msra.mxu0 0
        %1144 = vmatprep.subr.bf16.mxu0 0
        %1145 = vmatpush1.bf16.msra.mxu0 0
        %1146 = vmatprep.subr.bf16.mxu0 0
        %1147 = vmatpush1.bf16.msra.mxu0 0
        %1148 = vmatprep.mubr.bf16.mxu0 0
        %1149 = vmatmul.mubr.bf16.gmra.mrb[0].mxu0 %v1026
        %v1150 = vpop.f32.mrb[0].mxu0
        %v1151 = vadd.f32 0.0, %v1150
        %v1152 = vpop.f32.mrb[0].mxu0
        %v1153 = vpop.f32.mrb[0].mxu0
        %v1154 = vadd.f32 0.0, %v1153
        %v1155 = vpop.f32.mrb[0].mxu0
        %1156 = vmatprep.mubr.bf16.mxu0 0
        %1157 = vmatmul.mubr.bf16.gmra.mrb[0].mxu0 %v1035
        %v1158 = vpop.f32.mrb[0].mxu0
        %v1159 = vadd.f32 0.0, %v1158
        %v1160 = vpop.f32.mrb[0].mxu0
        %v1161 = vpop.f32.mrb[0].mxu0
        %v1162 = vadd.f32 0.0, %v1161
        %v1163 = vpop.f32.mrb[0].mxu0
        %1164 = vmatprep.mubr.bf16.mxu0 0
        %1165 = vmatmul.mubr.bf16.gmra.mrb[0].mxu0 %v1044
        %v1166 = vpop.f32.mrb[0].mxu0
        %v1167 = vadd.f32 0.0, %v1166
        %v1168 = vpop.f32.mrb[0].mxu0
        %v1169 = vpop.f32.mrb[0].mxu0
        %v1170 = vadd.f32 0.0, %v1169
        %v1171 = vpop.f32.mrb[0].mxu0
        %1172 = vmatprep.mubr.bf16.mxu0 0
        %1173 = vmatmul.mubr.bf16.gmra.mrb[0].mxu0 %v1053
        %v1174 = vpop.f32.mrb[0].mxu0
        %v1175 = vadd.f32 0.0, %v1174
        %v1176 = vpop.f32.mrb[0].mxu0
        %v1177 = vpop.f32.mrb[0].mxu0
        %v1178 = vadd.f32 0.0, %v1177
        %v1179 = vpop.f32.mrb[0].mxu0
        %1180 = vmatprep.mubr.bf16.mxu0 0
        %1181 = vmatmul.mubr.bf16.gmra.mrb[0].mxu0 %v1062
        %v1182 = vpop.f32.mrb[0].mxu0
        %v1183 = vadd.f32 0.0, %v1182
        %v1184 = vpop.f32.mrb[0].mxu0
        %v1185 = vpop.f32.mrb[0].mxu0
        %v1186 = vadd.f32 0.0, %v1185
        %v1187 = vpop.f32.mrb[0].mxu0
        %1188 = vdwg.mxu0
        %v1189 = vadd.f32 %v978, %v1151
        %v1190 = vadd.f32 %v979, %v1154
        %v1191 = vadd.f32 %v980, %v1159
        %v1192 = vadd.f32 %v981, %v1162
        %v1193 = vadd.f32 %v982, %v1167
        %v1194 = vadd.f32 %v983, %v1170
        %v1195 = vadd.f32 %v984, %v1175
        %v1196 = vadd.f32 %v985, %v1178
        %v1197 = vadd.f32 %v986, %v1183
        %v1198 = vadd.f32 %v987, %v1186
        %v1199 = vld [vmem:[%s246 + $0x4] sm:$0xc]
        %s1200 = scalar_lea.vmem %s1, 320
        %v1201 = vld [vmem:[%s1200] sm:$0xf]
        %v1202 = vld [vmem:[%s1200 + $0x4] sm:$0xf]
        %v1203 = vld [vmem:[%s1200 + $0x8] sm:$0xf]
        %v1204 = vld [vmem:[%s1200 + $0xc] sm:$0xf]
        %v1205 = vld [vmem:[%s1200 + $0x10] sm:$0xf]
        %v1206 = vld [vmem:[%s1200 + $0x14] sm:$0xf]
        %v1207 = vld [vmem:[%s1200 + $0x18] sm:$0xf]
        %v1208 = vld [vmem:[%s1200 + $0x1c] sm:$0xf]
        %v1209 = vld [vmem:[%s1200 + $0x20] sm:$0xf]
        %v1210 = vld [vmem:[%s1200 + $0x24] sm:$0xf]
        %v1211 = vld [vmem:[%s1200 + $0x28] sm:$0xf]
        %v1212 = vld [vmem:[%s1200 + $0x2c] sm:$0xf]
        %v1213 = vld [vmem:[%s1200 + $0x30] sm:$0xf]
        %v1214 = vld [vmem:[%s1200 + $0x34] sm:$0xf]
        %v1215 = vld [vmem:[%s1200 + $0x38] sm:$0xf]
        %v1216 = vld [vmem:[%s1200 + $0x3c] sm:$0xf]
        %v1218 = vunpack.c.l.b16 %v1199
        %v1219 = vpack.c.b16 %v825, %v1218
        %vm1220 = vcmask 1045504
        %v1221 = vrot.slane %v1219, 2
        %v1222 = vrot.slane %v836, 2
        %v1223 = vsel %vm1220, %v1221, %v1222
        %v1224 = vrot.slane %v837, 2
        %v1225 = vsel %vm1220, %v1222, %v1224
        %v1226 = vrot.slane %v838, 2
        %v1227 = vsel %vm1220, %v1224, %v1226
        %v1228 = vrot.slane %v839, 2
        %v1229 = vsel %vm1220, %v1226, %v1228
        %v1230 = vrot.slane %v1008, 2
        %v1231 = vsel %vm1220, %v1228, %v1230
        %v1253 = vunpack.c.l.b16 %v1201
        %v1254 = vunpack.c.l.b16 %v1202
        %v1255 = vunpack.c.l.b16 %v1203
        %v1256 = vunpack.c.l.b16 %v1204
        %v1257 = vunpack.c.l.b16 %v1205
        %v1258 = vunpack.c.l.b16 %v1206
        %v1259 = vunpack.c.l.b16 %v1207
        %v1260 = vunpack.c.l.b16 %v1208
        %v1261 = vunpack.c.l.b16 %v1209
        %v1262 = vunpack.c.l.b16 %v1210
        %v1263 = vunpack.c.l.b16 %v1211
        %v1264 = vunpack.c.l.b16 %v1212
        %v1265 = vunpack.c.l.b16 %v1213
        %v1266 = vunpack.c.l.b16 %v1214
        %v1267 = vunpack.c.l.b16 %v1215
        %v1268 = vunpack.c.l.b16 %v1216
        %v1269 = vpack.c.b16 %v1254, %v1253
        %v1270 = vpack.c.b16 %v1256, %v1255
        %v1271 = vpack.c.b16 %v1258, %v1257
        %v1272 = vpack.c.b16 %v1260, %v1259
        %v1273 = vpack.c.b16 %v1262, %v1261
        %v1274 = vpack.c.b16 %v1264, %v1263
        %v1275 = vpack.c.b16 %v1266, %v1265
        %v1276 = vpack.c.b16 %v1268, %v1267
        %1285 = vmatprep.subr.bf16.mxu0 0
        %1286 = vmatpush1.bf16.msra.mxu0 %v1269
        %1287 = vmatprep.subr.bf16.mxu0 0
        %1288 = vmatpush1.bf16.msra.mxu0 %v1270
        %1289 = vmatprep.subr.bf16.mxu0 0
        %1290 = vmatpush1.bf16.msra.mxu0 %v1271
        %1291 = vmatprep.subr.bf16.mxu0 0
        %1292 = vmatpush1.bf16.msra.mxu0 %v1272
        %1293 = vmatprep.subr.bf16.mxu0 0
        %1294 = vmatpush1.bf16.msra.mxu0 %v1273
        %1295 = vmatprep.subr.bf16.mxu0 0
        %1296 = vmatpush1.bf16.msra.mxu0 %v1274
        %1297 = vmatprep.subr.bf16.mxu0 0
        %1298 = vmatpush1.bf16.msra.mxu0 %v1275
        %1299 = vmatprep.subr.bf16.mxu0 0
        %1300 = vmatpush1.bf16.msra.mxu0 %v1276
        %1301 = vmatprep.subr.bf16.mxu0 0
        %1302 = vmatpush1.bf16.msra.mxu0 0
        %1303 = vmatprep.subr.bf16.mxu0 0
        %1304 = vmatpush1.bf16.msra.mxu0 0
        %1305 = vmatprep.subr.bf16.mxu0 0
        %1306 = vmatpush1.bf16.msra.mxu0 0
        %1307 = vmatprep.subr.bf16.mxu0 0
        %1308 = vmatpush1.bf16.msra.mxu0 0
        %1309 = vmatprep.subr.bf16.mxu0 0
        %1310 = vmatpush1.bf16.msra.mxu0 0
        %1311 = vmatprep.subr.bf16.mxu0 0
        %1312 = vmatpush1.bf16.msra.mxu0 0
        %1313 = vmatprep.subr.bf16.mxu0 0
        %1314 = vmatpush1.bf16.msra.mxu0 0
        %1315 = vmatprep.subr.bf16.mxu0 0
        %1316 = vmatpush1.bf16.msra.mxu0 0
        %1317 = vmatprep.mubr.bf16.mxu0 0
        %1318 = vmatmul.mubr.bf16.gmra.mrb[0].mxu0 %v1223
        %v1319 = vpop.f32.mrb[0].mxu0
        %v1320 = vadd.f32 0.0, %v1319
        %v1321 = vpop.f32.mrb[0].mxu0
        %v1322 = vpop.f32.mrb[0].mxu0
        %v1323 = vadd.f32 0.0, %v1322
        %v1324 = vpop.f32.mrb[0].mxu0
        %1325 = vmatprep.mubr.bf16.mxu0 0
        %1326 = vmatmul.mubr.bf16.gmra.mrb[0].mxu0 %v1225
        %v1327 = vpop.f32.mrb[0].mxu0
        %v1328 = vadd.f32 0.0, %v1327
        %v1329 = vpop.f32.mrb[0].mxu0
        %v1330 = vpop.f32.mrb[0].mxu0
        %v1331 = vadd.f32 0.0, %v1330
        %v1332 = vpop.f32.mrb[0].mxu0
        %1333 = vmatprep.mubr.bf16.mxu0 0
        %1334 = vmatmul.mubr.bf16.gmra.mrb[0].mxu0 %v1227
        %v1335 = vpop.f32.mrb[0].mxu0
        %v1336 = vadd.f32 0.0, %v1335
        %v1337 = vpop.f32.mrb[0].mxu0
        %v1338 = vpop.f32.mrb[0].mxu0
        %v1339 = vadd.f32 0.0, %v1338
        %v1340 = vpop.f32.mrb[0].mxu0
        %1341 = vmatprep.mubr.bf16.mxu0 0
        %1342 = vmatmul.mubr.bf16.gmra.mrb[0].mxu0 %v1229
        %v1343 = vpop.f32.mrb[0].mxu0
        %v1344 = vadd.f32 0.0, %v1343
        %v1345 = vpop.f32.mrb[0].mxu0
        %v1346 = vpop.f32.mrb[0].mxu0
        %v1347 = vadd.f32 0.0, %v1346
        %v1348 = vpop.f32.mrb[0].mxu0
        %1349 = vmatprep.mubr.bf16.mxu0 0
        %1350 = vmatmul.mubr.bf16.gmra.mrb[0].mxu0 %v1231
        %v1351 = vpop.f32.mrb[0].mxu0
        %v1352 = vadd.f32 0.0, %v1351
        %v1353 = vpop.f32.mrb[0].mxu0
        %v1354 = vpop.f32.mrb[0].mxu0
        %v1355 = vadd.f32 0.0, %v1354
        %v1356 = vpop.f32.mrb[0].mxu0
        %1357 = vdwg.mxu0
        %v1358 = vadd.f32 %v1189, %v1320
        %v1359 = vadd.f32 %v1190, %v1323
        %v1360 = vadd.f32 %v1191, %v1328
        %v1361 = vadd.f32 %v1192, %v1331
        %v1362 = vadd.f32 %v1193, %v1336
        %v1363 = vadd.f32 %v1194, %v1339
        %v1364 = vadd.f32 %v1195, %v1344
        %v1365 = vadd.f32 %v1196, %v1347
        %v1366 = vadd.f32 %v1197, %v1352
        %v1367 = vadd.f32 %v1198, %v1355
        %v1368 = vld [vmem:[%s246 + $0x8] sm:$0xc]
        %v1369 = vld [vmem:[%s246 + $0xc] sm:$0xf]
        %v1370 = vld [vmem:[%s246 + $0x10] sm:$0xf]
        %v1371 = vld [vmem:[%s246 + $0x14] sm:$0xf]
        %v1372 = vld [vmem:[%s246 + $0x18] sm:$0xf]
        %v1373 = vld [vmem:[%s246 + $0x1c] sm:$0xf]
        %v1374 = vld [vmem:[%s246 + $0x20] sm:$0xf]
        %v1375 = vld [vmem:[%s246 + $0x24] sm:$0xf]
        %v1376 = vld [vmem:[%s246 + $0x28] sm:$0xf]
        %v1377 = vld [vmem:[%s246 + $0x2c] sm:$0xf]
        %v1378 = vld [vmem:[%s246 + $0x30] sm:$0x3]
        %s1379 = scalar_lea.vmem %s1, 384
        %v1380 = vld [vmem:[%s1379] sm:$0xf]
        %v1381 = vld [vmem:[%s1379 + $0x4] sm:$0xf]
        %v1382 = vld [vmem:[%s1379 + $0x8] sm:$0xf]
        %v1383 = vld [vmem:[%s1379 + $0xc] sm:$0xf]
        %v1384 = vld [vmem:[%s1379 + $0x10] sm:$0xf]
        %v1385 = vld [vmem:[%s1379 + $0x14] sm:$0xf]
        %v1386 = vld [vmem:[%s1379 + $0x18] sm:$0xf]
        %v1387 = vld [vmem:[%s1379 + $0x1c] sm:$0xf]
        %v1388 = vld [vmem:[%s1379 + $0x20] sm:$0xf]
        %v1389 = vld [vmem:[%s1379 + $0x24] sm:$0xf]
        %v1390 = vld [vmem:[%s1379 + $0x28] sm:$0xf]
        %v1391 = vld [vmem:[%s1379 + $0x2c] sm:$0xf]
        %v1392 = vld [vmem:[%s1379 + $0x30] sm:$0xf]
        %v1393 = vld [vmem:[%s1379 + $0x34] sm:$0xf]
        %v1394 = vld [vmem:[%s1379 + $0x38] sm:$0xf]
        %v1395 = vld [vmem:[%s1379 + $0x3c] sm:$0xf]
        %v1407 = vunpack.c.l.b16 %v1368
        %v1408 = vunpack.c.l.b16 %v1369
        %v1409 = vunpack.c.l.b16 %v1370
        %v1410 = vunpack.c.l.b16 %v1371
        %v1411 = vunpack.c.l.b16 %v1372
        %v1412 = vunpack.c.l.b16 %v1373
        %v1413 = vunpack.c.l.b16 %v1374
        %v1414 = vunpack.c.l.b16 %v1375
        %v1415 = vunpack.c.l.b16 %v1376
        %v1416 = vunpack.c.l.b16 %v1377
        %v1417 = vunpack.c.l.b16 %v1378
        %v1418 = vpack.c.b16 %v1408, %v1407
        %v1419 = vpack.c.b16 %v1410, %v1409
        %v1420 = vpack.c.b16 %v1412, %v1411
        %v1421 = vpack.c.b16 %v1414, %v1413
        %v1422 = vpack.c.b16 %v1416, %v1415
        %v1423 = vpack.c.b16 %v1417, %v1417
        %v1424 = vrot.slane %v1418, 2
        %v1425 = vrot.slane %v1419, 2
        %v1426 = vsel %vm1220, %v1424, %v1425
        %v1427 = vrot.slane %v1420, 2
        %v1428 = vsel %vm1220, %v1425, %v1427
        %v1429 = vrot.slane %v1421, 2
        %v1430 = vsel %vm1220, %v1427, %v1429
        %v1431 = vrot.slane %v1422, 2
        %v1432 = vsel %vm1220, %v1429, %v1431
        %v1433 = vrot.slane %v1423, 2
        %v1434 = vsel %vm1220, %v1431, %v1433
        %v1456 = vunpack.c.l.b16 %v1380
        %v1457 = vunpack.c.l.b16 %v1381
        %v1458 = vunpack.c.l.b16 %v1382
        %v1459 = vunpack.c.l.b16 %v1383
        %v1460 = vunpack.c.l.b16 %v1384
        %v1461 = vunpack.c.l.b16 %v1385
        %v1462 = vunpack.c.l.b16 %v1386
        %v1463 = vunpack.c.l.b16 %v1387
        %v1464 = vunpack.c.l.b16 %v1388
        %v1465 = vunpack.c.l.b16 %v1389
        %v1466 = vunpack.c.l.b16 %v1390
        %v1467 = vunpack.c.l.b16 %v1391
        %v1468 = vunpack.c.l.b16 %v1392
        %v1469 = vunpack.c.l.b16 %v1393
        %v1470 = vunpack.c.l.b16 %v1394
        %v1471 = vunpack.c.l.b16 %v1395
        %v1472 = vpack.c.b16 %v1457, %v1456
        %v1473 = vpack.c.b16 %v1459, %v1458
        %v1474 = vpack.c.b16 %v1461, %v1460
        %v1475 = vpack.c.b16 %v1463, %v1462
        %v1476 = vpack.c.b16 %v1465, %v1464
        %v1477 = vpack.c.b16 %v1467, %v1466
        %v1478 = vpack.c.b16 %v1469, %v1468
        %v1479 = vpack.c.b16 %v1471, %v1470
        %1488 = vmatprep.subr.bf16.mxu0 0
        %1489 = vmatpush1.bf16.msra.mxu0 %v1472
        %1490 = vmatprep.subr.bf16.mxu0 0
        %1491 = vmatpush1.bf16.msra.mxu0 %v1473
        %1492 = vmatprep.subr.bf16.mxu0 0
        %1493 = vmatpush1.bf16.msra.mxu0 %v1474
        %1494 = vmatprep.subr.bf16.mxu0 0
        %1495 = vmatpush1.bf16.msra.mxu0 %v1475
        %1496 = vmatprep.subr.bf16.mxu0 0
        %1497 = vmatpush1.bf16.msra.mxu0 %v1476
        %1498 = vmatprep.subr.bf16.mxu0 0
        %1499 = vmatpush1.bf16.msra.mxu0 %v1477
        %1500 = vmatprep.subr.bf16.mxu0 0
        %1501 = vmatpush1.bf16.msra.mxu0 %v1478
        %1502 = vmatprep.subr.bf16.mxu0 0
        %1503 = vmatpush1.bf16.msra.mxu0 %v1479
        %1504 = vmatprep.subr.bf16.mxu0 0
        %1505 = vmatpush1.bf16.msra.mxu0 0
        %1506 = vmatprep.subr.bf16.mxu0 0
        %1507 = vmatpush1.bf16.msra.mxu0 0
        %1508 = vmatprep.subr.bf16.mxu0 0
        %1509 = vmatpush1.bf16.msra.mxu0 0
        %1510 = vmatprep.subr.bf16.mxu0 0
        %1511 = vmatpush1.bf16.msra.mxu0 0
        %1512 = vmatprep.subr.bf16.mxu0 0
        %1513 = vmatpush1.bf16.msra.mxu0 0
        %1514 = vmatprep.subr.bf16.mxu0 0
        %1515 = vmatpush1.bf16.msra.mxu0 0
        %1516 = vmatprep.subr.bf16.mxu0 0
        %1517 = vmatpush1.bf16.msra.mxu0 0
        %1518 = vmatprep.subr.bf16.mxu0 0
        %1519 = vmatpush1.bf16.msra.mxu0 0
        %1520 = vmatprep.mubr.bf16.mxu0 0
        %1521 = vmatmul.mubr.bf16.gmra.mrb[0].mxu0 %v1426
        %v1522 = vpop.f32.mrb[0].mxu0
        %v1523 = vadd.f32 0.0, %v1522
        %v1524 = vpop.f32.mrb[0].mxu0
        %v1525 = vpop.f32.mrb[0].mxu0
        %v1526 = vadd.f32 0.0, %v1525
        %v1527 = vpop.f32.mrb[0].mxu0
        %1528 = vmatprep.mubr.bf16.mxu0 0
        %1529 = vmatmul.mubr.bf16.gmra.mrb[0].mxu0 %v1428
        %v1530 = vpop.f32.mrb[0].mxu0
        %v1531 = vadd.f32 0.0, %v1530
        %v1532 = vpop.f32.mrb[0].mxu0
        %v1533 = vpop.f32.mrb[0].mxu0
        %v1534 = vadd.f32 0.0, %v1533
        %v1535 = vpop.f32.mrb[0].mxu0
        %1536 = vmatprep.mubr.bf16.mxu0 0
        %1537 = vmatmul.mubr.bf16.gmra.mrb[0].mxu0 %v1430
        %v1538 = vpop.f32.mrb[0].mxu0
        %v1539 = vadd.f32 0.0, %v1538
        %v1540 = vpop.f32.mrb[0].mxu0
        %v1541 = vpop.f32.mrb[0].mxu0
        %v1542 = vadd.f32 0.0, %v1541
        %v1543 = vpop.f32.mrb[0].mxu0
        %1544 = vmatprep.mubr.bf16.mxu0 0
        %1545 = vmatmul.mubr.bf16.gmra.mrb[0].mxu0 %v1432
        %v1546 = vpop.f32.mrb[0].mxu0
        %v1547 = vadd.f32 0.0, %v1546
        %v1548 = vpop.f32.mrb[0].mxu0
        %v1549 = vpop.f32.mrb[0].mxu0
        %v1550 = vadd.f32 0.0, %v1549
        %v1551 = vpop.f32.mrb[0].mxu0
        %1552 = vmatprep.mubr.bf16.mxu0 0
        %1553 = vmatmul.mubr.bf16.gmra.mrb[0].mxu0 %v1434
        %v1554 = vpop.f32.mrb[0].mxu0
        %v1555 = vadd.f32 0.0, %v1554
        %v1556 = vpop.f32.mrb[0].mxu0
        %v1557 = vpop.f32.mrb[0].mxu0
        %v1558 = vadd.f32 0.0, %v1557
        %v1559 = vpop.f32.mrb[0].mxu0
        %1560 = vdwg.mxu0
        %v1561 = vadd.f32 %v1358, %v1523
        %v1562 = vadd.f32 %v1359, %v1526
        %v1563 = vadd.f32 %v1360, %v1531
        %v1564 = vadd.f32 %v1361, %v1534
        %v1565 = vadd.f32 %v1362, %v1539
        %v1566 = vadd.f32 %v1363, %v1542
        %v1567 = vadd.f32 %v1364, %v1547
        %v1568 = vadd.f32 %v1365, %v1550
        %v1569 = vadd.f32 %v1366, %v1555
        %v1570 = vadd.f32 %v1367, %v1558
        %v1571 = vld [vmem:[%s246 + $0x30] sm:$0x7]
        %s1572 = scalar_lea.vmem %s1, 448
        %v1573 = vld [vmem:[%s1572] sm:$0xf]
        %v1574 = vld [vmem:[%s1572 + $0x4] sm:$0xf]
        %v1575 = vld [vmem:[%s1572 + $0x8] sm:$0xf]
        %v1576 = vld [vmem:[%s1572 + $0xc] sm:$0xf]
        %v1577 = vld [vmem:[%s1572 + $0x10] sm:$0xf]
        %v1578 = vld [vmem:[%s1572 + $0x14] sm:$0xf]
        %v1579 = vld [vmem:[%s1572 + $0x18] sm:$0xf]
        %v1580 = vld [vmem:[%s1572 + $0x1c] sm:$0xf]
        %v1581 = vld [vmem:[%s1572 + $0x20] sm:$0xf]
        %v1582 = vld [vmem:[%s1572 + $0x24] sm:$0xf]
        %v1583 = vld [vmem:[%s1572 + $0x28] sm:$0xf]
        %v1584 = vld [vmem:[%s1572 + $0x2c] sm:$0xf]
        %v1585 = vld [vmem:[%s1572 + $0x30] sm:$0xf]
        %v1586 = vld [vmem:[%s1572 + $0x34] sm:$0xf]
        %v1587 = vld [vmem:[%s1572 + $0x38] sm:$0xf]
        %v1588 = vld [vmem:[%s1572 + $0x3c] sm:$0xf]
        %v1590 = vunpack.c.l.b16 %v1571
        %v1591 = vpack.c.b16 %v1590, %v1590
        %vm1592 = vsmask.f32 5376
        %v1594 = vshrl.u32 %v1418, 16
        %v1596 = vrot.slane %v1594, 2
        %v1597 = vshll.u32 %v1418, 16
        %v1599 = vrot.slane %v1597, 3
        %v1600 = vor.u32 %v1596, %v1599
        %v1602 = vshrl.u32 %v1419, 16
        %v1604 = vrot.slane %v1602, 2
        %v1605 = vshll.u32 %v1419, 16
        %v1607 = vrot.slane %v1605, 3
        %v1608 = vor.u32 %v1604, %v1607
        %v1609 = vsel %vm1592, %v1600, %v1608
        %v1611 = vshrl.u32 %v1420, 16
        %v1613 = vrot.slane %v1611, 2
        %v1614 = vshll.u32 %v1420, 16
        %v1616 = vrot.slane %v1614, 3
        %v1617 = vor.u32 %v1613, %v1616
        %v1618 = vsel %vm1592, %v1608, %v1617
        %v1620 = vshrl.u32 %v1421, 16
        %v1622 = vrot.slane %v1620, 2
        %v1623 = vshll.u32 %v1421, 16
        %v1625 = vrot.slane %v1623, 3
        %v1626 = vor.u32 %v1622, %v1625
        %v1627 = vsel %vm1592, %v1617, %v1626
        %v1629 = vshrl.u32 %v1422, 16
        %v1631 = vrot.slane %v1629, 2
        %v1632 = vshll.u32 %v1422, 16
        %v1634 = vrot.slane %v1632, 3
        %v1635 = vor.u32 %v1631, %v1634
        %v1636 = vsel %vm1592, %v1626, %v1635
        %v1638 = vshrl.u32 %v1591, 16
        %v1640 = vrot.slane %v1638, 2
        %v1641 = vshll.u32 %v1591, 16
        %v1643 = vrot.slane %v1641, 3
        %v1644 = vor.u32 %v1640, %v1643
        %v1645 = vsel %vm1592, %v1635, %v1644
        %v1667 = vunpack.c.l.b16 %v1573
        %v1668 = vunpack.c.l.b16 %v1574
        %v1669 = vunpack.c.l.b16 %v1575
        %v1670 = vunpack.c.l.b16 %v1576
        %v1671 = vunpack.c.l.b16 %v1577
        %v1672 = vunpack.c.l.b16 %v1578
        %v1673 = vunpack.c.l.b16 %v1579
        %v1674 = vunpack.c.l.b16 %v1580
        %v1675 = vunpack.c.l.b16 %v1581
        %v1676 = vunpack.c.l.b16 %v1582
        %v1677 = vunpack.c.l.b16 %v1583
        %v1678 = vunpack.c.l.b16 %v1584
        %v1679 = vunpack.c.l.b16 %v1585
        %v1680 = vunpack.c.l.b16 %v1586
        %v1681 = vunpack.c.l.b16 %v1587
        %v1682 = vunpack.c.l.b16 %v1588
        %v1683 = vpack.c.b16 %v1668, %v1667
        %v1684 = vpack.c.b16 %v1670, %v1669
        %v1685 = vpack.c.b16 %v1672, %v1671
        %v1686 = vpack.c.b16 %v1674, %v1673
        %v1687 = vpack.c.b16 %v1676, %v1675
        %v1688 = vpack.c.b16 %v1678, %v1677
        %v1689 = vpack.c.b16 %v1680, %v1679
        %v1690 = vpack.c.b16 %v1682, %v1681
        %1699 = vmatprep.subr.bf16.mxu0 0
        %1700 = vmatpush1.bf16.msra.mxu0 %v1683
        %1701 = vmatprep.subr.bf16.mxu0 0
        %1702 = vmatpush1.bf16.msra.mxu0 %v1684
        %1703 = vmatprep.subr.bf16.mxu0 0
        %1704 = vmatpush1.bf16.msra.mxu0 %v1685
        %1705 = vmatprep.subr.bf16.mxu0 0
        %1706 = vmatpush1.bf16.msra.mxu0 %v1686
        %1707 = vmatprep.subr.bf16.mxu0 0
        %1708 = vmatpush1.bf16.msra.mxu0 %v1687
        %1709 = vmatprep.subr.bf16.mxu0 0
        %1710 = vmatpush1.bf16.msra.mxu0 %v1688
        %1711 = vmatprep.subr.bf16.mxu0 0
        %1712 = vmatpush1.bf16.msra.mxu0 %v1689
        %1713 = vmatprep.subr.bf16.mxu0 0
        %1714 = vmatpush1.bf16.msra.mxu0 %v1690
        %1715 = vmatprep.subr.bf16.mxu0 0
        %1716 = vmatpush1.bf16.msra.mxu0 0
        %1717 = vmatprep.subr.bf16.mxu0 0
        %1718 = vmatpush1.bf16.msra.mxu0 0
        %1719 = vmatprep.subr.bf16.mxu0 0
        %1720 = vmatpush1.bf16.msra.mxu0 0
        %1721 = vmatprep.subr.bf16.mxu0 0
        %1722 = vmatpush1.bf16.msra.mxu0 0
        %1723 = vmatprep.subr.bf16.mxu0 0
        %1724 = vmatpush1.bf16.msra.mxu0 0
        %1725 = vmatprep.subr.bf16.mxu0 0
        %1726 = vmatpush1.bf16.msra.mxu0 0
        %1727 = vmatprep.subr.bf16.mxu0 0
        %1728 = vmatpush1.bf16.msra.mxu0 0
        %1729 = vmatprep.subr.bf16.mxu0 0
        %1730 = vmatpush1.bf16.msra.mxu0 0
        %1731 = vmatprep.mubr.bf16.mxu0 0
        %1732 = vmatmul.mubr.bf16.gmra.mrb[0].mxu0 %v1609
        %v1733 = vpop.f32.mrb[0].mxu0
        %v1734 = vadd.f32 0.0, %v1733
        %v1735 = vpop.f32.mrb[0].mxu0
        %v1736 = vpop.f32.mrb[0].mxu0
        %v1737 = vadd.f32 0.0, %v1736
        %v1738 = vpop.f32.mrb[0].mxu0
        %1739 = vmatprep.mubr.bf16.mxu0 0
        %1740 = vmatmul.mubr.bf16.gmra.mrb[0].mxu0 %v1618
        %v1741 = vpop.f32.mrb[0].mxu0
        %v1742 = vadd.f32 0.0, %v1741
        %v1743 = vpop.f32.mrb[0].mxu0
        %v1744 = vpop.f32.mrb[0].mxu0
        %v1745 = vadd.f32 0.0, %v1744
        %v1746 = vpop.f32.mrb[0].mxu0
        %1747 = vmatprep.mubr.bf16.mxu0 0
        %1748 = vmatmul.mubr.bf16.gmra.mrb[0].mxu0 %v1627
        %v1749 = vpop.f32.mrb[0].mxu0
        %v1750 = vadd.f32 0.0, %v1749
        %v1751 = vpop.f32.mrb[0].mxu0
        %v1752 = vpop.f32.mrb[0].mxu0
        %v1753 = vadd.f32 0.0, %v1752
        %v1754 = vpop.f32.mrb[0].mxu0
        %1755 = vmatprep.mubr.bf16.mxu0 0
        %1756 = vmatmul.mubr.bf16.gmra.mrb[0].mxu0 %v1636
        %v1757 = vpop.f32.mrb[0].mxu0
        %v1758 = vadd.f32 0.0, %v1757
        %v1759 = vpop.f32.mrb[0].mxu0
        %v1760 = vpop.f32.mrb[0].mxu0
        %v1761 = vadd.f32 0.0, %v1760
        %v1762 = vpop.f32.mrb[0].mxu0
        %1763 = vmatprep.mubr.bf16.mxu0 0
        %1764 = vmatmul.mubr.bf16.gmra.mrb[0].mxu0 %v1645
        %v1765 = vpop.f32.mrb[0].mxu0
        %v1766 = vadd.f32 0.0, %v1765
        %v1767 = vpop.f32.mrb[0].mxu0
        %v1768 = vpop.f32.mrb[0].mxu0
        %v1769 = vadd.f32 0.0, %v1768
        %v1770 = vpop.f32.mrb[0].mxu0
        %1771 = vdwg.mxu0
        %v1772 = vadd.f32 %v1561, %v1734
        %v1773 = vadd.f32 %v1562, %v1737
        %v1774 = vadd.f32 %v1563, %v1742
        %v1775 = vadd.f32 %v1564, %v1745
        %v1776 = vadd.f32 %v1565, %v1750
        %v1777 = vadd.f32 %v1566, %v1753
        %v1778 = vadd.f32 %v1567, %v1758
        %v1779 = vadd.f32 %v1568, %v1761
        %v1780 = vadd.f32 %v1569, %v1766
        %v1781 = vadd.f32 %v1570, %v1769
        %v1782 = vld [vmem:[%s246 + $0x8] sm:$0x8]
        %s1783 = scalar_lea.vmem %s1, 512
        %v1784 = vld [vmem:[%s1783] sm:$0xf]
        %v1785 = vld [vmem:[%s1783 + $0x4] sm:$0xf]
        %v1786 = vld [vmem:[%s1783 + $0x8] sm:$0xf]
        %v1787 = vld [vmem:[%s1783 + $0xc] sm:$0xf]
        %v1788 = vld [vmem:[%s1783 + $0x10] sm:$0xf]
        %v1789 = vld [vmem:[%s1783 + $0x14] sm:$0xf]
        %v1790 = vld [vmem:[%s1783 + $0x18] sm:$0xf]
        %v1791 = vld [vmem:[%s1783 + $0x1c] sm:$0xf]
        %v1792 = vld [vmem:[%s1783 + $0x20] sm:$0xf]
        %v1793 = vld [vmem:[%s1783 + $0x24] sm:$0xf]
        %v1794 = vld [vmem:[%s1783 + $0x28] sm:$0xf]
        %v1795 = vld [vmem:[%s1783 + $0x2c] sm:$0xf]
        %v1796 = vld [vmem:[%s1783 + $0x30] sm:$0xf]
        %v1797 = vld [vmem:[%s1783 + $0x34] sm:$0xf]
        %v1798 = vld [vmem:[%s1783 + $0x38] sm:$0xf]
        %v1799 = vld [vmem:[%s1783 + $0x3c] sm:$0xf]
        %v1801 = vunpack.c.l.b16 %v1782
        %v1802 = vpack.c.b16 %v1408, %v1801
        %vm1803 = vcmask 1044480
        %v1804 = vrot.slane %v1802, 3
        %v1805 = vrot.slane %v1419, 3
        %v1806 = vsel %vm1803, %v1804, %v1805
        %v1807 = vrot.slane %v1420, 3
        %v1808 = vsel %vm1803, %v1805, %v1807
        %v1809 = vrot.slane %v1421, 3
        %v1810 = vsel %vm1803, %v1807, %v1809
        %v1811 = vrot.slane %v1422, 3
        %v1812 = vsel %vm1803, %v1809, %v1811
        %v1813 = vrot.slane %v1591, 3
        %v1814 = vsel %vm1803, %v1811, %v1813
        %v1836 = vunpack.c.l.b16 %v1784
        %v1837 = vunpack.c.l.b16 %v1785
        %v1838 = vunpack.c.l.b16 %v1786
        %v1839 = vunpack.c.l.b16 %v1787
        %v1840 = vunpack.c.l.b16 %v1788
        %v1841 = vunpack.c.l.b16 %v1789
        %v1842 = vunpack.c.l.b16 %v1790
        %v1843 = vunpack.c.l.b16 %v1791
        %v1844 = vunpack.c.l.b16 %v1792
        %v1845 = vunpack.c.l.b16 %v1793
        %v1846 = vunpack.c.l.b16 %v1794
        %v1847 = vunpack.c.l.b16 %v1795
        %v1848 = vunpack.c.l.b16 %v1796
        %v1849 = vunpack.c.l.b16 %v1797
        %v1850 = vunpack.c.l.b16 %v1798
        %v1851 = vunpack.c.l.b16 %v1799
        %v1852 = vpack.c.b16 %v1837, %v1836
        %v1853 = vpack.c.b16 %v1839, %v1838
        %v1854 = vpack.c.b16 %v1841, %v1840
        %v1855 = vpack.c.b16 %v1843, %v1842
        %v1856 = vpack.c.b16 %v1845, %v1844
        %v1857 = vpack.c.b16 %v1847, %v1846
        %v1858 = vpack.c.b16 %v1849, %v1848
        %v1859 = vpack.c.b16 %v1851, %v1850
        %1868 = vmatprep.subr.bf16.mxu0 0
        %1869 = vmatpush1.bf16.msra.mxu0 %v1852
        %1870 = vmatprep.subr.bf16.mxu0 0
        %1871 = vmatpush1.bf16.msra.mxu0 %v1853
        %1872 = vmatprep.subr.bf16.mxu0 0
        %1873 = vmatpush1.bf16.msra.mxu0 %v1854
        %1874 = vmatprep.subr.bf16.mxu0 0
        %1875 = vmatpush1.bf16.msra.mxu0 %v1855
        %1876 = vmatprep.subr.bf16.mxu0 0
        %1877 = vmatpush1.bf16.msra.mxu0 %v1856
        %1878 = vmatprep.subr.bf16.mxu0 0
        %1879 = vmatpush1.bf16.msra.mxu0 %v1857
        %1880 = vmatprep.subr.bf16.mxu0 0
        %1881 = vmatpush1.bf16.msra.mxu0 %v1858
        %1882 = vmatprep.subr.bf16.mxu0 0
        %1883 = vmatpush1.bf16.msra.mxu0 %v1859
        %1884 = vmatprep.subr.bf16.mxu0 0
        %1885 = vmatpush1.bf16.msra.mxu0 0
        %1886 = vmatprep.subr.bf16.mxu0 0
        %1887 = vmatpush1.bf16.msra.mxu0 0
        %1888 = vmatprep.subr.bf16.mxu0 0
        %1889 = vmatpush1.bf16.msra.mxu0 0
        %1890 = vmatprep.subr.bf16.mxu0 0
        %1891 = vmatpush1.bf16.msra.mxu0 0
        %1892 = vmatprep.subr.bf16.mxu0 0
        %1893 = vmatpush1.bf16.msra.mxu0 0
        %1894 = vmatprep.subr.bf16.mxu0 0
        %1895 = vmatpush1.bf16.msra.mxu0 0
        %1896 = vmatprep.subr.bf16.mxu0 0
        %1897 = vmatpush1.bf16.msra.mxu0 0
        %1898 = vmatprep.subr.bf16.mxu0 0
        %1899 = vmatpush1.bf16.msra.mxu0 0
        %1900 = vmatprep.mubr.bf16.mxu0 0
        %1901 = vmatmul.mubr.bf16.gmra.mrb[0].mxu0 %v1806
        %v1902 = vpop.f32.mrb[0].mxu0
        %v1903 = vadd.f32 0.0, %v1902
        %v1904 = vpop.f32.mrb[0].mxu0
        %v1905 = vpop.f32.mrb[0].mxu0
        %v1906 = vadd.f32 0.0, %v1905
        %v1907 = vpop.f32.mrb[0].mxu0
        %1908 = vmatprep.mubr.bf16.mxu0 0
        %1909 = vmatmul.mubr.bf16.gmra.mrb[0].mxu0 %v1808
        %v1910 = vpop.f32.mrb[0].mxu0
        %v1911 = vadd.f32 0.0, %v1910
        %v1912 = vpop.f32.mrb[0].mxu0
        %v1913 = vpop.f32.mrb[0].mxu0
        %v1914 = vadd.f32 0.0, %v1913
        %v1915 = vpop.f32.mrb[0].mxu0
        %1916 = vmatprep.mubr.bf16.mxu0 0
        %1917 = vmatmul.mubr.bf16.gmra.mrb[0].mxu0 %v1810
        %v1918 = vpop.f32.mrb[0].mxu0
        %v1919 = vadd.f32 0.0, %v1918
        %v1920 = vpop.f32.mrb[0].mxu0
        %v1921 = vpop.f32.mrb[0].mxu0
        %v1922 = vadd.f32 0.0, %v1921
        %v1923 = vpop.f32.mrb[0].mxu0
        %1924 = vmatprep.mubr.bf16.mxu0 0
        %1925 = vmatmul.mubr.bf16.gmra.mrb[0].mxu0 %v1812
        %v1926 = vpop.f32.mrb[0].mxu0
        %v1927 = vadd.f32 0.0, %v1926
        %v1928 = vpop.f32.mrb[0].mxu0
        %v1929 = vpop.f32.mrb[0].mxu0
        %v1930 = vadd.f32 0.0, %v1929
        %v1931 = vpop.f32.mrb[0].mxu0
        %1932 = vmatprep.mubr.bf16.mxu0 0
        %1933 = vmatmul.mubr.bf16.gmra.mrb[0].mxu0 %v1814
        %v1934 = vpop.f32.mrb[0].mxu0
        %v1935 = vadd.f32 0.0, %v1934
        %v1936 = vpop.f32.mrb[0].mxu0
        %v1937 = vpop.f32.mrb[0].mxu0
        %v1938 = vadd.f32 0.0, %v1937
        %v1939 = vpop.f32.mrb[0].mxu0
        %1940 = vdwg.mxu0
        %v1941 = vadd.f32 %v1772, %v1903
        %v1942 = vadd.f32 %v1773, %v1906
        %v1943 = vadd.f32 %v1774, %v1911
        %v1944 = vadd.f32 %v1775, %v1914
        %v1945 = vadd.f32 %v1776, %v1919
        %v1946 = vadd.f32 %v1777, %v1922
        %v1947 = vadd.f32 %v1778, %v1927
        %v1948 = vadd.f32 %v1779, %v1930
        %v1949 = vadd.f32 %v1780, %v1935
        %v1950 = vadd.f32 %v1781, %v1938
        %s1951 = sadd.s32 %s239, 1
        %s1952 = smul.u32 %s1951, 14
        %s1953 = smul.addr %s1952, 4
        %s1954 = scalar_lea.vmem %s214, %s1953
        %v1955 = vld [vmem:[%s1954] sm:$0xf]
        %v1956 = vld [vmem:[%s1954 + $0x4] sm:$0xf]
        %v1957 = vld [vmem:[%s1954 + $0x8] sm:$0xf]
        %v1958 = vld [vmem:[%s1954 + $0xc] sm:$0xf]
        %v1959 = vld [vmem:[%s1954 + $0x10] sm:$0xf]
        %v1960 = vld [vmem:[%s1954 + $0x14] sm:$0xf]
        %v1961 = vld [vmem:[%s1954 + $0x18] sm:$0xf]
        %v1962 = vld [vmem:[%s1954 + $0x1c] sm:$0xf]
        %v1963 = vld [vmem:[%s1954 + $0x20] sm:$0xf]
        %v1964 = vld [vmem:[%s1954 + $0x24] sm:$0xf]
        %s1965 = scalar_lea.vmem %s1, 576
        %v1966 = vld [vmem:[%s1965] sm:$0xf]
        %v1967 = vld [vmem:[%s1965 + $0x4] sm:$0xf]
        %v1968 = vld [vmem:[%s1965 + $0x8] sm:$0xf]
        %v1969 = vld [vmem:[%s1965 + $0xc] sm:$0xf]
        %v1970 = vld [vmem:[%s1965 + $0x10] sm:$0xf]
        %v1971 = vld [vmem:[%s1965 + $0x14] sm:$0xf]
        %v1972 = vld [vmem:[%s1965 + $0x18] sm:$0xf]
        %v1973 = vld [vmem:[%s1965 + $0x1c] sm:$0xf]
        %v1974 = vld [vmem:[%s1965 + $0x20] sm:$0xf]
        %v1975 = vld [vmem:[%s1965 + $0x24] sm:$0xf]
        %v1976 = vld [vmem:[%s1965 + $0x28] sm:$0xf]
        %v1977 = vld [vmem:[%s1965 + $0x2c] sm:$0xf]
        %v1978 = vld [vmem:[%s1965 + $0x30] sm:$0xf]
        %v1979 = vld [vmem:[%s1965 + $0x34] sm:$0xf]
        %v1980 = vld [vmem:[%s1965 + $0x38] sm:$0xf]
        %v1981 = vld [vmem:[%s1965 + $0x3c] sm:$0xf]
        %v1992 = vunpack.c.l.b16 %v1955
        %v1993 = vunpack.c.l.b16 %v1956
        %v1994 = vunpack.c.l.b16 %v1957
        %v1995 = vunpack.c.l.b16 %v1958
        %v1996 = vunpack.c.l.b16 %v1959
        %v1997 = vunpack.c.l.b16 %v1960
        %v1998 = vunpack.c.l.b16 %v1961
        %v1999 = vunpack.c.l.b16 %v1962
        %v2000 = vunpack.c.l.b16 %v1963
        %v2001 = vunpack.c.l.b16 %v1964
        %v2002 = vpack.c.b16 %v1993, %v1992
        %v2003 = vpack.c.b16 %v1995, %v1994
        %v2004 = vpack.c.b16 %v1997, %v1996
        %v2005 = vpack.c.b16 %v1999, %v1998
        %v2006 = vpack.c.b16 %v2001, %v2000
        %v2028 = vunpack.c.l.b16 %v1966
        %v2029 = vunpack.c.l.b16 %v1967
        %v2030 = vunpack.c.l.b16 %v1968
        %v2031 = vunpack.c.l.b16 %v1969
        %v2032 = vunpack.c.l.b16 %v1970
        %v2033 = vunpack.c.l.b16 %v1971
        %v2034 = vunpack.c.l.b16 %v1972
        %v2035 = vunpack.c.l.b16 %v1973
        %v2036 = vunpack.c.l.b16 %v1974
        %v2037 = vunpack.c.l.b16 %v1975
        %v2038 = vunpack.c.l.b16 %v1976
        %v2039 = vunpack.c.l.b16 %v1977
        %v2040 = vunpack.c.l.b16 %v1978
        %v2041 = vunpack.c.l.b16 %v1979
        %v2042 = vunpack.c.l.b16 %v1980
        %v2043 = vunpack.c.l.b16 %v1981
        %v2044 = vpack.c.b16 %v2029, %v2028
        %v2045 = vpack.c.b16 %v2031, %v2030
        %v2046 = vpack.c.b16 %v2033, %v2032
        %v2047 = vpack.c.b16 %v2035, %v2034
        %v2048 = vpack.c.b16 %v2037, %v2036
        %v2049 = vpack.c.b16 %v2039, %v2038
        %v2050 = vpack.c.b16 %v2041, %v2040
        %v2051 = vpack.c.b16 %v2043, %v2042
        %2060 = vmatprep.subr.bf16.mxu0 0
        %2061 = vmatpush1.bf16.msra.mxu0 %v2044
        %2062 = vmatprep.subr.bf16.mxu0 0
        %2063 = vmatpush1.bf16.msra.mxu0 %v2045
        %2064 = vmatprep.subr.bf16.mxu0 0
        %2065 = vmatpush1.bf16.msra.mxu0 %v2046
        %2066 = vmatprep.subr.bf16.mxu0 0
        %2067 = vmatpush1.bf16.msra.mxu0 %v2047
        %2068 = vmatprep.subr.bf16.mxu0 0
        %2069 = vmatpush1.bf16.msra.mxu0 %v2048
        %2070 = vmatprep.subr.bf16.mxu0 0
        %2071 = vmatpush1.bf16.msra.mxu0 %v2049
        %2072 = vmatprep.subr.bf16.mxu0 0
        %2073 = vmatpush1.bf16.msra.mxu0 %v2050
        %2074 = vmatprep.subr.bf16.mxu0 0
        %2075 = vmatpush1.bf16.msra.mxu0 %v2051
        %2076 = vmatprep.subr.bf16.mxu0 0
        %2077 = vmatpush1.bf16.msra.mxu0 0
        %2078 = vmatprep.subr.bf16.mxu0 0
        %2079 = vmatpush1.bf16.msra.mxu0 0
        %2080 = vmatprep.subr.bf16.mxu0 0
        %2081 = vmatpush1.bf16.msra.mxu0 0
        %2082 = vmatprep.subr.bf16.mxu0 0
        %2083 = vmatpush1.bf16.msra.mxu0 0
        %2084 = vmatprep.subr.bf16.mxu0 0
        %2085 = vmatpush1.bf16.msra.mxu0 0
        %2086 = vmatprep.subr.bf16.mxu0 0
        %2087 = vmatpush1.bf16.msra.mxu0 0
        %2088 = vmatprep.subr.bf16.mxu0 0
        %2089 = vmatpush1.bf16.msra.mxu0 0
        %2090 = vmatprep.subr.bf16.mxu0 0
        %2091 = vmatpush1.bf16.msra.mxu0 0
        %2092 = vmatprep.mubr.bf16.mxu0 0
        %2093 = vmatmul.mubr.bf16.gmra.mrb[0].mxu0 %v2002
        %v2094 = vpop.f32.mrb[0].mxu0
        %v2095 = vadd.f32 0.0, %v2094
        %v2096 = vpop.f32.mrb[0].mxu0
        %v2097 = vpop.f32.mrb[0].mxu0
        %v2098 = vadd.f32 0.0, %v2097
        %v2099 = vpop.f32.mrb[0].mxu0
        %2100 = vmatprep.mubr.bf16.mxu0 0
        %2101 = vmatmul.mubr.bf16.gmra.mrb[0].mxu0 %v2003
        %v2102 = vpop.f32.mrb[0].mxu0
        %v2103 = vadd.f32 0.0, %v2102
        %v2104 = vpop.f32.mrb[0].mxu0
        %v2105 = vpop.f32.mrb[0].mxu0
        %v2106 = vadd.f32 0.0, %v2105
        %v2107 = vpop.f32.mrb[0].mxu0
        %2108 = vmatprep.mubr.bf16.mxu0 0
        %2109 = vmatmul.mubr.bf16.gmra.mrb[0].mxu0 %v2004
        %v2110 = vpop.f32.mrb[0].mxu0
        %v2111 = vadd.f32 0.0, %v2110
        %v2112 = vpop.f32.mrb[0].mxu0
        %v2113 = vpop.f32.mrb[0].mxu0
        %v2114 = vadd.f32 0.0, %v2113
        %v2115 = vpop.f32.mrb[0].mxu0
        %2116 = vmatprep.mubr.bf16.mxu0 0
        %2117 = vmatmul.mubr.bf16.gmra.mrb[0].mxu0 %v2005
        %v2118 = vpop.f32.mrb[0].mxu0
        %v2119 = vadd.f32 0.0, %v2118
        %v2120 = vpop.f32.mrb[0].mxu0
        %v2121 = vpop.f32.mrb[0].mxu0
        %v2122 = vadd.f32 0.0, %v2121
        %v2123 = vpop.f32.mrb[0].mxu0
        %2124 = vmatprep.mubr.bf16.mxu0 0
        %2125 = vmatmul.mubr.bf16.gmra.mrb[0].mxu0 %v2006
        %v2126 = vpop.f32.mrb[0].mxu0
        %v2127 = vadd.f32 0.0, %v2126
        %v2128 = vpop.f32.mrb[0].mxu0
        %v2129 = vpop.f32.mrb[0].mxu0
        %v2130 = vadd.f32 0.0, %v2129
        %v2131 = vpop.f32.mrb[0].mxu0
        %2132 = vdwg.mxu0
        %v2133 = vadd.f32 %v1941, %v2095
        %v2134 = vadd.f32 %v1942, %v2098
        %v2135 = vadd.f32 %v1943, %v2103
        %v2136 = vadd.f32 %v1944, %v2106
        %v2137 = vadd.f32 %v1945, %v2111
        %v2138 = vadd.f32 %v1946, %v2114
        %v2139 = vadd.f32 %v1947, %v2119
        %v2140 = vadd.f32 %v1948, %v2122
        %v2141 = vadd.f32 %v1949, %v2127
        %v2142 = vadd.f32 %v1950, %v2130
        %v2143 = vld [vmem:[%s1954] sm:$0xf]
        %v2144 = vld [vmem:[%s1954 + $0x4] sm:$0xf]
        %v2145 = vld [vmem:[%s1954 + $0x8] sm:$0xf]
        %v2146 = vld [vmem:[%s1954 + $0xc] sm:$0xf]
        %v2147 = vld [vmem:[%s1954 + $0x10] sm:$0xf]
        %v2148 = vld [vmem:[%s1954 + $0x14] sm:$0xf]
        %v2149 = vld [vmem:[%s1954 + $0x18] sm:$0xf]
        %v2150 = vld [vmem:[%s1954 + $0x1c] sm:$0xf]
        %v2151 = vld [vmem:[%s1954 + $0x20] sm:$0xf]
        %v2152 = vld [vmem:[%s1954 + $0x24] sm:$0xf]
        %v2153 = vld [vmem:[%s1954 + $0x28] sm:$0x1]
        %s2154 = scalar_lea.vmem %s1, 640
        %v2155 = vld [vmem:[%s2154] sm:$0xf]
        %v2156 = vld [vmem:[%s2154 + $0x4] sm:$0xf]
        %v2157 = vld [vmem:[%s2154 + $0x8] sm:$0xf]
        %v2158 = vld [vmem:[%s2154 + $0xc] sm:$0xf]
        %v2159 = vld [vmem:[%s2154 + $0x10] sm:$0xf]
        %v2160 = vld [vmem:[%s2154 + $0x14] sm:$0xf]
        %v2161 = vld [vmem:[%s2154 + $0x18] sm:$0xf]
        %v2162 = vld [vmem:[%s2154 + $0x1c] sm:$0xf]
        %v2163 = vld [vmem:[%s2154 + $0x20] sm:$0xf]
        %v2164 = vld [vmem:[%s2154 + $0x24] sm:$0xf]
        %v2165 = vld [vmem:[%s2154 + $0x28] sm:$0xf]
        %v2166 = vld [vmem:[%s2154 + $0x2c] sm:$0xf]
        %v2167 = vld [vmem:[%s2154 + $0x30] sm:$0xf]
        %v2168 = vld [vmem:[%s2154 + $0x34] sm:$0xf]
        %v2169 = vld [vmem:[%s2154 + $0x38] sm:$0xf]
        %v2170 = vld [vmem:[%s2154 + $0x3c] sm:$0xf]
        %v2182 = vunpack.c.l.b16 %v2143
        %v2183 = vunpack.c.l.b16 %v2144
        %v2184 = vunpack.c.l.b16 %v2145
        %v2185 = vunpack.c.l.b16 %v2146
        %v2186 = vunpack.c.l.b16 %v2147
        %v2187 = vunpack.c.l.b16 %v2148
        %v2188 = vunpack.c.l.b16 %v2149
        %v2189 = vunpack.c.l.b16 %v2150
        %v2190 = vunpack.c.l.b16 %v2151
        %v2191 = vunpack.c.l.b16 %v2152
        %v2192 = vunpack.c.l.b16 %v2153
        %v2193 = vpack.c.b16 %v2183, %v2182
        %v2194 = vpack.c.b16 %v2185, %v2184
        %v2195 = vpack.c.b16 %v2187, %v2186
        %v2196 = vpack.c.b16 %v2189, %v2188
        %v2197 = vpack.c.b16 %v2191, %v2190
        %v2198 = vpack.c.b16 %v2192, %v2192
        %v2200 = vshrl.u32 %v2193, 16
        %v2202 = vshll.u32 %v2193, 16
        %v2204 = vrot.slane %v2202, 1
        %v2205 = vor.u32 %v2200, %v2204
        %v2207 = vshll.u32 %v2194, 16
        %v2209 = vrot.slane %v2207, 1
        %v2210 = vsel %vm319, %v2205, %v2209
        %v2211 = vshrl.u32 %v2194, 16
        %v2213 = vor.u32 %v2211, %v2209
        %v2215 = vshll.u32 %v2195, 16
        %v2217 = vrot.slane %v2215, 1
        %v2218 = vsel %vm319, %v2213, %v2217
        %v2219 = vshrl.u32 %v2195, 16
        %v2221 = vor.u32 %v2219, %v2217
        %v2223 = vshll.u32 %v2196, 16
        %v2225 = vrot.slane %v2223, 1
        %v2226 = vsel %vm319, %v2221, %v2225
        %v2227 = vshrl.u32 %v2196, 16
        %v2229 = vor.u32 %v2227, %v2225
        %v2231 = vshll.u32 %v2197, 16
        %v2233 = vrot.slane %v2231, 1
        %v2234 = vsel %vm319, %v2229, %v2233
        %v2235 = vshrl.u32 %v2197, 16
        %v2237 = vor.u32 %v2235, %v2233
        %v2239 = vshll.u32 %v2198, 16
        %v2241 = vrot.slane %v2239, 1
        %v2242 = vsel %vm319, %v2237, %v2241
        %v2264 = vunpack.c.l.b16 %v2155
        %v2265 = vunpack.c.l.b16 %v2156
        %v2266 = vunpack.c.l.b16 %v2157
        %v2267 = vunpack.c.l.b16 %v2158
        %v2268 = vunpack.c.l.b16 %v2159
        %v2269 = vunpack.c.l.b16 %v2160
        %v2270 = vunpack.c.l.b16 %v2161
        %v2271 = vunpack.c.l.b16 %v2162
        %v2272 = vunpack.c.l.b16 %v2163
        %v2273 = vunpack.c.l.b16 %v2164
        %v2274 = vunpack.c.l.b16 %v2165
        %v2275 = vunpack.c.l.b16 %v2166
        %v2276 = vunpack.c.l.b16 %v2167
        %v2277 = vunpack.c.l.b16 %v2168
        %v2278 = vunpack.c.l.b16 %v2169
        %v2279 = vunpack.c.l.b16 %v2170
        %v2280 = vpack.c.b16 %v2265, %v2264
        %v2281 = vpack.c.b16 %v2267, %v2266
        %v2282 = vpack.c.b16 %v2269, %v2268
        %v2283 = vpack.c.b16 %v2271, %v2270
        %v2284 = vpack.c.b16 %v2273, %v2272
        %v2285 = vpack.c.b16 %v2275, %v2274
        %v2286 = vpack.c.b16 %v2277, %v2276
        %v2287 = vpack.c.b16 %v2279, %v2278
        %2296 = vmatprep.subr.bf16.mxu0 0
        %2297 = vmatpush1.bf16.msra.mxu0 %v2280
        %2298 = vmatprep.subr.bf16.mxu0 0
        %2299 = vmatpush1.bf16.msra.mxu0 %v2281
        %2300 = vmatprep.subr.bf16.mxu0 0
        %2301 = vmatpush1.bf16.msra.mxu0 %v2282
        %2302 = vmatprep.subr.bf16.mxu0 0
        %2303 = vmatpush1.bf16.msra.mxu0 %v2283
        %2304 = vmatprep.subr.bf16.mxu0 0
        %2305 = vmatpush1.bf16.msra.mxu0 %v2284
        %2306 = vmatprep.subr.bf16.mxu0 0
        %2307 = vmatpush1.bf16.msra.mxu0 %v2285
        %2308 = vmatprep.subr.bf16.mxu0 0
        %2309 = vmatpush1.bf16.msra.mxu0 %v2286
        %2310 = vmatprep.subr.bf16.mxu0 0
        %2311 = vmatpush1.bf16.msra.mxu0 %v2287
        %2312 = vmatprep.subr.bf16.mxu0 0
        %2313 = vmatpush1.bf16.msra.mxu0 0
        %2314 = vmatprep.subr.bf16.mxu0 0
        %2315 = vmatpush1.bf16.msra.mxu0 0
        %2316 = vmatprep.subr.bf16.mxu0 0
        %2317 = vmatpush1.bf16.msra.mxu0 0
        %2318 = vmatprep.subr.bf16.mxu0 0
        %2319 = vmatpush1.bf16.msra.mxu0 0
        %2320 = vmatprep.subr.bf16.mxu0 0
        %2321 = vmatpush1.bf16.msra.mxu0 0
        %2322 = vmatprep.subr.bf16.mxu0 0
        %2323 = vmatpush1.bf16.msra.mxu0 0
        %2324 = vmatprep.subr.bf16.mxu0 0
        %2325 = vmatpush1.bf16.msra.mxu0 0
        %2326 = vmatprep.subr.bf16.mxu0 0
        %2327 = vmatpush1.bf16.msra.mxu0 0
        %2328 = vmatprep.mubr.bf16.mxu0 0
        %2329 = vmatmul.mubr.bf16.gmra.mrb[0].mxu0 %v2210
        %v2330 = vpop.f32.mrb[0].mxu0
        %v2331 = vadd.f32 0.0, %v2330
        %v2332 = vpop.f32.mrb[0].mxu0
        %v2333 = vpop.f32.mrb[0].mxu0
        %v2334 = vadd.f32 0.0, %v2333
        %v2335 = vpop.f32.mrb[0].mxu0
        %2336 = vmatprep.mubr.bf16.mxu0 0
        %2337 = vmatmul.mubr.bf16.gmra.mrb[0].mxu0 %v2218
        %v2338 = vpop.f32.mrb[0].mxu0
        %v2339 = vadd.f32 0.0, %v2338
        %v2340 = vpop.f32.mrb[0].mxu0
        %v2341 = vpop.f32.mrb[0].mxu0
        %v2342 = vadd.f32 0.0, %v2341
        %v2343 = vpop.f32.mrb[0].mxu0
        %2344 = vmatprep.mubr.bf16.mxu0 0
        %2345 = vmatmul.mubr.bf16.gmra.mrb[0].mxu0 %v2226
        %v2346 = vpop.f32.mrb[0].mxu0
        %v2347 = vadd.f32 0.0, %v2346
        %v2348 = vpop.f32.mrb[0].mxu0
        %v2349 = vpop.f32.mrb[0].mxu0
        %v2350 = vadd.f32 0.0, %v2349
        %v2351 = vpop.f32.mrb[0].mxu0
        %2352 = vmatprep.mubr.bf16.mxu0 0
        %2353 = vmatmul.mubr.bf16.gmra.mrb[0].mxu0 %v2234
        %v2354 = vpop.f32.mrb[0].mxu0
        %v2355 = vadd.f32 0.0, %v2354
        %v2356 = vpop.f32.mrb[0].mxu0
        %v2357 = vpop.f32.mrb[0].mxu0
        %v2358 = vadd.f32 0.0, %v2357
        %v2359 = vpop.f32.mrb[0].mxu0
        %2360 = vmatprep.mubr.bf16.mxu0 0
        %2361 = vmatmul.mubr.bf16.gmra.mrb[0].mxu0 %v2242
        %v2362 = vpop.f32.mrb[0].mxu0
        %v2363 = vadd.f32 0.0, %v2362
        %v2364 = vpop.f32.mrb[0].mxu0
        %v2365 = vpop.f32.mrb[0].mxu0
        %v2366 = vadd.f32 0.0, %v2365
        %v2367 = vpop.f32.mrb[0].mxu0
        %2368 = vdwg.mxu0
        %v2369 = vadd.f32 %v2133, %v2331
        %v2370 = vadd.f32 %v2134, %v2334
        %v2371 = vadd.f32 %v2135, %v2339
        %v2372 = vadd.f32 %v2136, %v2342
        %v2373 = vadd.f32 %v2137, %v2347
        %v2374 = vadd.f32 %v2138, %v2350
        %v2375 = vadd.f32 %v2139, %v2355
        %v2376 = vadd.f32 %v2140, %v2358
        %v2377 = vadd.f32 %v2141, %v2363
        %v2378 = vadd.f32 %v2142, %v2366
        %v2379 = vld [vmem:[%s1954] sm:$0xe]
        %s2380 = scalar_lea.vmem %s1, 704
        %v2381 = vld [vmem:[%s2380] sm:$0xf]
        %v2382 = vld [vmem:[%s2380 + $0x4] sm:$0xf]
        %v2383 = vld [vmem:[%s2380 + $0x8] sm:$0xf]
        %v2384 = vld [vmem:[%s2380 + $0xc] sm:$0xf]
        %v2385 = vld [vmem:[%s2380 + $0x10] sm:$0xf]
        %v2386 = vld [vmem:[%s2380 + $0x14] sm:$0xf]
        %v2387 = vld [vmem:[%s2380 + $0x18] sm:$0xf]
        %v2388 = vld [vmem:[%s2380 + $0x1c] sm:$0xf]
        %v2389 = vld [vmem:[%s2380 + $0x20] sm:$0xf]
        %v2390 = vld [vmem:[%s2380 + $0x24] sm:$0xf]
        %v2391 = vld [vmem:[%s2380 + $0x28] sm:$0xf]
        %v2392 = vld [vmem:[%s2380 + $0x2c] sm:$0xf]
        %v2393 = vld [vmem:[%s2380 + $0x30] sm:$0xf]
        %v2394 = vld [vmem:[%s2380 + $0x34] sm:$0xf]
        %v2395 = vld [vmem:[%s2380 + $0x38] sm:$0xf]
        %v2396 = vld [vmem:[%s2380 + $0x3c] sm:$0xf]
        %v2398 = vunpack.c.l.b16 %v2379
        %v2399 = vpack.c.b16 %v2183, %v2398
        %v2400 = vrot.slane %v2399, 1
        %v2401 = vrot.slane %v2194, 1
        %v2402 = vsel %vm637, %v2400, %v2401
        %v2403 = vrot.slane %v2195, 1
        %v2404 = vsel %vm637, %v2401, %v2403
        %v2405 = vrot.slane %v2196, 1
        %v2406 = vsel %vm637, %v2403, %v2405
        %v2407 = vrot.slane %v2197, 1
        %v2408 = vsel %vm637, %v2405, %v2407
        %v2409 = vrot.slane %v2198, 1
        %v2410 = vsel %vm637, %v2407, %v2409
        %v2432 = vunpack.c.l.b16 %v2381
        %v2433 = vunpack.c.l.b16 %v2382
        %v2434 = vunpack.c.l.b16 %v2383
        %v2435 = vunpack.c.l.b16 %v2384
        %v2436 = vunpack.c.l.b16 %v2385
        %v2437 = vunpack.c.l.b16 %v2386
        %v2438 = vunpack.c.l.b16 %v2387
        %v2439 = vunpack.c.l.b16 %v2388
        %v2440 = vunpack.c.l.b16 %v2389
        %v2441 = vunpack.c.l.b16 %v2390
        %v2442 = vunpack.c.l.b16 %v2391
        %v2443 = vunpack.c.l.b16 %v2392
        %v2444 = vunpack.c.l.b16 %v2393
        %v2445 = vunpack.c.l.b16 %v2394
        %v2446 = vunpack.c.l.b16 %v2395
        %v2447 = vunpack.c.l.b16 %v2396
        %v2448 = vpack.c.b16 %v2433, %v2432
        %v2449 = vpack.c.b16 %v2435, %v2434
        %v2450 = vpack.c.b16 %v2437, %v2436
        %v2451 = vpack.c.b16 %v2439, %v2438
        %v2452 = vpack.c.b16 %v2441, %v2440
        %v2453 = vpack.c.b16 %v2443, %v2442
        %v2454 = vpack.c.b16 %v2445, %v2444
        %v2455 = vpack.c.b16 %v2447, %v2446
        %2464 = vmatprep.subr.bf16.mxu0 0
        %2465 = vmatpush1.bf16.msra.mxu0 %v2448
        %2466 = vmatprep.subr.bf16.mxu0 0
        %2467 = vmatpush1.bf16.msra.mxu0 %v2449
        %2468 = vmatprep.subr.bf16.mxu0 0
        %2469 = vmatpush1.bf16.msra.mxu0 %v2450
        %2470 = vmatprep.subr.bf16.mxu0 0
        %2471 = vmatpush1.bf16.msra.mxu0 %v2451
        %2472 = vmatprep.subr.bf16.mxu0 0
        %2473 = vmatpush1.bf16.msra.mxu0 %v2452
        %2474 = vmatprep.subr.bf16.mxu0 0
        %2475 = vmatpush1.bf16.msra.mxu0 %v2453
        %2476 = vmatprep.subr.bf16.mxu0 0
        %2477 = vmatpush1.bf16.msra.mxu0 %v2454
        %2478 = vmatprep.subr.bf16.mxu0 0
        %2479 = vmatpush1.bf16.msra.mxu0 %v2455
        %2480 = vmatprep.subr.bf16.mxu0 0
        %2481 = vmatpush1.bf16.msra.mxu0 0
        %2482 = vmatprep.subr.bf16.mxu0 0
        %2483 = vmatpush1.bf16.msra.mxu0 0
        %2484 = vmatprep.subr.bf16.mxu0 0
        %2485 = vmatpush1.bf16.msra.mxu0 0
        %2486 = vmatprep.subr.bf16.mxu0 0
        %2487 = vmatpush1.bf16.msra.mxu0 0
        %2488 = vmatprep.subr.bf16.mxu0 0
        %2489 = vmatpush1.bf16.msra.mxu0 0
        %2490 = vmatprep.subr.bf16.mxu0 0
        %2491 = vmatpush1.bf16.msra.mxu0 0
        %2492 = vmatprep.subr.bf16.mxu0 0
        %2493 = vmatpush1.bf16.msra.mxu0 0
        %2494 = vmatprep.subr.bf16.mxu0 0
        %2495 = vmatpush1.bf16.msra.mxu0 0
        %2496 = vmatprep.mubr.bf16.mxu0 0
        %2497 = vmatmul.mubr.bf16.gmra.mrb[0].mxu0 %v2402
        %v2498 = vpop.f32.mrb[0].mxu0
        %v2499 = vadd.f32 0.0, %v2498
        %v2500 = vpop.f32.mrb[0].mxu0
        %v2501 = vpop.f32.mrb[0].mxu0
        %v2502 = vadd.f32 0.0, %v2501
        %v2503 = vpop.f32.mrb[0].mxu0
        %2504 = vmatprep.mubr.bf16.mxu0 0
        %2505 = vmatmul.mubr.bf16.gmra.mrb[0].mxu0 %v2404
        %v2506 = vpop.f32.mrb[0].mxu0
        %v2507 = vadd.f32 0.0, %v2506
        %v2508 = vpop.f32.mrb[0].mxu0
        %v2509 = vpop.f32.mrb[0].mxu0
        %v2510 = vadd.f32 0.0, %v2509
        %v2511 = vpop.f32.mrb[0].mxu0
        %2512 = vmatprep.mubr.bf16.mxu0 0
        %2513 = vmatmul.mubr.bf16.gmra.mrb[0].mxu0 %v2406
        %v2514 = vpop.f32.mrb[0].mxu0
        %v2515 = vadd.f32 0.0, %v2514
        %v2516 = vpop.f32.mrb[0].mxu0
        %v2517 = vpop.f32.mrb[0].mxu0
        %v2518 = vadd.f32 0.0, %v2517
        %v2519 = vpop.f32.mrb[0].mxu0
        %2520 = vmatprep.mubr.bf16.mxu0 0
        %2521 = vmatmul.mubr.bf16.gmra.mrb[0].mxu0 %v2408
        %v2522 = vpop.f32.mrb[0].mxu0
        %v2523 = vadd.f32 0.0, %v2522
        %v2524 = vpop.f32.mrb[0].mxu0
        %v2525 = vpop.f32.mrb[0].mxu0
        %v2526 = vadd.f32 0.0, %v2525
        %v2527 = vpop.f32.mrb[0].mxu0
        %2528 = vmatprep.mubr.bf16.mxu0 0
        %2529 = vmatmul.mubr.bf16.gmra.mrb[0].mxu0 %v2410
        %v2530 = vpop.f32.mrb[0].mxu0
        %v2531 = vadd.f32 0.0, %v2530
        %v2532 = vpop.f32.mrb[0].mxu0
        %v2533 = vpop.f32.mrb[0].mxu0
        %v2534 = vadd.f32 0.0, %v2533
        %v2535 = vpop.f32.mrb[0].mxu0
        %2536 = vdwg.mxu0
        %v2537 = vadd.f32 %v2369, %v2499
        %v2538 = vadd.f32 %v2370, %v2502
        %v2539 = vadd.f32 %v2371, %v2507
        %v2540 = vadd.f32 %v2372, %v2510
        %v2541 = vadd.f32 %v2373, %v2515
        %v2542 = vadd.f32 %v2374, %v2518
        %v2543 = vadd.f32 %v2375, %v2523
        %v2544 = vadd.f32 %v2376, %v2526
        %v2545 = vadd.f32 %v2377, %v2531
        %v2546 = vadd.f32 %v2378, %v2534
        %v2547 = vld [vmem:[%s1954 + $0x4] sm:$0xe]
        %v2548 = vld [vmem:[%s1954 + $0x8] sm:$0xf]
        %v2549 = vld [vmem:[%s1954 + $0xc] sm:$0xf]
        %v2550 = vld [vmem:[%s1954 + $0x10] sm:$0xf]
        %v2551 = vld [vmem:[%s1954 + $0x14] sm:$0xf]
        %v2552 = vld [vmem:[%s1954 + $0x18] sm:$0xf]
        %v2553 = vld [vmem:[%s1954 + $0x1c] sm:$0xf]
        %v2554 = vld [vmem:[%s1954 + $0x20] sm:$0xf]
        %v2555 = vld [vmem:[%s1954 + $0x24] sm:$0xf]
        %v2556 = vld [vmem:[%s1954 + $0x28] sm:$0xf]
        %v2557 = vld [vmem:[%s1954 + $0x2c] sm:$0x1]
        %s2558 = scalar_lea.vmem %s1, 768
        %v2559 = vld [vmem:[%s2558] sm:$0xf]
        %v2560 = vld [vmem:[%s2558 + $0x4] sm:$0xf]
        %v2561 = vld [vmem:[%s2558 + $0x8] sm:$0xf]
        %v2562 = vld [vmem:[%s2558 + $0xc] sm:$0xf]
        %v2563 = vld [vmem:[%s2558 + $0x10] sm:$0xf]
        %v2564 = vld [vmem:[%s2558 + $0x14] sm:$0xf]
        %v2565 = vld [vmem:[%s2558 + $0x18] sm:$0xf]
        %v2566 = vld [vmem:[%s2558 + $0x1c] sm:$0xf]
        %v2567 = vld [vmem:[%s2558 + $0x20] sm:$0xf]
        %v2568 = vld [vmem:[%s2558 + $0x24] sm:$0xf]
        %v2569 = vld [vmem:[%s2558 + $0x28] sm:$0xf]
        %v2570 = vld [vmem:[%s2558 + $0x2c] sm:$0xf]
        %v2571 = vld [vmem:[%s2558 + $0x30] sm:$0xf]
        %v2572 = vld [vmem:[%s2558 + $0x34] sm:$0xf]
        %v2573 = vld [vmem:[%s2558 + $0x38] sm:$0xf]
        %v2574 = vld [vmem:[%s2558 + $0x3c] sm:$0xf]
        %v2586 = vunpack.c.l.b16 %v2547
        %v2587 = vunpack.c.l.b16 %v2548
        %v2588 = vunpack.c.l.b16 %v2549
        %v2589 = vunpack.c.l.b16 %v2550
        %v2590 = vunpack.c.l.b16 %v2551
        %v2591 = vunpack.c.l.b16 %v2552
        %v2592 = vunpack.c.l.b16 %v2553
        %v2593 = vunpack.c.l.b16 %v2554
        %v2594 = vunpack.c.l.b16 %v2555
        %v2595 = vunpack.c.l.b16 %v2556
        %v2596 = vunpack.c.l.b16 %v2557
        %v2597 = vpack.c.b16 %v2587, %v2586
        %v2598 = vpack.c.b16 %v2589, %v2588
        %v2599 = vpack.c.b16 %v2591, %v2590
        %v2600 = vpack.c.b16 %v2593, %v2592
        %v2601 = vpack.c.b16 %v2595, %v2594
        %v2602 = vpack.c.b16 %v2596, %v2596
        %v2603 = vrot.slane %v2597, 1
        %v2604 = vrot.slane %v2598, 1
        %v2605 = vsel %vm637, %v2603, %v2604
        %v2606 = vrot.slane %v2599, 1
        %v2607 = vsel %vm637, %v2604, %v2606
        %v2608 = vrot.slane %v2600, 1
        %v2609 = vsel %vm637, %v2606, %v2608
        %v2610 = vrot.slane %v2601, 1
        %v2611 = vsel %vm637, %v2608, %v2610
        %v2612 = vrot.slane %v2602, 1
        %v2613 = vsel %vm637, %v2610, %v2612
        %v2635 = vunpack.c.l.b16 %v2559
        %v2636 = vunpack.c.l.b16 %v2560
        %v2637 = vunpack.c.l.b16 %v2561
        %v2638 = vunpack.c.l.b16 %v2562
        %v2639 = vunpack.c.l.b16 %v2563
        %v2640 = vunpack.c.l.b16 %v2564
        %v2641 = vunpack.c.l.b16 %v2565
        %v2642 = vunpack.c.l.b16 %v2566
        %v2643 = vunpack.c.l.b16 %v2567
        %v2644 = vunpack.c.l.b16 %v2568
        %v2645 = vunpack.c.l.b16 %v2569
        %v2646 = vunpack.c.l.b16 %v2570
        %v2647 = vunpack.c.l.b16 %v2571
        %v2648 = vunpack.c.l.b16 %v2572
        %v2649 = vunpack.c.l.b16 %v2573
        %v2650 = vunpack.c.l.b16 %v2574
        %v2651 = vpack.c.b16 %v2636, %v2635
        %v2652 = vpack.c.b16 %v2638, %v2637
        %v2653 = vpack.c.b16 %v2640, %v2639
        %v2654 = vpack.c.b16 %v2642, %v2641
        %v2655 = vpack.c.b16 %v2644, %v2643
        %v2656 = vpack.c.b16 %v2646, %v2645
        %v2657 = vpack.c.b16 %v2648, %v2647
        %v2658 = vpack.c.b16 %v2650, %v2649
        %2667 = vmatprep.subr.bf16.mxu0 0
        %2668 = vmatpush1.bf16.msra.mxu0 %v2651
        %2669 = vmatprep.subr.bf16.mxu0 0
        %2670 = vmatpush1.bf16.msra.mxu0 %v2652
        %2671 = vmatprep.subr.bf16.mxu0 0
        %2672 = vmatpush1.bf16.msra.mxu0 %v2653
        %2673 = vmatprep.subr.bf16.mxu0 0
        %2674 = vmatpush1.bf16.msra.mxu0 %v2654
        %2675 = vmatprep.subr.bf16.mxu0 0
        %2676 = vmatpush1.bf16.msra.mxu0 %v2655
        %2677 = vmatprep.subr.bf16.mxu0 0
        %2678 = vmatpush1.bf16.msra.mxu0 %v2656
        %2679 = vmatprep.subr.bf16.mxu0 0
        %2680 = vmatpush1.bf16.msra.mxu0 %v2657
        %2681 = vmatprep.subr.bf16.mxu0 0
        %2682 = vmatpush1.bf16.msra.mxu0 %v2658
        %2683 = vmatprep.subr.bf16.mxu0 0
        %2684 = vmatpush1.bf16.msra.mxu0 0
        %2685 = vmatprep.subr.bf16.mxu0 0
        %2686 = vmatpush1.bf16.msra.mxu0 0
        %2687 = vmatprep.subr.bf16.mxu0 0
        %2688 = vmatpush1.bf16.msra.mxu0 0
        %2689 = vmatprep.subr.bf16.mxu0 0
        %2690 = vmatpush1.bf16.msra.mxu0 0
        %2691 = vmatprep.subr.bf16.mxu0 0
        %2692 = vmatpush1.bf16.msra.mxu0 0
        %2693 = vmatprep.subr.bf16.mxu0 0
        %2694 = vmatpush1.bf16.msra.mxu0 0
        %2695 = vmatprep.subr.bf16.mxu0 0
        %2696 = vmatpush1.bf16.msra.mxu0 0
        %2697 = vmatprep.subr.bf16.mxu0 0
        %2698 = vmatpush1.bf16.msra.mxu0 0
        %2699 = vmatprep.mubr.bf16.mxu0 0
        %2700 = vmatmul.mubr.bf16.gmra.mrb[0].mxu0 %v2605
        %v2701 = vpop.f32.mrb[0].mxu0
        %v2702 = vadd.f32 0.0, %v2701
        %v2703 = vpop.f32.mrb[0].mxu0
        %v2704 = vpop.f32.mrb[0].mxu0
        %v2705 = vadd.f32 0.0, %v2704
        %v2706 = vpop.f32.mrb[0].mxu0
        %2707 = vmatprep.mubr.bf16.mxu0 0
        %2708 = vmatmul.mubr.bf16.gmra.mrb[0].mxu0 %v2607
        %v2709 = vpop.f32.mrb[0].mxu0
        %v2710 = vadd.f32 0.0, %v2709
        %v2711 = vpop.f32.mrb[0].mxu0
        %v2712 = vpop.f32.mrb[0].mxu0
        %v2713 = vadd.f32 0.0, %v2712
        %v2714 = vpop.f32.mrb[0].mxu0
        %2715 = vmatprep.mubr.bf16.mxu0 0
        %2716 = vmatmul.mubr.bf16.gmra.mrb[0].mxu0 %v2609
        %v2717 = vpop.f32.mrb[0].mxu0
        %v2718 = vadd.f32 0.0, %v2717
        %v2719 = vpop.f32.mrb[0].mxu0
        %v2720 = vpop.f32.mrb[0].mxu0
        %v2721 = vadd.f32 0.0, %v2720
        %v2722 = vpop.f32.mrb[0].mxu0
        %2723 = vmatprep.mubr.bf16.mxu0 0
        %2724 = vmatmul.mubr.bf16.gmra.mrb[0].mxu0 %v2611
        %v2725 = vpop.f32.mrb[0].mxu0
        %v2726 = vadd.f32 0.0, %v2725
        %v2727 = vpop.f32.mrb[0].mxu0
        %v2728 = vpop.f32.mrb[0].mxu0
        %v2729 = vadd.f32 0.0, %v2728
        %v2730 = vpop.f32.mrb[0].mxu0
        %2731 = vmatprep.mubr.bf16.mxu0 0
        %2732 = vmatmul.mubr.bf16.gmra.mrb[0].mxu0 %v2613
        %v2733 = vpop.f32.mrb[0].mxu0
        %v2734 = vadd.f32 0.0, %v2733
        %v2735 = vpop.f32.mrb[0].mxu0
        %v2736 = vpop.f32.mrb[0].mxu0
        %v2737 = vadd.f32 0.0, %v2736
        %v2738 = vpop.f32.mrb[0].mxu0
        %2739 = vdwg.mxu0
        %v2740 = vadd.f32 %v2537, %v2702
        %v2741 = vadd.f32 %v2538, %v2705
        %v2742 = vadd.f32 %v2539, %v2710
        %v2743 = vadd.f32 %v2540, %v2713
        %v2744 = vadd.f32 %v2541, %v2718
        %v2745 = vadd.f32 %v2542, %v2721
        %v2746 = vadd.f32 %v2543, %v2726
        %v2747 = vadd.f32 %v2544, %v2729
        %v2748 = vadd.f32 %v2545, %v2734
        %v2749 = vadd.f32 %v2546, %v2737
        %v2750 = vld [vmem:[%s1954 + $0x2c] sm:$0x3]
        %s2751 = scalar_lea.vmem %s1, 832
        %v2752 = vld [vmem:[%s2751] sm:$0xf]
        %v2753 = vld [vmem:[%s2751 + $0x4] sm:$0xf]
        %v2754 = vld [vmem:[%s2751 + $0x8] sm:$0xf]
        %v2755 = vld [vmem:[%s2751 + $0xc] sm:$0xf]
        %v2756 = vld [vmem:[%s2751 + $0x10] sm:$0xf]
        %v2757 = vld [vmem:[%s2751 + $0x14] sm:$0xf]
        %v2758 = vld [vmem:[%s2751 + $0x18] sm:$0xf]
        %v2759 = vld [vmem:[%s2751 + $0x1c] sm:$0xf]
        %v2760 = vld [vmem:[%s2751 + $0x20] sm:$0xf]
        %v2761 = vld [vmem:[%s2751 + $0x24] sm:$0xf]
        %v2762 = vld [vmem:[%s2751 + $0x28] sm:$0xf]
        %v2763 = vld [vmem:[%s2751 + $0x2c] sm:$0xf]
        %v2764 = vld [vmem:[%s2751 + $0x30] sm:$0xf]
        %v2765 = vld [vmem:[%s2751 + $0x34] sm:$0xf]
        %v2766 = vld [vmem:[%s2751 + $0x38] sm:$0xf]
        %v2767 = vld [vmem:[%s2751 + $0x3c] sm:$0xf]
        %v2769 = vunpack.c.l.b16 %v2750
        %v2770 = vpack.c.b16 %v2769, %v2769
        %v2772 = vshrl.u32 %v2597, 16
        %v2774 = vrot.slane %v2772, 1
        %v2775 = vshll.u32 %v2597, 16
        %v2777 = vrot.slane %v2775, 2
        %v2778 = vor.u32 %v2774, %v2777
        %v2780 = vshrl.u32 %v2598, 16
        %v2782 = vrot.slane %v2780, 1
        %v2783 = vshll.u32 %v2598, 16
        %v2785 = vrot.slane %v2783, 2
        %v2786 = vor.u32 %v2782, %v2785
        %v2787 = vsel %vm1009, %v2778, %v2786
        %v2789 = vshrl.u32 %v2599, 16
        %v2791 = vrot.slane %v2789, 1
        %v2792 = vshll.u32 %v2599, 16
        %v2794 = vrot.slane %v2792, 2
        %v2795 = vor.u32 %v2791, %v2794
        %v2796 = vsel %vm1009, %v2786, %v2795
        %v2798 = vshrl.u32 %v2600, 16
        %v2800 = vrot.slane %v2798, 1
        %v2801 = vshll.u32 %v2600, 16
        %v2803 = vrot.slane %v2801, 2
        %v2804 = vor.u32 %v2800, %v2803
        %v2805 = vsel %vm1009, %v2795, %v2804
        %v2807 = vshrl.u32 %v2601, 16
        %v2809 = vrot.slane %v2807, 1
        %v2810 = vshll.u32 %v2601, 16
        %v2812 = vrot.slane %v2810, 2
        %v2813 = vor.u32 %v2809, %v2812
        %v2814 = vsel %vm1009, %v2804, %v2813
        %v2816 = vshrl.u32 %v2770, 16
        %v2818 = vrot.slane %v2816, 1
        %v2819 = vshll.u32 %v2770, 16
        %v2821 = vrot.slane %v2819, 2
        %v2822 = vor.u32 %v2818, %v2821
        %v2823 = vsel %vm1009, %v2813, %v2822
        %v2845 = vunpack.c.l.b16 %v2752
        %v2846 = vunpack.c.l.b16 %v2753
        %v2847 = vunpack.c.l.b16 %v2754
        %v2848 = vunpack.c.l.b16 %v2755
        %v2849 = vunpack.c.l.b16 %v2756
        %v2850 = vunpack.c.l.b16 %v2757
        %v2851 = vunpack.c.l.b16 %v2758
        %v2852 = vunpack.c.l.b16 %v2759
        %v2853 = vunpack.c.l.b16 %v2760
        %v2854 = vunpack.c.l.b16 %v2761
        %v2855 = vunpack.c.l.b16 %v2762
        %v2856 = vunpack.c.l.b16 %v2763
        %v2857 = vunpack.c.l.b16 %v2764
        %v2858 = vunpack.c.l.b16 %v2765
        %v2859 = vunpack.c.l.b16 %v2766
        %v2860 = vunpack.c.l.b16 %v2767
        %v2861 = vpack.c.b16 %v2846, %v2845
        %v2862 = vpack.c.b16 %v2848, %v2847
        %v2863 = vpack.c.b16 %v2850, %v2849
        %v2864 = vpack.c.b16 %v2852, %v2851
        %v2865 = vpack.c.b16 %v2854, %v2853
        %v2866 = vpack.c.b16 %v2856, %v2855
        %v2867 = vpack.c.b16 %v2858, %v2857
        %v2868 = vpack.c.b16 %v2860, %v2859
        %2877 = vmatprep.subr.bf16.mxu0 0
        %2878 = vmatpush1.bf16.msra.mxu0 %v2861
        %2879 = vmatprep.subr.bf16.mxu0 0
        %2880 = vmatpush1.bf16.msra.mxu0 %v2862
        %2881 = vmatprep.subr.bf16.mxu0 0
        %2882 = vmatpush1.bf16.msra.mxu0 %v2863
        %2883 = vmatprep.subr.bf16.mxu0 0
        %2884 = vmatpush1.bf16.msra.mxu0 %v2864
        %2885 = vmatprep.subr.bf16.mxu0 0
        %2886 = vmatpush1.bf16.msra.mxu0 %v2865
        %2887 = vmatprep.subr.bf16.mxu0 0
        %2888 = vmatpush1.bf16.msra.mxu0 %v2866
        %2889 = vmatprep.subr.bf16.mxu0 0
        %2890 = vmatpush1.bf16.msra.mxu0 %v2867
        %2891 = vmatprep.subr.bf16.mxu0 0
        %2892 = vmatpush1.bf16.msra.mxu0 %v2868
        %2893 = vmatprep.subr.bf16.mxu0 0
        %2894 = vmatpush1.bf16.msra.mxu0 0
        %2895 = vmatprep.subr.bf16.mxu0 0
        %2896 = vmatpush1.bf16.msra.mxu0 0
        %2897 = vmatprep.subr.bf16.mxu0 0
        %2898 = vmatpush1.bf16.msra.mxu0 0
        %2899 = vmatprep.subr.bf16.mxu0 0
        %2900 = vmatpush1.bf16.msra.mxu0 0
        %2901 = vmatprep.subr.bf16.mxu0 0
        %2902 = vmatpush1.bf16.msra.mxu0 0
        %2903 = vmatprep.subr.bf16.mxu0 0
        %2904 = vmatpush1.bf16.msra.mxu0 0
        %2905 = vmatprep.subr.bf16.mxu0 0
        %2906 = vmatpush1.bf16.msra.mxu0 0
        %2907 = vmatprep.subr.bf16.mxu0 0
        %2908 = vmatpush1.bf16.msra.mxu0 0
        %2909 = vmatprep.mubr.bf16.mxu0 0
        %2910 = vmatmul.mubr.bf16.gmra.mrb[0].mxu0 %v2787
        %v2911 = vpop.f32.mrb[0].mxu0
        %v2912 = vadd.f32 0.0, %v2911
        %v2913 = vpop.f32.mrb[0].mxu0
        %v2914 = vpop.f32.mrb[0].mxu0
        %v2915 = vadd.f32 0.0, %v2914
        %v2916 = vpop.f32.mrb[0].mxu0
        %2917 = vmatprep.mubr.bf16.mxu0 0
        %2918 = vmatmul.mubr.bf16.gmra.mrb[0].mxu0 %v2796
        %v2919 = vpop.f32.mrb[0].mxu0
        %v2920 = vadd.f32 0.0, %v2919
        %v2921 = vpop.f32.mrb[0].mxu0
        %v2922 = vpop.f32.mrb[0].mxu0
        %v2923 = vadd.f32 0.0, %v2922
        %v2924 = vpop.f32.mrb[0].mxu0
        %2925 = vmatprep.mubr.bf16.mxu0 0
        %2926 = vmatmul.mubr.bf16.gmra.mrb[0].mxu0 %v2805
        %v2927 = vpop.f32.mrb[0].mxu0
        %v2928 = vadd.f32 0.0, %v2927
        %v2929 = vpop.f32.mrb[0].mxu0
        %v2930 = vpop.f32.mrb[0].mxu0
        %v2931 = vadd.f32 0.0, %v2930
        %v2932 = vpop.f32.mrb[0].mxu0
        %2933 = vmatprep.mubr.bf16.mxu0 0
        %2934 = vmatmul.mubr.bf16.gmra.mrb[0].mxu0 %v2814
        %v2935 = vpop.f32.mrb[0].mxu0
        %v2936 = vadd.f32 0.0, %v2935
        %v2937 = vpop.f32.mrb[0].mxu0
        %v2938 = vpop.f32.mrb[0].mxu0
        %v2939 = vadd.f32 0.0, %v2938
        %v2940 = vpop.f32.mrb[0].mxu0
        %2941 = vmatprep.mubr.bf16.mxu0 0
        %2942 = vmatmul.mubr.bf16.gmra.mrb[0].mxu0 %v2823
        %v2943 = vpop.f32.mrb[0].mxu0
        %v2944 = vadd.f32 0.0, %v2943
        %v2945 = vpop.f32.mrb[0].mxu0
        %v2946 = vpop.f32.mrb[0].mxu0
        %v2947 = vadd.f32 0.0, %v2946
        %v2948 = vpop.f32.mrb[0].mxu0
        %2949 = vdwg.mxu0
        %v2950 = vadd.f32 %v2740, %v2912
        %v2951 = vadd.f32 %v2741, %v2915
        %v2952 = vadd.f32 %v2742, %v2920
        %v2953 = vadd.f32 %v2743, %v2923
        %v2954 = vadd.f32 %v2744, %v2928
        %v2955 = vadd.f32 %v2745, %v2931
        %v2956 = vadd.f32 %v2746, %v2936
        %v2957 = vadd.f32 %v2747, %v2939
        %v2958 = vadd.f32 %v2748, %v2944
        %v2959 = vadd.f32 %v2749, %v2947
        %v2960 = vld [vmem:[%s1954 + $0x4] sm:$0xc]
        %s2961 = scalar_lea.vmem %s1, 896
        %v2962 = vld [vmem:[%s2961] sm:$0xf]
        %v2963 = vld [vmem:[%s2961 + $0x4] sm:$0xf]
        %v2964 = vld [vmem:[%s2961 + $0x8] sm:$0xf]
        %v2965 = vld [vmem:[%s2961 + $0xc] sm:$0xf]
        %v2966 = vld [vmem:[%s2961 + $0x10] sm:$0xf]
        %v2967 = vld [vmem:[%s2961 + $0x14] sm:$0xf]
        %v2968 = vld [vmem:[%s2961 + $0x18] sm:$0xf]
        %v2969 = vld [vmem:[%s2961 + $0x1c] sm:$0xf]
        %v2970 = vld [vmem:[%s2961 + $0x20] sm:$0xf]
        %v2971 = vld [vmem:[%s2961 + $0x24] sm:$0xf]
        %v2972 = vld [vmem:[%s2961 + $0x28] sm:$0xf]
        %v2973 = vld [vmem:[%s2961 + $0x2c] sm:$0xf]
        %v2974 = vld [vmem:[%s2961 + $0x30] sm:$0xf]
        %v2975 = vld [vmem:[%s2961 + $0x34] sm:$0xf]
        %v2976 = vld [vmem:[%s2961 + $0x38] sm:$0xf]
        %v2977 = vld [vmem:[%s2961 + $0x3c] sm:$0xf]
        %v2979 = vunpack.c.l.b16 %v2960
        %v2980 = vpack.c.b16 %v2587, %v2979
        %v2981 = vrot.slane %v2980, 2
        %v2982 = vrot.slane %v2598, 2
        %v2983 = vsel %vm1220, %v2981, %v2982
        %v2984 = vrot.slane %v2599, 2
        %v2985 = vsel %vm1220, %v2982, %v2984
        %v2986 = vrot.slane %v2600, 2
        %v2987 = vsel %vm1220, %v2984, %v2986
        %v2988 = vrot.slane %v2601, 2
        %v2989 = vsel %vm1220, %v2986, %v2988
        %v2990 = vrot.slane %v2770, 2
        %v2991 = vsel %vm1220, %v2988, %v2990
        %v3013 = vunpack.c.l.b16 %v2962
        %v3014 = vunpack.c.l.b16 %v2963
        %v3015 = vunpack.c.l.b16 %v2964
        %v3016 = vunpack.c.l.b16 %v2965
        %v3017 = vunpack.c.l.b16 %v2966
        %v3018 = vunpack.c.l.b16 %v2967
        %v3019 = vunpack.c.l.b16 %v2968
        %v3020 = vunpack.c.l.b16 %v2969
        %v3021 = vunpack.c.l.b16 %v2970
        %v3022 = vunpack.c.l.b16 %v2971
        %v3023 = vunpack.c.l.b16 %v2972
        %v3024 = vunpack.c.l.b16 %v2973
        %v3025 = vunpack.c.l.b16 %v2974
        %v3026 = vunpack.c.l.b16 %v2975
        %v3027 = vunpack.c.l.b16 %v2976
        %v3028 = vunpack.c.l.b16 %v2977
        %v3029 = vpack.c.b16 %v3014, %v3013
        %v3030 = vpack.c.b16 %v3016, %v3015
        %v3031 = vpack.c.b16 %v3018, %v3017
        %v3032 = vpack.c.b16 %v3020, %v3019
        %v3033 = vpack.c.b16 %v3022, %v3021
        %v3034 = vpack.c.b16 %v3024, %v3023
        %v3035 = vpack.c.b16 %v3026, %v3025
        %v3036 = vpack.c.b16 %v3028, %v3027
        %3045 = vmatprep.subr.bf16.mxu0 0
        %3046 = vmatpush1.bf16.msra.mxu0 %v3029
        %3047 = vmatprep.subr.bf16.mxu0 0
        %3048 = vmatpush1.bf16.msra.mxu0 %v3030
        %3049 = vmatprep.subr.bf16.mxu0 0
        %3050 = vmatpush1.bf16.msra.mxu0 %v3031
        %3051 = vmatprep.subr.bf16.mxu0 0
        %3052 = vmatpush1.bf16.msra.mxu0 %v3032
        %3053 = vmatprep.subr.bf16.mxu0 0
        %3054 = vmatpush1.bf16.msra.mxu0 %v3033
        %3055 = vmatprep.subr.bf16.mxu0 0
        %3056 = vmatpush1.bf16.msra.mxu0 %v3034
        %3057 = vmatprep.subr.bf16.mxu0 0
        %3058 = vmatpush1.bf16.msra.mxu0 %v3035
        %3059 = vmatprep.subr.bf16.mxu0 0
        %3060 = vmatpush1.bf16.msra.mxu0 %v3036
        %3061 = vmatprep.subr.bf16.mxu0 0
        %3062 = vmatpush1.bf16.msra.mxu0 0
        %3063 = vmatprep.subr.bf16.mxu0 0
        %3064 = vmatpush1.bf16.msra.mxu0 0
        %3065 = vmatprep.subr.bf16.mxu0 0
        %3066 = vmatpush1.bf16.msra.mxu0 0
        %3067 = vmatprep.subr.bf16.mxu0 0
        %3068 = vmatpush1.bf16.msra.mxu0 0
        %3069 = vmatprep.subr.bf16.mxu0 0
        %3070 = vmatpush1.bf16.msra.mxu0 0
        %3071 = vmatprep.subr.bf16.mxu0 0
        %3072 = vmatpush1.bf16.msra.mxu0 0
        %3073 = vmatprep.subr.bf16.mxu0 0
        %3074 = vmatpush1.bf16.msra.mxu0 0
        %3075 = vmatprep.subr.bf16.mxu0 0
        %3076 = vmatpush1.bf16.msra.mxu0 0
        %3077 = vmatprep.mubr.bf16.mxu0 0
        %3078 = vmatmul.mubr.bf16.gmra.mrb[0].mxu0 %v2983
        %v3079 = vpop.f32.mrb[0].mxu0
        %v3080 = vadd.f32 0.0, %v3079
        %v3081 = vpop.f32.mrb[0].mxu0
        %v3082 = vpop.f32.mrb[0].mxu0
        %v3083 = vadd.f32 0.0, %v3082
        %v3084 = vpop.f32.mrb[0].mxu0
        %3085 = vmatprep.mubr.bf16.mxu0 0
        %3086 = vmatmul.mubr.bf16.gmra.mrb[0].mxu0 %v2985
        %v3087 = vpop.f32.mrb[0].mxu0
        %v3088 = vadd.f32 0.0, %v3087
        %v3089 = vpop.f32.mrb[0].mxu0
        %v3090 = vpop.f32.mrb[0].mxu0
        %v3091 = vadd.f32 0.0, %v3090
        %v3092 = vpop.f32.mrb[0].mxu0
        %3093 = vmatprep.mubr.bf16.mxu0 0
        %3094 = vmatmul.mubr.bf16.gmra.mrb[0].mxu0 %v2987
        %v3095 = vpop.f32.mrb[0].mxu0
        %v3096 = vadd.f32 0.0, %v3095
        %v3097 = vpop.f32.mrb[0].mxu0
        %v3098 = vpop.f32.mrb[0].mxu0
        %v3099 = vadd.f32 0.0, %v3098
        %v3100 = vpop.f32.mrb[0].mxu0
        %3101 = vmatprep.mubr.bf16.mxu0 0
        %3102 = vmatmul.mubr.bf16.gmra.mrb[0].mxu0 %v2989
        %v3103 = vpop.f32.mrb[0].mxu0
        %v3104 = vadd.f32 0.0, %v3103
        %v3105 = vpop.f32.mrb[0].mxu0
        %v3106 = vpop.f32.mrb[0].mxu0
        %v3107 = vadd.f32 0.0, %v3106
        %v3108 = vpop.f32.mrb[0].mxu0
        %3109 = vmatprep.mubr.bf16.mxu0 0
        %3110 = vmatmul.mubr.bf16.gmra.mrb[0].mxu0 %v2991
        %v3111 = vpop.f32.mrb[0].mxu0
        %v3112 = vadd.f32 0.0, %v3111
        %v3113 = vpop.f32.mrb[0].mxu0
        %v3114 = vpop.f32.mrb[0].mxu0
        %v3115 = vadd.f32 0.0, %v3114
        %v3116 = vpop.f32.mrb[0].mxu0
        %3117 = vdwg.mxu0
        %v3118 = vadd.f32 %v2950, %v3080
        %v3119 = vadd.f32 %v2951, %v3083
        %v3120 = vadd.f32 %v2952, %v3088
        %v3121 = vadd.f32 %v2953, %v3091
        %v3122 = vadd.f32 %v2954, %v3096
        %v3123 = vadd.f32 %v2955, %v3099
        %v3124 = vadd.f32 %v2956, %v3104
        %v3125 = vadd.f32 %v2957, %v3107
        %v3126 = vadd.f32 %v2958, %v3112
        %v3127 = vadd.f32 %v2959, %v3115
        %v3128 = vld [vmem:[%s1954 + $0x8] sm:$0xc]
        %v3129 = vld [vmem:[%s1954 + $0xc] sm:$0xf]
        %v3130 = vld [vmem:[%s1954 + $0x10] sm:$0xf]
        %v3131 = vld [vmem:[%s1954 + $0x14] sm:$0xf]
        %v3132 = vld [vmem:[%s1954 + $0x18] sm:$0xf]
        %v3133 = vld [vmem:[%s1954 + $0x1c] sm:$0xf]
        %v3134 = vld [vmem:[%s1954 + $0x20] sm:$0xf]
        %v3135 = vld [vmem:[%s1954 + $0x24] sm:$0xf]
        %v3136 = vld [vmem:[%s1954 + $0x28] sm:$0xf]
        %v3137 = vld [vmem:[%s1954 + $0x2c] sm:$0xf]
        %v3138 = vld [vmem:[%s1954 + $0x30] sm:$0x3]
        %s3139 = scalar_lea.vmem %s1, 960
        %v3140 = vld [vmem:[%s3139] sm:$0xf]
        %v3141 = vld [vmem:[%s3139 + $0x4] sm:$0xf]
        %v3142 = vld [vmem:[%s3139 + $0x8] sm:$0xf]
        %v3143 = vld [vmem:[%s3139 + $0xc] sm:$0xf]
        %v3144 = vld [vmem:[%s3139 + $0x10] sm:$0xf]
        %v3145 = vld [vmem:[%s3139 + $0x14] sm:$0xf]
        %v3146 = vld [vmem:[%s3139 + $0x18] sm:$0xf]
        %v3147 = vld [vmem:[%s3139 + $0x1c] sm:$0xf]
        %v3148 = vld [vmem:[%s3139 + $0x20] sm:$0xf]
        %v3149 = vld [vmem:[%s3139 + $0x24] sm:$0xf]
        %v3150 = vld [vmem:[%s3139 + $0x28] sm:$0xf]
        %v3151 = vld [vmem:[%s3139 + $0x2c] sm:$0xf]
        %v3152 = vld [vmem:[%s3139 + $0x30] sm:$0xf]
        %v3153 = vld [vmem:[%s3139 + $0x34] sm:$0xf]
        %v3154 = vld [vmem:[%s3139 + $0x38] sm:$0xf]
        %v3155 = vld [vmem:[%s3139 + $0x3c] sm:$0xf]
        %v3167 = vunpack.c.l.b16 %v3128
        %v3168 = vunpack.c.l.b16 %v3129
        %v3169 = vunpack.c.l.b16 %v3130
        %v3170 = vunpack.c.l.b16 %v3131
        %v3171 = vunpack.c.l.b16 %v3132
        %v3172 = vunpack.c.l.b16 %v3133
        %v3173 = vunpack.c.l.b16 %v3134
        %v3174 = vunpack.c.l.b16 %v3135
        %v3175 = vunpack.c.l.b16 %v3136
        %v3176 = vunpack.c.l.b16 %v3137
        %v3177 = vunpack.c.l.b16 %v3138
        %v3178 = vpack.c.b16 %v3168, %v3167
        %v3179 = vpack.c.b16 %v3170, %v3169
        %v3180 = vpack.c.b16 %v3172, %v3171
        %v3181 = vpack.c.b16 %v3174, %v3173
        %v3182 = vpack.c.b16 %v3176, %v3175
        %v3183 = vpack.c.b16 %v3177, %v3177
        %v3184 = vrot.slane %v3178, 2
        %v3185 = vrot.slane %v3179, 2
        %v3186 = vsel %vm1220, %v3184, %v3185
        %v3187 = vrot.slane %v3180, 2
        %v3188 = vsel %vm1220, %v3185, %v3187
        %v3189 = vrot.slane %v3181, 2
        %v3190 = vsel %vm1220, %v3187, %v3189
        %v3191 = vrot.slane %v3182, 2
        %v3192 = vsel %vm1220, %v3189, %v3191
        %v3193 = vrot.slane %v3183, 2
        %v3194 = vsel %vm1220, %v3191, %v3193
        %v3216 = vunpack.c.l.b16 %v3140
        %v3217 = vunpack.c.l.b16 %v3141
        %v3218 = vunpack.c.l.b16 %v3142
        %v3219 = vunpack.c.l.b16 %v3143
        %v3220 = vunpack.c.l.b16 %v3144
        %v3221 = vunpack.c.l.b16 %v3145
        %v3222 = vunpack.c.l.b16 %v3146
        %v3223 = vunpack.c.l.b16 %v3147
        %v3224 = vunpack.c.l.b16 %v3148
        %v3225 = vunpack.c.l.b16 %v3149
        %v3226 = vunpack.c.l.b16 %v3150
        %v3227 = vunpack.c.l.b16 %v3151
        %v3228 = vunpack.c.l.b16 %v3152
        %v3229 = vunpack.c.l.b16 %v3153
        %v3230 = vunpack.c.l.b16 %v3154
        %v3231 = vunpack.c.l.b16 %v3155
        %v3232 = vpack.c.b16 %v3217, %v3216
        %v3233 = vpack.c.b16 %v3219, %v3218
        %v3234 = vpack.c.b16 %v3221, %v3220
        %v3235 = vpack.c.b16 %v3223, %v3222
        %v3236 = vpack.c.b16 %v3225, %v3224
        %v3237 = vpack.c.b16 %v3227, %v3226
        %v3238 = vpack.c.b16 %v3229, %v3228
        %v3239 = vpack.c.b16 %v3231, %v3230
        %3248 = vmatprep.subr.bf16.mxu0 0
        %3249 = vmatpush1.bf16.msra.mxu0 %v3232
        %3250 = vmatprep.subr.bf16.mxu0 0
        %3251 = vmatpush1.bf16.msra.mxu0 %v3233
        %3252 = vmatprep.subr.bf16.mxu0 0
        %3253 = vmatpush1.bf16.msra.mxu0 %v3234
        %3254 = vmatprep.subr.bf16.mxu0 0
        %3255 = vmatpush1.bf16.msra.mxu0 %v3235
        %3256 = vmatprep.subr.bf16.mxu0 0
        %3257 = vmatpush1.bf16.msra.mxu0 %v3236
        %3258 = vmatprep.subr.bf16.mxu0 0
        %3259 = vmatpush1.bf16.msra.mxu0 %v3237
        %3260 = vmatprep.subr.bf16.mxu0 0
        %3261 = vmatpush1.bf16.msra.mxu0 %v3238
        %3262 = vmatprep.subr.bf16.mxu0 0
        %3263 = vmatpush1.bf16.msra.mxu0 %v3239
        %3264 = vmatprep.subr.bf16.mxu0 0
        %3265 = vmatpush1.bf16.msra.mxu0 0
        %3266 = vmatprep.subr.bf16.mxu0 0
        %3267 = vmatpush1.bf16.msra.mxu0 0
        %3268 = vmatprep.subr.bf16.mxu0 0
        %3269 = vmatpush1.bf16.msra.mxu0 0
        %3270 = vmatprep.subr.bf16.mxu0 0
        %3271 = vmatpush1.bf16.msra.mxu0 0
        %3272 = vmatprep.subr.bf16.mxu0 0
        %3273 = vmatpush1.bf16.msra.mxu0 0
        %3274 = vmatprep.subr.bf16.mxu0 0
        %3275 = vmatpush1.bf16.msra.mxu0 0
        %3276 = vmatprep.subr.bf16.mxu0 0
        %3277 = vmatpush1.bf16.msra.mxu0 0
        %3278 = vmatprep.subr.bf16.mxu0 0
        %3279 = vmatpush1.bf16.msra.mxu0 0
        %3280 = vmatprep.mubr.bf16.mxu0 0
        %3281 = vmatmul.mubr.bf16.gmra.mrb[0].mxu0 %v3186
        %v3282 = vpop.f32.mrb[0].mxu0
        %v3283 = vadd.f32 0.0, %v3282
        %v3284 = vpop.f32.mrb[0].mxu0
        %v3285 = vpop.f32.mrb[0].mxu0
        %v3286 = vadd.f32 0.0, %v3285
        %v3287 = vpop.f32.mrb[0].mxu0
        %3288 = vmatprep.mubr.bf16.mxu0 0
        %3289 = vmatmul.mubr.bf16.gmra.mrb[0].mxu0 %v3188
        %v3290 = vpop.f32.mrb[0].mxu0
        %v3291 = vadd.f32 0.0, %v3290
        %v3292 = vpop.f32.mrb[0].mxu0
        %v3293 = vpop.f32.mrb[0].mxu0
        %v3294 = vadd.f32 0.0, %v3293
        %v3295 = vpop.f32.mrb[0].mxu0
        %3296 = vmatprep.mubr.bf16.mxu0 0
        %3297 = vmatmul.mubr.bf16.gmra.mrb[0].mxu0 %v3190
        %v3298 = vpop.f32.mrb[0].mxu0
        %v3299 = vadd.f32 0.0, %v3298
        %v3300 = vpop.f32.mrb[0].mxu0
        %v3301 = vpop.f32.mrb[0].mxu0
        %v3302 = vadd.f32 0.0, %v3301
        %v3303 = vpop.f32.mrb[0].mxu0
        %3304 = vmatprep.mubr.bf16.mxu0 0
        %3305 = vmatmul.mubr.bf16.gmra.mrb[0].mxu0 %v3192
        %v3306 = vpop.f32.mrb[0].mxu0
        %v3307 = vadd.f32 0.0, %v3306
        %v3308 = vpop.f32.mrb[0].mxu0
        %v3309 = vpop.f32.mrb[0].mxu0
        %v3310 = vadd.f32 0.0, %v3309
        %v3311 = vpop.f32.mrb[0].mxu0
        %3312 = vmatprep.mubr.bf16.mxu0 0
        %3313 = vmatmul.mubr.bf16.gmra.mrb[0].mxu0 %v3194
        %v3314 = vpop.f32.mrb[0].mxu0
        %v3315 = vadd.f32 0.0, %v3314
        %v3316 = vpop.f32.mrb[0].mxu0
        %v3317 = vpop.f32.mrb[0].mxu0
        %v3318 = vadd.f32 0.0, %v3317
        %v3319 = vpop.f32.mrb[0].mxu0
        %3320 = vdwg.mxu0
        %v3321 = vadd.f32 %v3118, %v3283
        %v3322 = vadd.f32 %v3119, %v3286
        %v3323 = vadd.f32 %v3120, %v3291
        %v3324 = vadd.f32 %v3121, %v3294
        %v3325 = vadd.f32 %v3122, %v3299
        %v3326 = vadd.f32 %v3123, %v3302
        %v3327 = vadd.f32 %v3124, %v3307
        %v3328 = vadd.f32 %v3125, %v3310
        %v3329 = vadd.f32 %v3126, %v3315
        %v3330 = vadd.f32 %v3127, %v3318
        %v3331 = vld [vmem:[%s1954 + $0x30] sm:$0x7]
        %s3332 = scalar_lea.vmem %s1, 1024
        %v3333 = vld [vmem:[%s3332] sm:$0xf]
        %v3334 = vld [vmem:[%s3332 + $0x4] sm:$0xf]
        %v3335 = vld [vmem:[%s3332 + $0x8] sm:$0xf]
        %v3336 = vld [vmem:[%s3332 + $0xc] sm:$0xf]
        %v3337 = vld [vmem:[%s3332 + $0x10] sm:$0xf]
        %v3338 = vld [vmem:[%s3332 + $0x14] sm:$0xf]
        %v3339 = vld [vmem:[%s3332 + $0x18] sm:$0xf]
        %v3340 = vld [vmem:[%s3332 + $0x1c] sm:$0xf]
        %v3341 = vld [vmem:[%s3332 + $0x20] sm:$0xf]
        %v3342 = vld [vmem:[%s3332 + $0x24] sm:$0xf]
        %v3343 = vld [vmem:[%s3332 + $0x28] sm:$0xf]
        %v3344 = vld [vmem:[%s3332 + $0x2c] sm:$0xf]
        %v3345 = vld [vmem:[%s3332 + $0x30] sm:$0xf]
        %v3346 = vld [vmem:[%s3332 + $0x34] sm:$0xf]
        %v3347 = vld [vmem:[%s3332 + $0x38] sm:$0xf]
        %v3348 = vld [vmem:[%s3332 + $0x3c] sm:$0xf]
        %v3350 = vunpack.c.l.b16 %v3331
        %v3351 = vpack.c.b16 %v3350, %v3350
        %v3353 = vshrl.u32 %v3178, 16
        %v3355 = vrot.slane %v3353, 2
        %v3356 = vshll.u32 %v3178, 16
        %v3358 = vrot.slane %v3356, 3
        %v3359 = vor.u32 %v3355, %v3358
        %v3361 = vshrl.u32 %v3179, 16
        %v3363 = vrot.slane %v3361, 2
        %v3364 = vshll.u32 %v3179, 16
        %v3366 = vrot.slane %v3364, 3
        %v3367 = vor.u32 %v3363, %v3366
        %v3368 = vsel %vm1592, %v3359, %v3367
        %v3370 = vshrl.u32 %v3180, 16
        %v3372 = vrot.slane %v3370, 2
        %v3373 = vshll.u32 %v3180, 16
        %v3375 = vrot.slane %v3373, 3
        %v3376 = vor.u32 %v3372, %v3375
        %v3377 = vsel %vm1592, %v3367, %v3376
        %v3379 = vshrl.u32 %v3181, 16
        %v3381 = vrot.slane %v3379, 2
        %v3382 = vshll.u32 %v3181, 16
        %v3384 = vrot.slane %v3382, 3
        %v3385 = vor.u32 %v3381, %v3384
        %v3386 = vsel %vm1592, %v3376, %v3385
        %v3388 = vshrl.u32 %v3182, 16
        %v3390 = vrot.slane %v3388, 2
        %v3391 = vshll.u32 %v3182, 16
        %v3393 = vrot.slane %v3391, 3
        %v3394 = vor.u32 %v3390, %v3393
        %v3395 = vsel %vm1592, %v3385, %v3394
        %v3397 = vshrl.u32 %v3351, 16
        %v3399 = vrot.slane %v3397, 2
        %v3400 = vshll.u32 %v3351, 16
        %v3402 = vrot.slane %v3400, 3
        %v3403 = vor.u32 %v3399, %v3402
        %v3404 = vsel %vm1592, %v3394, %v3403
        %v3426 = vunpack.c.l.b16 %v3333
        %v3427 = vunpack.c.l.b16 %v3334
        %v3428 = vunpack.c.l.b16 %v3335
        %v3429 = vunpack.c.l.b16 %v3336
        %v3430 = vunpack.c.l.b16 %v3337
        %v3431 = vunpack.c.l.b16 %v3338
        %v3432 = vunpack.c.l.b16 %v3339
        %v3433 = vunpack.c.l.b16 %v3340
        %v3434 = vunpack.c.l.b16 %v3341
        %v3435 = vunpack.c.l.b16 %v3342
        %v3436 = vunpack.c.l.b16 %v3343
        %v3437 = vunpack.c.l.b16 %v3344
        %v3438 = vunpack.c.l.b16 %v3345
        %v3439 = vunpack.c.l.b16 %v3346
        %v3440 = vunpack.c.l.b16 %v3347
        %v3441 = vunpack.c.l.b16 %v3348
        %v3442 = vpack.c.b16 %v3427, %v3426
        %v3443 = vpack.c.b16 %v3429, %v3428
        %v3444 = vpack.c.b16 %v3431, %v3430
        %v3445 = vpack.c.b16 %v3433, %v3432
        %v3446 = vpack.c.b16 %v3435, %v3434
        %v3447 = vpack.c.b16 %v3437, %v3436
        %v3448 = vpack.c.b16 %v3439, %v3438
        %v3449 = vpack.c.b16 %v3441, %v3440
        %3458 = vmatprep.subr.bf16.mxu0 0
        %3459 = vmatpush1.bf16.msra.mxu0 %v3442
        %3460 = vmatprep.subr.bf16.mxu0 0
        %3461 = vmatpush1.bf16.msra.mxu0 %v3443
        %3462 = vmatprep.subr.bf16.mxu0 0
        %3463 = vmatpush1.bf16.msra.mxu0 %v3444
        %3464 = vmatprep.subr.bf16.mxu0 0
        %3465 = vmatpush1.bf16.msra.mxu0 %v3445
        %3466 = vmatprep.subr.bf16.mxu0 0
        %3467 = vmatpush1.bf16.msra.mxu0 %v3446
        %3468 = vmatprep.subr.bf16.mxu0 0
        %3469 = vmatpush1.bf16.msra.mxu0 %v3447
        %3470 = vmatprep.subr.bf16.mxu0 0
        %3471 = vmatpush1.bf16.msra.mxu0 %v3448
        %3472 = vmatprep.subr.bf16.mxu0 0
        %3473 = vmatpush1.bf16.msra.mxu0 %v3449
        %3474 = vmatprep.subr.bf16.mxu0 0
        %3475 = vmatpush1.bf16.msra.mxu0 0
        %3476 = vmatprep.subr.bf16.mxu0 0
        %3477 = vmatpush1.bf16.msra.mxu0 0
        %3478 = vmatprep.subr.bf16.mxu0 0
        %3479 = vmatpush1.bf16.msra.mxu0 0
        %3480 = vmatprep.subr.bf16.mxu0 0
        %3481 = vmatpush1.bf16.msra.mxu0 0
        %3482 = vmatprep.subr.bf16.mxu0 0
        %3483 = vmatpush1.bf16.msra.mxu0 0
        %3484 = vmatprep.subr.bf16.mxu0 0
        %3485 = vmatpush1.bf16.msra.mxu0 0
        %3486 = vmatprep.subr.bf16.mxu0 0
        %3487 = vmatpush1.bf16.msra.mxu0 0
        %3488 = vmatprep.subr.bf16.mxu0 0
        %3489 = vmatpush1.bf16.msra.mxu0 0
        %3490 = vmatprep.mubr.bf16.mxu0 0
        %3491 = vmatmul.mubr.bf16.gmra.mrb[0].mxu0 %v3368
        %v3492 = vpop.f32.mrb[0].mxu0
        %v3493 = vadd.f32 0.0, %v3492
        %v3494 = vpop.f32.mrb[0].mxu0
        %v3495 = vpop.f32.mrb[0].mxu0
        %v3496 = vadd.f32 0.0, %v3495
        %v3497 = vpop.f32.mrb[0].mxu0
        %3498 = vmatprep.mubr.bf16.mxu0 0
        %3499 = vmatmul.mubr.bf16.gmra.mrb[0].mxu0 %v3377
        %v3500 = vpop.f32.mrb[0].mxu0
        %v3501 = vadd.f32 0.0, %v3500
        %v3502 = vpop.f32.mrb[0].mxu0
        %v3503 = vpop.f32.mrb[0].mxu0
        %v3504 = vadd.f32 0.0, %v3503
        %v3505 = vpop.f32.mrb[0].mxu0
        %3506 = vmatprep.mubr.bf16.mxu0 0
        %3507 = vmatmul.mubr.bf16.gmra.mrb[0].mxu0 %v3386
        %v3508 = vpop.f32.mrb[0].mxu0
        %v3509 = vadd.f32 0.0, %v3508
        %v3510 = vpop.f32.mrb[0].mxu0
        %v3511 = vpop.f32.mrb[0].mxu0
        %v3512 = vadd.f32 0.0, %v3511
        %v3513 = vpop.f32.mrb[0].mxu0
        %3514 = vmatprep.mubr.bf16.mxu0 0
        %3515 = vmatmul.mubr.bf16.gmra.mrb[0].mxu0 %v3395
        %v3516 = vpop.f32.mrb[0].mxu0
        %v3517 = vadd.f32 0.0, %v3516
        %v3518 = vpop.f32.mrb[0].mxu0
        %v3519 = vpop.f32.mrb[0].mxu0
        %v3520 = vadd.f32 0.0, %v3519
        %v3521 = vpop.f32.mrb[0].mxu0
        %3522 = vmatprep.mubr.bf16.mxu0 0
        %3523 = vmatmul.mubr.bf16.gmra.mrb[0].mxu0 %v3404
        %v3524 = vpop.f32.mrb[0].mxu0
        %v3525 = vadd.f32 0.0, %v3524
        %v3526 = vpop.f32.mrb[0].mxu0
        %v3527 = vpop.f32.mrb[0].mxu0
        %v3528 = vadd.f32 0.0, %v3527
        %v3529 = vpop.f32.mrb[0].mxu0
        %3530 = vdwg.mxu0
        %v3531 = vadd.f32 %v3321, %v3493
        %v3532 = vadd.f32 %v3322, %v3496
        %v3533 = vadd.f32 %v3323, %v3501
        %v3534 = vadd.f32 %v3324, %v3504
        %v3535 = vadd.f32 %v3325, %v3509
        %v3536 = vadd.f32 %v3326, %v3512
        %v3537 = vadd.f32 %v3327, %v3517
        %v3538 = vadd.f32 %v3328, %v3520
        %v3539 = vadd.f32 %v3329, %v3525
        %v3540 = vadd.f32 %v3330, %v3528
        %v3541 = vld [vmem:[%s1954 + $0x8] sm:$0x8]
        %s3542 = scalar_lea.vmem %s1, 1088
        %v3543 = vld [vmem:[%s3542] sm:$0xf]
        %v3544 = vld [vmem:[%s3542 + $0x4] sm:$0xf]
        %v3545 = vld [vmem:[%s3542 + $0x8] sm:$0xf]
        %v3546 = vld [vmem:[%s3542 + $0xc] sm:$0xf]
        %v3547 = vld [vmem:[%s3542 + $0x10] sm:$0xf]
        %v3548 = vld [vmem:[%s3542 + $0x14] sm:$0xf]
        %v3549 = vld [vmem:[%s3542 + $0x18] sm:$0xf]
        %v3550 = vld [vmem:[%s3542 + $0x1c] sm:$0xf]
        %v3551 = vld [vmem:[%s3542 + $0x20] sm:$0xf]
        %v3552 = vld [vmem:[%s3542 + $0x24] sm:$0xf]
        %v3553 = vld [vmem:[%s3542 + $0x28] sm:$0xf]
        %v3554 = vld [vmem:[%s3542 + $0x2c] sm:$0xf]
        %v3555 = vld [vmem:[%s3542 + $0x30] sm:$0xf]
        %v3556 = vld [vmem:[%s3542 + $0x34] sm:$0xf]
        %v3557 = vld [vmem:[%s3542 + $0x38] sm:$0xf]
        %v3558 = vld [vmem:[%s3542 + $0x3c] sm:$0xf]
        %v3560 = vunpack.c.l.b16 %v3541
        %v3561 = vpack.c.b16 %v3168, %v3560
        %v3562 = vrot.slane %v3561, 3
        %v3563 = vrot.slane %v3179, 3
        %v3564 = vsel %vm1803, %v3562, %v3563
        %v3565 = vrot.slane %v3180, 3
        %v3566 = vsel %vm1803, %v3563, %v3565
        %v3567 = vrot.slane %v3181, 3
        %v3568 = vsel %vm1803, %v3565, %v3567
        %v3569 = vrot.slane %v3182, 3
        %v3570 = vsel %vm1803, %v3567, %v3569
        %v3571 = vrot.slane %v3351, 3
        %v3572 = vsel %vm1803, %v3569, %v3571
        %v3594 = vunpack.c.l.b16 %v3543
        %v3595 = vunpack.c.l.b16 %v3544
        %v3596 = vunpack.c.l.b16 %v3545
        %v3597 = vunpack.c.l.b16 %v3546
        %v3598 = vunpack.c.l.b16 %v3547
        %v3599 = vunpack.c.l.b16 %v3548
        %v3600 = vunpack.c.l.b16 %v3549
        %v3601 = vunpack.c.l.b16 %v3550
        %v3602 = vunpack.c.l.b16 %v3551
        %v3603 = vunpack.c.l.b16 %v3552
        %v3604 = vunpack.c.l.b16 %v3553
        %v3605 = vunpack.c.l.b16 %v3554
        %v3606 = vunpack.c.l.b16 %v3555
        %v3607 = vunpack.c.l.b16 %v3556
        %v3608 = vunpack.c.l.b16 %v3557
        %v3609 = vunpack.c.l.b16 %v3558
        %v3610 = vpack.c.b16 %v3595, %v3594
        %v3611 = vpack.c.b16 %v3597, %v3596
        %v3612 = vpack.c.b16 %v3599, %v3598
        %v3613 = vpack.c.b16 %v3601, %v3600
        %v3614 = vpack.c.b16 %v3603, %v3602
        %v3615 = vpack.c.b16 %v3605, %v3604
        %v3616 = vpack.c.b16 %v3607, %v3606
        %v3617 = vpack.c.b16 %v3609, %v3608
        %3626 = vmatprep.subr.bf16.mxu0 0
        %3627 = vmatpush1.bf16.msra.mxu0 %v3610
        %3628 = vmatprep.subr.bf16.mxu0 0
        %3629 = vmatpush1.bf16.msra.mxu0 %v3611
        %3630 = vmatprep.subr.bf16.mxu0 0
        %3631 = vmatpush1.bf16.msra.mxu0 %v3612
        %3632 = vmatprep.subr.bf16.mxu0 0
        %3633 = vmatpush1.bf16.msra.mxu0 %v3613
        %3634 = vmatprep.subr.bf16.mxu0 0
        %3635 = vmatpush1.bf16.msra.mxu0 %v3614
        %3636 = vmatprep.subr.bf16.mxu0 0
        %3637 = vmatpush1.bf16.msra.mxu0 %v3615
        %3638 = vmatprep.subr.bf16.mxu0 0
        %3639 = vmatpush1.bf16.msra.mxu0 %v3616
        %3640 = vmatprep.subr.bf16.mxu0 0
        %3641 = vmatpush1.bf16.msra.mxu0 %v3617
        %3642 = vmatprep.subr.bf16.mxu0 0
        %3643 = vmatpush1.bf16.msra.mxu0 0
        %3644 = vmatprep.subr.bf16.mxu0 0
        %3645 = vmatpush1.bf16.msra.mxu0 0
        %3646 = vmatprep.subr.bf16.mxu0 0
        %3647 = vmatpush1.bf16.msra.mxu0 0
        %3648 = vmatprep.subr.bf16.mxu0 0
        %3649 = vmatpush1.bf16.msra.mxu0 0
        %3650 = vmatprep.subr.bf16.mxu0 0
        %3651 = vmatpush1.bf16.msra.mxu0 0
        %3652 = vmatprep.subr.bf16.mxu0 0
        %3653 = vmatpush1.bf16.msra.mxu0 0
        %3654 = vmatprep.subr.bf16.mxu0 0
        %3655 = vmatpush1.bf16.msra.mxu0 0
        %3656 = vmatprep.subr.bf16.mxu0 0
        %3657 = vmatpush1.bf16.msra.mxu0 0
        %3658 = vmatprep.mubr.bf16.mxu0 0
        %3659 = vmatmul.mubr.bf16.gmra.mrb[0].mxu0 %v3564
        %v3660 = vpop.f32.mrb[0].mxu0
        %v3661 = vadd.f32 0.0, %v3660
        %v3662 = vpop.f32.mrb[0].mxu0
        %v3663 = vpop.f32.mrb[0].mxu0
        %v3664 = vadd.f32 0.0, %v3663
        %v3665 = vpop.f32.mrb[0].mxu0
        %3666 = vmatprep.mubr.bf16.mxu0 0
        %3667 = vmatmul.mubr.bf16.gmra.mrb[0].mxu0 %v3566
        %v3668 = vpop.f32.mrb[0].mxu0
        %v3669 = vadd.f32 0.0, %v3668
        %v3670 = vpop.f32.mrb[0].mxu0
        %v3671 = vpop.f32.mrb[0].mxu0
        %v3672 = vadd.f32 0.0, %v3671
        %v3673 = vpop.f32.mrb[0].mxu0
        %3674 = vmatprep.mubr.bf16.mxu0 0
        %3675 = vmatmul.mubr.bf16.gmra.mrb[0].mxu0 %v3568
        %v3676 = vpop.f32.mrb[0].mxu0
        %v3677 = vadd.f32 0.0, %v3676
        %v3678 = vpop.f32.mrb[0].mxu0
        %v3679 = vpop.f32.mrb[0].mxu0
        %v3680 = vadd.f32 0.0, %v3679
        %v3681 = vpop.f32.mrb[0].mxu0
        %3682 = vmatprep.mubr.bf16.mxu0 0
        %3683 = vmatmul.mubr.bf16.gmra.mrb[0].mxu0 %v3570
        %v3684 = vpop.f32.mrb[0].mxu0
        %v3685 = vadd.f32 0.0, %v3684
        %v3686 = vpop.f32.mrb[0].mxu0
        %v3687 = vpop.f32.mrb[0].mxu0
        %v3688 = vadd.f32 0.0, %v3687
        %v3689 = vpop.f32.mrb[0].mxu0
        %3690 = vmatprep.mubr.bf16.mxu0 0
        %3691 = vmatmul.mubr.bf16.gmra.mrb[0].mxu0 %v3572
        %v3692 = vpop.f32.mrb[0].mxu0
        %v3693 = vadd.f32 0.0, %v3692
        %v3694 = vpop.f32.mrb[0].mxu0
        %v3695 = vpop.f32.mrb[0].mxu0
        %v3696 = vadd.f32 0.0, %v3695
        %v3697 = vpop.f32.mrb[0].mxu0
        %3698 = vdwg.mxu0
        %v3699 = vadd.f32 %v3531, %v3661
        %v3700 = vadd.f32 %v3532, %v3664
        %v3701 = vadd.f32 %v3533, %v3669
        %v3702 = vadd.f32 %v3534, %v3672
        %v3703 = vadd.f32 %v3535, %v3677
        %v3704 = vadd.f32 %v3536, %v3680
        %v3705 = vadd.f32 %v3537, %v3685
        %v3706 = vadd.f32 %v3538, %v3688
        %v3707 = vadd.f32 %v3539, %v3693
        %v3708 = vadd.f32 %v3540, %v3696
        %s3709 = sadd.s32 %s239, 2
        %s3710 = smul.u32 %s3709, 14
        %s3711 = smul.addr %s3710, 4
        %s3712 = scalar_lea.vmem %s214, %s3711
        %v3713 = vld [vmem:[%s3712] sm:$0xf]
        %v3714 = vld [vmem:[%s3712 + $0x4] sm:$0xf]
        %v3715 = vld [vmem:[%s3712 + $0x8] sm:$0xf]
        %v3716 = vld [vmem:[%s3712 + $0xc] sm:$0xf]
        %v3717 = vld [vmem:[%s3712 + $0x10] sm:$0xf]
        %v3718 = vld [vmem:[%s3712 + $0x14] sm:$0xf]
        %v3719 = vld [vmem:[%s3712 + $0x18] sm:$0xf]
        %v3720 = vld [vmem:[%s3712 + $0x1c] sm:$0xf]
        %v3721 = vld [vmem:[%s3712 + $0x20] sm:$0xf]
        %v3722 = vld [vmem:[%s3712 + $0x24] sm:$0xf]
        %s3723 = scalar_lea.vmem %s1, 1152
        %v3724 = vld [vmem:[%s3723] sm:$0xf]
        %v3725 = vld [vmem:[%s3723 + $0x4] sm:$0xf]
        %v3726 = vld [vmem:[%s3723 + $0x8] sm:$0xf]
        %v3727 = vld [vmem:[%s3723 + $0xc] sm:$0xf]
        %v3728 = vld [vmem:[%s3723 + $0x10] sm:$0xf]
        %v3729 = vld [vmem:[%s3723 + $0x14] sm:$0xf]
        %v3730 = vld [vmem:[%s3723 + $0x18] sm:$0xf]
        %v3731 = vld [vmem:[%s3723 + $0x1c] sm:$0xf]
        %v3732 = vld [vmem:[%s3723 + $0x20] sm:$0xf]
        %v3733 = vld [vmem:[%s3723 + $0x24] sm:$0xf]
        %v3734 = vld [vmem:[%s3723 + $0x28] sm:$0xf]
        %v3735 = vld [vmem:[%s3723 + $0x2c] sm:$0xf]
        %v3736 = vld [vmem:[%s3723 + $0x30] sm:$0xf]
        %v3737 = vld [vmem:[%s3723 + $0x34] sm:$0xf]
        %v3738 = vld [vmem:[%s3723 + $0x38] sm:$0xf]
        %v3739 = vld [vmem:[%s3723 + $0x3c] sm:$0xf]
        %v3750 = vunpack.c.l.b16 %v3713
        %v3751 = vunpack.c.l.b16 %v3714
        %v3752 = vunpack.c.l.b16 %v3715
        %v3753 = vunpack.c.l.b16 %v3716
        %v3754 = vunpack.c.l.b16 %v3717
        %v3755 = vunpack.c.l.b16 %v3718
        %v3756 = vunpack.c.l.b16 %v3719
        %v3757 = vunpack.c.l.b16 %v3720
        %v3758 = vunpack.c.l.b16 %v3721
        %v3759 = vunpack.c.l.b16 %v3722
        %v3760 = vpack.c.b16 %v3751, %v3750
        %v3761 = vpack.c.b16 %v3753, %v3752
        %v3762 = vpack.c.b16 %v3755, %v3754
        %v3763 = vpack.c.b16 %v3757, %v3756
        %v3764 = vpack.c.b16 %v3759, %v3758
        %v3786 = vunpack.c.l.b16 %v3724
        %v3787 = vunpack.c.l.b16 %v3725
        %v3788 = vunpack.c.l.b16 %v3726
        %v3789 = vunpack.c.l.b16 %v3727
        %v3790 = vunpack.c.l.b16 %v3728
        %v3791 = vunpack.c.l.b16 %v3729
        %v3792 = vunpack.c.l.b16 %v3730
        %v3793 = vunpack.c.l.b16 %v3731
        %v3794 = vunpack.c.l.b16 %v3732
        %v3795 = vunpack.c.l.b16 %v3733
        %v3796 = vunpack.c.l.b16 %v3734
        %v3797 = vunpack.c.l.b16 %v3735
        %v3798 = vunpack.c.l.b16 %v3736
        %v3799 = vunpack.c.l.b16 %v3737
        %v3800 = vunpack.c.l.b16 %v3738
        %v3801 = vunpack.c.l.b16 %v3739
        %v3802 = vpack.c.b16 %v3787, %v3786
        %v3803 = vpack.c.b16 %v3789, %v3788
        %v3804 = vpack.c.b16 %v3791, %v3790
        %v3805 = vpack.c.b16 %v3793, %v3792
        %v3806 = vpack.c.b16 %v3795, %v3794
        %v3807 = vpack.c.b16 %v3797, %v3796
        %v3808 = vpack.c.b16 %v3799, %v3798
        %v3809 = vpack.c.b16 %v3801, %v3800
        %3818 = vmatprep.subr.bf16.mxu0 0
        %3819 = vmatpush1.bf16.msra.mxu0 %v3802
        %3820 = vmatprep.subr.bf16.mxu0 0
        %3821 = vmatpush1.bf16.msra.mxu0 %v3803
        %3822 = vmatprep.subr.bf16.mxu0 0
        %3823 = vmatpush1.bf16.msra.mxu0 %v3804
        %3824 = vmatprep.subr.bf16.mxu0 0
        %3825 = vmatpush1.bf16.msra.mxu0 %v3805
        %3826 = vmatprep.subr.bf16.mxu0 0
        %3827 = vmatpush1.bf16.msra.mxu0 %v3806
        %3828 = vmatprep.subr.bf16.mxu0 0
        %3829 = vmatpush1.bf16.msra.mxu0 %v3807
        %3830 = vmatprep.subr.bf16.mxu0 0
        %3831 = vmatpush1.bf16.msra.mxu0 %v3808
        %3832 = vmatprep.subr.bf16.mxu0 0
        %3833 = vmatpush1.bf16.msra.mxu0 %v3809
        %3834 = vmatprep.subr.bf16.mxu0 0
        %3835 = vmatpush1.bf16.msra.mxu0 0
        %3836 = vmatprep.subr.bf16.mxu0 0
        %3837 = vmatpush1.bf16.msra.mxu0 0
        %3838 = vmatprep.subr.bf16.mxu0 0
        %3839 = vmatpush1.bf16.msra.mxu0 0
        %3840 = vmatprep.subr.bf16.mxu0 0
        %3841 = vmatpush1.bf16.msra.mxu0 0
        %3842 = vmatprep.subr.bf16.mxu0 0
        %3843 = vmatpush1.bf16.msra.mxu0 0
        %3844 = vmatprep.subr.bf16.mxu0 0
        %3845 = vmatpush1.bf16.msra.mxu0 0
        %3846 = vmatprep.subr.bf16.mxu0 0
        %3847 = vmatpush1.bf16.msra.mxu0 0
        %3848 = vmatprep.subr.bf16.mxu0 0
        %3849 = vmatpush1.bf16.msra.mxu0 0
        %3850 = vmatprep.mubr.bf16.mxu0 0
        %3851 = vmatmul.mubr.bf16.gmra.mrb[0].mxu0 %v3760
        %v3852 = vpop.f32.mrb[0].mxu0
        %v3853 = vadd.f32 0.0, %v3852
        %v3854 = vpop.f32.mrb[0].mxu0
        %v3855 = vpop.f32.mrb[0].mxu0
        %v3856 = vadd.f32 0.0, %v3855
        %v3857 = vpop.f32.mrb[0].mxu0
        %3858 = vmatprep.mubr.bf16.mxu0 0
        %3859 = vmatmul.mubr.bf16.gmra.mrb[0].mxu0 %v3761
        %v3860 = vpop.f32.mrb[0].mxu0
        %v3861 = vadd.f32 0.0, %v3860
        %v3862 = vpop.f32.mrb[0].mxu0
        %v3863 = vpop.f32.mrb[0].mxu0
        %v3864 = vadd.f32 0.0, %v3863
        %v3865 = vpop.f32.mrb[0].mxu0
        %3866 = vmatprep.mubr.bf16.mxu0 0
        %3867 = vmatmul.mubr.bf16.gmra.mrb[0].mxu0 %v3762
        %v3868 = vpop.f32.mrb[0].mxu0
        %v3869 = vadd.f32 0.0, %v3868
        %v3870 = vpop.f32.mrb[0].mxu0
        %v3871 = vpop.f32.mrb[0].mxu0
        %v3872 = vadd.f32 0.0, %v3871
        %v3873 = vpop.f32.mrb[0].mxu0
        %3874 = vmatprep.mubr.bf16.mxu0 0
        %3875 = vmatmul.mubr.bf16.gmra.mrb[0].mxu0 %v3763
        %v3876 = vpop.f32.mrb[0].mxu0
        %v3877 = vadd.f32 0.0, %v3876
        %v3878 = vpop.f32.mrb[0].mxu0
        %v3879 = vpop.f32.mrb[0].mxu0
        %v3880 = vadd.f32 0.0, %v3879
        %v3881 = vpop.f32.mrb[0].mxu0
        %3882 = vmatprep.mubr.bf16.mxu0 0
        %3883 = vmatmul.mubr.bf16.gmra.mrb[0].mxu0 %v3764
        %v3884 = vpop.f32.mrb[0].mxu0
        %v3885 = vadd.f32 0.0, %v3884
        %v3886 = vpop.f32.mrb[0].mxu0
        %v3887 = vpop.f32.mrb[0].mxu0
        %v3888 = vadd.f32 0.0, %v3887
        %v3889 = vpop.f32.mrb[0].mxu0
        %3890 = vdwg.mxu0
        %v3891 = vadd.f32 %v3699, %v3853
        %v3892 = vadd.f32 %v3700, %v3856
        %v3893 = vadd.f32 %v3701, %v3861
        %v3894 = vadd.f32 %v3702, %v3864
        %v3895 = vadd.f32 %v3703, %v3869
        %v3896 = vadd.f32 %v3704, %v3872
        %v3897 = vadd.f32 %v3705, %v3877
        %v3898 = vadd.f32 %v3706, %v3880
        %v3899 = vadd.f32 %v3707, %v3885
        %v3900 = vadd.f32 %v3708, %v3888
        %v3901 = vld [vmem:[%s3712] sm:$0xf]
        %v3902 = vld [vmem:[%s3712 + $0x4] sm:$0xf]
        %v3903 = vld [vmem:[%s3712 + $0x8] sm:$0xf]
        %v3904 = vld [vmem:[%s3712 + $0xc] sm:$0xf]
        %v3905 = vld [vmem:[%s3712 + $0x10] sm:$0xf]
        %v3906 = vld [vmem:[%s3712 + $0x14] sm:$0xf]
        %v3907 = vld [vmem:[%s3712 + $0x18] sm:$0xf]
        %v3908 = vld [vmem:[%s3712 + $0x1c] sm:$0xf]
        %v3909 = vld [vmem:[%s3712 + $0x20] sm:$0xf]
        %v3910 = vld [vmem:[%s3712 + $0x24] sm:$0xf]
        %v3911 = vld [vmem:[%s3712 + $0x28] sm:$0x1]
        %s3912 = scalar_lea.vmem %s1, 1216
        %v3913 = vld [vmem:[%s3912] sm:$0xf]
        %v3914 = vld [vmem:[%s3912 + $0x4] sm:$0xf]
        %v3915 = vld [vmem:[%s3912 + $0x8] sm:$0xf]
        %v3916 = vld [vmem:[%s3912 + $0xc] sm:$0xf]
        %v3917 = vld [vmem:[%s3912 + $0x10] sm:$0xf]
        %v3918 = vld [vmem:[%s3912 + $0x14] sm:$0xf]
        %v3919 = vld [vmem:[%s3912 + $0x18] sm:$0xf]
        %v3920 = vld [vmem:[%s3912 + $0x1c] sm:$0xf]
        %v3921 = vld [vmem:[%s3912 + $0x20] sm:$0xf]
        %v3922 = vld [vmem:[%s3912 + $0x24] sm:$0xf]
        %v3923 = vld [vmem:[%s3912 + $0x28] sm:$0xf]
        %v3924 = vld [vmem:[%s3912 + $0x2c] sm:$0xf]
        %v3925 = vld [vmem:[%s3912 + $0x30] sm:$0xf]
        %v3926 = vld [vmem:[%s3912 + $0x34] sm:$0xf]
        %v3927 = vld [vmem:[%s3912 + $0x38] sm:$0xf]
        %v3928 = vld [vmem:[%s3912 + $0x3c] sm:$0xf]
        %v3940 = vunpack.c.l.b16 %v3901
        %v3941 = vunpack.c.l.b16 %v3902
        %v3942 = vunpack.c.l.b16 %v3903
        %v3943 = vunpack.c.l.b16 %v3904
        %v3944 = vunpack.c.l.b16 %v3905
        %v3945 = vunpack.c.l.b16 %v3906
        %v3946 = vunpack.c.l.b16 %v3907
        %v3947 = vunpack.c.l.b16 %v3908
        %v3948 = vunpack.c.l.b16 %v3909
        %v3949 = vunpack.c.l.b16 %v3910
        %v3950 = vunpack.c.l.b16 %v3911
        %v3951 = vpack.c.b16 %v3941, %v3940
        %v3952 = vpack.c.b16 %v3943, %v3942
        %v3953 = vpack.c.b16 %v3945, %v3944
        %v3954 = vpack.c.b16 %v3947, %v3946
        %v3955 = vpack.c.b16 %v3949, %v3948
        %v3956 = vpack.c.b16 %v3950, %v3950
        %v3958 = vshrl.u32 %v3951, 16
        %v3960 = vshll.u32 %v3951, 16
        %v3962 = vrot.slane %v3960, 1
        %v3963 = vor.u32 %v3958, %v3962
        %v3965 = vshll.u32 %v3952, 16
        %v3967 = vrot.slane %v3965, 1
        %v3968 = vsel %vm319, %v3963, %v3967
        %v3969 = vshrl.u32 %v3952, 16
        %v3971 = vor.u32 %v3969, %v3967
        %v3973 = vshll.u32 %v3953, 16
        %v3975 = vrot.slane %v3973, 1
        %v3976 = vsel %vm319, %v3971, %v3975
        %v3977 = vshrl.u32 %v3953, 16
        %v3979 = vor.u32 %v3977, %v3975
        %v3981 = vshll.u32 %v3954, 16
        %v3983 = vrot.slane %v3981, 1
        %v3984 = vsel %vm319, %v3979, %v3983
        %v3985 = vshrl.u32 %v3954, 16
        %v3987 = vor.u32 %v3985, %v3983
        %v3989 = vshll.u32 %v3955, 16
        %v3991 = vrot.slane %v3989, 1
        %v3992 = vsel %vm319, %v3987, %v3991
        %v3993 = vshrl.u32 %v3955, 16
        %v3995 = vor.u32 %v3993, %v3991
        %v3997 = vshll.u32 %v3956, 16
        %v3999 = vrot.slane %v3997, 1
        %v4000 = vsel %vm319, %v3995, %v3999
        %v4022 = vunpack.c.l.b16 %v3913
        %v4023 = vunpack.c.l.b16 %v3914
        %v4024 = vunpack.c.l.b16 %v3915
        %v4025 = vunpack.c.l.b16 %v3916
        %v4026 = vunpack.c.l.b16 %v3917
        %v4027 = vunpack.c.l.b16 %v3918
        %v4028 = vunpack.c.l.b16 %v3919
        %v4029 = vunpack.c.l.b16 %v3920
        %v4030 = vunpack.c.l.b16 %v3921
        %v4031 = vunpack.c.l.b16 %v3922
        %v4032 = vunpack.c.l.b16 %v3923
        %v4033 = vunpack.c.l.b16 %v3924
        %v4034 = vunpack.c.l.b16 %v3925
        %v4035 = vunpack.c.l.b16 %v3926
        %v4036 = vunpack.c.l.b16 %v3927
        %v4037 = vunpack.c.l.b16 %v3928
        %v4038 = vpack.c.b16 %v4023, %v4022
        %v4039 = vpack.c.b16 %v4025, %v4024
        %v4040 = vpack.c.b16 %v4027, %v4026
        %v4041 = vpack.c.b16 %v4029, %v4028
        %v4042 = vpack.c.b16 %v4031, %v4030
        %v4043 = vpack.c.b16 %v4033, %v4032
        %v4044 = vpack.c.b16 %v4035, %v4034
        %v4045 = vpack.c.b16 %v4037, %v4036
        %4054 = vmatprep.subr.bf16.mxu0 0
        %4055 = vmatpush1.bf16.msra.mxu0 %v4038
        %4056 = vmatprep.subr.bf16.mxu0 0
        %4057 = vmatpush1.bf16.msra.mxu0 %v4039
        %4058 = vmatprep.subr.bf16.mxu0 0
        %4059 = vmatpush1.bf16.msra.mxu0 %v4040
        %4060 = vmatprep.subr.bf16.mxu0 0
        %4061 = vmatpush1.bf16.msra.mxu0 %v4041
        %4062 = vmatprep.subr.bf16.mxu0 0
        %4063 = vmatpush1.bf16.msra.mxu0 %v4042
        %4064 = vmatprep.subr.bf16.mxu0 0
        %4065 = vmatpush1.bf16.msra.mxu0 %v4043
        %4066 = vmatprep.subr.bf16.mxu0 0
        %4067 = vmatpush1.bf16.msra.mxu0 %v4044
        %4068 = vmatprep.subr.bf16.mxu0 0
        %4069 = vmatpush1.bf16.msra.mxu0 %v4045
        %4070 = vmatprep.subr.bf16.mxu0 0
        %4071 = vmatpush1.bf16.msra.mxu0 0
        %4072 = vmatprep.subr.bf16.mxu0 0
        %4073 = vmatpush1.bf16.msra.mxu0 0
        %4074 = vmatprep.subr.bf16.mxu0 0
        %4075 = vmatpush1.bf16.msra.mxu0 0
        %4076 = vmatprep.subr.bf16.mxu0 0
        %4077 = vmatpush1.bf16.msra.mxu0 0
        %4078 = vmatprep.subr.bf16.mxu0 0
        %4079 = vmatpush1.bf16.msra.mxu0 0
        %4080 = vmatprep.subr.bf16.mxu0 0
        %4081 = vmatpush1.bf16.msra.mxu0 0
        %4082 = vmatprep.subr.bf16.mxu0 0
        %4083 = vmatpush1.bf16.msra.mxu0 0
        %4084 = vmatprep.subr.bf16.mxu0 0
        %4085 = vmatpush1.bf16.msra.mxu0 0
        %4086 = vmatprep.mubr.bf16.mxu0 0
        %4087 = vmatmul.mubr.bf16.gmra.mrb[0].mxu0 %v3968
        %v4088 = vpop.f32.mrb[0].mxu0
        %v4089 = vadd.f32 0.0, %v4088
        %v4090 = vpop.f32.mrb[0].mxu0
        %v4091 = vpop.f32.mrb[0].mxu0
        %v4092 = vadd.f32 0.0, %v4091
        %v4093 = vpop.f32.mrb[0].mxu0
        %4094 = vmatprep.mubr.bf16.mxu0 0
        %4095 = vmatmul.mubr.bf16.gmra.mrb[0].mxu0 %v3976
        %v4096 = vpop.f32.mrb[0].mxu0
        %v4097 = vadd.f32 0.0, %v4096
        %v4098 = vpop.f32.mrb[0].mxu0
        %v4099 = vpop.f32.mrb[0].mxu0
        %v4100 = vadd.f32 0.0, %v4099
        %v4101 = vpop.f32.mrb[0].mxu0
        %4102 = vmatprep.mubr.bf16.mxu0 0
        %4103 = vmatmul.mubr.bf16.gmra.mrb[0].mxu0 %v3984
        %v4104 = vpop.f32.mrb[0].mxu0
        %v4105 = vadd.f32 0.0, %v4104
        %v4106 = vpop.f32.mrb[0].mxu0
        %v4107 = vpop.f32.mrb[0].mxu0
        %v4108 = vadd.f32 0.0, %v4107
        %v4109 = vpop.f32.mrb[0].mxu0
        %4110 = vmatprep.mubr.bf16.mxu0 0
        %4111 = vmatmul.mubr.bf16.gmra.mrb[0].mxu0 %v3992
        %v4112 = vpop.f32.mrb[0].mxu0
        %v4113 = vadd.f32 0.0, %v4112
        %v4114 = vpop.f32.mrb[0].mxu0
        %v4115 = vpop.f32.mrb[0].mxu0
        %v4116 = vadd.f32 0.0, %v4115
        %v4117 = vpop.f32.mrb[0].mxu0
        %4118 = vmatprep.mubr.bf16.mxu0 0
        %4119 = vmatmul.mubr.bf16.gmra.mrb[0].mxu0 %v4000
        %v4120 = vpop.f32.mrb[0].mxu0
        %v4121 = vadd.f32 0.0, %v4120
        %v4122 = vpop.f32.mrb[0].mxu0
        %v4123 = vpop.f32.mrb[0].mxu0
        %v4124 = vadd.f32 0.0, %v4123
        %v4125 = vpop.f32.mrb[0].mxu0
        %4126 = vdwg.mxu0
        %v4127 = vadd.f32 %v3891, %v4089
        %v4128 = vadd.f32 %v3892, %v4092
        %v4129 = vadd.f32 %v3893, %v4097
        %v4130 = vadd.f32 %v3894, %v4100
        %v4131 = vadd.f32 %v3895, %v4105
        %v4132 = vadd.f32 %v3896, %v4108
        %v4133 = vadd.f32 %v3897, %v4113
        %v4134 = vadd.f32 %v3898, %v4116
        %v4135 = vadd.f32 %v3899, %v4121
        %v4136 = vadd.f32 %v3900, %v4124
        %v4137 = vld [vmem:[%s3712] sm:$0xe]
        %s4138 = scalar_lea.vmem %s1, 1280
        %v4139 = vld [vmem:[%s4138] sm:$0xf]
        %v4140 = vld [vmem:[%s4138 + $0x4] sm:$0xf]
        %v4141 = vld [vmem:[%s4138 + $0x8] sm:$0xf]
        %v4142 = vld [vmem:[%s4138 + $0xc] sm:$0xf]
        %v4143 = vld [vmem:[%s4138 + $0x10] sm:$0xf]
        %v4144 = vld [vmem:[%s4138 + $0x14] sm:$0xf]
        %v4145 = vld [vmem:[%s4138 + $0x18] sm:$0xf]
        %v4146 = vld [vmem:[%s4138 + $0x1c] sm:$0xf]
        %v4147 = vld [vmem:[%s4138 + $0x20] sm:$0xf]
        %v4148 = vld [vmem:[%s4138 + $0x24] sm:$0xf]
        %v4149 = vld [vmem:[%s4138 + $0x28] sm:$0xf]
        %v4150 = vld [vmem:[%s4138 + $0x2c] sm:$0xf]
        %v4151 = vld [vmem:[%s4138 + $0x30] sm:$0xf]
        %v4152 = vld [vmem:[%s4138 + $0x34] sm:$0xf]
        %v4153 = vld [vmem:[%s4138 + $0x38] sm:$0xf]
        %v4154 = vld [vmem:[%s4138 + $0x3c] sm:$0xf]
        %v4156 = vunpack.c.l.b16 %v4137
        %v4157 = vpack.c.b16 %v3941, %v4156
        %v4158 = vrot.slane %v4157, 1
        %v4159 = vrot.slane %v3952, 1
        %v4160 = vsel %vm637, %v4158, %v4159
        %v4161 = vrot.slane %v3953, 1
        %v4162 = vsel %vm637, %v4159, %v4161
        %v4163 = vrot.slane %v3954, 1
        %v4164 = vsel %vm637, %v4161, %v4163
        %v4165 = vrot.slane %v3955, 1
        %v4166 = vsel %vm637, %v4163, %v4165
        %v4167 = vrot.slane %v3956, 1
        %v4168 = vsel %vm637, %v4165, %v4167
        %v4190 = vunpack.c.l.b16 %v4139
        %v4191 = vunpack.c.l.b16 %v4140
        %v4192 = vunpack.c.l.b16 %v4141
        %v4193 = vunpack.c.l.b16 %v4142
        %v4194 = vunpack.c.l.b16 %v4143
        %v4195 = vunpack.c.l.b16 %v4144
        %v4196 = vunpack.c.l.b16 %v4145
        %v4197 = vunpack.c.l.b16 %v4146
        %v4198 = vunpack.c.l.b16 %v4147
        %v4199 = vunpack.c.l.b16 %v4148
        %v4200 = vunpack.c.l.b16 %v4149
        %v4201 = vunpack.c.l.b16 %v4150
        %v4202 = vunpack.c.l.b16 %v4151
        %v4203 = vunpack.c.l.b16 %v4152
        %v4204 = vunpack.c.l.b16 %v4153
        %v4205 = vunpack.c.l.b16 %v4154
        %v4206 = vpack.c.b16 %v4191, %v4190
        %v4207 = vpack.c.b16 %v4193, %v4192
        %v4208 = vpack.c.b16 %v4195, %v4194
        %v4209 = vpack.c.b16 %v4197, %v4196
        %v4210 = vpack.c.b16 %v4199, %v4198
        %v4211 = vpack.c.b16 %v4201, %v4200
        %v4212 = vpack.c.b16 %v4203, %v4202
        %v4213 = vpack.c.b16 %v4205, %v4204
        %4222 = vmatprep.subr.bf16.mxu0 0
        %4223 = vmatpush1.bf16.msra.mxu0 %v4206
        %4224 = vmatprep.subr.bf16.mxu0 0
        %4225 = vmatpush1.bf16.msra.mxu0 %v4207
        %4226 = vmatprep.subr.bf16.mxu0 0
        %4227 = vmatpush1.bf16.msra.mxu0 %v4208
        %4228 = vmatprep.subr.bf16.mxu0 0
        %4229 = vmatpush1.bf16.msra.mxu0 %v4209
        %4230 = vmatprep.subr.bf16.mxu0 0
        %4231 = vmatpush1.bf16.msra.mxu0 %v4210
        %4232 = vmatprep.subr.bf16.mxu0 0
        %4233 = vmatpush1.bf16.msra.mxu0 %v4211
        %4234 = vmatprep.subr.bf16.mxu0 0
        %4235 = vmatpush1.bf16.msra.mxu0 %v4212
        %4236 = vmatprep.subr.bf16.mxu0 0
        %4237 = vmatpush1.bf16.msra.mxu0 %v4213
        %4238 = vmatprep.subr.bf16.mxu0 0
        %4239 = vmatpush1.bf16.msra.mxu0 0
        %4240 = vmatprep.subr.bf16.mxu0 0
        %4241 = vmatpush1.bf16.msra.mxu0 0
        %4242 = vmatprep.subr.bf16.mxu0 0
        %4243 = vmatpush1.bf16.msra.mxu0 0
        %4244 = vmatprep.subr.bf16.mxu0 0
        %4245 = vmatpush1.bf16.msra.mxu0 0
        %4246 = vmatprep.subr.bf16.mxu0 0
        %4247 = vmatpush1.bf16.msra.mxu0 0
        %4248 = vmatprep.subr.bf16.mxu0 0
        %4249 = vmatpush1.bf16.msra.mxu0 0
        %4250 = vmatprep.subr.bf16.mxu0 0
        %4251 = vmatpush1.bf16.msra.mxu0 0
        %4252 = vmatprep.subr.bf16.mxu0 0
        %4253 = vmatpush1.bf16.msra.mxu0 0
        %4254 = vmatprep.mubr.bf16.mxu0 0
        %4255 = vmatmul.mubr.bf16.gmra.mrb[0].mxu0 %v4160
        %v4256 = vpop.f32.mrb[0].mxu0
        %v4257 = vadd.f32 0.0, %v4256
        %v4258 = vpop.f32.mrb[0].mxu0
        %v4259 = vpop.f32.mrb[0].mxu0
        %v4260 = vadd.f32 0.0, %v4259
        %v4261 = vpop.f32.mrb[0].mxu0
        %4262 = vmatprep.mubr.bf16.mxu0 0
        %4263 = vmatmul.mubr.bf16.gmra.mrb[0].mxu0 %v4162
        %v4264 = vpop.f32.mrb[0].mxu0
        %v4265 = vadd.f32 0.0, %v4264
        %v4266 = vpop.f32.mrb[0].mxu0
        %v4267 = vpop.f32.mrb[0].mxu0
        %v4268 = vadd.f32 0.0, %v4267
        %v4269 = vpop.f32.mrb[0].mxu0
        %4270 = vmatprep.mubr.bf16.mxu0 0
        %4271 = vmatmul.mubr.bf16.gmra.mrb[0].mxu0 %v4164
        %v4272 = vpop.f32.mrb[0].mxu0
        %v4273 = vadd.f32 0.0, %v4272
        %v4274 = vpop.f32.mrb[0].mxu0
        %v4275 = vpop.f32.mrb[0].mxu0
        %v4276 = vadd.f32 0.0, %v4275
        %v4277 = vpop.f32.mrb[0].mxu0
        %4278 = vmatprep.mubr.bf16.mxu0 0
        %4279 = vmatmul.mubr.bf16.gmra.mrb[0].mxu0 %v4166
        %v4280 = vpop.f32.mrb[0].mxu0
        %v4281 = vadd.f32 0.0, %v4280
        %v4282 = vpop.f32.mrb[0].mxu0
        %v4283 = vpop.f32.mrb[0].mxu0
        %v4284 = vadd.f32 0.0, %v4283
        %v4285 = vpop.f32.mrb[0].mxu0
        %4286 = vmatprep.mubr.bf16.mxu0 0
        %4287 = vmatmul.mubr.bf16.gmra.mrb[0].mxu0 %v4168
        %v4288 = vpop.f32.mrb[0].mxu0
        %v4289 = vadd.f32 0.0, %v4288
        %v4290 = vpop.f32.mrb[0].mxu0
        %v4291 = vpop.f32.mrb[0].mxu0
        %v4292 = vadd.f32 0.0, %v4291
        %v4293 = vpop.f32.mrb[0].mxu0
        %4294 = vdwg.mxu0
        %v4295 = vadd.f32 %v4127, %v4257
        %v4296 = vadd.f32 %v4128, %v4260
        %v4297 = vadd.f32 %v4129, %v4265
        %v4298 = vadd.f32 %v4130, %v4268
        %v4299 = vadd.f32 %v4131, %v4273
        %v4300 = vadd.f32 %v4132, %v4276
        %v4301 = vadd.f32 %v4133, %v4281
        %v4302 = vadd.f32 %v4134, %v4284
        %v4303 = vadd.f32 %v4135, %v4289
        %v4304 = vadd.f32 %v4136, %v4292
        %v4305 = vld [vmem:[%s3712 + $0x4] sm:$0xe]
        %v4306 = vld [vmem:[%s3712 + $0x8] sm:$0xf]
        %v4307 = vld [vmem:[%s3712 + $0xc] sm:$0xf]
        %v4308 = vld [vmem:[%s3712 + $0x10] sm:$0xf]
        %v4309 = vld [vmem:[%s3712 + $0x14] sm:$0xf]
        %v4310 = vld [vmem:[%s3712 + $0x18] sm:$0xf]
        %v4311 = vld [vmem:[%s3712 + $0x1c] sm:$0xf]
        %v4312 = vld [vmem:[%s3712 + $0x20] sm:$0xf]
        %v4313 = vld [vmem:[%s3712 + $0x24] sm:$0xf]
        %v4314 = vld [vmem:[%s3712 + $0x28] sm:$0xf]
        %v4315 = vld [vmem:[%s3712 + $0x2c] sm:$0x1]
        %s4316 = scalar_lea.vmem %s1, 1344
        %v4317 = vld [vmem:[%s4316] sm:$0xf]
        %v4318 = vld [vmem:[%s4316 + $0x4] sm:$0xf]
        %v4319 = vld [vmem:[%s4316 + $0x8] sm:$0xf]
        %v4320 = vld [vmem:[%s4316 + $0xc] sm:$0xf]
        %v4321 = vld [vmem:[%s4316 + $0x10] sm:$0xf]
        %v4322 = vld [vmem:[%s4316 + $0x14] sm:$0xf]
        %v4323 = vld [vmem:[%s4316 + $0x18] sm:$0xf]
        %v4324 = vld [vmem:[%s4316 + $0x1c] sm:$0xf]
        %v4325 = vld [vmem:[%s4316 + $0x20] sm:$0xf]
        %v4326 = vld [vmem:[%s4316 + $0x24] sm:$0xf]
        %v4327 = vld [vmem:[%s4316 + $0x28] sm:$0xf]
        %v4328 = vld [vmem:[%s4316 + $0x2c] sm:$0xf]
        %v4329 = vld [vmem:[%s4316 + $0x30] sm:$0xf]
        %v4330 = vld [vmem:[%s4316 + $0x34] sm:$0xf]
        %v4331 = vld [vmem:[%s4316 + $0x38] sm:$0xf]
        %v4332 = vld [vmem:[%s4316 + $0x3c] sm:$0xf]
        %v4344 = vunpack.c.l.b16 %v4305
        %v4345 = vunpack.c.l.b16 %v4306
        %v4346 = vunpack.c.l.b16 %v4307
        %v4347 = vunpack.c.l.b16 %v4308
        %v4348 = vunpack.c.l.b16 %v4309
        %v4349 = vunpack.c.l.b16 %v4310
        %v4350 = vunpack.c.l.b16 %v4311
        %v4351 = vunpack.c.l.b16 %v4312
        %v4352 = vunpack.c.l.b16 %v4313
        %v4353 = vunpack.c.l.b16 %v4314
        %v4354 = vunpack.c.l.b16 %v4315
        %v4355 = vpack.c.b16 %v4345, %v4344
        %v4356 = vpack.c.b16 %v4347, %v4346
        %v4357 = vpack.c.b16 %v4349, %v4348
        %v4358 = vpack.c.b16 %v4351, %v4350
        %v4359 = vpack.c.b16 %v4353, %v4352
        %v4360 = vpack.c.b16 %v4354, %v4354
        %v4361 = vrot.slane %v4355, 1
        %v4362 = vrot.slane %v4356, 1
        %v4363 = vsel %vm637, %v4361, %v4362
        %v4364 = vrot.slane %v4357, 1
        %v4365 = vsel %vm637, %v4362, %v4364
        %v4366 = vrot.slane %v4358, 1
        %v4367 = vsel %vm637, %v4364, %v4366
        %v4368 = vrot.slane %v4359, 1
        %v4369 = vsel %vm637, %v4366, %v4368
        %v4370 = vrot.slane %v4360, 1
        %v4371 = vsel %vm637, %v4368, %v4370
        %v4393 = vunpack.c.l.b16 %v4317
        %v4394 = vunpack.c.l.b16 %v4318
        %v4395 = vunpack.c.l.b16 %v4319
        %v4396 = vunpack.c.l.b16 %v4320
        %v4397 = vunpack.c.l.b16 %v4321
        %v4398 = vunpack.c.l.b16 %v4322
        %v4399 = vunpack.c.l.b16 %v4323
        %v4400 = vunpack.c.l.b16 %v4324
        %v4401 = vunpack.c.l.b16 %v4325
        %v4402 = vunpack.c.l.b16 %v4326
        %v4403 = vunpack.c.l.b16 %v4327
        %v4404 = vunpack.c.l.b16 %v4328
        %v4405 = vunpack.c.l.b16 %v4329
        %v4406 = vunpack.c.l.b16 %v4330
        %v4407 = vunpack.c.l.b16 %v4331
        %v4408 = vunpack.c.l.b16 %v4332
        %v4409 = vpack.c.b16 %v4394, %v4393
        %v4410 = vpack.c.b16 %v4396, %v4395
        %v4411 = vpack.c.b16 %v4398, %v4397
        %v4412 = vpack.c.b16 %v4400, %v4399
        %v4413 = vpack.c.b16 %v4402, %v4401
        %v4414 = vpack.c.b16 %v4404, %v4403
        %v4415 = vpack.c.b16 %v4406, %v4405
        %v4416 = vpack.c.b16 %v4408, %v4407
        %4425 = vmatprep.subr.bf16.mxu0 0
        %4426 = vmatpush1.bf16.msra.mxu0 %v4409
        %4427 = vmatprep.subr.bf16.mxu0 0
        %4428 = vmatpush1.bf16.msra.mxu0 %v4410
        %4429 = vmatprep.subr.bf16.mxu0 0
        %4430 = vmatpush1.bf16.msra.mxu0 %v4411
        %4431 = vmatprep.subr.bf16.mxu0 0
        %4432 = vmatpush1.bf16.msra.mxu0 %v4412
        %4433 = vmatprep.subr.bf16.mxu0 0
        %4434 = vmatpush1.bf16.msra.mxu0 %v4413
        %4435 = vmatprep.subr.bf16.mxu0 0
        %4436 = vmatpush1.bf16.msra.mxu0 %v4414
        %4437 = vmatprep.subr.bf16.mxu0 0
        %4438 = vmatpush1.bf16.msra.mxu0 %v4415
        %4439 = vmatprep.subr.bf16.mxu0 0
        %4440 = vmatpush1.bf16.msra.mxu0 %v4416
        %4441 = vmatprep.subr.bf16.mxu0 0
        %4442 = vmatpush1.bf16.msra.mxu0 0
        %4443 = vmatprep.subr.bf16.mxu0 0
        %4444 = vmatpush1.bf16.msra.mxu0 0
        %4445 = vmatprep.subr.bf16.mxu0 0
        %4446 = vmatpush1.bf16.msra.mxu0 0
        %4447 = vmatprep.subr.bf16.mxu0 0
        %4448 = vmatpush1.bf16.msra.mxu0 0
        %4449 = vmatprep.subr.bf16.mxu0 0
        %4450 = vmatpush1.bf16.msra.mxu0 0
        %4451 = vmatprep.subr.bf16.mxu0 0
        %4452 = vmatpush1.bf16.msra.mxu0 0
        %4453 = vmatprep.subr.bf16.mxu0 0
        %4454 = vmatpush1.bf16.msra.mxu0 0
        %4455 = vmatprep.subr.bf16.mxu0 0
        %4456 = vmatpush1.bf16.msra.mxu0 0
        %4457 = vmatprep.mubr.bf16.mxu0 0
        %4458 = vmatmul.mubr.bf16.gmra.mrb[0].mxu0 %v4363
        %v4459 = vpop.f32.mrb[0].mxu0
        %v4460 = vadd.f32 0.0, %v4459
        %v4461 = vpop.f32.mrb[0].mxu0
        %v4462 = vpop.f32.mrb[0].mxu0
        %v4463 = vadd.f32 0.0, %v4462
        %v4464 = vpop.f32.mrb[0].mxu0
        %4465 = vmatprep.mubr.bf16.mxu0 0
        %4466 = vmatmul.mubr.bf16.gmra.mrb[0].mxu0 %v4365
        %v4467 = vpop.f32.mrb[0].mxu0
        %v4468 = vadd.f32 0.0, %v4467
        %v4469 = vpop.f32.mrb[0].mxu0
        %v4470 = vpop.f32.mrb[0].mxu0
        %v4471 = vadd.f32 0.0, %v4470
        %v4472 = vpop.f32.mrb[0].mxu0
        %4473 = vmatprep.mubr.bf16.mxu0 0
        %4474 = vmatmul.mubr.bf16.gmra.mrb[0].mxu0 %v4367
        %v4475 = vpop.f32.mrb[0].mxu0
        %v4476 = vadd.f32 0.0, %v4475
        %v4477 = vpop.f32.mrb[0].mxu0
        %v4478 = vpop.f32.mrb[0].mxu0
        %v4479 = vadd.f32 0.0, %v4478
        %v4480 = vpop.f32.mrb[0].mxu0
        %4481 = vmatprep.mubr.bf16.mxu0 0
        %4482 = vmatmul.mubr.bf16.gmra.mrb[0].mxu0 %v4369
        %v4483 = vpop.f32.mrb[0].mxu0
        %v4484 = vadd.f32 0.0, %v4483
        %v4485 = vpop.f32.mrb[0].mxu0
        %v4486 = vpop.f32.mrb[0].mxu0
        %v4487 = vadd.f32 0.0, %v4486
        %v4488 = vpop.f32.mrb[0].mxu0
        %4489 = vmatprep.mubr.bf16.mxu0 0
        %4490 = vmatmul.mubr.bf16.gmra.mrb[0].mxu0 %v4371
        %v4491 = vpop.f32.mrb[0].mxu0
        %v4492 = vadd.f32 0.0, %v4491
        %v4493 = vpop.f32.mrb[0].mxu0
        %v4494 = vpop.f32.mrb[0].mxu0
        %v4495 = vadd.f32 0.0, %v4494
        %v4496 = vpop.f32.mrb[0].mxu0
        %4497 = vdwg.mxu0
        %v4498 = vadd.f32 %v4295, %v4460
        %v4499 = vadd.f32 %v4296, %v4463
        %v4500 = vadd.f32 %v4297, %v4468
        %v4501 = vadd.f32 %v4298, %v4471
        %v4502 = vadd.f32 %v4299, %v4476
        %v4503 = vadd.f32 %v4300, %v4479
        %v4504 = vadd.f32 %v4301, %v4484
        %v4505 = vadd.f32 %v4302, %v4487
        %v4506 = vadd.f32 %v4303, %v4492
        %v4507 = vadd.f32 %v4304, %v4495
        %v4508 = vld [vmem:[%s3712 + $0x2c] sm:$0x3]
        %s4509 = scalar_lea.vmem %s1, 1408
        %v4510 = vld [vmem:[%s4509] sm:$0xf]
        %v4511 = vld [vmem:[%s4509 + $0x4] sm:$0xf]
        %v4512 = vld [vmem:[%s4509 + $0x8] sm:$0xf]
        %v4513 = vld [vmem:[%s4509 + $0xc] sm:$0xf]
        %v4514 = vld [vmem:[%s4509 + $0x10] sm:$0xf]
        %v4515 = vld [vmem:[%s4509 + $0x14] sm:$0xf]
        %v4516 = vld [vmem:[%s4509 + $0x18] sm:$0xf]
        %v4517 = vld [vmem:[%s4509 + $0x1c] sm:$0xf]
        %v4518 = vld [vmem:[%s4509 + $0x20] sm:$0xf]
        %v4519 = vld [vmem:[%s4509 + $0x24] sm:$0xf]
        %v4520 = vld [vmem:[%s4509 + $0x28] sm:$0xf]
        %v4521 = vld [vmem:[%s4509 + $0x2c] sm:$0xf]
        %v4522 = vld [vmem:[%s4509 + $0x30] sm:$0xf]
        %v4523 = vld [vmem:[%s4509 + $0x34] sm:$0xf]
        %v4524 = vld [vmem:[%s4509 + $0x38] sm:$0xf]
        %v4525 = vld [vmem:[%s4509 + $0x3c] sm:$0xf]
        %v4527 = vunpack.c.l.b16 %v4508
        %v4528 = vpack.c.b16 %v4527, %v4527
        %v4530 = vshrl.u32 %v4355, 16
        %v4532 = vrot.slane %v4530, 1
        %v4533 = vshll.u32 %v4355, 16
        %v4535 = vrot.slane %v4533, 2
        %v4536 = vor.u32 %v4532, %v4535
        %v4538 = vshrl.u32 %v4356, 16
        %v4540 = vrot.slane %v4538, 1
        %v4541 = vshll.u32 %v4356, 16
        %v4543 = vrot.slane %v4541, 2
        %v4544 = vor.u32 %v4540, %v4543
        %v4545 = vsel %vm1009, %v4536, %v4544
        %v4547 = vshrl.u32 %v4357, 16
        %v4549 = vrot.slane %v4547, 1
        %v4550 = vshll.u32 %v4357, 16
        %v4552 = vrot.slane %v4550, 2
        %v4553 = vor.u32 %v4549, %v4552
        %v4554 = vsel %vm1009, %v4544, %v4553
        %v4556 = vshrl.u32 %v4358, 16
        %v4558 = vrot.slane %v4556, 1
        %v4559 = vshll.u32 %v4358, 16
        %v4561 = vrot.slane %v4559, 2
        %v4562 = vor.u32 %v4558, %v4561
        %v4563 = vsel %vm1009, %v4553, %v4562
        %v4565 = vshrl.u32 %v4359, 16
        %v4567 = vrot.slane %v4565, 1
        %v4568 = vshll.u32 %v4359, 16
        %v4570 = vrot.slane %v4568, 2
        %v4571 = vor.u32 %v4567, %v4570
        %v4572 = vsel %vm1009, %v4562, %v4571
        %v4574 = vshrl.u32 %v4528, 16
        %v4576 = vrot.slane %v4574, 1
        %v4577 = vshll.u32 %v4528, 16
        %v4579 = vrot.slane %v4577, 2
        %v4580 = vor.u32 %v4576, %v4579
        %v4581 = vsel %vm1009, %v4571, %v4580
        %v4603 = vunpack.c.l.b16 %v4510
        %v4604 = vunpack.c.l.b16 %v4511
        %v4605 = vunpack.c.l.b16 %v4512
        %v4606 = vunpack.c.l.b16 %v4513
        %v4607 = vunpack.c.l.b16 %v4514
        %v4608 = vunpack.c.l.b16 %v4515
        %v4609 = vunpack.c.l.b16 %v4516
        %v4610 = vunpack.c.l.b16 %v4517
        %v4611 = vunpack.c.l.b16 %v4518
        %v4612 = vunpack.c.l.b16 %v4519
        %v4613 = vunpack.c.l.b16 %v4520
        %v4614 = vunpack.c.l.b16 %v4521
        %v4615 = vunpack.c.l.b16 %v4522
        %v4616 = vunpack.c.l.b16 %v4523
        %v4617 = vunpack.c.l.b16 %v4524
        %v4618 = vunpack.c.l.b16 %v4525
        %v4619 = vpack.c.b16 %v4604, %v4603
        %v4620 = vpack.c.b16 %v4606, %v4605
        %v4621 = vpack.c.b16 %v4608, %v4607
        %v4622 = vpack.c.b16 %v4610, %v4609
        %v4623 = vpack.c.b16 %v4612, %v4611
        %v4624 = vpack.c.b16 %v4614, %v4613
        %v4625 = vpack.c.b16 %v4616, %v4615
        %v4626 = vpack.c.b16 %v4618, %v4617
        %4635 = vmatprep.subr.bf16.mxu0 0
        %4636 = vmatpush1.bf16.msra.mxu0 %v4619
        %4637 = vmatprep.subr.bf16.mxu0 0
        %4638 = vmatpush1.bf16.msra.mxu0 %v4620
        %4639 = vmatprep.subr.bf16.mxu0 0
        %4640 = vmatpush1.bf16.msra.mxu0 %v4621
        %4641 = vmatprep.subr.bf16.mxu0 0
        %4642 = vmatpush1.bf16.msra.mxu0 %v4622
        %4643 = vmatprep.subr.bf16.mxu0 0
        %4644 = vmatpush1.bf16.msra.mxu0 %v4623
        %4645 = vmatprep.subr.bf16.mxu0 0
        %4646 = vmatpush1.bf16.msra.mxu0 %v4624
        %4647 = vmatprep.subr.bf16.mxu0 0
        %4648 = vmatpush1.bf16.msra.mxu0 %v4625
        %4649 = vmatprep.subr.bf16.mxu0 0
        %4650 = vmatpush1.bf16.msra.mxu0 %v4626
        %4651 = vmatprep.subr.bf16.mxu0 0
        %4652 = vmatpush1.bf16.msra.mxu0 0
        %4653 = vmatprep.subr.bf16.mxu0 0
        %4654 = vmatpush1.bf16.msra.mxu0 0
        %4655 = vmatprep.subr.bf16.mxu0 0
        %4656 = vmatpush1.bf16.msra.mxu0 0
        %4657 = vmatprep.subr.bf16.mxu0 0
        %4658 = vmatpush1.bf16.msra.mxu0 0
        %4659 = vmatprep.subr.bf16.mxu0 0
        %4660 = vmatpush1.bf16.msra.mxu0 0
        %4661 = vmatprep.subr.bf16.mxu0 0
        %4662 = vmatpush1.bf16.msra.mxu0 0
        %4663 = vmatprep.subr.bf16.mxu0 0
        %4664 = vmatpush1.bf16.msra.mxu0 0
        %4665 = vmatprep.subr.bf16.mxu0 0
        %4666 = vmatpush1.bf16.msra.mxu0 0
        %4667 = vmatprep.mubr.bf16.mxu0 0
        %4668 = vmatmul.mubr.bf16.gmra.mrb[0].mxu0 %v4545
        %v4669 = vpop.f32.mrb[0].mxu0
        %v4670 = vadd.f32 0.0, %v4669
        %v4671 = vpop.f32.mrb[0].mxu0
        %v4672 = vpop.f32.mrb[0].mxu0
        %v4673 = vadd.f32 0.0, %v4672
        %v4674 = vpop.f32.mrb[0].mxu0
        %4675 = vmatprep.mubr.bf16.mxu0 0
        %4676 = vmatmul.mubr.bf16.gmra.mrb[0].mxu0 %v4554
        %v4677 = vpop.f32.mrb[0].mxu0
        %v4678 = vadd.f32 0.0, %v4677
        %v4679 = vpop.f32.mrb[0].mxu0
        %v4680 = vpop.f32.mrb[0].mxu0
        %v4681 = vadd.f32 0.0, %v4680
        %v4682 = vpop.f32.mrb[0].mxu0
        %4683 = vmatprep.mubr.bf16.mxu0 0
        %4684 = vmatmul.mubr.bf16.gmra.mrb[0].mxu0 %v4563
        %v4685 = vpop.f32.mrb[0].mxu0
        %v4686 = vadd.f32 0.0, %v4685
        %v4687 = vpop.f32.mrb[0].mxu0
        %v4688 = vpop.f32.mrb[0].mxu0
        %v4689 = vadd.f32 0.0, %v4688
        %v4690 = vpop.f32.mrb[0].mxu0
        %4691 = vmatprep.mubr.bf16.mxu0 0
        %4692 = vmatmul.mubr.bf16.gmra.mrb[0].mxu0 %v4572
        %v4693 = vpop.f32.mrb[0].mxu0
        %v4694 = vadd.f32 0.0, %v4693
        %v4695 = vpop.f32.mrb[0].mxu0
        %v4696 = vpop.f32.mrb[0].mxu0
        %v4697 = vadd.f32 0.0, %v4696
        %v4698 = vpop.f32.mrb[0].mxu0
        %4699 = vmatprep.mubr.bf16.mxu0 0
        %4700 = vmatmul.mubr.bf16.gmra.mrb[0].mxu0 %v4581
        %v4701 = vpop.f32.mrb[0].mxu0
        %v4702 = vadd.f32 0.0, %v4701
        %v4703 = vpop.f32.mrb[0].mxu0
        %v4704 = vpop.f32.mrb[0].mxu0
        %v4705 = vadd.f32 0.0, %v4704
        %v4706 = vpop.f32.mrb[0].mxu0
        %4707 = vdwg.mxu0
        %v4708 = vadd.f32 %v4498, %v4670
        %v4709 = vadd.f32 %v4499, %v4673
        %v4710 = vadd.f32 %v4500, %v4678
        %v4711 = vadd.f32 %v4501, %v4681
        %v4712 = vadd.f32 %v4502, %v4686
        %v4713 = vadd.f32 %v4503, %v4689
        %v4714 = vadd.f32 %v4504, %v4694
        %v4715 = vadd.f32 %v4505, %v4697
        %v4716 = vadd.f32 %v4506, %v4702
        %v4717 = vadd.f32 %v4507, %v4705
        %v4718 = vld [vmem:[%s3712 + $0x4] sm:$0xc]
        %s4719 = scalar_lea.vmem %s1, 1472
        %v4720 = vld [vmem:[%s4719] sm:$0xf]
        %v4721 = vld [vmem:[%s4719 + $0x4] sm:$0xf]
        %v4722 = vld [vmem:[%s4719 + $0x8] sm:$0xf]
        %v4723 = vld [vmem:[%s4719 + $0xc] sm:$0xf]
        %v4724 = vld [vmem:[%s4719 + $0x10] sm:$0xf]
        %v4725 = vld [vmem:[%s4719 + $0x14] sm:$0xf]
        %v4726 = vld [vmem:[%s4719 + $0x18] sm:$0xf]
        %v4727 = vld [vmem:[%s4719 + $0x1c] sm:$0xf]
        %v4728 = vld [vmem:[%s4719 + $0x20] sm:$0xf]
        %v4729 = vld [vmem:[%s4719 + $0x24] sm:$0xf]
        %v4730 = vld [vmem:[%s4719 + $0x28] sm:$0xf]
        %v4731 = vld [vmem:[%s4719 + $0x2c] sm:$0xf]
        %v4732 = vld [vmem:[%s4719 + $0x30] sm:$0xf]
        %v4733 = vld [vmem:[%s4719 + $0x34] sm:$0xf]
        %v4734 = vld [vmem:[%s4719 + $0x38] sm:$0xf]
        %v4735 = vld [vmem:[%s4719 + $0x3c] sm:$0xf]
        %v4737 = vunpack.c.l.b16 %v4718
        %v4738 = vpack.c.b16 %v4345, %v4737
        %v4739 = vrot.slane %v4738, 2
        %v4740 = vrot.slane %v4356, 2
        %v4741 = vsel %vm1220, %v4739, %v4740
        %v4742 = vrot.slane %v4357, 2
        %v4743 = vsel %vm1220, %v4740, %v4742
        %v4744 = vrot.slane %v4358, 2
        %v4745 = vsel %vm1220, %v4742, %v4744
        %v4746 = vrot.slane %v4359, 2
        %v4747 = vsel %vm1220, %v4744, %v4746
        %v4748 = vrot.slane %v4528, 2
        %v4749 = vsel %vm1220, %v4746, %v4748
        %v4771 = vunpack.c.l.b16 %v4720
        %v4772 = vunpack.c.l.b16 %v4721
        %v4773 = vunpack.c.l.b16 %v4722
        %v4774 = vunpack.c.l.b16 %v4723
        %v4775 = vunpack.c.l.b16 %v4724
        %v4776 = vunpack.c.l.b16 %v4725
        %v4777 = vunpack.c.l.b16 %v4726
        %v4778 = vunpack.c.l.b16 %v4727
        %v4779 = vunpack.c.l.b16 %v4728
        %v4780 = vunpack.c.l.b16 %v4729
        %v4781 = vunpack.c.l.b16 %v4730
        %v4782 = vunpack.c.l.b16 %v4731
        %v4783 = vunpack.c.l.b16 %v4732
        %v4784 = vunpack.c.l.b16 %v4733
        %v4785 = vunpack.c.l.b16 %v4734
        %v4786 = vunpack.c.l.b16 %v4735
        %v4787 = vpack.c.b16 %v4772, %v4771
        %v4788 = vpack.c.b16 %v4774, %v4773
        %v4789 = vpack.c.b16 %v4776, %v4775
        %v4790 = vpack.c.b16 %v4778, %v4777
        %v4791 = vpack.c.b16 %v4780, %v4779
        %v4792 = vpack.c.b16 %v4782, %v4781
        %v4793 = vpack.c.b16 %v4784, %v4783
        %v4794 = vpack.c.b16 %v4786, %v4785
        %4803 = vmatprep.subr.bf16.mxu0 0
        %4804 = vmatpush1.bf16.msra.mxu0 %v4787
        %4805 = vmatprep.subr.bf16.mxu0 0
        %4806 = vmatpush1.bf16.msra.mxu0 %v4788
        %4807 = vmatprep.subr.bf16.mxu0 0
        %4808 = vmatpush1.bf16.msra.mxu0 %v4789
        %4809 = vmatprep.subr.bf16.mxu0 0
        %4810 = vmatpush1.bf16.msra.mxu0 %v4790
        %4811 = vmatprep.subr.bf16.mxu0 0
        %4812 = vmatpush1.bf16.msra.mxu0 %v4791
        %4813 = vmatprep.subr.bf16.mxu0 0
        %4814 = vmatpush1.bf16.msra.mxu0 %v4792
        %4815 = vmatprep.subr.bf16.mxu0 0
        %4816 = vmatpush1.bf16.msra.mxu0 %v4793
        %4817 = vmatprep.subr.bf16.mxu0 0
        %4818 = vmatpush1.bf16.msra.mxu0 %v4794
        %4819 = vmatprep.subr.bf16.mxu0 0
        %4820 = vmatpush1.bf16.msra.mxu0 0
        %4821 = vmatprep.subr.bf16.mxu0 0
        %4822 = vmatpush1.bf16.msra.mxu0 0
        %4823 = vmatprep.subr.bf16.mxu0 0
        %4824 = vmatpush1.bf16.msra.mxu0 0
        %4825 = vmatprep.subr.bf16.mxu0 0
        %4826 = vmatpush1.bf16.msra.mxu0 0
        %4827 = vmatprep.subr.bf16.mxu0 0
        %4828 = vmatpush1.bf16.msra.mxu0 0
        %4829 = vmatprep.subr.bf16.mxu0 0
        %4830 = vmatpush1.bf16.msra.mxu0 0
        %4831 = vmatprep.subr.bf16.mxu0 0
        %4832 = vmatpush1.bf16.msra.mxu0 0
        %4833 = vmatprep.subr.bf16.mxu0 0
        %4834 = vmatpush1.bf16.msra.mxu0 0
        %4835 = vmatprep.mubr.bf16.mxu0 0
        %4836 = vmatmul.mubr.bf16.gmra.mrb[0].mxu0 %v4741
        %v4837 = vpop.f32.mrb[0].mxu0
        %v4838 = vadd.f32 0.0, %v4837
        %v4839 = vpop.f32.mrb[0].mxu0
        %v4840 = vpop.f32.mrb[0].mxu0
        %v4841 = vadd.f32 0.0, %v4840
        %v4842 = vpop.f32.mrb[0].mxu0
        %4843 = vmatprep.mubr.bf16.mxu0 0
        %4844 = vmatmul.mubr.bf16.gmra.mrb[0].mxu0 %v4743
        %v4845 = vpop.f32.mrb[0].mxu0
        %v4846 = vadd.f32 0.0, %v4845
        %v4847 = vpop.f32.mrb[0].mxu0
        %v4848 = vpop.f32.mrb[0].mxu0
        %v4849 = vadd.f32 0.0, %v4848
        %v4850 = vpop.f32.mrb[0].mxu0
        %4851 = vmatprep.mubr.bf16.mxu0 0
        %4852 = vmatmul.mubr.bf16.gmra.mrb[0].mxu0 %v4745
        %v4853 = vpop.f32.mrb[0].mxu0
        %v4854 = vadd.f32 0.0, %v4853
        %v4855 = vpop.f32.mrb[0].mxu0
        %v4856 = vpop.f32.mrb[0].mxu0
        %v4857 = vadd.f32 0.0, %v4856
        %v4858 = vpop.f32.mrb[0].mxu0
        %4859 = vmatprep.mubr.bf16.mxu0 0
        %4860 = vmatmul.mubr.bf16.gmra.mrb[0].mxu0 %v4747
        %v4861 = vpop.f32.mrb[0].mxu0
        %v4862 = vadd.f32 0.0, %v4861
        %v4863 = vpop.f32.mrb[0].mxu0
        %v4864 = vpop.f32.mrb[0].mxu0
        %v4865 = vadd.f32 0.0, %v4864
        %v4866 = vpop.f32.mrb[0].mxu0
        %4867 = vmatprep.mubr.bf16.mxu0 0
        %4868 = vmatmul.mubr.bf16.gmra.mrb[0].mxu0 %v4749
        %v4869 = vpop.f32.mrb[0].mxu0
        %v4870 = vadd.f32 0.0, %v4869
        %v4871 = vpop.f32.mrb[0].mxu0
        %v4872 = vpop.f32.mrb[0].mxu0
        %v4873 = vadd.f32 0.0, %v4872
        %v4874 = vpop.f32.mrb[0].mxu0
        %4875 = vdwg.mxu0
        %v4876 = vadd.f32 %v4708, %v4838
        %v4877 = vadd.f32 %v4709, %v4841
        %v4878 = vadd.f32 %v4710, %v4846
        %v4879 = vadd.f32 %v4711, %v4849
        %v4880 = vadd.f32 %v4712, %v4854
        %v4881 = vadd.f32 %v4713, %v4857
        %v4882 = vadd.f32 %v4714, %v4862
        %v4883 = vadd.f32 %v4715, %v4865
        %v4884 = vadd.f32 %v4716, %v4870
        %v4885 = vadd.f32 %v4717, %v4873
        %v4886 = vld [vmem:[%s3712 + $0x8] sm:$0xc]
        %v4887 = vld [vmem:[%s3712 + $0xc] sm:$0xf]
        %v4888 = vld [vmem:[%s3712 + $0x10] sm:$0xf]
        %v4889 = vld [vmem:[%s3712 + $0x14] sm:$0xf]
        %v4890 = vld [vmem:[%s3712 + $0x18] sm:$0xf]
        %v4891 = vld [vmem:[%s3712 + $0x1c] sm:$0xf]
        %v4892 = vld [vmem:[%s3712 + $0x20] sm:$0xf]
        %v4893 = vld [vmem:[%s3712 + $0x24] sm:$0xf]
        %v4894 = vld [vmem:[%s3712 + $0x28] sm:$0xf]
        %v4895 = vld [vmem:[%s3712 + $0x2c] sm:$0xf]
        %v4896 = vld [vmem:[%s3712 + $0x30] sm:$0x3]
        %s4897 = scalar_lea.vmem %s1, 1536
        %v4898 = vld [vmem:[%s4897] sm:$0xf]
        %v4899 = vld [vmem:[%s4897 + $0x4] sm:$0xf]
        %v4900 = vld [vmem:[%s4897 + $0x8] sm:$0xf]
        %v4901 = vld [vmem:[%s4897 + $0xc] sm:$0xf]
        %v4902 = vld [vmem:[%s4897 + $0x10] sm:$0xf]
        %v4903 = vld [vmem:[%s4897 + $0x14] sm:$0xf]
        %v4904 = vld [vmem:[%s4897 + $0x18] sm:$0xf]
        %v4905 = vld [vmem:[%s4897 + $0x1c] sm:$0xf]
        %v4906 = vld [vmem:[%s4897 + $0x20] sm:$0xf]
        %v4907 = vld [vmem:[%s4897 + $0x24] sm:$0xf]
        %v4908 = vld [vmem:[%s4897 + $0x28] sm:$0xf]
        %v4909 = vld [vmem:[%s4897 + $0x2c] sm:$0xf]
        %v4910 = vld [vmem:[%s4897 + $0x30] sm:$0xf]
        %v4911 = vld [vmem:[%s4897 + $0x34] sm:$0xf]
        %v4912 = vld [vmem:[%s4897 + $0x38] sm:$0xf]
        %v4913 = vld [vmem:[%s4897 + $0x3c] sm:$0xf]
        %v4925 = vunpack.c.l.b16 %v4886
        %v4926 = vunpack.c.l.b16 %v4887
        %v4927 = vunpack.c.l.b16 %v4888
        %v4928 = vunpack.c.l.b16 %v4889
        %v4929 = vunpack.c.l.b16 %v4890
        %v4930 = vunpack.c.l.b16 %v4891
        %v4931 = vunpack.c.l.b16 %v4892
        %v4932 = vunpack.c.l.b16 %v4893
        %v4933 = vunpack.c.l.b16 %v4894
        %v4934 = vunpack.c.l.b16 %v4895
        %v4935 = vunpack.c.l.b16 %v4896
        %v4936 = vpack.c.b16 %v4926, %v4925
        %v4937 = vpack.c.b16 %v4928, %v4927
        %v4938 = vpack.c.b16 %v4930, %v4929
        %v4939 = vpack.c.b16 %v4932, %v4931
        %v4940 = vpack.c.b16 %v4934, %v4933
        %v4941 = vpack.c.b16 %v4935, %v4935
        %v4942 = vrot.slane %v4936, 2
        %v4943 = vrot.slane %v4937, 2
        %v4944 = vsel %vm1220, %v4942, %v4943
        %v4945 = vrot.slane %v4938, 2
        %v4946 = vsel %vm1220, %v4943, %v4945
        %v4947 = vrot.slane %v4939, 2
        %v4948 = vsel %vm1220, %v4945, %v4947
        %v4949 = vrot.slane %v4940, 2
        %v4950 = vsel %vm1220, %v4947, %v4949
        %v4951 = vrot.slane %v4941, 2
        %v4952 = vsel %vm1220, %v4949, %v4951
        %v4974 = vunpack.c.l.b16 %v4898
        %v4975 = vunpack.c.l.b16 %v4899
        %v4976 = vunpack.c.l.b16 %v4900
        %v4977 = vunpack.c.l.b16 %v4901
        %v4978 = vunpack.c.l.b16 %v4902
        %v4979 = vunpack.c.l.b16 %v4903
        %v4980 = vunpack.c.l.b16 %v4904
        %v4981 = vunpack.c.l.b16 %v4905
        %v4982 = vunpack.c.l.b16 %v4906
        %v4983 = vunpack.c.l.b16 %v4907
        %v4984 = vunpack.c.l.b16 %v4908
        %v4985 = vunpack.c.l.b16 %v4909
        %v4986 = vunpack.c.l.b16 %v4910
        %v4987 = vunpack.c.l.b16 %v4911
        %v4988 = vunpack.c.l.b16 %v4912
        %v4989 = vunpack.c.l.b16 %v4913
        %v4990 = vpack.c.b16 %v4975, %v4974
        %v4991 = vpack.c.b16 %v4977, %v4976
        %v4992 = vpack.c.b16 %v4979, %v4978
        %v4993 = vpack.c.b16 %v4981, %v4980
        %v4994 = vpack.c.b16 %v4983, %v4982
        %v4995 = vpack.c.b16 %v4985, %v4984
        %v4996 = vpack.c.b16 %v4987, %v4986
        %v4997 = vpack.c.b16 %v4989, %v4988
        %5006 = vmatprep.subr.bf16.mxu0 0
        %5007 = vmatpush1.bf16.msra.mxu0 %v4990
        %5008 = vmatprep.subr.bf16.mxu0 0
        %5009 = vmatpush1.bf16.msra.mxu0 %v4991
        %5010 = vmatprep.subr.bf16.mxu0 0
        %5011 = vmatpush1.bf16.msra.mxu0 %v4992
        %5012 = vmatprep.subr.bf16.mxu0 0
        %5013 = vmatpush1.bf16.msra.mxu0 %v4993
        %5014 = vmatprep.subr.bf16.mxu0 0
        %5015 = vmatpush1.bf16.msra.mxu0 %v4994
        %5016 = vmatprep.subr.bf16.mxu0 0
        %5017 = vmatpush1.bf16.msra.mxu0 %v4995
        %5018 = vmatprep.subr.bf16.mxu0 0
        %5019 = vmatpush1.bf16.msra.mxu0 %v4996
        %5020 = vmatprep.subr.bf16.mxu0 0
        %5021 = vmatpush1.bf16.msra.mxu0 %v4997
        %5022 = vmatprep.subr.bf16.mxu0 0
        %5023 = vmatpush1.bf16.msra.mxu0 0
        %5024 = vmatprep.subr.bf16.mxu0 0
        %5025 = vmatpush1.bf16.msra.mxu0 0
        %5026 = vmatprep.subr.bf16.mxu0 0
        %5027 = vmatpush1.bf16.msra.mxu0 0
        %5028 = vmatprep.subr.bf16.mxu0 0
        %5029 = vmatpush1.bf16.msra.mxu0 0
        %5030 = vmatprep.subr.bf16.mxu0 0
        %5031 = vmatpush1.bf16.msra.mxu0 0
        %5032 = vmatprep.subr.bf16.mxu0 0
        %5033 = vmatpush1.bf16.msra.mxu0 0
        %5034 = vmatprep.subr.bf16.mxu0 0
        %5035 = vmatpush1.bf16.msra.mxu0 0
        %5036 = vmatprep.subr.bf16.mxu0 0
        %5037 = vmatpush1.bf16.msra.mxu0 0
        %5038 = vmatprep.mubr.bf16.mxu0 0
        %5039 = vmatmul.mubr.bf16.gmra.mrb[0].mxu0 %v4944
        %v5040 = vpop.f32.mrb[0].mxu0
        %v5041 = vadd.f32 0.0, %v5040
        %v5042 = vpop.f32.mrb[0].mxu0
        %v5043 = vpop.f32.mrb[0].mxu0
        %v5044 = vadd.f32 0.0, %v5043
        %v5045 = vpop.f32.mrb[0].mxu0
        %5046 = vmatprep.mubr.bf16.mxu0 0
        %5047 = vmatmul.mubr.bf16.gmra.mrb[0].mxu0 %v4946
        %v5048 = vpop.f32.mrb[0].mxu0
        %v5049 = vadd.f32 0.0, %v5048
        %v5050 = vpop.f32.mrb[0].mxu0
        %v5051 = vpop.f32.mrb[0].mxu0
        %v5052 = vadd.f32 0.0, %v5051
        %v5053 = vpop.f32.mrb[0].mxu0
        %5054 = vmatprep.mubr.bf16.mxu0 0
        %5055 = vmatmul.mubr.bf16.gmra.mrb[0].mxu0 %v4948
        %v5056 = vpop.f32.mrb[0].mxu0
        %v5057 = vadd.f32 0.0, %v5056
        %v5058 = vpop.f32.mrb[0].mxu0
        %v5059 = vpop.f32.mrb[0].mxu0
        %v5060 = vadd.f32 0.0, %v5059
        %v5061 = vpop.f32.mrb[0].mxu0
        %5062 = vmatprep.mubr.bf16.mxu0 0
        %5063 = vmatmul.mubr.bf16.gmra.mrb[0].mxu0 %v4950
        %v5064 = vpop.f32.mrb[0].mxu0
        %v5065 = vadd.f32 0.0, %v5064
        %v5066 = vpop.f32.mrb[0].mxu0
        %v5067 = vpop.f32.mrb[0].mxu0
        %v5068 = vadd.f32 0.0, %v5067
        %v5069 = vpop.f32.mrb[0].mxu0
        %5070 = vmatprep.mubr.bf16.mxu0 0
        %5071 = vmatmul.mubr.bf16.gmra.mrb[0].mxu0 %v4952
        %v5072 = vpop.f32.mrb[0].mxu0
        %v5073 = vadd.f32 0.0, %v5072
        %v5074 = vpop.f32.mrb[0].mxu0
        %v5075 = vpop.f32.mrb[0].mxu0
        %v5076 = vadd.f32 0.0, %v5075
        %v5077 = vpop.f32.mrb[0].mxu0
        %5078 = vdwg.mxu0
        %v5079 = vadd.f32 %v4876, %v5041
        %v5080 = vadd.f32 %v4877, %v5044
        %v5081 = vadd.f32 %v4878, %v5049
        %v5082 = vadd.f32 %v4879, %v5052
        %v5083 = vadd.f32 %v4880, %v5057
        %v5084 = vadd.f32 %v4881, %v5060
        %v5085 = vadd.f32 %v4882, %v5065
        %v5086 = vadd.f32 %v4883, %v5068
        %v5087 = vadd.f32 %v4884, %v5073
        %v5088 = vadd.f32 %v4885, %v5076
        %v5089 = vld [vmem:[%s3712 + $0x30] sm:$0x7]
        %s5090 = scalar_lea.vmem %s1, 1600
        %v5091 = vld [vmem:[%s5090] sm:$0xf]
        %v5092 = vld [vmem:[%s5090 + $0x4] sm:$0xf]
        %v5093 = vld [vmem:[%s5090 + $0x8] sm:$0xf]
        %v5094 = vld [vmem:[%s5090 + $0xc] sm:$0xf]
        %v5095 = vld [vmem:[%s5090 + $0x10] sm:$0xf]
        %v5096 = vld [vmem:[%s5090 + $0x14] sm:$0xf]
        %v5097 = vld [vmem:[%s5090 + $0x18] sm:$0xf]
        %v5098 = vld [vmem:[%s5090 + $0x1c] sm:$0xf]
        %v5099 = vld [vmem:[%s5090 + $0x20] sm:$0xf]
        %v5100 = vld [vmem:[%s5090 + $0x24] sm:$0xf]
        %v5101 = vld [vmem:[%s5090 + $0x28] sm:$0xf]
        %v5102 = vld [vmem:[%s5090 + $0x2c] sm:$0xf]
        %v5103 = vld [vmem:[%s5090 + $0x30] sm:$0xf]
        %v5104 = vld [vmem:[%s5090 + $0x34] sm:$0xf]
        %v5105 = vld [vmem:[%s5090 + $0x38] sm:$0xf]
        %v5106 = vld [vmem:[%s5090 + $0x3c] sm:$0xf]
        %v5108 = vunpack.c.l.b16 %v5089
        %v5109 = vpack.c.b16 %v5108, %v5108
        %v5111 = vshrl.u32 %v4936, 16
        %v5113 = vrot.slane %v5111, 2
        %v5114 = vshll.u32 %v4936, 16
        %v5116 = vrot.slane %v5114, 3
        %v5117 = vor.u32 %v5113, %v5116
        %v5119 = vshrl.u32 %v4937, 16
        %v5121 = vrot.slane %v5119, 2
        %v5122 = vshll.u32 %v4937, 16
        %v5124 = vrot.slane %v5122, 3
        %v5125 = vor.u32 %v5121, %v5124
        %v5126 = vsel %vm1592, %v5117, %v5125
        %v5128 = vshrl.u32 %v4938, 16
        %v5130 = vrot.slane %v5128, 2
        %v5131 = vshll.u32 %v4938, 16
        %v5133 = vrot.slane %v5131, 3
        %v5134 = vor.u32 %v5130, %v5133
        %v5135 = vsel %vm1592, %v5125, %v5134
        %v5137 = vshrl.u32 %v4939, 16
        %v5139 = vrot.slane %v5137, 2
        %v5140 = vshll.u32 %v4939, 16
        %v5142 = vrot.slane %v5140, 3
        %v5143 = vor.u32 %v5139, %v5142
        %v5144 = vsel %vm1592, %v5134, %v5143
        %v5146 = vshrl.u32 %v4940, 16
        %v5148 = vrot.slane %v5146, 2
        %v5149 = vshll.u32 %v4940, 16
        %v5151 = vrot.slane %v5149, 3
        %v5152 = vor.u32 %v5148, %v5151
        %v5153 = vsel %vm1592, %v5143, %v5152
        %v5155 = vshrl.u32 %v5109, 16
        %v5157 = vrot.slane %v5155, 2
        %v5158 = vshll.u32 %v5109, 16
        %v5160 = vrot.slane %v5158, 3
        %v5161 = vor.u32 %v5157, %v5160
        %v5162 = vsel %vm1592, %v5152, %v5161
        %v5184 = vunpack.c.l.b16 %v5091
        %v5185 = vunpack.c.l.b16 %v5092
        %v5186 = vunpack.c.l.b16 %v5093
        %v5187 = vunpack.c.l.b16 %v5094
        %v5188 = vunpack.c.l.b16 %v5095
        %v5189 = vunpack.c.l.b16 %v5096
        %v5190 = vunpack.c.l.b16 %v5097
        %v5191 = vunpack.c.l.b16 %v5098
        %v5192 = vunpack.c.l.b16 %v5099
        %v5193 = vunpack.c.l.b16 %v5100
        %v5194 = vunpack.c.l.b16 %v5101
        %v5195 = vunpack.c.l.b16 %v5102
        %v5196 = vunpack.c.l.b16 %v5103
        %v5197 = vunpack.c.l.b16 %v5104
        %v5198 = vunpack.c.l.b16 %v5105
        %v5199 = vunpack.c.l.b16 %v5106
        %v5200 = vpack.c.b16 %v5185, %v5184
        %v5201 = vpack.c.b16 %v5187, %v5186
        %v5202 = vpack.c.b16 %v5189, %v5188
        %v5203 = vpack.c.b16 %v5191, %v5190
        %v5204 = vpack.c.b16 %v5193, %v5192
        %v5205 = vpack.c.b16 %v5195, %v5194
        %v5206 = vpack.c.b16 %v5197, %v5196
        %v5207 = vpack.c.b16 %v5199, %v5198
        %5216 = vmatprep.subr.bf16.mxu0 0
        %5217 = vmatpush1.bf16.msra.mxu0 %v5200
        %5218 = vmatprep.subr.bf16.mxu0 0
        %5219 = vmatpush1.bf16.msra.mxu0 %v5201
        %5220 = vmatprep.subr.bf16.mxu0 0
        %5221 = vmatpush1.bf16.msra.mxu0 %v5202
        %5222 = vmatprep.subr.bf16.mxu0 0
        %5223 = vmatpush1.bf16.msra.mxu0 %v5203
        %5224 = vmatprep.subr.bf16.mxu0 0
        %5225 = vmatpush1.bf16.msra.mxu0 %v5204
        %5226 = vmatprep.subr.bf16.mxu0 0
        %5227 = vmatpush1.bf16.msra.mxu0 %v5205
        %5228 = vmatprep.subr.bf16.mxu0 0
        %5229 = vmatpush1.bf16.msra.mxu0 %v5206
        %5230 = vmatprep.subr.bf16.mxu0 0
        %5231 = vmatpush1.bf16.msra.mxu0 %v5207
        %5232 = vmatprep.subr.bf16.mxu0 0
        %5233 = vmatpush1.bf16.msra.mxu0 0
        %5234 = vmatprep.subr.bf16.mxu0 0
        %5235 = vmatpush1.bf16.msra.mxu0 0
        %5236 = vmatprep.subr.bf16.mxu0 0
        %5237 = vmatpush1.bf16.msra.mxu0 0
        %5238 = vmatprep.subr.bf16.mxu0 0
        %5239 = vmatpush1.bf16.msra.mxu0 0
        %5240 = vmatprep.subr.bf16.mxu0 0
        %5241 = vmatpush1.bf16.msra.mxu0 0
        %5242 = vmatprep.subr.bf16.mxu0 0
        %5243 = vmatpush1.bf16.msra.mxu0 0
        %5244 = vmatprep.subr.bf16.mxu0 0
        %5245 = vmatpush1.bf16.msra.mxu0 0
        %5246 = vmatprep.subr.bf16.mxu0 0
        %5247 = vmatpush1.bf16.msra.mxu0 0
        %5248 = vmatprep.mubr.bf16.mxu0 0
        %5249 = vmatmul.mubr.bf16.gmra.mrb[0].mxu0 %v5126
        %v5250 = vpop.f32.mrb[0].mxu0
        %v5251 = vadd.f32 0.0, %v5250
        %v5252 = vpop.f32.mrb[0].mxu0
        %v5253 = vpop.f32.mrb[0].mxu0
        %v5254 = vadd.f32 0.0, %v5253
        %v5255 = vpop.f32.mrb[0].mxu0
        %5256 = vmatprep.mubr.bf16.mxu0 0
        %5257 = vmatmul.mubr.bf16.gmra.mrb[0].mxu0 %v5135
        %v5258 = vpop.f32.mrb[0].mxu0
        %v5259 = vadd.f32 0.0, %v5258
        %v5260 = vpop.f32.mrb[0].mxu0
        %v5261 = vpop.f32.mrb[0].mxu0
        %v5262 = vadd.f32 0.0, %v5261
        %v5263 = vpop.f32.mrb[0].mxu0
        %5264 = vmatprep.mubr.bf16.mxu0 0
        %5265 = vmatmul.mubr.bf16.gmra.mrb[0].mxu0 %v5144
        %v5266 = vpop.f32.mrb[0].mxu0
        %v5267 = vadd.f32 0.0, %v5266
        %v5268 = vpop.f32.mrb[0].mxu0
        %v5269 = vpop.f32.mrb[0].mxu0
        %v5270 = vadd.f32 0.0, %v5269
        %v5271 = vpop.f32.mrb[0].mxu0
        %5272 = vmatprep.mubr.bf16.mxu0 0
        %5273 = vmatmul.mubr.bf16.gmra.mrb[0].mxu0 %v5153
        %v5274 = vpop.f32.mrb[0].mxu0
        %v5275 = vadd.f32 0.0, %v5274
        %v5276 = vpop.f32.mrb[0].mxu0
        %v5277 = vpop.f32.mrb[0].mxu0
        %v5278 = vadd.f32 0.0, %v5277
        %v5279 = vpop.f32.mrb[0].mxu0
        %5280 = vmatprep.mubr.bf16.mxu0 0
        %5281 = vmatmul.mubr.bf16.gmra.mrb[0].mxu0 %v5162
        %v5282 = vpop.f32.mrb[0].mxu0
        %v5283 = vadd.f32 0.0, %v5282
        %v5284 = vpop.f32.mrb[0].mxu0
        %v5285 = vpop.f32.mrb[0].mxu0
        %v5286 = vadd.f32 0.0, %v5285
        %v5287 = vpop.f32.mrb[0].mxu0
        %5288 = vdwg.mxu0
        %v5289 = vadd.f32 %v5079, %v5251
        %v5290 = vadd.f32 %v5080, %v5254
        %v5291 = vadd.f32 %v5081, %v5259
        %v5292 = vadd.f32 %v5082, %v5262
        %v5293 = vadd.f32 %v5083, %v5267
        %v5294 = vadd.f32 %v5084, %v5270
        %v5295 = vadd.f32 %v5085, %v5275
        %v5296 = vadd.f32 %v5086, %v5278
        %v5297 = vadd.f32 %v5087, %v5283
        %v5298 = vadd.f32 %v5088, %v5286
        %v5299 = vld [vmem:[%s3712 + $0x8] sm:$0x8]
        %s5300 = scalar_lea.vmem %s1, 1664
        %v5301 = vld [vmem:[%s5300] sm:$0xf]
        %v5302 = vld [vmem:[%s5300 + $0x4] sm:$0xf]
        %v5303 = vld [vmem:[%s5300 + $0x8] sm:$0xf]
        %v5304 = vld [vmem:[%s5300 + $0xc] sm:$0xf]
        %v5305 = vld [vmem:[%s5300 + $0x10] sm:$0xf]
        %v5306 = vld [vmem:[%s5300 + $0x14] sm:$0xf]
        %v5307 = vld [vmem:[%s5300 + $0x18] sm:$0xf]
        %v5308 = vld [vmem:[%s5300 + $0x1c] sm:$0xf]
        %v5309 = vld [vmem:[%s5300 + $0x20] sm:$0xf]
        %v5310 = vld [vmem:[%s5300 + $0x24] sm:$0xf]
        %v5311 = vld [vmem:[%s5300 + $0x28] sm:$0xf]
        %v5312 = vld [vmem:[%s5300 + $0x2c] sm:$0xf]
        %v5313 = vld [vmem:[%s5300 + $0x30] sm:$0xf]
        %v5314 = vld [vmem:[%s5300 + $0x34] sm:$0xf]
        %v5315 = vld [vmem:[%s5300 + $0x38] sm:$0xf]
        %v5316 = vld [vmem:[%s5300 + $0x3c] sm:$0xf]
        %v5318 = vunpack.c.l.b16 %v5299
        %v5319 = vpack.c.b16 %v4926, %v5318
        %v5320 = vrot.slane %v5319, 3
        %v5321 = vrot.slane %v4937, 3
        %v5322 = vsel %vm1803, %v5320, %v5321
        %v5323 = vrot.slane %v4938, 3
        %v5324 = vsel %vm1803, %v5321, %v5323
        %v5325 = vrot.slane %v4939, 3
        %v5326 = vsel %vm1803, %v5323, %v5325
        %v5327 = vrot.slane %v4940, 3
        %v5328 = vsel %vm1803, %v5325, %v5327
        %v5329 = vrot.slane %v5109, 3
        %v5330 = vsel %vm1803, %v5327, %v5329
        %v5352 = vunpack.c.l.b16 %v5301
        %v5353 = vunpack.c.l.b16 %v5302
        %v5354 = vunpack.c.l.b16 %v5303
        %v5355 = vunpack.c.l.b16 %v5304
        %v5356 = vunpack.c.l.b16 %v5305
        %v5357 = vunpack.c.l.b16 %v5306
        %v5358 = vunpack.c.l.b16 %v5307
        %v5359 = vunpack.c.l.b16 %v5308
        %v5360 = vunpack.c.l.b16 %v5309
        %v5361 = vunpack.c.l.b16 %v5310
        %v5362 = vunpack.c.l.b16 %v5311
        %v5363 = vunpack.c.l.b16 %v5312
        %v5364 = vunpack.c.l.b16 %v5313
        %v5365 = vunpack.c.l.b16 %v5314
        %v5366 = vunpack.c.l.b16 %v5315
        %v5367 = vunpack.c.l.b16 %v5316
        %v5368 = vpack.c.b16 %v5353, %v5352
        %v5369 = vpack.c.b16 %v5355, %v5354
        %v5370 = vpack.c.b16 %v5357, %v5356
        %v5371 = vpack.c.b16 %v5359, %v5358
        %v5372 = vpack.c.b16 %v5361, %v5360
        %v5373 = vpack.c.b16 %v5363, %v5362
        %v5374 = vpack.c.b16 %v5365, %v5364
        %v5375 = vpack.c.b16 %v5367, %v5366
        %5384 = vmatprep.subr.bf16.mxu0 0
        %5385 = vmatpush1.bf16.msra.mxu0 %v5368
        %5386 = vmatprep.subr.bf16.mxu0 0
        %5387 = vmatpush1.bf16.msra.mxu0 %v5369
        %5388 = vmatprep.subr.bf16.mxu0 0
        %5389 = vmatpush1.bf16.msra.mxu0 %v5370
        %5390 = vmatprep.subr.bf16.mxu0 0
        %5391 = vmatpush1.bf16.msra.mxu0 %v5371
        %5392 = vmatprep.subr.bf16.mxu0 0
        %5393 = vmatpush1.bf16.msra.mxu0 %v5372
        %5394 = vmatprep.subr.bf16.mxu0 0
        %5395 = vmatpush1.bf16.msra.mxu0 %v5373
        %5396 = vmatprep.subr.bf16.mxu0 0
        %5397 = vmatpush1.bf16.msra.mxu0 %v5374
        %5398 = vmatprep.subr.bf16.mxu0 0
        %5399 = vmatpush1.bf16.msra.mxu0 %v5375
        %5400 = vmatprep.subr.bf16.mxu0 0
        %5401 = vmatpush1.bf16.msra.mxu0 0
        %5402 = vmatprep.subr.bf16.mxu0 0
        %5403 = vmatpush1.bf16.msra.mxu0 0
        %5404 = vmatprep.subr.bf16.mxu0 0
        %5405 = vmatpush1.bf16.msra.mxu0 0
        %5406 = vmatprep.subr.bf16.mxu0 0
        %5407 = vmatpush1.bf16.msra.mxu0 0
        %5408 = vmatprep.subr.bf16.mxu0 0
        %5409 = vmatpush1.bf16.msra.mxu0 0
        %5410 = vmatprep.subr.bf16.mxu0 0
        %5411 = vmatpush1.bf16.msra.mxu0 0
        %5412 = vmatprep.subr.bf16.mxu0 0
        %5413 = vmatpush1.bf16.msra.mxu0 0
        %5414 = vmatprep.subr.bf16.mxu0 0
        %5415 = vmatpush1.bf16.msra.mxu0 0
        %5416 = vmatprep.mubr.bf16.mxu0 0
        %5417 = vmatmul.mubr.bf16.gmra.mrb[0].mxu0 %v5322
        %v5418 = vpop.f32.mrb[0].mxu0
        %v5419 = vadd.f32 0.0, %v5418
        %v5420 = vpop.f32.mrb[0].mxu0
        %v5421 = vpop.f32.mrb[0].mxu0
        %v5422 = vadd.f32 0.0, %v5421
        %v5423 = vpop.f32.mrb[0].mxu0
        %5424 = vmatprep.mubr.bf16.mxu0 0
        %5425 = vmatmul.mubr.bf16.gmra.mrb[0].mxu0 %v5324
        %v5426 = vpop.f32.mrb[0].mxu0
        %v5427 = vadd.f32 0.0, %v5426
        %v5428 = vpop.f32.mrb[0].mxu0
        %v5429 = vpop.f32.mrb[0].mxu0
        %v5430 = vadd.f32 0.0, %v5429
        %v5431 = vpop.f32.mrb[0].mxu0
        %5432 = vmatprep.mubr.bf16.mxu0 0
        %5433 = vmatmul.mubr.bf16.gmra.mrb[0].mxu0 %v5326
        %v5434 = vpop.f32.mrb[0].mxu0
        %v5435 = vadd.f32 0.0, %v5434
        %v5436 = vpop.f32.mrb[0].mxu0
        %v5437 = vpop.f32.mrb[0].mxu0
        %v5438 = vadd.f32 0.0, %v5437
        %v5439 = vpop.f32.mrb[0].mxu0
        %5440 = vmatprep.mubr.bf16.mxu0 0
        %5441 = vmatmul.mubr.bf16.gmra.mrb[0].mxu0 %v5328
        %v5442 = vpop.f32.mrb[0].mxu0
        %v5443 = vadd.f32 0.0, %v5442
        %v5444 = vpop.f32.mrb[0].mxu0
        %v5445 = vpop.f32.mrb[0].mxu0
        %v5446 = vadd.f32 0.0, %v5445
        %v5447 = vpop.f32.mrb[0].mxu0
        %5448 = vmatprep.mubr.bf16.mxu0 0
        %5449 = vmatmul.mubr.bf16.gmra.mrb[0].mxu0 %v5330
        %v5450 = vpop.f32.mrb[0].mxu0
        %v5451 = vadd.f32 0.0, %v5450
        %v5452 = vpop.f32.mrb[0].mxu0
        %v5453 = vpop.f32.mrb[0].mxu0
        %v5454 = vadd.f32 0.0, %v5453
        %v5455 = vpop.f32.mrb[0].mxu0
        %5456 = vdwg.mxu0
        %v5457 = vadd.f32 %v5289, %v5419
        %v5458 = vadd.f32 %v5290, %v5422
        %v5459 = vadd.f32 %v5291, %v5427
        %v5460 = vadd.f32 %v5292, %v5430
        %v5461 = vadd.f32 %v5293, %v5435
        %v5462 = vadd.f32 %v5294, %v5438
        %v5463 = vadd.f32 %v5295, %v5443
        %v5464 = vadd.f32 %v5296, %v5446
        %v5465 = vadd.f32 %v5297, %v5451
        %v5466 = vadd.f32 %v5298, %v5454
        %5468 = vset.pattern.permute.xlu0 0
        %5469 = vperm.xlu0 %5468, %v228
        %v5470 = vpop.permute.xlu0 %5469
        %5473 = vset.pattern.permute.xlu0 0
        %5474 = vperm.xlu0 %5473, %v229
        %v5475 = vpop.permute.xlu0 %5474
        %5478 = vset.pattern.permute.xlu0 0
        %5479 = vperm.xlu0 %5478, %v230
        %v5480 = vpop.permute.xlu0 %5479
        %5483 = vset.pattern.permute.xlu0 0
        %5484 = vperm.xlu0 %5483, %v231
        %v5485 = vpop.permute.xlu0 %5484
        %5488 = vset.pattern.permute.xlu0 0
        %5489 = vperm.xlu0 %5488, %v232
        %v5490 = vpop.permute.xlu0 %5489
        %5493 = vset.pattern.permute.xlu0 0
        %5494 = vperm.xlu0 %5493, %v233
        %v5495 = vpop.permute.xlu0 %5494
        %5498 = vset.pattern.permute.xlu0 0
        %5499 = vperm.xlu0 %5498, %v234
        %v5500 = vpop.permute.xlu0 %5499
        %5503 = vset.pattern.permute.xlu0 0
        %5504 = vperm.xlu0 %5503, %v235
        %v5505 = vpop.permute.xlu0 %5504
        %5508 = vset.pattern.permute.xlu0 0
        %5509 = vperm.xlu0 %5508, %v236
        %v5510 = vpop.permute.xlu0 %5509
        %5513 = vset.pattern.permute.xlu0 0
        %5514 = vperm.xlu0 %5513, %v237
        %v5515 = vpop.permute.xlu0 %5514
        %v5517 = vmul.f32 %v5457, %v5470
        %v5518 = vmul.f32 %v5458, %v5475
        %v5519 = vmul.f32 %v5459, %v5480
        %v5520 = vmul.f32 %v5460, %v5485
        %v5521 = vmul.f32 %v5461, %v5490
        %v5522 = vmul.f32 %v5462, %v5495
        %v5523 = vmul.f32 %v5463, %v5500
        %v5524 = vmul.f32 %v5464, %v5505
        %v5525 = vmul.f32 %v5465, %v5510
        %v5526 = vmul.f32 %v5466, %v5515
        %v5527 = vld [vmem:[%s4] sm:$0x1]
        %v5528 = vadd.f32 %v5517, %v5518
        %v5529 = vadd.f32 %v5528, %v5519
        %v5530 = vadd.f32 %v5529, %v5520
        %v5531 = vadd.f32 %v5530, %v5521
        %v5532 = vadd.f32 %v5531, %v5522
        %v5533 = vadd.f32 %v5532, %v5523
        %v5534 = vadd.f32 %v5533, %v5524
        %v5535 = vadd.f32 %v5534, %v5525
        %v5536 = vadd.f32 %v5535, %v5526
        %v5537 = vrot.slane %v5536, 4
        %v5538 = vadd.f32 %v5536, %v5537
        %v5539 = vrot.slane %v5538, 2
        %v5540 = vadd.f32 %v5538, %v5539
        %v5541 = vrot.slane %v5540, 1
        %v5542 = vadd.f32 %v5540, %v5541
        %v5543 = vadd.f32 %v5527, %v5542
        %5544 = vst [vmem:[%s4] sm:$0x1] %v5543
        %v5545 = vld [vmem:[%s5] sm:$0x1]
        %v5546 = vmul.f32 %v5517, %v5517
        %v5547 = vmul.f32 %v5518, %v5518
        %v5548 = vmul.f32 %v5519, %v5519
        %v5549 = vmul.f32 %v5520, %v5520
        %v5550 = vmul.f32 %v5521, %v5521
        %v5551 = vmul.f32 %v5522, %v5522
        %v5552 = vmul.f32 %v5523, %v5523
        %v5553 = vmul.f32 %v5524, %v5524
        %v5554 = vmul.f32 %v5525, %v5525
        %v5555 = vmul.f32 %v5526, %v5526
        %v5556 = vadd.f32 %v5546, %v5547
        %v5557 = vadd.f32 %v5556, %v5548
        %v5558 = vadd.f32 %v5557, %v5549
        %v5559 = vadd.f32 %v5558, %v5550
        %v5560 = vadd.f32 %v5559, %v5551
        %v5561 = vadd.f32 %v5560, %v5552
        %v5562 = vadd.f32 %v5561, %v5553
        %v5563 = vadd.f32 %v5562, %v5554
        %v5564 = vadd.f32 %v5563, %v5555
        %v5565 = vrot.slane %v5564, 4
        %v5566 = vadd.f32 %v5564, %v5565
        %v5567 = vrot.slane %v5566, 2
        %v5568 = vadd.f32 %v5566, %v5567
        %v5569 = vrot.slane %v5568, 1
        %v5570 = vadd.f32 %v5568, %v5569
        %v5571 = vadd.f32 %v5545, %v5570
        %5572 = vst [vmem:[%s5] sm:$0x1] %v5571
        %s5573 = smul.u32 %s239, 80
        %v5574 = vpack.c.bf16 %v5458, %v5457
        %v5575 = vpack.c.bf16 %v5460, %v5459
        %v5576 = vpack.c.bf16 %v5462, %v5461
        %v5577 = vpack.c.bf16 %v5464, %v5463
        %v5578 = vpack.c.bf16 %v5466, %v5465
        %v5584 = vunpack.c.l.b16 %v5574
        %v5585 = vunpack.c.h.b16 %v5574
        %v5586 = vunpack.c.l.b16 %v5575
        %v5587 = vunpack.c.h.b16 %v5575
        %v5588 = vunpack.c.l.b16 %v5576
        %v5589 = vunpack.c.h.b16 %v5576
        %v5590 = vunpack.c.l.b16 %v5577
        %v5591 = vunpack.c.h.b16 %v5577
        %v5592 = vunpack.c.l.b16 %v5578
        %v5593 = vunpack.c.h.b16 %v5578
        %v5594 = vpack.c.b16 %v5584, %v5584
        %v5595 = vpack.c.b16 %v5585, %v5585
        %v5596 = vpack.c.b16 %v5586, %v5586
        %v5597 = vpack.c.b16 %v5587, %v5587
        %v5598 = vpack.c.b16 %v5588, %v5588
        %v5599 = vpack.c.b16 %v5589, %v5589
        %v5600 = vpack.c.b16 %v5590, %v5590
        %v5601 = vpack.c.b16 %v5591, %v5591
        %v5602 = vpack.c.b16 %v5592, %v5592
        %v5603 = vpack.c.b16 %v5593, %v5593
        %s5614 = sshra.s32 %s5573, 3
        %s5615 = sand.u32 %s5573, 7
        %s5616 = smul.addr %s5614, 4
        %s5617 = scalar_lea.vmem %s219, %s5616
        %5618 = vst [vmem:[%s5617] sm:$0xf] %v5594
        %5619 = vst [vmem:[%s5617 + $0x4] sm:$0xf] %v5595
        %5620 = vst [vmem:[%s5617 + $0x8] sm:$0xf] %v5596
        %5621 = vst [vmem:[%s5617 + $0xc] sm:$0xf] %v5597
        %5622 = vst [vmem:[%s5617 + $0x10] sm:$0xf] %v5598
        %5623 = vst [vmem:[%s5617 + $0x14] sm:$0xf] %v5599
        %5624 = vst [vmem:[%s5617 + $0x18] sm:$0xf] %v5600
        %5625 = vst [vmem:[%s5617 + $0x1c] sm:$0xf] %v5601
        %5626 = vst [vmem:[%s5617 + $0x20] sm:$0xf] %v5602
        %5627 = vst [vmem:[%s5617 + $0x24] sm:$0xf] %v5603
      $region41: #{basic_block3d_forward.6} parent=31 // loop_footer
        %s243 = sadd.s32 1, %s239
      $region42: #{basic_block3d_forward.6} parent=31 // loop_footer_branch
        %238 = sbr.rel target = $region38
      $region43: #{basic_block3d_forward.6} parent=31 // loop_exit
        _
      %s5628 = smul.u32 80, %s17
      %p5629 = scmp.lt.s32.totalorder %s5628, 159
      %s5630 = scalar_select %p5629, %s5628, 159
      %s5631 = smul.addr %s5630, 4
      %s5632 = scalar_lea.vmem %s3, %s5631
      // Predicated region
      $region44: #{basic_block3d_forward.6} parent=31 // pred_check
        %p5633 = pneg %p103
      $region45: #{basic_block3d_forward.6} parent=31 // pred_check_branch
        %5635 = sbr.rel (%p5633) target = $region47
      $region46: #{basic_block3d_forward.6} parent=31 // pred_region
        %s5636 = smul.u32 80, %s17
      $region47: #{basic_block3d_forward.6} parent=31 // pred_fallthru
        _
      // Predicated region
      $region48: #{basic_block3d_forward.6} parent=31 // pred_check
        %p5637 = pneg %p124
      $region49: #{basic_block3d_forward.6} parent=31 // pred_check_branch
        %5639 = sbr.rel (%p5637) target = $region51
      $region50: #{basic_block3d_forward.6} parent=31 // pred_region
        _
      $region51: #{basic_block3d_forward.6} parent=31 // pred_fallthru
        _
      // Predicated region
      $region52: #{basic_block3d_forward.6} parent=31 // pred_check
        %p5640 = pneg %p145
      $region53: #{basic_block3d_forward.6} parent=31 // pred_check_branch
        %5642 = sbr.rel (%p5640) target = $region55
      $region54: #{basic_block3d_forward.6} parent=31 // pred_region
        _
      $region55: #{basic_block3d_forward.6} parent=31 // pred_fallthru
        _
      // Predicated region
      $region56: #{basic_block3d_forward.6} parent=31 // pred_check
        %p5643 = pneg %p124
      $region57: #{basic_block3d_forward.6} parent=31 // pred_check_branch
        %5645 = sbr.rel (%p5643) target = $region59
      $region58: #{basic_block3d_forward.6} parent=31 // pred_region
        _
      $region59: #{basic_block3d_forward.6} parent=31 // pred_fallthru
        _
      // Predicated region
      $region60: #{basic_block3d_forward.6} parent=31 // pred_check
        %p5646 = pneg %p145
      $region61: #{basic_block3d_forward.6} parent=31 // pred_check_branch
        %5648 = sbr.rel (%p5646) target = $region63
      $region62: #{basic_block3d_forward.6} parent=31 // pred_region
        _
      $region63: #{basic_block3d_forward.6} parent=31 // pred_fallthru
        _
    $region32: #{basic_block3d_forward.6} parent=5 // pred_fallthru
      _
    %p5649 = scmp.le.s32.totalorder 2, %s12
    // Predicated region
    $region64: #{basic_block3d_forward.6} parent=5 // pred_check
      %p5650 = pneg %p5649
    $region65: #{basic_block3d_forward.6} parent=5 // pred_check_branch
      %5652 = sbr.rel (%p5650) target = $region67
    $region66: #{basic_block3d_forward.6} parent=5 // pred_region
      %s5653 = ssub.s32 %s12, 2
      // Predicated region
      $region68: #{basic_block3d_forward.6} parent=66 // pred_check
        %p5654 = pneg %p109
      $region69: #{basic_block3d_forward.6} parent=66 // pred_check_branch
        %5656 = sbr.rel (%p5654) target = $region71
      $region70: #{basic_block3d_forward.6} parent=66 // pred_region
        %s5657 = smul.u32 80, %s18
        %p5658 = scmp.lt.s32.totalorder %s5657, 159
        %s5659 = scalar_select %p5658, %s5657, 159
        %s5660 = smul.addr %s5659, 4
        %s5661 = scalar_lea.vmem %s3, %s5660
      $region71: #{basic_block3d_forward.6} parent=66 // pred_fallthru
        _
    $region67: #{basic_block3d_forward.6} parent=5 // pred_fallthru
      _
  $region6: #{basic_block3d_forward.6} parent=0 // loop_footer
    %s16 = sadd.s32 1, %s12
  $region7: #{basic_block3d_forward.6} parent=0 // loop_footer_branch
    %11 = sbr.rel target = $region3
  $region8: #{basic_block3d_forward.6} parent=0 // loop_exit
    _

</llo_original>
